<compile_context>
chip_gen: v5e
topology: v5e:2x2
jax: 0.10.0
libtpu: 0.0.40
codegen_flags: <defaults>
</compile_context>

<pallas_src>
import functools

import jax
import jax.numpy as jnp
from jax.experimental import pallas as pl
from jax.experimental.pallas import tpu as pltpu

LRELU_SLOPE = 0.2
BN_EPS = 1e-5
ROW_TILE = 512  # rows per grid step (~85% of HBM roofline vs ~29% at 128)


def _round_up(x, m):
    return (x + m - 1) // m * m


def _row_tile(m):
    # Bounded tile (never the whole array) -> portable across 64/128 MiB VMEM.
    return ROW_TILE if m >= ROW_TILE else _round_up(m, 16)


# ---------------------------------------------------------------------------
# Pallas kernels
# ---------------------------------------------------------------------------
def _conv_act_kernel(p_ref, w_ref, y_ref, *, act):
    # (tm, K) @ (K, C) on the MXU: bf16 operands, f32 accumulation.
    acc = jnp.dot(p_ref[...], w_ref[...], preferred_element_type=jnp.float32)
    if act == "leaky":
        acc = jnp.where(acc > 0, acc, LRELU_SLOPE * acc)
    elif act == "sigmoid":
        acc = jax.nn.sigmoid(acc)
    y_ref[...] = acc.astype(y_ref.dtype)


def _conv_stats_kernel(p_ref, w_ref, y_ref, psum_ref, psq_ref):
    # Conv matmul that also emits per-block partial BN statistics (computed
    # from the f32 accumulator before the bf16 store), removing the separate
    # stats pass over y.
    acc = jnp.dot(p_ref[...], w_ref[...], preferred_element_type=jnp.float32)
    y_ref[...] = acc.astype(y_ref.dtype)
    s = jnp.sum(acc, axis=0, keepdims=True)            # (1, C) f32
    ss = jnp.sum(acc * acc, axis=0, keepdims=True)     # (1, C) f32
    # Replicate across the 8 sublanes of the (8, C) output block; the wrapper
    # reads row 0 of every block (exact, no extra rounding).
    psum_ref[...] = jnp.broadcast_to(s, psum_ref.shape)
    psq_ref[...] = jnp.broadcast_to(ss, psq_ref.shape)


def _bn_leaky_kernel(y_ref, scale_ref, shift_ref, o_ref):
    y = y_ref[...].astype(jnp.float32) * scale_ref[...] + shift_ref[...]
    o_ref[...] = jnp.where(y > 0, y, LRELU_SLOPE * y).astype(o_ref.dtype)


# ---------------------------------------------------------------------------
# pallas_call wrappers
# ---------------------------------------------------------------------------
def conv_block(patches, w_mat, *, act="none", emit_stats=False,
               out_dtype=jnp.bfloat16):
    """Fused im2col-GEMM: (M, K) bf16 @ (K, C) bf16 -> f32 accumulate,
    optional activation, optional fused per-block BN partial statistics."""
    m, k = patches.shape
    c = w_mat.shape[1]
    tm = _row_tile(m)
    m_pad = _round_up(m, tm)
    if m_pad != m:
        # Zero patch rows contribute exactly 0 to the conv output, so fused BN
        # statistics stay correct when divided by the true M.
        patches = jnp.pad(patches, ((0, m_pad - m), (0, 0)))
    grid_m = m_pad // tm

    in_specs = [
        pl.BlockSpec((tm, k), lambda i: (i, 0)),   # streaming patch tile
        pl.BlockSpec((k, c), lambda i: (0, 0)),    # resident weight
    ]

    if emit_stats:
        kernel = _conv_stats_kernel
        out_shape = (
            jax.ShapeDtypeStruct((m_pad, c), out_dtype),
            jax.ShapeDtypeStruct((grid_m * 8, c), jnp.float32),
            jax.ShapeDtypeStruct((grid_m * 8, c), jnp.float32),
        )
        out_specs = (
            pl.BlockSpec((tm, c), lambda i: (i, 0)),
            pl.BlockSpec((8, c), lambda i: (i, 0)),
            pl.BlockSpec((8, c), lambda i: (i, 0)),
        )
    else:
        kernel = functools.partial(_conv_act_kernel, act=act)
        out_shape = jax.ShapeDtypeStruct((m_pad, c), out_dtype)
        out_specs = pl.BlockSpec((tm, c), lambda i: (i, 0))

    return pl.pallas_call(
        kernel,
        out_shape=out_shape,
        grid=(grid_m,),
        in_specs=in_specs,
        out_specs=out_specs,
        compiler_params=pltpu.CompilerParams(
            dimension_semantics=("parallel",)),
    )(patches, w_mat)


def bn_leaky(y, scale, shift):
    """Per-channel affine (BatchNorm apply) + LeakyReLU over the (M, C) slab."""
    m, c = y.shape                 # m is already tile-aligned (padded conv out)
    tm = _row_tile(m)
    return pl.pallas_call(
        _bn_leaky_kernel,
        out_shape=jax.ShapeDtypeStruct((m, c), y.dtype),
        grid=(m // tm,),
        in_specs=[
            pl.BlockSpec((tm, c), lambda i: (i, 0)),
            pl.BlockSpec((1, c), lambda i: (0, 0)),
            pl.BlockSpec((1, c), lambda i: (0, 0)),
        ],
        out_specs=pl.BlockSpec((tm, c), lambda i: (i, 0)),
        compiler_params=pltpu.CompilerParams(
            dimension_semantics=("parallel",)),
    )(y, scale, shift)


# ---------------------------------------------------------------------------
# Glue: NHWC im2col + layer composition
# ---------------------------------------------------------------------------
def im2col_nhwc(x, kh=4, kw=4, stride=2, pad=1):
    # x: (N, H, W, C) -> patches (N*Ho*Wo, KH*KW*C), K ordered (kh, kw, cin)
    n, h, w, c = x.shape
    ho = (h + 2 * pad - kh) // stride + 1
    wo = (w + 2 * pad - kw) // stride + 1
    xp = jnp.pad(x, ((0, 0), (pad, pad), (pad, pad), (0, 0)))
    cols = []
    for i in range(kh):
        for j in range(kw):
            cols.append(xp[:, i:i + stride * ho:stride, j:j + stride * wo:stride, :])
    p = jnp.stack(cols, axis=3)                        # (N, Ho, Wo, KH*KW, C)
    return p.reshape(n * ho * wo, kh * kw * c), (n, ho, wo)


def _wmat(w, pad_cout_to=None):
    # PyTorch OIHW -> (KH*KW*Cin, Cout), bf16; matches patch K order (kh,kw,cin)
    cout = w.shape[0]
    wm = jnp.transpose(w, (2, 3, 1, 0)).reshape(-1, cout)
    if pad_cout_to is not None and cout < pad_cout_to:
        wm = jnp.pad(wm, ((0, 0), (0, pad_cout_to - cout)))
    return wm.astype(jnp.bfloat16)


def conv_leaky(x_nhwc, w):
    p, (n, ho, wo) = im2col_nhwc(x_nhwc)
    m = n * ho * wo
    y = conv_block(p, _wmat(w), act="leaky")
    return y[:m].reshape(n, ho, wo, -1)


def conv_bn_leaky(x_nhwc, w, gamma, beta):
    p, (n, ho, wo) = im2col_nhwc(x_nhwc)
    m = n * ho * wo
    y, psum, psq = conv_block(p, _wmat(w), emit_stats=True)   # pre-BN conv + stats

    # Finalize BatchNorm batch statistics on tiny (C,) vectors in JAX.
    c = y.shape[1]
    grid_m = psum.shape[0] // 8
    s = psum.reshape(grid_m, 8, c)[:, 0, :].sum(axis=0)
    ss = psq.reshape(grid_m, 8, c)[:, 0, :].sum(axis=0)
    mean = s / m
    var = ss / m - mean * mean          # biased variance (train-mode BN)
    inv = gamma * jax.lax.rsqrt(var + BN_EPS)
    scale = inv.reshape(1, -1).astype(jnp.float32)
    shift = (beta - mean * inv).reshape(1, -1).astype(jnp.float32)

    y = bn_leaky(y, scale, shift)       # single elementwise Pallas pass
    return y[:m].reshape(n, ho, wo, -1)


def conv_sigmoid_flat(x_nhwc, w):
    p, (n, ho, wo) = im2col_nhwc(x_nhwc)
    m = n * ho * wo
    # Pad Cout (=1) to 128 lanes for lane-dense stores; slice column 0 after.
    y = conv_block(p, _wmat(w, pad_cout_to=128), act="sigmoid",
                   out_dtype=jnp.float32)
    # Rows are (n, h, w) ordered and Cout == 1, matching PyTorch's
    # .view(-1, 1).squeeze(1) on the NCHW output.
    return y[:m, 0]


def discriminator_forward(x, params):
    # Single NCHW->NHWC transpose + bf16 cast of the input; all intermediate
    # activations stay in the flattened NHWC / (M, C) layout the matmul emits.
    y = jnp.transpose(x, (0, 2, 3, 1)).astype(jnp.bfloat16)
    y = conv_leaky(y, params["w1"])
    y = conv_bn_leaky(y, params["w2"], params["g2"], params["b2"])
    y = conv_bn_leaky(y, params["w3"], params["g3"], params["b3"])
    return conv_sigmoid_flat(y, params["w4"])


# ---------------------------------------------------------------------------
# Pure-JAX f32 reference (silent correctness check)
# ---------------------------------------------------------------------------
def _ref_forward(x, params):
    def conv(z, w):
        return jax.lax.conv_general_dilated(
            z, w, (2, 2), ((1, 1), (1, 1)),
            dimension_numbers=("NCHW", "OIHW", "NCHW"))

    def bn(z, g, b):
        m = z.mean(axis=(0, 2, 3), keepdims=True)
        v = ((z - m) ** 2).mean(axis=(0, 2, 3), keepdims=True)
        return (z - m) / jnp.sqrt(v + BN_EPS) * g.reshape(1, -1, 1, 1) + b.reshape(1, -1, 1, 1)

    lrelu = lambda z: jnp.where(z > 0, z, LRELU_SLOPE * z)
    y = lrelu(conv(x, params["w1"]))
    y = lrelu(bn(conv(y, params["w2"]), params["g2"], params["b2"]))
    y = lrelu(bn(conv(y, params["w3"]), params["g3"], params["b3"]))
    y = jax.nn.sigmoid(conv(y, params["w4"]))
    return y.reshape(-1)


if __name__ == "__main__":
    num_classes, ndf = 1, 64
    key = jax.random.PRNGKey(0)
    k = jax.random.split(key, 5)
    params = {
        "w1": 0.02 * jax.random.normal(k[0], (ndf, num_classes, 4, 4), jnp.float32),
        "w2": 0.02 * jax.random.normal(k[1], (ndf * 2, ndf, 4, 4), jnp.float32),
        "g2": jnp.ones((ndf * 2,), jnp.float32),
        "b2": jnp.zeros((ndf * 2,), jnp.float32),
        "w3": 0.02 * jax.random.normal(k[2], (ndf * 4, ndf * 2, 4, 4), jnp.float32),
        "g3": jnp.ones((ndf * 4,), jnp.float32),
        "b3": jnp.zeros((ndf * 4,), jnp.float32),
        "w4": 0.02 * jax.random.normal(k[3], (1, ndf * 4, 4, 4), jnp.float32),
    }

    # Small input: batch=2, channels=num_classes=1, spatial=32 -> output (2*2*2,)
    x = jax.random.normal(k[4], (2, num_classes, 32, 32), jnp.float32)

    out = jax.jit(discriminator_forward)(x, params)
    out = jax.block_until_ready(out)

    ref = _ref_forward(x, params)
    assert out.shape == ref.shape == (2 * 2 * 2,), (out.shape, ref.shape)
    # bf16 MXU operands (f32 accumulation) -> compare against the f32
    # reference with a correspondingly looser tolerance.
    max_err = float(jnp.max(jnp.abs(out.astype(jnp.float32) - ref)))
    if max_err > 3e-2:
        raise AssertionError(f"Pallas output mismatch vs reference: {max_err}")

    print("KERNEL_OK")
</pallas_src>

<mosaic_0001>
module attributes {stable_mosaic.version = 11 : i64} {
  func.func @_conv_act_kernel(%arg0: i32, %arg1: memref<512x16xbf16, #tpu.memory_space<vmem>>, %arg2: memref<16x64xbf16, #tpu.memory_space<vmem>>, %arg3: memref<512x64xbf16, #tpu.memory_space<vmem>>) attributes {dimension_semantics = [#tpu.dimension_semantics<parallel>], iteration_bounds = array<i64: 1>, scalar_prefetch = 0 : i64, scratch_operands = 0 : i64, tpu.core_type = #tpu.core_type<tc>, window_params = [{transform_indices = @transform_0, window_bounds = array<i64: 512, 16>}, {pipeline_mode = #tpu.pipeline_mode<synchronous>, transform_indices = @transform_1, window_bounds = array<i64: 16, 64>}, {transform_indices = @transform_2, window_bounds = array<i64: 512, 64>}]} {
    %c0 = arith.constant 0 : index
    %c0_0 = arith.constant 0 : index
    %0 = vector.load %arg1[%c0, %c0_0] : memref<512x16xbf16, #tpu.memory_space<vmem>>, vector<512x16xbf16>
    %c0_1 = arith.constant 0 : index
    %c0_2 = arith.constant 0 : index
    %1 = vector.load %arg2[%c0_1, %c0_2] : memref<16x64xbf16, #tpu.memory_space<vmem>>, vector<16x64xbf16>
    %cst = arith.constant dense<0.000000e+00> : vector<512x64xf32>
    %2 = tpu.matmul %0, %1, %cst {dimension_numbers = #tpu.dot_dimension_numbers<[1], [0], [0], [1], [0, 0, 1, 1], [], []>} : vector<512x16xbf16>, vector<16x64xbf16>, vector<512x64xf32> -> vector<512x64xf32>
    %cst_3 = arith.constant 0.000000e+00 : f32
    %3 = vector.broadcast %cst_3 : f32 to vector<512x64xf32>
    %4 = arith.cmpf ogt, %2, %3 : vector<512x64xf32>
    %cst_4 = arith.constant 2.000000e-01 : f32
    %5 = vector.broadcast %cst_4 : f32 to vector<512x64xf32>
    %6 = arith.mulf %5, %2 : vector<512x64xf32>
    %7 = arith.select %4, %2, %6 : vector<512x64xi1>, vector<512x64xf32>
    %8 = arith.truncf %7 : vector<512x64xf32> to vector<512x64xbf16>
    %c0_5 = arith.constant 0 : index
    %c0_6 = arith.constant 0 : index
    %9 = vector.load %arg3[%c0_5, %c0_6] : memref<512x64xbf16, #tpu.memory_space<vmem>>, vector<512x64xbf16>
    tpu.vector_store %arg3[%c0_5, %c0_6], %8 {strides = array<i32>} : memref<512x64xbf16, #tpu.memory_space<vmem>>, vector<512x64xbf16>,
    return
  }
  func.func @transform_0(%arg0: i32) -> (i32, i32) {
    %c0_i32 = arith.constant 0 : i32
    %c0_i32_0 = arith.constant 0 : i32
    return %arg0, %c0_i32 : i32, i32
  }
  func.func @transform_1(%arg0: i32) -> (i32, i32) {
    %c0_i32 = arith.constant 0 : i32
    %c0_i32_0 = arith.constant 0 : i32
    %c0_i32_1 = arith.constant 0 : i32
    return %c0_i32, %c0_i32_0 : i32, i32
  }
  func.func @transform_2(%arg0: i32) -> (i32, i32) {
    %c0_i32 = arith.constant 0 : i32
    %c0_i32_0 = arith.constant 0 : i32
    return %arg0, %c0_i32 : i32, i32
  }
}

module attributes {stable_mosaic.version = 11 : i64} {
  func.func @_conv_stats_kernel(%arg0: i32, %arg1: memref<128x1024xbf16, #tpu.memory_space<vmem>>, %arg2: memref<1024x128xbf16, #tpu.memory_space<vmem>>, %arg3: memref<128x128xbf16, #tpu.memory_space<vmem>>, %arg4: memref<8x128xf32, #tpu.memory_space<vmem>>, %arg5: memref<8x128xf32, #tpu.memory_space<vmem>>) attributes {dimension_semantics = [#tpu.dimension_semantics<parallel>], iteration_bounds = array<i64: 1>, scalar_prefetch = 0 : i64, scratch_operands = 0 : i64, tpu.core_type = #tpu.core_type<tc>, window_params = [{transform_indices = @transform_0, window_bounds = array<i64: 128, 1024>}, {pipeline_mode = #tpu.pipeline_mode<synchronous>, transform_indices = @transform_1, window_bounds = array<i64: 1024, 128>}, {transform_indices = @transform_2, window_bounds = array<i64: 128, 128>}, {transform_indices = @transform_3, window_bounds = array<i64: 8, 128>}, {transform_indices = @transform_4, window_bounds = array<i64: 8, 128>}]} {
    %c0 = arith.constant 0 : index
    %c0_0 = arith.constant 0 : index
    %0 = vector.load %arg1[%c0, %c0_0] : memref<128x1024xbf16, #tpu.memory_space<vmem>>, vector<128x1024xbf16>
    %c0_1 = arith.constant 0 : index
    %c0_2 = arith.constant 0 : index
    %1 = vector.load %arg2[%c0_1, %c0_2] : memref<1024x128xbf16, #tpu.memory_space<vmem>>, vector<1024x128xbf16>
    %cst = arith.constant dense<0.000000e+00> : vector<128x128xf32>
    %2 = tpu.matmul %0, %1, %cst {dimension_numbers = #tpu.dot_dimension_numbers<[1], [0], [0], [1], [0, 0, 1, 1], [], []>} : vector<128x1024xbf16>, vector<1024x128xbf16>, vector<128x128xf32> -> vector<128x128xf32>
    %3 = arith.truncf %2 : vector<128x128xf32> to vector<128x128xbf16>
    %c0_3 = arith.constant 0 : index
    %c0_4 = arith.constant 0 : index
    %4 = vector.load %arg3[%c0_3, %c0_4] : memref<128x128xbf16, #tpu.memory_space<vmem>>, vector<128x128xbf16>
    tpu.vector_store %arg3[%c0_3, %c0_4], %3 {strides = array<i32>} : memref<128x128xbf16, #tpu.memory_space<vmem>>, vector<128x128xbf16>,
    %cst_5 = arith.constant dense<0.000000e+00> : vector<128xf32>
    %5 = vector.multi_reduction <add>, %2, %cst_5 [0] : vector<128x128xf32> to vector<128xf32>
    %6 = vector.shape_cast %5 : vector<128xf32> to vector<1x128xf32>
    %7 = arith.mulf %2, %2 : vector<128x128xf32>
    %cst_6 = arith.constant dense<0.000000e+00> : vector<128xf32>
    %8 = vector.multi_reduction <add>, %7, %cst_6 [0] : vector<128x128xf32> to vector<128xf32>
    %9 = vector.shape_cast %8 : vector<128xf32> to vector<1x128xf32>
    %10 = vector.shape_cast %6 : vector<1x128xf32> to vector<1x128xf32>
    %11 = vector.broadcast %10 : vector<1x128xf32> to vector<8x128xf32>
    %c0_7 = arith.constant 0 : index
    %c0_8 = arith.constant 0 : index
    %12 = vector.load %arg4[%c0_7, %c0_8] : memref<8x128xf32, #tpu.memory_space<vmem>>, vector<8x128xf32>
    tpu.vector_store %arg4[%c0_7, %c0_8], %11 {strides = array<i32>} : memref<8x128xf32, #tpu.memory_space<vmem>>, vector<8x128xf32>,
    %13 = vector.shape_cast %9 : vector<1x128xf32> to vector<1x128xf32>
    %14 = vector.broadcast %13 : vector<1x128xf32> to vector<8x128xf32>
    %c0_9 = arith.constant 0 : index
    %c0_10 = arith.constant 0 : index
    %15 = vector.load %arg5[%c0_9, %c0_10] : memref<8x128xf32, #tpu.memory_space<vmem>>, vector<8x128xf32>
    tpu.vector_store %arg5[%c0_9, %c0_10], %14 {strides = array<i32>} : memref<8x128xf32, #tpu.memory_space<vmem>>, vector<8x128xf32>,
    return
  }
  func.func @transform_0(%arg0: i32) -> (i32, i32) {
    %c0_i32 = arith.constant 0 : i32
    %c0_i32_0 = arith.constant 0 : i32
    return %arg0, %c0_i32 : i32, i32
  }
  func.func @transform_1(%arg0: i32) -> (i32, i32) {
    %c0_i32 = arith.constant 0 : i32
    %c0_i32_0 = arith.constant 0 : i32
    %c0_i32_1 = arith.constant 0 : i32
    return %c0_i32, %c0_i32_0 : i32, i32
  }
  func.func @transform_2(%arg0: i32) -> (i32, i32) {
    %c0_i32 = arith.constant 0 : i32
    %c0_i32_0 = arith.constant 0 : i32
    return %arg0, %c0_i32 : i32, i32
  }
  func.func @transform_3(%arg0: i32) -> (i32, i32) {
    %c0_i32 = arith.constant 0 : i32
    %c0_i32_0 = arith.constant 0 : i32
    return %arg0, %c0_i32 : i32, i32
  }
  func.func @transform_4(%arg0: i32) -> (i32, i32) {
    %c0_i32 = arith.constant 0 : i32
    %c0_i32_0 = arith.constant 0 : i32
    return %arg0, %c0_i32 : i32, i32
  }
}

module attributes {stable_mosaic.version = 11 : i64} {
  func.func @_bn_leaky_kernel(%arg0: i32, %arg1: memref<128x128xbf16, #tpu.memory_space<vmem>>, %arg2: memref<1x128xf32, #tpu.memory_space<vmem>>, %arg3: memref<1x128xf32, #tpu.memory_space<vmem>>, %arg4: memref<128x128xbf16, #tpu.memory_space<vmem>>) attributes {dimension_semantics = [#tpu.dimension_semantics<parallel>], iteration_bounds = array<i64: 1>, scalar_prefetch = 0 : i64, scratch_operands = 0 : i64, tpu.core_type = #tpu.core_type<tc>, window_params = [{transform_indices = @transform_0, window_bounds = array<i64: 128, 128>}, {pipeline_mode = #tpu.pipeline_mode<synchronous>, transform_indices = @transform_1, window_bounds = array<i64: 1, 128>}, {pipeline_mode = #tpu.pipeline_mode<synchronous>, transform_indices = @transform_2, window_bounds = array<i64: 1, 128>}, {transform_indices = @transform_3, window_bounds = array<i64: 128, 128>}]} {
    %c0 = arith.constant 0 : index
    %c0_0 = arith.constant 0 : index
    %0 = vector.load %arg1[%c0, %c0_0] : memref<128x128xbf16, #tpu.memory_space<vmem>>, vector<128x128xbf16>
    %1 = arith.extf %0 : vector<128x128xbf16> to vector<128x128xf32>
    %c0_1 = arith.constant 0 : index
    %c0_2 = arith.constant 0 : index
    %2 = vector.load %arg2[%c0_1, %c0_2] : memref<1x128xf32, #tpu.memory_space<vmem>>, vector<1x128xf32>
    %3 = vector.broadcast %2 : vector<1x128xf32> to vector<128x128xf32>
    %4 = arith.mulf %1, %3 : vector<128x128xf32>
    %c0_3 = arith.constant 0 : index
    %c0_4 = arith.constant 0 : index
    %5 = vector.load %arg3[%c0_3, %c0_4] : memref<1x128xf32, #tpu.memory_space<vmem>>, vector<1x128xf32>
    %6 = vector.broadcast %5 : vector<1x128xf32> to vector<128x128xf32>
    %7 = arith.addf %4, %6 : vector<128x128xf32>
    %cst = arith.constant 0.000000e+00 : f32
    %8 = vector.broadcast %cst : f32 to vector<128x128xf32>
    %9 = arith.cmpf ogt, %7, %8 : vector<128x128xf32>
    %cst_5 = arith.constant 2.000000e-01 : f32
    %10 = vector.broadcast %cst_5 : f32 to vector<128x128xf32>
    %11 = arith.mulf %10, %7 : vector<128x128xf32>
    %12 = arith.select %9, %7, %11 : vector<128x128xi1>, vector<128x128xf32>
    %13 = arith.truncf %12 : vector<128x128xf32> to vector<128x128xbf16>
    %c0_6 = arith.constant 0 : index
    %c0_7 = arith.constant 0 : index
    %14 = vector.load %arg4[%c0_6, %c0_7] : memref<128x128xbf16, #tpu.memory_space<vmem>>, vector<128x128xbf16>
    tpu.vector_store %arg4[%c0_6, %c0_7], %13 {strides = array<i32>} : memref<128x128xbf16, #tpu.memory_space<vmem>>, vector<128x128xbf16>,
    return
  }
  func.func @transform_0(%arg0: i32) -> (i32, i32) {
    %c0_i32 = arith.constant 0 : i32
    %c0_i32_0 = arith.constant 0 : i32
    return %arg0, %c0_i32 : i32, i32
  }
  func.func @transform_1(%arg0: i32) -> (i32, i32) {
    %c0_i32 = arith.constant 0 : i32
    %c0_i32_0 = arith.constant 0 : i32
    %c0_i32_1 = arith.constant 0 : i32
    return %c0_i32, %c0_i32_0 : i32, i32
  }
  func.func @transform_2(%arg0: i32) -> (i32, i32) {
    %c0_i32 = arith.constant 0 : i32
    %c0_i32_0 = arith.constant 0 : i32
    %c0_i32_1 = arith.constant 0 : i32
    return %c0_i32, %c0_i32_0 : i32, i32
  }
  func.func @transform_3(%arg0: i32) -> (i32, i32) {
    %c0_i32 = arith.constant 0 : i32
    %c0_i32_0 = arith.constant 0 : i32
    return %arg0, %c0_i32 : i32, i32
  }
}

module attributes {stable_mosaic.version = 11 : i64} {
  func.func @_bn_leaky_kernel(%arg0: i32, %arg1: memref<32x256xbf16, #tpu.memory_space<vmem>>, %arg2: memref<1x256xf32, #tpu.memory_space<vmem>>, %arg3: memref<1x256xf32, #tpu.memory_space<vmem>>, %arg4: memref<32x256xbf16, #tpu.memory_space<vmem>>) attributes {dimension_semantics = [#tpu.dimension_semantics<parallel>], iteration_bounds = array<i64: 1>, scalar_prefetch = 0 : i64, scratch_operands = 0 : i64, tpu.core_type = #tpu.core_type<tc>, window_params = [{transform_indices = @transform_0, window_bounds = array<i64: 32, 256>}, {pipeline_mode = #tpu.pipeline_mode<synchronous>, transform_indices = @transform_1, window_bounds = array<i64: 1, 256>}, {pipeline_mode = #tpu.pipeline_mode<synchronous>, transform_indices = @transform_2, window_bounds = array<i64: 1, 256>}, {transform_indices = @transform_3, window_bounds = array<i64: 32, 256>}]} {
    %c0 = arith.constant 0 : index
    %c0_0 = arith.constant 0 : index
    %0 = vector.load %arg1[%c0, %c0_0] : memref<32x256xbf16, #tpu.memory_space<vmem>>, vector<32x256xbf16>
    %1 = arith.extf %0 : vector<32x256xbf16> to vector<32x256xf32>
    %c0_1 = arith.constant 0 : index
    %c0_2 = arith.constant 0 : index
    %2 = vector.load %arg2[%c0_1, %c0_2] : memref<1x256xf32, #tpu.memory_space<vmem>>, vector<1x256xf32>
    %3 = vector.broadcast %2 : vector<1x256xf32> to vector<32x256xf32>
    %4 = arith.mulf %1, %3 : vector<32x256xf32>
    %c0_3 = arith.constant 0 : index
    %c0_4 = arith.constant 0 : index
    %5 = vector.load %arg3[%c0_3, %c0_4] : memref<1x256xf32, #tpu.memory_space<vmem>>, vector<1x256xf32>
    %6 = vector.broadcast %5 : vector<1x256xf32> to vector<32x256xf32>
    %7 = arith.addf %4, %6 : vector<32x256xf32>
    %cst = arith.constant 0.000000e+00 : f32
    %8 = vector.broadcast %cst : f32 to vector<32x256xf32>
    %9 = arith.cmpf ogt, %7, %8 : vector<32x256xf32>
    %cst_5 = arith.constant 2.000000e-01 : f32
    %10 = vector.broadcast %cst_5 : f32 to vector<32x256xf32>
    %11 = arith.mulf %10, %7 : vector<32x256xf32>
    %12 = arith.select %9, %7, %11 : vector<32x256xi1>, vector<32x256xf32>
    %13 = arith.truncf %12 : vector<32x256xf32> to vector<32x256xbf16>
    %c0_6 = arith.constant 0 : index
    %c0_7 = arith.constant 0 : index
    %14 = vector.load %arg4[%c0_6, %c0_7] : memref<32x256xbf16, #tpu.memory_space<vmem>>, vector<32x256xbf16>
    tpu.vector_store %arg4[%c0_6, %c0_7], %13 {strides = array<i32>} : memref<32x256xbf16, #tpu.memory_space<vmem>>, vector<32x256xbf16>,
    return
  }
  func.func @transform_0(%arg0: i32) -> (i32, i32) {
    %c0_i32 = arith.constant 0 : i32
    %c0_i32_0 = arith.constant 0 : i32
    return %arg0, %c0_i32 : i32, i32
  }
  func.func @transform_1(%arg0: i32) -> (i32, i32) {
    %c0_i32 = arith.constant 0 : i32
    %c0_i32_0 = arith.constant 0 : i32
    %c0_i32_1 = arith.constant 0 : i32
    return %c0_i32, %c0_i32_0 : i32, i32
  }
  func.func @transform_2(%arg0: i32) -> (i32, i32) {
    %c0_i32 = arith.constant 0 : i32
    %c0_i32_0 = arith.constant 0 : i32
    %c0_i32_1 = arith.constant 0 : i32
    return %c0_i32, %c0_i32_0 : i32, i32
  }
  func.func @transform_3(%arg0: i32) -> (i32, i32) {
    %c0_i32 = arith.constant 0 : i32
    %c0_i32_0 = arith.constant 0 : i32
    return %arg0, %c0_i32 : i32, i32
  }
}

module attributes {stable_mosaic.version = 11 : i64} {
  func.func @_conv_stats_kernel(%arg0: i32, %arg1: memref<32x2048xbf16, #tpu.memory_space<vmem>>, %arg2: memref<2048x256xbf16, #tpu.memory_space<vmem>>, %arg3: memref<32x256xbf16, #tpu.memory_space<vmem>>, %arg4: memref<8x256xf32, #tpu.memory_space<vmem>>, %arg5: memref<8x256xf32, #tpu.memory_space<vmem>>) attributes {dimension_semantics = [#tpu.dimension_semantics<parallel>], iteration_bounds = array<i64: 1>, scalar_prefetch = 0 : i64, scratch_operands = 0 : i64, tpu.core_type = #tpu.core_type<tc>, window_params = [{transform_indices = @transform_0, window_bounds = array<i64: 32, 2048>}, {pipeline_mode = #tpu.pipeline_mode<synchronous>, transform_indices = @transform_1, window_bounds = array<i64: 2048, 256>}, {transform_indices = @transform_2, window_bounds = array<i64: 32, 256>}, {transform_indices = @transform_3, window_bounds = array<i64: 8, 256>}, {transform_indices = @transform_4, window_bounds = array<i64: 8, 256>}]} {
    %c0 = arith.constant 0 : index
    %c0_0 = arith.constant 0 : index
    %0 = vector.load %arg1[%c0, %c0_0] : memref<32x2048xbf16, #tpu.memory_space<vmem>>, vector<32x2048xbf16>
    %c0_1 = arith.constant 0 : index
    %c0_2 = arith.constant 0 : index
    %1 = vector.load %arg2[%c0_1, %c0_2] : memref<2048x256xbf16, #tpu.memory_space<vmem>>, vector<2048x256xbf16>
    %cst = arith.constant dense<0.000000e+00> : vector<32x256xf32>
    %2 = tpu.matmul %0, %1, %cst {dimension_numbers = #tpu.dot_dimension_numbers<[1], [0], [0], [1], [0, 0, 1, 1], [], []>} : vector<32x2048xbf16>, vector<2048x256xbf16>, vector<32x256xf32> -> vector<32x256xf32>
    %3 = arith.truncf %2 : vector<32x256xf32> to vector<32x256xbf16>
    %c0_3 = arith.constant 0 : index
    %c0_4 = arith.constant 0 : index
    %4 = vector.load %arg3[%c0_3, %c0_4] : memref<32x256xbf16, #tpu.memory_space<vmem>>, vector<32x256xbf16>
    tpu.vector_store %arg3[%c0_3, %c0_4], %3 {strides = array<i32>} : memref<32x256xbf16, #tpu.memory_space<vmem>>, vector<32x256xbf16>,
    %cst_5 = arith.constant dense<0.000000e+00> : vector<256xf32>
    %5 = vector.multi_reduction <add>, %2, %cst_5 [0] : vector<32x256xf32> to vector<256xf32>
    %6 = vector.shape_cast %5 : vector<256xf32> to vector<1x256xf32>
    %7 = arith.mulf %2, %2 : vector<32x256xf32>
    %cst_6 = arith.constant dense<0.000000e+00> : vector<256xf32>
    %8 = vector.multi_reduction <add>, %7, %cst_6 [0] : vector<32x256xf32> to vector<256xf32>
    %9 = vector.shape_cast %8 : vector<256xf32> to vector<1x256xf32>
    %10 = vector.shape_cast %6 : vector<1x256xf32> to vector<1x256xf32>
    %11 = vector.broadcast %10 : vector<1x256xf32> to vector<8x256xf32>
    %c0_7 = arith.constant 0 : index
    %c0_8 = arith.constant 0 : index
    %12 = vector.load %arg4[%c0_7, %c0_8] : memref<8x256xf32, #tpu.memory_space<vmem>>, vector<8x256xf32>
    tpu.vector_store %arg4[%c0_7, %c0_8], %11 {strides = array<i32>} : memref<8x256xf32, #tpu.memory_space<vmem>>, vector<8x256xf32>,
    %13 = vector.shape_cast %9 : vector<1x256xf32> to vector<1x256xf32>
    %14 = vector.broadcast %13 : vector<1x256xf32> to vector<8x256xf32>
    %c0_9 = arith.constant 0 : index
    %c0_10 = arith.constant 0 : index
    %15 = vector.load %arg5[%c0_9, %c0_10] : memref<8x256xf32, #tpu.memory_space<vmem>>, vector<8x256xf32>
    tpu.vector_store %arg5[%c0_9, %c0_10], %14 {strides = array<i32>} : memref<8x256xf32, #tpu.memory_space<vmem>>, vector<8x256xf32>,
    return
  }
  func.func @transform_0(%arg0: i32) -> (i32, i32) {
    %c0_i32 = arith.constant 0 : i32
    %c0_i32_0 = arith.constant 0 : i32
    return %arg0, %c0_i32 : i32, i32
  }
  func.func @transform_1(%arg0: i32) -> (i32, i32) {
    %c0_i32 = arith.constant 0 : i32
    %c0_i32_0 = arith.constant 0 : i32
    %c0_i32_1 = arith.constant 0 : i32
    return %c0_i32, %c0_i32_0 : i32, i32
  }
  func.func @transform_2(%arg0: i32) -> (i32, i32) {
    %c0_i32 = arith.constant 0 : i32
    %c0_i32_0 = arith.constant 0 : i32
    return %arg0, %c0_i32 : i32, i32
  }
  func.func @transform_3(%arg0: i32) -> (i32, i32) {
    %c0_i32 = arith.constant 0 : i32
    %c0_i32_0 = arith.constant 0 : i32
    return %arg0, %c0_i32 : i32, i32
  }
  func.func @transform_4(%arg0: i32) -> (i32, i32) {
    %c0_i32 = arith.constant 0 : i32
    %c0_i32_0 = arith.constant 0 : i32
    return %arg0, %c0_i32 : i32, i32
  }
}

module attributes {stable_mosaic.version = 11 : i64} {
  func.func @_conv_act_kernel(%arg0: i32, %arg1: memref<16x4096xbf16, #tpu.memory_space<vmem>>, %arg2: memref<4096x128xbf16, #tpu.memory_space<vmem>>, %arg3: memref<16x128xf32, #tpu.memory_space<vmem>>) attributes {dimension_semantics = [#tpu.dimension_semantics<parallel>], iteration_bounds = array<i64: 1>, scalar_prefetch = 0 : i64, scratch_operands = 0 : i64, tpu.core_type = #tpu.core_type<tc>, window_params = [{transform_indices = @transform_0, window_bounds = array<i64: 16, 4096>}, {pipeline_mode = #tpu.pipeline_mode<synchronous>, transform_indices = @transform_1, window_bounds = array<i64: 4096, 128>}, {transform_indices = @transform_2, window_bounds = array<i64: 16, 128>}]} {
    %c0 = arith.constant 0 : index
    %c0_0 = arith.constant 0 : index
    %0 = vector.load %arg1[%c0, %c0_0] : memref<16x4096xbf16, #tpu.memory_space<vmem>>, vector<16x4096xbf16>
    %c0_1 = arith.constant 0 : index
    %c0_2 = arith.constant 0 : index
    %1 = vector.load %arg2[%c0_1, %c0_2] : memref<4096x128xbf16, #tpu.memory_space<vmem>>, vector<4096x128xbf16>
    %cst = arith.constant dense<0.000000e+00> : vector<16x128xf32>
    %2 = tpu.matmul %0, %1, %cst {dimension_numbers = #tpu.dot_dimension_numbers<[1], [0], [0], [1], [0, 0, 1, 1], [], []>} : vector<16x4096xbf16>, vector<4096x128xbf16>, vector<16x128xf32> -> vector<16x128xf32>
    %3 = arith.negf %2 : vector<16x128xf32>
    %4 = math.exp %3 : vector<16x128xf32>
    %cst_3 = arith.constant 1.000000e+00 : f32
    %5 = vector.broadcast %cst_3 : f32 to vector<16x128xf32>
    %6 = arith.addf %5, %4 : vector<16x128xf32>
    %7 = arith.divf %5, %6 : vector<16x128xf32>
    %c0_4 = arith.constant 0 : index
    %c0_5 = arith.constant 0 : index
    %8 = vector.load %arg3[%c0_4, %c0_5] : memref<16x128xf32, #tpu.memory_space<vmem>>, vector<16x128xf32>
    tpu.vector_store %arg3[%c0_4, %c0_5], %7 {strides = array<i32>} : memref<16x128xf32, #tpu.memory_space<vmem>>, vector<16x128xf32>,
    return
  }
  func.func @transform_0(%arg0: i32) -> (i32, i32) {
    %c0_i32 = arith.constant 0 : i32
    %c0_i32_0 = arith.constant 0 : i32
    return %arg0, %c0_i32 : i32, i32
  }
  func.func @transform_1(%arg0: i32) -> (i32, i32) {
    %c0_i32 = arith.constant 0 : i32
    %c0_i32_0 = arith.constant 0 : i32
    %c0_i32_1 = arith.constant 0 : i32
    return %c0_i32, %c0_i32_0 : i32, i32
  }
  func.func @transform_2(%arg0: i32) -> (i32, i32) {
    %c0_i32 = arith.constant 0 : i32
    %c0_i32_0 = arith.constant 0 : i32
    return %arg0, %c0_i32 : i32, i32
  }
}

</mosaic_0001>

<llo_original>
// kernel: discriminator_forward.6
$region0: #{discriminator_forward.6}
  #allocation0 [shape = 'u32[]', space=smem, size = 0x4, offset = 0x4, fixed_abs, tag = 'smem constant byte address 0x4 - core index']
  #allocation1 [shape = 'u32[72,128]{1,0:T(1,128)}', space=vmem, size = 0x9000, scoped, tag = 'internal scratch']
  %s0 = inlined_call_operand.vmem [shape: bf16[512,16], index: 0, kind: input, shape index: {}]
  %s1 = inlined_call_operand.vmem [shape: bf16[16,64], index: 1, kind: input, shape index: {}]
  %s2 = inlined_call_operand.vmem [shape: bf16[512,64], index: 2, kind: output, shape index: {}]
  %s3 = sld [smem:[#allocation0]]
  $region18: #{discriminator_forward.6} parent=0
    _
  %s5 = ssub.s32 1, %s3
  %s6 = scalar_select 0, %s5, %s3
  // Predicated region
  $region2: #{discriminator_forward.6} parent=0 // pred_check
    _
  $region3: #{discriminator_forward.6} parent=0 // pred_check_branch
    %8 = sbr.rel (0) target = $region5
  $region4: #{discriminator_forward.6} parent=0 // pred_region
    _
  $region5: #{discriminator_forward.6} parent=0 // pred_fallthru
    _
  // Predicated region
  $region6: #{discriminator_forward.6} parent=0 // pred_check
    _
  $region7: #{discriminator_forward.6} parent=0 // pred_check_branch
    %10 = sbr.rel (0) target = $region9
  $region8: #{discriminator_forward.6} parent=0 // pred_region
    _
  $region9: #{discriminator_forward.6} parent=0 // pred_fallthru
    _
  %v12 = vld [vmem:[%s0] sm:$0xf]
  %v13 = vld [vmem:[%s0 + $0x4] sm:$0xf]
  %v14 = vld [vmem:[%s0 + $0x8] sm:$0xf]
  %v15 = vld [vmem:[%s0 + $0xc] sm:$0xf]
  %v16 = vld [vmem:[%s0 + $0x10] sm:$0xf]
  %v17 = vld [vmem:[%s0 + $0x14] sm:$0xf]
  %v18 = vld [vmem:[%s0 + $0x18] sm:$0xf]
  %v19 = vld [vmem:[%s0 + $0x1c] sm:$0xf]
  %v20 = vld [vmem:[%s0 + $0x20] sm:$0xf]
  %v21 = vld [vmem:[%s0 + $0x24] sm:$0xf]
  %v22 = vld [vmem:[%s0 + $0x28] sm:$0xf]
  %v23 = vld [vmem:[%s0 + $0x2c] sm:$0xf]
  %v24 = vld [vmem:[%s0 + $0x30] sm:$0xf]
  %v25 = vld [vmem:[%s0 + $0x34] sm:$0xf]
  %v26 = vld [vmem:[%s0 + $0x38] sm:$0xf]
  %v27 = vld [vmem:[%s0 + $0x3c] sm:$0xf]
  %v28 = vld [vmem:[%s0 + $0x40] sm:$0xf]
  %v29 = vld [vmem:[%s0 + $0x44] sm:$0xf]
  %v30 = vld [vmem:[%s0 + $0x48] sm:$0xf]
  %v31 = vld [vmem:[%s0 + $0x4c] sm:$0xf]
  %v32 = vld [vmem:[%s0 + $0x50] sm:$0xf]
  %v33 = vld [vmem:[%s0 + $0x54] sm:$0xf]
  %v34 = vld [vmem:[%s0 + $0x58] sm:$0xf]
  %v35 = vld [vmem:[%s0 + $0x5c] sm:$0xf]
  %v36 = vld [vmem:[%s0 + $0x60] sm:$0xf]
  %v37 = vld [vmem:[%s0 + $0x64] sm:$0xf]
  %v38 = vld [vmem:[%s0 + $0x68] sm:$0xf]
  %v39 = vld [vmem:[%s0 + $0x6c] sm:$0xf]
  %v40 = vld [vmem:[%s0 + $0x70] sm:$0xf]
  %v41 = vld [vmem:[%s0 + $0x74] sm:$0xf]
  %v42 = vld [vmem:[%s0 + $0x78] sm:$0xf]
  %v43 = vld [vmem:[%s0 + $0x7c] sm:$0xf]
  %v44 = vld [vmem:[%s0 + $0x80] sm:$0xf]
  %v45 = vld [vmem:[%s0 + $0x84] sm:$0xf]
  %v46 = vld [vmem:[%s0 + $0x88] sm:$0xf]
  %v47 = vld [vmem:[%s0 + $0x8c] sm:$0xf]
  %v48 = vld [vmem:[%s0 + $0x90] sm:$0xf]
  %v49 = vld [vmem:[%s0 + $0x94] sm:$0xf]
  %v50 = vld [vmem:[%s0 + $0x98] sm:$0xf]
  %v51 = vld [vmem:[%s0 + $0x9c] sm:$0xf]
  %v52 = vld [vmem:[%s0 + $0xa0] sm:$0xf]
  %v53 = vld [vmem:[%s0 + $0xa4] sm:$0xf]
  %v54 = vld [vmem:[%s0 + $0xa8] sm:$0xf]
  %v55 = vld [vmem:[%s0 + $0xac] sm:$0xf]
  %v56 = vld [vmem:[%s0 + $0xb0] sm:$0xf]
  %v57 = vld [vmem:[%s0 + $0xb4] sm:$0xf]
  %v58 = vld [vmem:[%s0 + $0xb8] sm:$0xf]
  %v59 = vld [vmem:[%s0 + $0xbc] sm:$0xf]
  %v60 = vld [vmem:[%s0 + $0xc0] sm:$0xf]
  %v61 = vld [vmem:[%s0 + $0xc4] sm:$0xf]
  %v62 = vld [vmem:[%s0 + $0xc8] sm:$0xf]
  %v63 = vld [vmem:[%s0 + $0xcc] sm:$0xf]
  %v64 = vld [vmem:[%s0 + $0xd0] sm:$0xf]
  %v65 = vld [vmem:[%s0 + $0xd4] sm:$0xf]
  %v66 = vld [vmem:[%s0 + $0xd8] sm:$0xf]
  %v67 = vld [vmem:[%s0 + $0xdc] sm:$0xf]
  %v68 = vld [vmem:[%s0 + $0xe0] sm:$0xf]
  %v69 = vld [vmem:[%s0 + $0xe4] sm:$0xf]
  %v70 = vld [vmem:[%s0 + $0xe8] sm:$0xf]
  %v71 = vld [vmem:[%s0 + $0xec] sm:$0xf]
  %v72 = vld [vmem:[%s0 + $0xf0] sm:$0xf]
  %v73 = vld [vmem:[%s0 + $0xf4] sm:$0xf]
  %v74 = vld [vmem:[%s0 + $0xf8] sm:$0xf]
  %v75 = vld [vmem:[%s0 + $0xfc] sm:$0xf]
  %v76 = vld [vmem:[%s1] sm:$0xf]
  %v77 = vld [vmem:[%s1 + $0x4] sm:$0xf]
  %v142 = vunpack.c.l.b16 %v12
  %v143 = vunpack.c.l.b16 %v13
  %v144 = vunpack.c.l.b16 %v14
  %v145 = vunpack.c.l.b16 %v15
  %v146 = vunpack.c.l.b16 %v16
  %v147 = vunpack.c.l.b16 %v17
  %v148 = vunpack.c.l.b16 %v18
  %v149 = vunpack.c.l.b16 %v19
  %v150 = vunpack.c.l.b16 %v20
  %v151 = vunpack.c.l.b16 %v21
  %v152 = vunpack.c.l.b16 %v22
  %v153 = vunpack.c.l.b16 %v23
  %v154 = vunpack.c.l.b16 %v24
  %v155 = vunpack.c.l.b16 %v25
  %v156 = vunpack.c.l.b16 %v26
  %v157 = vunpack.c.l.b16 %v27
  %v158 = vunpack.c.l.b16 %v28
  %v159 = vunpack.c.l.b16 %v29
  %v160 = vunpack.c.l.b16 %v30
  %v161 = vunpack.c.l.b16 %v31
  %v162 = vunpack.c.l.b16 %v32
  %v163 = vunpack.c.l.b16 %v33
  %v164 = vunpack.c.l.b16 %v34
  %v165 = vunpack.c.l.b16 %v35
  %v166 = vunpack.c.l.b16 %v36
  %v167 = vunpack.c.l.b16 %v37
  %v168 = vunpack.c.l.b16 %v38
  %v169 = vunpack.c.l.b16 %v39
  %v170 = vunpack.c.l.b16 %v40
  %v171 = vunpack.c.l.b16 %v41
  %v172 = vunpack.c.l.b16 %v42
  %v173 = vunpack.c.l.b16 %v43
  %v174 = vunpack.c.l.b16 %v44
  %v175 = vunpack.c.l.b16 %v45
  %v176 = vunpack.c.l.b16 %v46
  %v177 = vunpack.c.l.b16 %v47
  %v178 = vunpack.c.l.b16 %v48
  %v179 = vunpack.c.l.b16 %v49
  %v180 = vunpack.c.l.b16 %v50
  %v181 = vunpack.c.l.b16 %v51
  %v182 = vunpack.c.l.b16 %v52
  %v183 = vunpack.c.l.b16 %v53
  %v184 = vunpack.c.l.b16 %v54
  %v185 = vunpack.c.l.b16 %v55
  %v186 = vunpack.c.l.b16 %v56
  %v187 = vunpack.c.l.b16 %v57
  %v188 = vunpack.c.l.b16 %v58
  %v189 = vunpack.c.l.b16 %v59
  %v190 = vunpack.c.l.b16 %v60
  %v191 = vunpack.c.l.b16 %v61
  %v192 = vunpack.c.l.b16 %v62
  %v193 = vunpack.c.l.b16 %v63
  %v194 = vunpack.c.l.b16 %v64
  %v195 = vunpack.c.l.b16 %v65
  %v196 = vunpack.c.l.b16 %v66
  %v197 = vunpack.c.l.b16 %v67
  %v198 = vunpack.c.l.b16 %v68
  %v199 = vunpack.c.l.b16 %v69
  %v200 = vunpack.c.l.b16 %v70
  %v201 = vunpack.c.l.b16 %v71
  %v202 = vunpack.c.l.b16 %v72
  %v203 = vunpack.c.l.b16 %v73
  %v204 = vunpack.c.l.b16 %v74
  %v205 = vunpack.c.l.b16 %v75
  %v206 = vpack.c.b16 %v143, %v142
  %v207 = vpack.c.b16 %v145, %v144
  %v208 = vpack.c.b16 %v147, %v146
  %v209 = vpack.c.b16 %v149, %v148
  %v210 = vpack.c.b16 %v151, %v150
  %v211 = vpack.c.b16 %v153, %v152
  %v212 = vpack.c.b16 %v155, %v154
  %v213 = vpack.c.b16 %v157, %v156
  %v214 = vpack.c.b16 %v159, %v158
  %v215 = vpack.c.b16 %v161, %v160
  %v216 = vpack.c.b16 %v163, %v162
  %v217 = vpack.c.b16 %v165, %v164
  %v218 = vpack.c.b16 %v167, %v166
  %v219 = vpack.c.b16 %v169, %v168
  %v220 = vpack.c.b16 %v171, %v170
  %v221 = vpack.c.b16 %v173, %v172
  %v222 = vpack.c.b16 %v175, %v174
  %v223 = vpack.c.b16 %v177, %v176
  %v224 = vpack.c.b16 %v179, %v178
  %v225 = vpack.c.b16 %v181, %v180
  %v226 = vpack.c.b16 %v183, %v182
  %v227 = vpack.c.b16 %v185, %v184
  %v228 = vpack.c.b16 %v187, %v186
  %v229 = vpack.c.b16 %v189, %v188
  %v230 = vpack.c.b16 %v191, %v190
  %v231 = vpack.c.b16 %v193, %v192
  %v232 = vpack.c.b16 %v195, %v194
  %v233 = vpack.c.b16 %v197, %v196
  %v234 = vpack.c.b16 %v199, %v198
  %v235 = vpack.c.b16 %v201, %v200
  %v236 = vpack.c.b16 %v203, %v202
  %v237 = vpack.c.b16 %v205, %v204
  %v240 = vunpack.c.l.b16 %v76
  %v241 = vunpack.c.l.b16 %v77
  %v242 = vpack.c.b16 %v241, %v240
  %vm244 = vcmask 130048
  %v246 = vsel %vm244, %v206, 0
  %v249 = vsel %vm244, %v207, 0
  %v252 = vsel %vm244, %v208, 0
  %v255 = vsel %vm244, %v209, 0
  %v258 = vsel %vm244, %v210, 0
  %v261 = vsel %vm244, %v211, 0
  %v264 = vsel %vm244, %v212, 0
  %v267 = vsel %vm244, %v213, 0
  %v270 = vsel %vm244, %v214, 0
  %v273 = vsel %vm244, %v215, 0
  %v276 = vsel %vm244, %v216, 0
  %v279 = vsel %vm244, %v217, 0
  %v282 = vsel %vm244, %v218, 0
  %v285 = vsel %vm244, %v219, 0
  %v288 = vsel %vm244, %v220, 0
  %v291 = vsel %vm244, %v221, 0
  %v294 = vsel %vm244, %v222, 0
  %v297 = vsel %vm244, %v223, 0
  %v300 = vsel %vm244, %v224, 0
  %v303 = vsel %vm244, %v225, 0
  %v306 = vsel %vm244, %v226, 0
  %v309 = vsel %vm244, %v227, 0
  %v312 = vsel %vm244, %v228, 0
  %v315 = vsel %vm244, %v229, 0
  %v318 = vsel %vm244, %v230, 0
  %v321 = vsel %vm244, %v231, 0
  %v324 = vsel %vm244, %v232, 0
  %v327 = vsel %vm244, %v233, 0
  %v330 = vsel %vm244, %v234, 0
  %v333 = vsel %vm244, %v235, 0
  %v336 = vsel %vm244, %v236, 0
  %v339 = vsel %vm244, %v237, 0
  %341 = vmatpush.bf16.msra.mxu0 0
  %342 = vmatpush.bf16.msra.mxu0 0
  %343 = vmatpush.bf16.msra.mxu0 0
  %344 = vmatpush.bf16.msra.mxu0 0
  %345 = vmatpush.bf16.msra.mxu0 0
  %346 = vmatpush.bf16.msra.mxu0 0
  %347 = vmatpush.bf16.msra.mxu0 0
  %348 = vmatpush.bf16.msra.mxu0 %v242
  %349 = vmatmul.bf16.gmra.mxu0 %v246
  %v350 = vpop.f32.mrf.mxu0
  %v351 = vadd.f32 0.0, %v350
  %v352 = vpop.f32.mrf.mxu0
  %v353 = vadd.f32 0.0, %v352
  %354 = vmatmul.bf16.gmra.mxu0 %v249
  %v355 = vpop.f32.mrf.mxu0
  %v356 = vadd.f32 0.0, %v355
  %v357 = vpop.f32.mrf.mxu0
  %v358 = vadd.f32 0.0, %v357
  %359 = vmatmul.bf16.gmra.mxu0 %v252
  %v360 = vpop.f32.mrf.mxu0
  %v361 = vadd.f32 0.0, %v360
  %v362 = vpop.f32.mrf.mxu0
  %v363 = vadd.f32 0.0, %v362
  %364 = vmatmul.bf16.gmra.mxu0 %v255
  %v365 = vpop.f32.mrf.mxu0
  %v366 = vadd.f32 0.0, %v365
  %v367 = vpop.f32.mrf.mxu0
  %v368 = vadd.f32 0.0, %v367
  %369 = vmatmul.bf16.gmra.mxu0 %v258
  %v370 = vpop.f32.mrf.mxu0
  %v371 = vadd.f32 0.0, %v370
  %v372 = vpop.f32.mrf.mxu0
  %v373 = vadd.f32 0.0, %v372
  %374 = vmatmul.bf16.gmra.mxu0 %v261
  %v375 = vpop.f32.mrf.mxu0
  %v376 = vadd.f32 0.0, %v375
  %v377 = vpop.f32.mrf.mxu0
  %v378 = vadd.f32 0.0, %v377
  %379 = vmatmul.bf16.gmra.mxu0 %v264
  %v380 = vpop.f32.mrf.mxu0
  %v381 = vadd.f32 0.0, %v380
  %v382 = vpop.f32.mrf.mxu0
  %v383 = vadd.f32 0.0, %v382
  %384 = vmatmul.bf16.gmra.mxu0 %v267
  %v385 = vpop.f32.mrf.mxu0
  %v386 = vadd.f32 0.0, %v385
  %v387 = vpop.f32.mrf.mxu0
  %v388 = vadd.f32 0.0, %v387
  %389 = vmatmul.bf16.gmra.mxu0 %v270
  %v390 = vpop.f32.mrf.mxu0
  %v391 = vadd.f32 0.0, %v390
  %v392 = vpop.f32.mrf.mxu0
  %v393 = vadd.f32 0.0, %v392
  %394 = vmatmul.bf16.gmra.mxu0 %v273
  %v395 = vpop.f32.mrf.mxu0
  %v396 = vadd.f32 0.0, %v395
  %v397 = vpop.f32.mrf.mxu0
  %v398 = vadd.f32 0.0, %v397
  %399 = vmatmul.bf16.gmra.mxu0 %v276
  %v400 = vpop.f32.mrf.mxu0
  %v401 = vadd.f32 0.0, %v400
  %v402 = vpop.f32.mrf.mxu0
  %v403 = vadd.f32 0.0, %v402
  %404 = vmatmul.bf16.gmra.mxu0 %v279
  %v405 = vpop.f32.mrf.mxu0
  %v406 = vadd.f32 0.0, %v405
  %v407 = vpop.f32.mrf.mxu0
  %v408 = vadd.f32 0.0, %v407
  %409 = vmatmul.bf16.gmra.mxu0 %v282
  %v410 = vpop.f32.mrf.mxu0
  %v411 = vadd.f32 0.0, %v410
  %v412 = vpop.f32.mrf.mxu0
  %v413 = vadd.f32 0.0, %v412
  %414 = vmatmul.bf16.gmra.mxu0 %v285
  %v415 = vpop.f32.mrf.mxu0
  %v416 = vadd.f32 0.0, %v415
  %v417 = vpop.f32.mrf.mxu0
  %v418 = vadd.f32 0.0, %v417
  %419 = vmatmul.bf16.gmra.mxu0 %v288
  %v420 = vpop.f32.mrf.mxu0
  %v421 = vadd.f32 0.0, %v420
  %v422 = vpop.f32.mrf.mxu0
  %v423 = vadd.f32 0.0, %v422
  %424 = vmatmul.bf16.gmra.mxu0 %v291
  %v425 = vpop.f32.mrf.mxu0
  %v426 = vadd.f32 0.0, %v425
  %v427 = vpop.f32.mrf.mxu0
  %v428 = vadd.f32 0.0, %v427
  %429 = vmatmul.bf16.gmra.mxu0 %v294
  %v430 = vpop.f32.mrf.mxu0
  %v431 = vadd.f32 0.0, %v430
  %v432 = vpop.f32.mrf.mxu0
  %v433 = vadd.f32 0.0, %v432
  %434 = vmatmul.bf16.gmra.mxu0 %v297
  %v435 = vpop.f32.mrf.mxu0
  %v436 = vadd.f32 0.0, %v435
  %v437 = vpop.f32.mrf.mxu0
  %v438 = vadd.f32 0.0, %v437
  %439 = vmatmul.bf16.gmra.mxu0 %v300
  %v440 = vpop.f32.mrf.mxu0
  %v441 = vadd.f32 0.0, %v440
  %v442 = vpop.f32.mrf.mxu0
  %v443 = vadd.f32 0.0, %v442
  %444 = vmatmul.bf16.gmra.mxu0 %v303
  %v445 = vpop.f32.mrf.mxu0
  %v446 = vadd.f32 0.0, %v445
  %v447 = vpop.f32.mrf.mxu0
  %v448 = vadd.f32 0.0, %v447
  %449 = vmatmul.bf16.gmra.mxu0 %v306
  %v450 = vpop.f32.mrf.mxu0
  %v451 = vadd.f32 0.0, %v450
  %v452 = vpop.f32.mrf.mxu0
  %v453 = vadd.f32 0.0, %v452
  %454 = vmatmul.bf16.gmra.mxu0 %v309
  %v455 = vpop.f32.mrf.mxu0
  %v456 = vadd.f32 0.0, %v455
  %v457 = vpop.f32.mrf.mxu0
  %v458 = vadd.f32 0.0, %v457
  %459 = vmatmul.bf16.gmra.mxu0 %v312
  %v460 = vpop.f32.mrf.mxu0
  %v461 = vadd.f32 0.0, %v460
  %v462 = vpop.f32.mrf.mxu0
  %v463 = vadd.f32 0.0, %v462
  %464 = vmatmul.bf16.gmra.mxu0 %v315
  %v465 = vpop.f32.mrf.mxu0
  %v466 = vadd.f32 0.0, %v465
  %v467 = vpop.f32.mrf.mxu0
  %v468 = vadd.f32 0.0, %v467
  %469 = vmatmul.bf16.gmra.mxu0 %v318
  %v470 = vpop.f32.mrf.mxu0
  %v471 = vadd.f32 0.0, %v470
  %v472 = vpop.f32.mrf.mxu0
  %v473 = vadd.f32 0.0, %v472
  %474 = vmatmul.bf16.gmra.mxu0 %v321
  %v475 = vpop.f32.mrf.mxu0
  %v476 = vadd.f32 0.0, %v475
  %v477 = vpop.f32.mrf.mxu0
  %v478 = vadd.f32 0.0, %v477
  %479 = vmatmul.bf16.gmra.mxu0 %v324
  %v480 = vpop.f32.mrf.mxu0
  %v481 = vadd.f32 0.0, %v480
  %v482 = vpop.f32.mrf.mxu0
  %v483 = vadd.f32 0.0, %v482
  %484 = vmatmul.bf16.gmra.mxu0 %v327
  %v485 = vpop.f32.mrf.mxu0
  %v486 = vadd.f32 0.0, %v485
  %v487 = vpop.f32.mrf.mxu0
  %v488 = vadd.f32 0.0, %v487
  %489 = vmatmul.bf16.gmra.mxu0 %v330
  %v490 = vpop.f32.mrf.mxu0
  %v491 = vadd.f32 0.0, %v490
  %v492 = vpop.f32.mrf.mxu0
  %v493 = vadd.f32 0.0, %v492
  %494 = vmatmul.bf16.gmra.mxu0 %v333
  %v495 = vpop.f32.mrf.mxu0
  %v496 = vadd.f32 0.0, %v495
  %v497 = vpop.f32.mrf.mxu0
  %v498 = vadd.f32 0.0, %v497
  %499 = vmatmul.bf16.gmra.mxu0 %v336
  %v500 = vpop.f32.mrf.mxu0
  %v501 = vadd.f32 0.0, %v500
  %v502 = vpop.f32.mrf.mxu0
  %v503 = vadd.f32 0.0, %v502
  %504 = vmatmul.bf16.gmra.mxu0 %v339
  %v505 = vpop.f32.mrf.mxu0
  %v506 = vadd.f32 0.0, %v505
  %v507 = vpop.f32.mrf.mxu0
  %v508 = vadd.f32 0.0, %v507
  %509 = vdwg.mxu0
  %vm510 = vcmp.gt.f32.partialorder %v351, 0.0
  %vm511 = vcmp.gt.f32.partialorder %v353, 0.0
  %vm512 = vcmp.gt.f32.partialorder %v356, 0.0
  %vm513 = vcmp.gt.f32.partialorder %v358, 0.0
  %vm514 = vcmp.gt.f32.partialorder %v361, 0.0
  %vm515 = vcmp.gt.f32.partialorder %v363, 0.0
  %vm516 = vcmp.gt.f32.partialorder %v366, 0.0
  %vm517 = vcmp.gt.f32.partialorder %v368, 0.0
  %vm518 = vcmp.gt.f32.partialorder %v371, 0.0
  %vm519 = vcmp.gt.f32.partialorder %v373, 0.0
  %vm520 = vcmp.gt.f32.partialorder %v376, 0.0
  %vm521 = vcmp.gt.f32.partialorder %v378, 0.0
  %vm522 = vcmp.gt.f32.partialorder %v381, 0.0
  %vm523 = vcmp.gt.f32.partialorder %v383, 0.0
  %vm524 = vcmp.gt.f32.partialorder %v386, 0.0
  %vm525 = vcmp.gt.f32.partialorder %v388, 0.0
  %vm526 = vcmp.gt.f32.partialorder %v391, 0.0
  %vm527 = vcmp.gt.f32.partialorder %v393, 0.0
  %vm528 = vcmp.gt.f32.partialorder %v396, 0.0
  %vm529 = vcmp.gt.f32.partialorder %v398, 0.0
  %vm530 = vcmp.gt.f32.partialorder %v401, 0.0
  %vm531 = vcmp.gt.f32.partialorder %v403, 0.0
  %vm532 = vcmp.gt.f32.partialorder %v406, 0.0
  %vm533 = vcmp.gt.f32.partialorder %v408, 0.0
  %vm534 = vcmp.gt.f32.partialorder %v411, 0.0
  %vm535 = vcmp.gt.f32.partialorder %v413, 0.0
  %vm536 = vcmp.gt.f32.partialorder %v416, 0.0
  %vm537 = vcmp.gt.f32.partialorder %v418, 0.0
  %vm538 = vcmp.gt.f32.partialorder %v421, 0.0
  %vm539 = vcmp.gt.f32.partialorder %v423, 0.0
  %vm540 = vcmp.gt.f32.partialorder %v426, 0.0
  %vm541 = vcmp.gt.f32.partialorder %v428, 0.0
  %vm542 = vcmp.gt.f32.partialorder %v431, 0.0
  %vm543 = vcmp.gt.f32.partialorder %v433, 0.0
  %vm544 = vcmp.gt.f32.partialorder %v436, 0.0
  %vm545 = vcmp.gt.f32.partialorder %v438, 0.0
  %vm546 = vcmp.gt.f32.partialorder %v441, 0.0
  %vm547 = vcmp.gt.f32.partialorder %v443, 0.0
  %vm548 = vcmp.gt.f32.partialorder %v446, 0.0
  %vm549 = vcmp.gt.f32.partialorder %v448, 0.0
  %vm550 = vcmp.gt.f32.partialorder %v451, 0.0
  %vm551 = vcmp.gt.f32.partialorder %v453, 0.0
  %vm552 = vcmp.gt.f32.partialorder %v456, 0.0
  %vm553 = vcmp.gt.f32.partialorder %v458, 0.0
  %vm554 = vcmp.gt.f32.partialorder %v461, 0.0
  %vm555 = vcmp.gt.f32.partialorder %v463, 0.0
  %vm556 = vcmp.gt.f32.partialorder %v466, 0.0
  %vm557 = vcmp.gt.f32.partialorder %v468, 0.0
  %vm558 = vcmp.gt.f32.partialorder %v471, 0.0
  %vm559 = vcmp.gt.f32.partialorder %v473, 0.0
  %vm560 = vcmp.gt.f32.partialorder %v476, 0.0
  %vm561 = vcmp.gt.f32.partialorder %v478, 0.0
  %vm562 = vcmp.gt.f32.partialorder %v481, 0.0
  %vm563 = vcmp.gt.f32.partialorder %v483, 0.0
  %vm564 = vcmp.gt.f32.partialorder %v486, 0.0
  %vm565 = vcmp.gt.f32.partialorder %v488, 0.0
  %vm566 = vcmp.gt.f32.partialorder %v491, 0.0
  %vm567 = vcmp.gt.f32.partialorder %v493, 0.0
  %vm568 = vcmp.gt.f32.partialorder %v496, 0.0
  %vm569 = vcmp.gt.f32.partialorder %v498, 0.0
  %vm570 = vcmp.gt.f32.partialorder %v501, 0.0
  %vm571 = vcmp.gt.f32.partialorder %v503, 0.0
  %vm572 = vcmp.gt.f32.partialorder %v506, 0.0
  %vm573 = vcmp.gt.f32.partialorder %v508, 0.0
  %v574 = vmul.f32 %v351, 0.2
  %v575 = vmul.f32 %v353, 0.2
  %v576 = vmul.f32 %v356, 0.2
  %v577 = vmul.f32 %v358, 0.2
  %v578 = vmul.f32 %v361, 0.2
  %v579 = vmul.f32 %v363, 0.2
  %v580 = vmul.f32 %v366, 0.2
  %v581 = vmul.f32 %v368, 0.2
  %v582 = vmul.f32 %v371, 0.2
  %v583 = vmul.f32 %v373, 0.2
  %v584 = vmul.f32 %v376, 0.2
  %v585 = vmul.f32 %v378, 0.2
  %v586 = vmul.f32 %v381, 0.2
  %v587 = vmul.f32 %v383, 0.2
  %v588 = vmul.f32 %v386, 0.2
  %v589 = vmul.f32 %v388, 0.2
  %v590 = vmul.f32 %v391, 0.2
  %v591 = vmul.f32 %v393, 0.2
  %v592 = vmul.f32 %v396, 0.2
  %v593 = vmul.f32 %v398, 0.2
  %v594 = vmul.f32 %v401, 0.2
  %v595 = vmul.f32 %v403, 0.2
  %v596 = vmul.f32 %v406, 0.2
  %v597 = vmul.f32 %v408, 0.2
  %v598 = vmul.f32 %v411, 0.2
  %v599 = vmul.f32 %v413, 0.2
  %v600 = vmul.f32 %v416, 0.2
  %v601 = vmul.f32 %v418, 0.2
  %v602 = vmul.f32 %v421, 0.2
  %v603 = vmul.f32 %v423, 0.2
  %v604 = vmul.f32 %v426, 0.2
  %v605 = vmul.f32 %v428, 0.2
  %v606 = vmul.f32 %v431, 0.2
  %v607 = vmul.f32 %v433, 0.2
  %v608 = vmul.f32 %v436, 0.2
  %v609 = vmul.f32 %v438, 0.2
  %v610 = vmul.f32 %v441, 0.2
  %v611 = vmul.f32 %v443, 0.2
  %v612 = vmul.f32 %v446, 0.2
  %v613 = vmul.f32 %v448, 0.2
  %v614 = vmul.f32 %v451, 0.2
  %v615 = vmul.f32 %v453, 0.2
  %v616 = vmul.f32 %v456, 0.2
  %v617 = vmul.f32 %v458, 0.2
  %v618 = vmul.f32 %v461, 0.2
  %v619 = vmul.f32 %v463, 0.2
  %v620 = vmul.f32 %v466, 0.2
  %v621 = vmul.f32 %v468, 0.2
  %v622 = vmul.f32 %v471, 0.2
  %v623 = vmul.f32 %v473, 0.2
  %v624 = vmul.f32 %v476, 0.2
  %v625 = vmul.f32 %v478, 0.2
  %v626 = vmul.f32 %v481, 0.2
  %v627 = vmul.f32 %v483, 0.2
  %v628 = vmul.f32 %v486, 0.2
  %v629 = vmul.f32 %v488, 0.2
  %v630 = vmul.f32 %v491, 0.2
  %v631 = vmul.f32 %v493, 0.2
  %v632 = vmul.f32 %v496, 0.2
  %v633 = vmul.f32 %v498, 0.2
  %v634 = vmul.f32 %v501, 0.2
  %v635 = vmul.f32 %v503, 0.2
  %v636 = vmul.f32 %v506, 0.2
  %v637 = vmul.f32 %v508, 0.2
  %v638 = vsel %vm510, %v351, %v574
  %v639 = vsel %vm511, %v353, %v575
  %v640 = vsel %vm512, %v356, %v576
  %v641 = vsel %vm513, %v358, %v577
  %v642 = vsel %vm514, %v361, %v578
  %v643 = vsel %vm515, %v363, %v579
  %v644 = vsel %vm516, %v366, %v580
  %v645 = vsel %vm517, %v368, %v581
  %v646 = vsel %vm518, %v371, %v582
  %v647 = vsel %vm519, %v373, %v583
  %v648 = vsel %vm520, %v376, %v584
  %v649 = vsel %vm521, %v378, %v585
  %v650 = vsel %vm522, %v381, %v586
  %v651 = vsel %vm523, %v383, %v587
  %v652 = vsel %vm524, %v386, %v588
  %v653 = vsel %vm525, %v388, %v589
  %v654 = vsel %vm526, %v391, %v590
  %v655 = vsel %vm527, %v393, %v591
  %v656 = vsel %vm528, %v396, %v592
  %v657 = vsel %vm529, %v398, %v593
  %v658 = vsel %vm530, %v401, %v594
  %v659 = vsel %vm531, %v403, %v595
  %v660 = vsel %vm532, %v406, %v596
  %v661 = vsel %vm533, %v408, %v597
  %v662 = vsel %vm534, %v411, %v598
  %v663 = vsel %vm535, %v413, %v599
  %v664 = vsel %vm536, %v416, %v600
  %v665 = vsel %vm537, %v418, %v601
  %v666 = vsel %vm538, %v421, %v602
  %v667 = vsel %vm539, %v423, %v603
  %v668 = vsel %vm540, %v426, %v604
  %v669 = vsel %vm541, %v428, %v605
  %v670 = vsel %vm542, %v431, %v606
  %v671 = vsel %vm543, %v433, %v607
  %v672 = vsel %vm544, %v436, %v608
  %v673 = vsel %vm545, %v438, %v609
  %v674 = vsel %vm546, %v441, %v610
  %v675 = vsel %vm547, %v443, %v611
  %v676 = vsel %vm548, %v446, %v612
  %v677 = vsel %vm549, %v448, %v613
  %v678 = vsel %vm550, %v451, %v614
  %v679 = vsel %vm551, %v453, %v615
  %v680 = vsel %vm552, %v456, %v616
  %v681 = vsel %vm553, %v458, %v617
  %v682 = vsel %vm554, %v461, %v618
  %v683 = vsel %vm555, %v463, %v619
  %v684 = vsel %vm556, %v466, %v620
  %v685 = vsel %vm557, %v468, %v621
  %v686 = vsel %vm558, %v471, %v622
  %v687 = vsel %vm559, %v473, %v623
  %v688 = vsel %vm560, %v476, %v624
  %v689 = vsel %vm561, %v478, %v625
  %v690 = vsel %vm562, %v481, %v626
  %v691 = vsel %vm563, %v483, %v627
  %v692 = vsel %vm564, %v486, %v628
  %v693 = vsel %vm565, %v488, %v629
  %v694 = vsel %vm566, %v491, %v630
  %v695 = vsel %vm567, %v493, %v631
  %v696 = vsel %vm568, %v496, %v632
  %v697 = vsel %vm569, %v498, %v633
  %v698 = vsel %vm570, %v501, %v634
  %v699 = vsel %vm571, %v503, %v635
  %v700 = vsel %vm572, %v506, %v636
  %v701 = vsel %vm573, %v508, %v637
  %v702 = vpack.c.bf16 %v638, %v638
  %v703 = vpack.c.bf16 %v639, %v639
  %v704 = vpack.c.bf16 %v640, %v640
  %v705 = vpack.c.bf16 %v641, %v641
  %v706 = vpack.c.bf16 %v642, %v642
  %v707 = vpack.c.bf16 %v643, %v643
  %v708 = vpack.c.bf16 %v644, %v644
  %v709 = vpack.c.bf16 %v645, %v645
  %v710 = vpack.c.bf16 %v646, %v646
  %v711 = vpack.c.bf16 %v647, %v647
  %v712 = vpack.c.bf16 %v648, %v648
  %v713 = vpack.c.bf16 %v649, %v649
  %v714 = vpack.c.bf16 %v650, %v650
  %v715 = vpack.c.bf16 %v651, %v651
  %v716 = vpack.c.bf16 %v652, %v652
  %v717 = vpack.c.bf16 %v653, %v653
  %v718 = vpack.c.bf16 %v654, %v654
  %v719 = vpack.c.bf16 %v655, %v655
  %v720 = vpack.c.bf16 %v656, %v656
  %v721 = vpack.c.bf16 %v657, %v657
  %v722 = vpack.c.bf16 %v658, %v658
  %v723 = vpack.c.bf16 %v659, %v659
  %v724 = vpack.c.bf16 %v660, %v660
  %v725 = vpack.c.bf16 %v661, %v661
  %v726 = vpack.c.bf16 %v662, %v662
  %v727 = vpack.c.bf16 %v663, %v663
  %v728 = vpack.c.bf16 %v664, %v664
  %v729 = vpack.c.bf16 %v665, %v665
  %v730 = vpack.c.bf16 %v666, %v666
  %v731 = vpack.c.bf16 %v667, %v667
  %v732 = vpack.c.bf16 %v668, %v668
  %v733 = vpack.c.bf16 %v669, %v669
  %v734 = vpack.c.bf16 %v670, %v670
  %v735 = vpack.c.bf16 %v671, %v671
  %v736 = vpack.c.bf16 %v672, %v672
  %v737 = vpack.c.bf16 %v673, %v673
  %v738 = vpack.c.bf16 %v674, %v674
  %v739 = vpack.c.bf16 %v675, %v675
  %v740 = vpack.c.bf16 %v676, %v676
  %v741 = vpack.c.bf16 %v677, %v677
  %v742 = vpack.c.bf16 %v678, %v678
  %v743 = vpack.c.bf16 %v679, %v679
  %v744 = vpack.c.bf16 %v680, %v680
  %v745 = vpack.c.bf16 %v681, %v681
  %v746 = vpack.c.bf16 %v682, %v682
  %v747 = vpack.c.bf16 %v683, %v683
  %v748 = vpack.c.bf16 %v684, %v684
  %v749 = vpack.c.bf16 %v685, %v685
  %v750 = vpack.c.bf16 %v686, %v686
  %v751 = vpack.c.bf16 %v687, %v687
  %v752 = vpack.c.bf16 %v688, %v688
  %v753 = vpack.c.bf16 %v689, %v689
  %v754 = vpack.c.bf16 %v690, %v690
  %v755 = vpack.c.bf16 %v691, %v691
  %v756 = vpack.c.bf16 %v692, %v692
  %v757 = vpack.c.bf16 %v693, %v693
  %v758 = vpack.c.bf16 %v694, %v694
  %v759 = vpack.c.bf16 %v695, %v695
  %v760 = vpack.c.bf16 %v696, %v696
  %v761 = vpack.c.bf16 %v697, %v697
  %v762 = vpack.c.bf16 %v698, %v698
  %v763 = vpack.c.bf16 %v699, %v699
  %v764 = vpack.c.bf16 %v700, %v700
  %v765 = vpack.c.bf16 %v701, %v701
  %vm766 = vcmask 519168
  %767 = vst.msk [vmem:[%s2] sm:$0xf] %vm766, %v702
  %768 = vst.msk [vmem:[%s2 + $0x4] sm:$0xf] %vm766, %v703
  %769 = vst.msk [vmem:[%s2 + $0x8] sm:$0xf] %vm766, %v704
  %770 = vst.msk [vmem:[%s2 + $0xc] sm:$0xf] %vm766, %v705
  %771 = vst.msk [vmem:[%s2 + $0x10] sm:$0xf] %vm766, %v706
  %772 = vst.msk [vmem:[%s2 + $0x14] sm:$0xf] %vm766, %v707
  %773 = vst.msk [vmem:[%s2 + $0x18] sm:$0xf] %vm766, %v708
  %774 = vst.msk [vmem:[%s2 + $0x1c] sm:$0xf] %vm766, %v709
  %775 = vst.msk [vmem:[%s2 + $0x20] sm:$0xf] %vm766, %v710
  %776 = vst.msk [vmem:[%s2 + $0x24] sm:$0xf] %vm766, %v711
  %777 = vst.msk [vmem:[%s2 + $0x28] sm:$0xf] %vm766, %v712
  %778 = vst.msk [vmem:[%s2 + $0x2c] sm:$0xf] %vm766, %v713
  %779 = vst.msk [vmem:[%s2 + $0x30] sm:$0xf] %vm766, %v714
  %780 = vst.msk [vmem:[%s2 + $0x34] sm:$0xf] %vm766, %v715
  %781 = vst.msk [vmem:[%s2 + $0x38] sm:$0xf] %vm766, %v716
  %782 = vst.msk [vmem:[%s2 + $0x3c] sm:$0xf] %vm766, %v717
  %783 = vst.msk [vmem:[%s2 + $0x40] sm:$0xf] %vm766, %v718
  %784 = vst.msk [vmem:[%s2 + $0x44] sm:$0xf] %vm766, %v719
  %785 = vst.msk [vmem:[%s2 + $0x48] sm:$0xf] %vm766, %v720
  %786 = vst.msk [vmem:[%s2 + $0x4c] sm:$0xf] %vm766, %v721
  %787 = vst.msk [vmem:[%s2 + $0x50] sm:$0xf] %vm766, %v722
  %788 = vst.msk [vmem:[%s2 + $0x54] sm:$0xf] %vm766, %v723
  %789 = vst.msk [vmem:[%s2 + $0x58] sm:$0xf] %vm766, %v724
  %790 = vst.msk [vmem:[%s2 + $0x5c] sm:$0xf] %vm766, %v725
  %791 = vst.msk [vmem:[%s2 + $0x60] sm:$0xf] %vm766, %v726
  %792 = vst.msk [vmem:[%s2 + $0x64] sm:$0xf] %vm766, %v727
  %793 = vst.msk [vmem:[%s2 + $0x68] sm:$0xf] %vm766, %v728
  %794 = vst.msk [vmem:[%s2 + $0x6c] sm:$0xf] %vm766, %v729
  %795 = vst.msk [vmem:[%s2 + $0x70] sm:$0xf] %vm766, %v730
  %796 = vst.msk [vmem:[%s2 + $0x74] sm:$0xf] %vm766, %v731
  %797 = vst.msk [vmem:[%s2 + $0x78] sm:$0xf] %vm766, %v732
  %798 = vst.msk [vmem:[%s2 + $0x7c] sm:$0xf] %vm766, %v733
  %799 = vst.msk [vmem:[%s2 + $0x80] sm:$0xf] %vm766, %v734
  %800 = vst.msk [vmem:[%s2 + $0x84] sm:$0xf] %vm766, %v735
  %801 = vst.msk [vmem:[%s2 + $0x88] sm:$0xf] %vm766, %v736
  %802 = vst.msk [vmem:[%s2 + $0x8c] sm:$0xf] %vm766, %v737
  %803 = vst.msk [vmem:[%s2 + $0x90] sm:$0xf] %vm766, %v738
  %804 = vst.msk [vmem:[%s2 + $0x94] sm:$0xf] %vm766, %v739
  %805 = vst.msk [vmem:[%s2 + $0x98] sm:$0xf] %vm766, %v740
  %806 = vst.msk [vmem:[%s2 + $0x9c] sm:$0xf] %vm766, %v741
  %807 = vst.msk [vmem:[%s2 + $0xa0] sm:$0xf] %vm766, %v742
  %808 = vst.msk [vmem:[%s2 + $0xa4] sm:$0xf] %vm766, %v743
  %809 = vst.msk [vmem:[%s2 + $0xa8] sm:$0xf] %vm766, %v744
  %810 = vst.msk [vmem:[%s2 + $0xac] sm:$0xf] %vm766, %v745
  %811 = vst.msk [vmem:[%s2 + $0xb0] sm:$0xf] %vm766, %v746
  %812 = vst.msk [vmem:[%s2 + $0xb4] sm:$0xf] %vm766, %v747
  %813 = vst.msk [vmem:[%s2 + $0xb8] sm:$0xf] %vm766, %v748
  %814 = vst.msk [vmem:[%s2 + $0xbc] sm:$0xf] %vm766, %v749
  %815 = vst.msk [vmem:[%s2 + $0xc0] sm:$0xf] %vm766, %v750
  %816 = vst.msk [vmem:[%s2 + $0xc4] sm:$0xf] %vm766, %v751
  %817 = vst.msk [vmem:[%s2 + $0xc8] sm:$0xf] %vm766, %v752
  %818 = vst.msk [vmem:[%s2 + $0xcc] sm:$0xf] %vm766, %v753
  %819 = vst.msk [vmem:[%s2 + $0xd0] sm:$0xf] %vm766, %v754
  %820 = vst.msk [vmem:[%s2 + $0xd4] sm:$0xf] %vm766, %v755
  %821 = vst.msk [vmem:[%s2 + $0xd8] sm:$0xf] %vm766, %v756
  %822 = vst.msk [vmem:[%s2 + $0xdc] sm:$0xf] %vm766, %v757
  %823 = vst.msk [vmem:[%s2 + $0xe0] sm:$0xf] %vm766, %v758
  %824 = vst.msk [vmem:[%s2 + $0xe4] sm:$0xf] %vm766, %v759
  %825 = vst.msk [vmem:[%s2 + $0xe8] sm:$0xf] %vm766, %v760
  %826 = vst.msk [vmem:[%s2 + $0xec] sm:$0xf] %vm766, %v761
  %827 = vst.msk [vmem:[%s2 + $0xf0] sm:$0xf] %vm766, %v762
  %828 = vst.msk [vmem:[%s2 + $0xf4] sm:$0xf] %vm766, %v763
  %829 = vst.msk [vmem:[%s2 + $0xf8] sm:$0xf] %vm766, %v764
  %830 = vst.msk [vmem:[%s2 + $0xfc] sm:$0xf] %vm766, %v765
  // Predicated region
  $region10: #{discriminator_forward.6} parent=0 // pred_check
    _
  $region11: #{discriminator_forward.6} parent=0 // pred_check_branch
    %832 = sbr.rel (0) target = $region13
  $region12: #{discriminator_forward.6} parent=0 // pred_region
    _
  $region13: #{discriminator_forward.6} parent=0 // pred_fallthru
    _
  // Predicated region
  $region14: #{discriminator_forward.6} parent=0 // pred_check
    _
  $region15: #{discriminator_forward.6} parent=0 // pred_check_branch
    %834 = sbr.rel (0) target = $region17
  $region16: #{discriminator_forward.6} parent=0 // pred_region
    _
  $region17: #{discriminator_forward.6} parent=0 // pred_fallthru
    _

// kernel: discriminator_forward.8
$region0: #{discriminator_forward.8}
  #allocation0 [shape = 'u32[]', space=smem, size = 0x4, offset = 0x4, fixed_abs, tag = 'smem constant byte address 0x4 - core index']
  #allocation1 [shape = 'u32[72,128]{1,0:T(1,128)}', space=vmem, size = 0x9000, scoped, tag = 'internal scratch']
  %s0 = inlined_call_operand.vmem [shape: bf16[128,128], index: 0, kind: input, shape index: {}]
  %s1 = inlined_call_operand.vmem [shape: f32[1,128], index: 1, kind: input, shape index: {}]
  %s2 = inlined_call_operand.vmem [shape: f32[1,128], index: 2, kind: input, shape index: {}]
  %s3 = inlined_call_operand.vmem [shape: bf16[128,128], index: 3, kind: output, shape index: {}]
  %s4 = sld [smem:[#allocation0]]
  $region22: #{discriminator_forward.8} parent=0
    _
  %s6 = ssub.s32 1, %s4
  %s7 = scalar_select 0, %s6, %s4
  // Predicated region
  $region2: #{discriminator_forward.8} parent=0 // pred_check
    _
  $region3: #{discriminator_forward.8} parent=0 // pred_check_branch
    %9 = sbr.rel (0) target = $region5
  $region4: #{discriminator_forward.8} parent=0 // pred_region
    _
  $region5: #{discriminator_forward.8} parent=0 // pred_fallthru
    _
  // Predicated region
  $region6: #{discriminator_forward.8} parent=0 // pred_check
    _
  $region7: #{discriminator_forward.8} parent=0 // pred_check_branch
    %11 = sbr.rel (0) target = $region9
  $region8: #{discriminator_forward.8} parent=0 // pred_region
    _
  $region9: #{discriminator_forward.8} parent=0 // pred_fallthru
    _
  // Predicated region
  $region10: #{discriminator_forward.8} parent=0 // pred_check
    _
  $region11: #{discriminator_forward.8} parent=0 // pred_check_branch
    %13 = sbr.rel (0) target = $region13
  $region12: #{discriminator_forward.8} parent=0 // pred_region
    _
  $region13: #{discriminator_forward.8} parent=0 // pred_fallthru
    _
  %v14 = vld [vmem:[%s0] sm:$0xf]
  %v15 = vld [vmem:[%s0 + $0x4] sm:$0xf]
  %v16 = vld [vmem:[%s0 + $0x8] sm:$0xf]
  %v17 = vld [vmem:[%s0 + $0xc] sm:$0xf]
  %v18 = vld [vmem:[%s0 + $0x10] sm:$0xf]
  %v19 = vld [vmem:[%s0 + $0x14] sm:$0xf]
  %v20 = vld [vmem:[%s0 + $0x18] sm:$0xf]
  %v21 = vld [vmem:[%s0 + $0x1c] sm:$0xf]
  %v22 = vld [vmem:[%s0 + $0x20] sm:$0xf]
  %v23 = vld [vmem:[%s0 + $0x24] sm:$0xf]
  %v24 = vld [vmem:[%s0 + $0x28] sm:$0xf]
  %v25 = vld [vmem:[%s0 + $0x2c] sm:$0xf]
  %v26 = vld [vmem:[%s0 + $0x30] sm:$0xf]
  %v27 = vld [vmem:[%s0 + $0x34] sm:$0xf]
  %v28 = vld [vmem:[%s0 + $0x38] sm:$0xf]
  %v29 = vld [vmem:[%s0 + $0x3c] sm:$0xf]
  %v30 = vunpack.c.l.bf16 %v14
  %v31 = vunpack.c.l.bf16 %v15
  %v32 = vunpack.c.l.bf16 %v16
  %v33 = vunpack.c.l.bf16 %v17
  %v34 = vunpack.c.l.bf16 %v18
  %v35 = vunpack.c.l.bf16 %v19
  %v36 = vunpack.c.l.bf16 %v20
  %v37 = vunpack.c.l.bf16 %v21
  %v38 = vunpack.c.l.bf16 %v22
  %v39 = vunpack.c.l.bf16 %v23
  %v40 = vunpack.c.l.bf16 %v24
  %v41 = vunpack.c.l.bf16 %v25
  %v42 = vunpack.c.l.bf16 %v26
  %v43 = vunpack.c.l.bf16 %v27
  %v44 = vunpack.c.l.bf16 %v28
  %v45 = vunpack.c.l.bf16 %v29
  %v46 = vld [vmem:[%s1] sm:$0x1]
  %v48 = vperm.slane %v46, 0
  %v50 = vmul.f32 %v30, %v48
  %v51 = vmul.f32 %v31, %v48
  %v52 = vmul.f32 %v32, %v48
  %v53 = vmul.f32 %v33, %v48
  %v54 = vmul.f32 %v34, %v48
  %v55 = vmul.f32 %v35, %v48
  %v56 = vmul.f32 %v36, %v48
  %v57 = vmul.f32 %v37, %v48
  %v58 = vmul.f32 %v38, %v48
  %v59 = vmul.f32 %v39, %v48
  %v60 = vmul.f32 %v40, %v48
  %v61 = vmul.f32 %v41, %v48
  %v62 = vmul.f32 %v42, %v48
  %v63 = vmul.f32 %v43, %v48
  %v64 = vmul.f32 %v44, %v48
  %v65 = vmul.f32 %v45, %v48
  %v66 = vld [vmem:[%s2] sm:$0x1]
  %v68 = vperm.slane %v66, 0
  %v70 = vadd.f32 %v50, %v68
  %v71 = vadd.f32 %v51, %v68
  %v72 = vadd.f32 %v52, %v68
  %v73 = vadd.f32 %v53, %v68
  %v74 = vadd.f32 %v54, %v68
  %v75 = vadd.f32 %v55, %v68
  %v76 = vadd.f32 %v56, %v68
  %v77 = vadd.f32 %v57, %v68
  %v78 = vadd.f32 %v58, %v68
  %v79 = vadd.f32 %v59, %v68
  %v80 = vadd.f32 %v60, %v68
  %v81 = vadd.f32 %v61, %v68
  %v82 = vadd.f32 %v62, %v68
  %v83 = vadd.f32 %v63, %v68
  %v84 = vadd.f32 %v64, %v68
  %v85 = vadd.f32 %v65, %v68
  %vm86 = vcmp.gt.f32.partialorder %v70, 0.0
  %vm87 = vcmp.gt.f32.partialorder %v71, 0.0
  %vm88 = vcmp.gt.f32.partialorder %v72, 0.0
  %vm89 = vcmp.gt.f32.partialorder %v73, 0.0
  %vm90 = vcmp.gt.f32.partialorder %v74, 0.0
  %vm91 = vcmp.gt.f32.partialorder %v75, 0.0
  %vm92 = vcmp.gt.f32.partialorder %v76, 0.0
  %vm93 = vcmp.gt.f32.partialorder %v77, 0.0
  %vm94 = vcmp.gt.f32.partialorder %v78, 0.0
  %vm95 = vcmp.gt.f32.partialorder %v79, 0.0
  %vm96 = vcmp.gt.f32.partialorder %v80, 0.0
  %vm97 = vcmp.gt.f32.partialorder %v81, 0.0
  %vm98 = vcmp.gt.f32.partialorder %v82, 0.0
  %vm99 = vcmp.gt.f32.partialorder %v83, 0.0
  %vm100 = vcmp.gt.f32.partialorder %v84, 0.0
  %vm101 = vcmp.gt.f32.partialorder %v85, 0.0
  %v102 = vmul.f32 %v70, 0.2
  %v103 = vmul.f32 %v71, 0.2
  %v104 = vmul.f32 %v72, 0.2
  %v105 = vmul.f32 %v73, 0.2
  %v106 = vmul.f32 %v74, 0.2
  %v107 = vmul.f32 %v75, 0.2
  %v108 = vmul.f32 %v76, 0.2
  %v109 = vmul.f32 %v77, 0.2
  %v110 = vmul.f32 %v78, 0.2
  %v111 = vmul.f32 %v79, 0.2
  %v112 = vmul.f32 %v80, 0.2
  %v113 = vmul.f32 %v81, 0.2
  %v114 = vmul.f32 %v82, 0.2
  %v115 = vmul.f32 %v83, 0.2
  %v116 = vmul.f32 %v84, 0.2
  %v117 = vmul.f32 %v85, 0.2
  %v118 = vsel %vm86, %v70, %v102
  %v119 = vsel %vm87, %v71, %v103
  %v120 = vsel %vm88, %v72, %v104
  %v121 = vsel %vm89, %v73, %v105
  %v122 = vsel %vm90, %v74, %v106
  %v123 = vsel %vm91, %v75, %v107
  %v124 = vsel %vm92, %v76, %v108
  %v125 = vsel %vm93, %v77, %v109
  %v126 = vsel %vm94, %v78, %v110
  %v127 = vsel %vm95, %v79, %v111
  %v128 = vsel %vm96, %v80, %v112
  %v129 = vsel %vm97, %v81, %v113
  %v130 = vsel %vm98, %v82, %v114
  %v131 = vsel %vm99, %v83, %v115
  %v132 = vsel %vm100, %v84, %v116
  %v133 = vsel %vm101, %v85, %v117
  %v134 = vpack.c.bf16 %v118, %v118
  %v135 = vpack.c.bf16 %v119, %v119
  %v136 = vpack.c.bf16 %v120, %v120
  %v137 = vpack.c.bf16 %v121, %v121
  %v138 = vpack.c.bf16 %v122, %v122
  %v139 = vpack.c.bf16 %v123, %v123
  %v140 = vpack.c.bf16 %v124, %v124
  %v141 = vpack.c.bf16 %v125, %v125
  %v142 = vpack.c.bf16 %v126, %v126
  %v143 = vpack.c.bf16 %v127, %v127
  %v144 = vpack.c.bf16 %v128, %v128
  %v145 = vpack.c.bf16 %v129, %v129
  %v146 = vpack.c.bf16 %v130, %v130
  %v147 = vpack.c.bf16 %v131, %v131
  %v148 = vpack.c.bf16 %v132, %v132
  %v149 = vpack.c.bf16 %v133, %v133
  %150 = vst [vmem:[%s3] sm:$0xf] %v134
  %151 = vst [vmem:[%s3 + $0x4] sm:$0xf] %v135
  %152 = vst [vmem:[%s3 + $0x8] sm:$0xf] %v136
  %153 = vst [vmem:[%s3 + $0xc] sm:$0xf] %v137
  %154 = vst [vmem:[%s3 + $0x10] sm:$0xf] %v138
  %155 = vst [vmem:[%s3 + $0x14] sm:$0xf] %v139
  %156 = vst [vmem:[%s3 + $0x18] sm:$0xf] %v140
  %157 = vst [vmem:[%s3 + $0x1c] sm:$0xf] %v141
  %158 = vst [vmem:[%s3 + $0x20] sm:$0xf] %v142
  %159 = vst [vmem:[%s3 + $0x24] sm:$0xf] %v143
  %160 = vst [vmem:[%s3 + $0x28] sm:$0xf] %v144
  %161 = vst [vmem:[%s3 + $0x2c] sm:$0xf] %v145
  %162 = vst [vmem:[%s3 + $0x30] sm:$0xf] %v146
  %163 = vst [vmem:[%s3 + $0x34] sm:$0xf] %v147
  %164 = vst [vmem:[%s3 + $0x38] sm:$0xf] %v148
  %165 = vst [vmem:[%s3 + $0x3c] sm:$0xf] %v149
  // Predicated region
  $region14: #{discriminator_forward.8} parent=0 // pred_check
    _
  $region15: #{discriminator_forward.8} parent=0 // pred_check_branch
    %167 = sbr.rel (0) target = $region17
  $region16: #{discriminator_forward.8} parent=0 // pred_region
    _
  $region17: #{discriminator_forward.8} parent=0 // pred_fallthru
    _
  // Predicated region
  $region18: #{discriminator_forward.8} parent=0 // pred_check
    _
  $region19: #{discriminator_forward.8} parent=0 // pred_check_branch
    %169 = sbr.rel (0) target = $region21
  $region20: #{discriminator_forward.8} parent=0 // pred_region
    _
  $region21: #{discriminator_forward.8} parent=0 // pred_fallthru
    _

// kernel: discriminator_forward.7
$region0: #{discriminator_forward.7}
  #allocation0 [shape = 'u32[]', space=smem, size = 0x4, offset = 0x4, fixed_abs, tag = 'smem constant byte address 0x4 - core index']
  #allocation1 [shape = 'u32[72,128]{1,0:T(1,128)}', space=vmem, size = 0x9000, scoped, tag = 'internal scratch']
  %s0 = inlined_call_operand.vmem [shape: bf16[128,1024], index: 0, kind: input, shape index: {}]
  %s1 = inlined_call_operand.vmem [shape: bf16[1024,128], index: 1, kind: input, shape index: {}]
  %s2 = inlined_call_operand.vmem [shape: bf16[128,128], index: 2, kind: output, shape index: {0}]
  %s3 = inlined_call_operand.vmem [shape: f32[8,128], index: 3, kind: output, shape index: {1}]
  %s4 = inlined_call_operand.vmem [shape: f32[8,128], index: 4, kind: output, shape index: {2}]
  %5 = xla_tuple %s2, %s3, %s4
  %s6 = sld [smem:[#allocation0]]
  $region34: #{discriminator_forward.7} parent=0
    _
  %s8 = ssub.s32 1, %s6
  %s9 = scalar_select 0, %s8, %s6
  // Predicated region
  $region2: #{discriminator_forward.7} parent=0 // pred_check
    _
  $region3: #{discriminator_forward.7} parent=0 // pred_check_branch
    %11 = sbr.rel (0) target = $region5
  $region4: #{discriminator_forward.7} parent=0 // pred_region
    _
  $region5: #{discriminator_forward.7} parent=0 // pred_fallthru
    _
  // Predicated region
  $region6: #{discriminator_forward.7} parent=0 // pred_check
    _
  $region7: #{discriminator_forward.7} parent=0 // pred_check_branch
    %13 = sbr.rel (0) target = $region9
  $region8: #{discriminator_forward.7} parent=0 // pred_region
    _
  $region9: #{discriminator_forward.7} parent=0 // pred_fallthru
    _
  %v14 = vld [vmem:[%s0] sm:$0xff]
  %v15 = vld [vmem:[%s0 + $0x8] sm:$0xff]
  %v16 = vld [vmem:[%s0 + $0x10] sm:$0xff]
  %v17 = vld [vmem:[%s0 + $0x18] sm:$0xff]
  %v18 = vld [vmem:[%s0 + $0x20] sm:$0xff]
  %v19 = vld [vmem:[%s0 + $0x28] sm:$0xff]
  %v20 = vld [vmem:[%s0 + $0x30] sm:$0xff]
  %v21 = vld [vmem:[%s0 + $0x38] sm:$0xff]
  %v22 = vld [vmem:[%s0 + $0x40] sm:$0xff]
  %v23 = vld [vmem:[%s0 + $0x48] sm:$0xff]
  %v24 = vld [vmem:[%s0 + $0x50] sm:$0xff]
  %v25 = vld [vmem:[%s0 + $0x58] sm:$0xff]
  %v26 = vld [vmem:[%s0 + $0x60] sm:$0xff]
  %v27 = vld [vmem:[%s0 + $0x68] sm:$0xff]
  %v28 = vld [vmem:[%s0 + $0x70] sm:$0xff]
  %v29 = vld [vmem:[%s0 + $0x78] sm:$0xff]
  %v30 = vld [vmem:[%s0 + $0x80] sm:$0xff]
  %v31 = vld [vmem:[%s0 + $0x88] sm:$0xff]
  %v32 = vld [vmem:[%s0 + $0x90] sm:$0xff]
  %v33 = vld [vmem:[%s0 + $0x98] sm:$0xff]
  %v34 = vld [vmem:[%s0 + $0xa0] sm:$0xff]
  %v35 = vld [vmem:[%s0 + $0xa8] sm:$0xff]
  %v36 = vld [vmem:[%s0 + $0xb0] sm:$0xff]
  %v37 = vld [vmem:[%s0 + $0xb8] sm:$0xff]
  %v38 = vld [vmem:[%s0 + $0xc0] sm:$0xff]
  %v39 = vld [vmem:[%s0 + $0xc8] sm:$0xff]
  %v40 = vld [vmem:[%s0 + $0xd0] sm:$0xff]
  %v41 = vld [vmem:[%s0 + $0xd8] sm:$0xff]
  %v42 = vld [vmem:[%s0 + $0xe0] sm:$0xff]
  %v43 = vld [vmem:[%s0 + $0xe8] sm:$0xff]
  %v44 = vld [vmem:[%s0 + $0xf0] sm:$0xff]
  %v45 = vld [vmem:[%s0 + $0xf8] sm:$0xff]
  %v46 = vld [vmem:[%s0 + $0x100] sm:$0xff]
  %v47 = vld [vmem:[%s0 + $0x108] sm:$0xff]
  %v48 = vld [vmem:[%s0 + $0x110] sm:$0xff]
  %v49 = vld [vmem:[%s0 + $0x118] sm:$0xff]
  %v50 = vld [vmem:[%s0 + $0x120] sm:$0xff]
  %v51 = vld [vmem:[%s0 + $0x128] sm:$0xff]
  %v52 = vld [vmem:[%s0 + $0x130] sm:$0xff]
  %v53 = vld [vmem:[%s0 + $0x138] sm:$0xff]
  %v54 = vld [vmem:[%s0 + $0x140] sm:$0xff]
  %v55 = vld [vmem:[%s0 + $0x148] sm:$0xff]
  %v56 = vld [vmem:[%s0 + $0x150] sm:$0xff]
  %v57 = vld [vmem:[%s0 + $0x158] sm:$0xff]
  %v58 = vld [vmem:[%s0 + $0x160] sm:$0xff]
  %v59 = vld [vmem:[%s0 + $0x168] sm:$0xff]
  %v60 = vld [vmem:[%s0 + $0x170] sm:$0xff]
  %v61 = vld [vmem:[%s0 + $0x178] sm:$0xff]
  %v62 = vld [vmem:[%s0 + $0x180] sm:$0xff]
  %v63 = vld [vmem:[%s0 + $0x188] sm:$0xff]
  %v64 = vld [vmem:[%s0 + $0x190] sm:$0xff]
  %v65 = vld [vmem:[%s0 + $0x198] sm:$0xff]
  %v66 = vld [vmem:[%s0 + $0x1a0] sm:$0xff]
  %v67 = vld [vmem:[%s0 + $0x1a8] sm:$0xff]
  %v68 = vld [vmem:[%s0 + $0x1b0] sm:$0xff]
  %v69 = vld [vmem:[%s0 + $0x1b8] sm:$0xff]
  %v70 = vld [vmem:[%s0 + $0x1c0] sm:$0xff]
  %v71 = vld [vmem:[%s0 + $0x1c8] sm:$0xff]
  %v72 = vld [vmem:[%s0 + $0x1d0] sm:$0xff]
  %v73 = vld [vmem:[%s0 + $0x1d8] sm:$0xff]
  %v74 = vld [vmem:[%s0 + $0x1e0] sm:$0xff]
  %v75 = vld [vmem:[%s0 + $0x1e8] sm:$0xff]
  %v76 = vld [vmem:[%s0 + $0x1f0] sm:$0xff]
  %v77 = vld [vmem:[%s0 + $0x1f8] sm:$0xff]
  %v78 = vld [vmem:[%s1] sm:$0xf]
  %v79 = vld [vmem:[%s1 + $0x4] sm:$0xf]
  %v80 = vld [vmem:[%s1 + $0x8] sm:$0xf]
  %v81 = vld [vmem:[%s1 + $0xc] sm:$0xf]
  %v82 = vld [vmem:[%s1 + $0x10] sm:$0xf]
  %v83 = vld [vmem:[%s1 + $0x14] sm:$0xf]
  %v84 = vld [vmem:[%s1 + $0x18] sm:$0xf]
  %v85 = vld [vmem:[%s1 + $0x1c] sm:$0xf]
  %v86 = vld [vmem:[%s1 + $0x20] sm:$0xf]
  %v87 = vld [vmem:[%s1 + $0x24] sm:$0xf]
  %v88 = vld [vmem:[%s1 + $0x28] sm:$0xf]
  %v89 = vld [vmem:[%s1 + $0x2c] sm:$0xf]
  %v90 = vld [vmem:[%s1 + $0x30] sm:$0xf]
  %v91 = vld [vmem:[%s1 + $0x34] sm:$0xf]
  %v92 = vld [vmem:[%s1 + $0x38] sm:$0xf]
  %v93 = vld [vmem:[%s1 + $0x3c] sm:$0xf]
  %v94 = vld [vmem:[%s1 + $0x40] sm:$0xf]
  %v95 = vld [vmem:[%s1 + $0x44] sm:$0xf]
  %v96 = vld [vmem:[%s1 + $0x48] sm:$0xf]
  %v97 = vld [vmem:[%s1 + $0x4c] sm:$0xf]
  %v98 = vld [vmem:[%s1 + $0x50] sm:$0xf]
  %v99 = vld [vmem:[%s1 + $0x54] sm:$0xf]
  %v100 = vld [vmem:[%s1 + $0x58] sm:$0xf]
  %v101 = vld [vmem:[%s1 + $0x5c] sm:$0xf]
  %v102 = vld [vmem:[%s1 + $0x60] sm:$0xf]
  %v103 = vld [vmem:[%s1 + $0x64] sm:$0xf]
  %v104 = vld [vmem:[%s1 + $0x68] sm:$0xf]
  %v105 = vld [vmem:[%s1 + $0x6c] sm:$0xf]
  %v106 = vld [vmem:[%s1 + $0x70] sm:$0xf]
  %v107 = vld [vmem:[%s1 + $0x74] sm:$0xf]
  %v108 = vld [vmem:[%s1 + $0x78] sm:$0xf]
  %v109 = vld [vmem:[%s1 + $0x7c] sm:$0xf]
  %v110 = vld [vmem:[%s1 + $0x80] sm:$0xf]
  %v111 = vld [vmem:[%s1 + $0x84] sm:$0xf]
  %v112 = vld [vmem:[%s1 + $0x88] sm:$0xf]
  %v113 = vld [vmem:[%s1 + $0x8c] sm:$0xf]
  %v114 = vld [vmem:[%s1 + $0x90] sm:$0xf]
  %v115 = vld [vmem:[%s1 + $0x94] sm:$0xf]
  %v116 = vld [vmem:[%s1 + $0x98] sm:$0xf]
  %v117 = vld [vmem:[%s1 + $0x9c] sm:$0xf]
  %v118 = vld [vmem:[%s1 + $0xa0] sm:$0xf]
  %v119 = vld [vmem:[%s1 + $0xa4] sm:$0xf]
  %v120 = vld [vmem:[%s1 + $0xa8] sm:$0xf]
  %v121 = vld [vmem:[%s1 + $0xac] sm:$0xf]
  %v122 = vld [vmem:[%s1 + $0xb0] sm:$0xf]
  %v123 = vld [vmem:[%s1 + $0xb4] sm:$0xf]
  %v124 = vld [vmem:[%s1 + $0xb8] sm:$0xf]
  %v125 = vld [vmem:[%s1 + $0xbc] sm:$0xf]
  %v126 = vld [vmem:[%s1 + $0xc0] sm:$0xf]
  %v127 = vld [vmem:[%s1 + $0xc4] sm:$0xf]
  %v128 = vld [vmem:[%s1 + $0xc8] sm:$0xf]
  %v129 = vld [vmem:[%s1 + $0xcc] sm:$0xf]
  %v130 = vld [vmem:[%s1 + $0xd0] sm:$0xf]
  %v131 = vld [vmem:[%s1 + $0xd4] sm:$0xf]
  %v132 = vld [vmem:[%s1 + $0xd8] sm:$0xf]
  %v133 = vld [vmem:[%s1 + $0xdc] sm:$0xf]
  %v134 = vld [vmem:[%s1 + $0xe0] sm:$0xf]
  %v135 = vld [vmem:[%s1 + $0xe4] sm:$0xf]
  %v136 = vld [vmem:[%s1 + $0xe8] sm:$0xf]
  %v137 = vld [vmem:[%s1 + $0xec] sm:$0xf]
  %v138 = vld [vmem:[%s1 + $0xf0] sm:$0xf]
  %v139 = vld [vmem:[%s1 + $0xf4] sm:$0xf]
  %v140 = vld [vmem:[%s1 + $0xf8] sm:$0xf]
  %v141 = vld [vmem:[%s1 + $0xfc] sm:$0xf]
  %v142 = vld [vmem:[%s1 + $0x100] sm:$0xf]
  %v143 = vld [vmem:[%s1 + $0x104] sm:$0xf]
  %v144 = vld [vmem:[%s1 + $0x108] sm:$0xf]
  %v145 = vld [vmem:[%s1 + $0x10c] sm:$0xf]
  %v146 = vld [vmem:[%s1 + $0x110] sm:$0xf]
  %v147 = vld [vmem:[%s1 + $0x114] sm:$0xf]
  %v148 = vld [vmem:[%s1 + $0x118] sm:$0xf]
  %v149 = vld [vmem:[%s1 + $0x11c] sm:$0xf]
  %v150 = vld [vmem:[%s1 + $0x120] sm:$0xf]
  %v151 = vld [vmem:[%s1 + $0x124] sm:$0xf]
  %v152 = vld [vmem:[%s1 + $0x128] sm:$0xf]
  %v153 = vld [vmem:[%s1 + $0x12c] sm:$0xf]
  %v154 = vld [vmem:[%s1 + $0x130] sm:$0xf]
  %v155 = vld [vmem:[%s1 + $0x134] sm:$0xf]
  %v156 = vld [vmem:[%s1 + $0x138] sm:$0xf]
  %v157 = vld [vmem:[%s1 + $0x13c] sm:$0xf]
  %v158 = vld [vmem:[%s1 + $0x140] sm:$0xf]
  %v159 = vld [vmem:[%s1 + $0x144] sm:$0xf]
  %v160 = vld [vmem:[%s1 + $0x148] sm:$0xf]
  %v161 = vld [vmem:[%s1 + $0x14c] sm:$0xf]
  %v162 = vld [vmem:[%s1 + $0x150] sm:$0xf]
  %v163 = vld [vmem:[%s1 + $0x154] sm:$0xf]
  %v164 = vld [vmem:[%s1 + $0x158] sm:$0xf]
  %v165 = vld [vmem:[%s1 + $0x15c] sm:$0xf]
  %v166 = vld [vmem:[%s1 + $0x160] sm:$0xf]
  %v167 = vld [vmem:[%s1 + $0x164] sm:$0xf]
  %v168 = vld [vmem:[%s1 + $0x168] sm:$0xf]
  %v169 = vld [vmem:[%s1 + $0x16c] sm:$0xf]
  %v170 = vld [vmem:[%s1 + $0x170] sm:$0xf]
  %v171 = vld [vmem:[%s1 + $0x174] sm:$0xf]
  %v172 = vld [vmem:[%s1 + $0x178] sm:$0xf]
  %v173 = vld [vmem:[%s1 + $0x17c] sm:$0xf]
  %v174 = vld [vmem:[%s1 + $0x180] sm:$0xf]
  %v175 = vld [vmem:[%s1 + $0x184] sm:$0xf]
  %v176 = vld [vmem:[%s1 + $0x188] sm:$0xf]
  %v177 = vld [vmem:[%s1 + $0x18c] sm:$0xf]
  %v178 = vld [vmem:[%s1 + $0x190] sm:$0xf]
  %v179 = vld [vmem:[%s1 + $0x194] sm:$0xf]
  %v180 = vld [vmem:[%s1 + $0x198] sm:$0xf]
  %v181 = vld [vmem:[%s1 + $0x19c] sm:$0xf]
  %v182 = vld [vmem:[%s1 + $0x1a0] sm:$0xf]
  %v183 = vld [vmem:[%s1 + $0x1a4] sm:$0xf]
  %v184 = vld [vmem:[%s1 + $0x1a8] sm:$0xf]
  %v185 = vld [vmem:[%s1 + $0x1ac] sm:$0xf]
  %v186 = vld [vmem:[%s1 + $0x1b0] sm:$0xf]
  %v187 = vld [vmem:[%s1 + $0x1b4] sm:$0xf]
  %v188 = vld [vmem:[%s1 + $0x1b8] sm:$0xf]
  %v189 = vld [vmem:[%s1 + $0x1bc] sm:$0xf]
  %v190 = vld [vmem:[%s1 + $0x1c0] sm:$0xf]
  %v191 = vld [vmem:[%s1 + $0x1c4] sm:$0xf]
  %v192 = vld [vmem:[%s1 + $0x1c8] sm:$0xf]
  %v193 = vld [vmem:[%s1 + $0x1cc] sm:$0xf]
  %v194 = vld [vmem:[%s1 + $0x1d0] sm:$0xf]
  %v195 = vld [vmem:[%s1 + $0x1d4] sm:$0xf]
  %v196 = vld [vmem:[%s1 + $0x1d8] sm:$0xf]
  %v197 = vld [vmem:[%s1 + $0x1dc] sm:$0xf]
  %v198 = vld [vmem:[%s1 + $0x1e0] sm:$0xf]
  %v199 = vld [vmem:[%s1 + $0x1e4] sm:$0xf]
  %v200 = vld [vmem:[%s1 + $0x1e8] sm:$0xf]
  %v201 = vld [vmem:[%s1 + $0x1ec] sm:$0xf]
  %v202 = vld [vmem:[%s1 + $0x1f0] sm:$0xf]
  %v203 = vld [vmem:[%s1 + $0x1f4] sm:$0xf]
  %v204 = vld [vmem:[%s1 + $0x1f8] sm:$0xf]
  %v205 = vld [vmem:[%s1 + $0x1fc] sm:$0xf]
  %v270 = vunpack.c.l.b16 %v14
  %v271 = vunpack.c.h.b16 %v14
  %v272 = vunpack.c.l.b16 %v15
  %v273 = vunpack.c.h.b16 %v15
  %v274 = vunpack.c.l.b16 %v16
  %v275 = vunpack.c.h.b16 %v16
  %v276 = vunpack.c.l.b16 %v17
  %v277 = vunpack.c.h.b16 %v17
  %v278 = vunpack.c.l.b16 %v18
  %v279 = vunpack.c.h.b16 %v18
  %v280 = vunpack.c.l.b16 %v19
  %v281 = vunpack.c.h.b16 %v19
  %v282 = vunpack.c.l.b16 %v20
  %v283 = vunpack.c.h.b16 %v20
  %v284 = vunpack.c.l.b16 %v21
  %v285 = vunpack.c.h.b16 %v21
  %v286 = vunpack.c.l.b16 %v22
  %v287 = vunpack.c.h.b16 %v22
  %v288 = vunpack.c.l.b16 %v23
  %v289 = vunpack.c.h.b16 %v23
  %v290 = vunpack.c.l.b16 %v24
  %v291 = vunpack.c.h.b16 %v24
  %v292 = vunpack.c.l.b16 %v25
  %v293 = vunpack.c.h.b16 %v25
  %v294 = vunpack.c.l.b16 %v26
  %v295 = vunpack.c.h.b16 %v26
  %v296 = vunpack.c.l.b16 %v27
  %v297 = vunpack.c.h.b16 %v27
  %v298 = vunpack.c.l.b16 %v28
  %v299 = vunpack.c.h.b16 %v28
  %v300 = vunpack.c.l.b16 %v29
  %v301 = vunpack.c.h.b16 %v29
  %v302 = vunpack.c.l.b16 %v30
  %v303 = vunpack.c.h.b16 %v30
  %v304 = vunpack.c.l.b16 %v31
  %v305 = vunpack.c.h.b16 %v31
  %v306 = vunpack.c.l.b16 %v32
  %v307 = vunpack.c.h.b16 %v32
  %v308 = vunpack.c.l.b16 %v33
  %v309 = vunpack.c.h.b16 %v33
  %v310 = vunpack.c.l.b16 %v34
  %v311 = vunpack.c.h.b16 %v34
  %v312 = vunpack.c.l.b16 %v35
  %v313 = vunpack.c.h.b16 %v35
  %v314 = vunpack.c.l.b16 %v36
  %v315 = vunpack.c.h.b16 %v36
  %v316 = vunpack.c.l.b16 %v37
  %v317 = vunpack.c.h.b16 %v37
  %v318 = vunpack.c.l.b16 %v38
  %v319 = vunpack.c.h.b16 %v38
  %v320 = vunpack.c.l.b16 %v39
  %v321 = vunpack.c.h.b16 %v39
  %v322 = vunpack.c.l.b16 %v40
  %v323 = vunpack.c.h.b16 %v40
  %v324 = vunpack.c.l.b16 %v41
  %v325 = vunpack.c.h.b16 %v41
  %v326 = vunpack.c.l.b16 %v42
  %v327 = vunpack.c.h.b16 %v42
  %v328 = vunpack.c.l.b16 %v43
  %v329 = vunpack.c.h.b16 %v43
  %v330 = vunpack.c.l.b16 %v44
  %v331 = vunpack.c.h.b16 %v44
  %v332 = vunpack.c.l.b16 %v45
  %v333 = vunpack.c.h.b16 %v45
  %v334 = vunpack.c.l.b16 %v46
  %v335 = vunpack.c.h.b16 %v46
  %v336 = vunpack.c.l.b16 %v47
  %v337 = vunpack.c.h.b16 %v47
  %v338 = vunpack.c.l.b16 %v48
  %v339 = vunpack.c.h.b16 %v48
  %v340 = vunpack.c.l.b16 %v49
  %v341 = vunpack.c.h.b16 %v49
  %v342 = vunpack.c.l.b16 %v50
  %v343 = vunpack.c.h.b16 %v50
  %v344 = vunpack.c.l.b16 %v51
  %v345 = vunpack.c.h.b16 %v51
  %v346 = vunpack.c.l.b16 %v52
  %v347 = vunpack.c.h.b16 %v52
  %v348 = vunpack.c.l.b16 %v53
  %v349 = vunpack.c.h.b16 %v53
  %v350 = vunpack.c.l.b16 %v54
  %v351 = vunpack.c.h.b16 %v54
  %v352 = vunpack.c.l.b16 %v55
  %v353 = vunpack.c.h.b16 %v55
  %v354 = vunpack.c.l.b16 %v56
  %v355 = vunpack.c.h.b16 %v56
  %v356 = vunpack.c.l.b16 %v57
  %v357 = vunpack.c.h.b16 %v57
  %v358 = vunpack.c.l.b16 %v58
  %v359 = vunpack.c.h.b16 %v58
  %v360 = vunpack.c.l.b16 %v59
  %v361 = vunpack.c.h.b16 %v59
  %v362 = vunpack.c.l.b16 %v60
  %v363 = vunpack.c.h.b16 %v60
  %v364 = vunpack.c.l.b16 %v61
  %v365 = vunpack.c.h.b16 %v61
  %v366 = vunpack.c.l.b16 %v62
  %v367 = vunpack.c.h.b16 %v62
  %v368 = vunpack.c.l.b16 %v63
  %v369 = vunpack.c.h.b16 %v63
  %v370 = vunpack.c.l.b16 %v64
  %v371 = vunpack.c.h.b16 %v64
  %v372 = vunpack.c.l.b16 %v65
  %v373 = vunpack.c.h.b16 %v65
  %v374 = vunpack.c.l.b16 %v66
  %v375 = vunpack.c.h.b16 %v66
  %v376 = vunpack.c.l.b16 %v67
  %v377 = vunpack.c.h.b16 %v67
  %v378 = vunpack.c.l.b16 %v68
  %v379 = vunpack.c.h.b16 %v68
  %v380 = vunpack.c.l.b16 %v69
  %v381 = vunpack.c.h.b16 %v69
  %v382 = vunpack.c.l.b16 %v70
  %v383 = vunpack.c.h.b16 %v70
  %v384 = vunpack.c.l.b16 %v71
  %v385 = vunpack.c.h.b16 %v71
  %v386 = vunpack.c.l.b16 %v72
  %v387 = vunpack.c.h.b16 %v72
  %v388 = vunpack.c.l.b16 %v73
  %v389 = vunpack.c.h.b16 %v73
  %v390 = vunpack.c.l.b16 %v74
  %v391 = vunpack.c.h.b16 %v74
  %v392 = vunpack.c.l.b16 %v75
  %v393 = vunpack.c.h.b16 %v75
  %v394 = vunpack.c.l.b16 %v76
  %v395 = vunpack.c.h.b16 %v76
  %v396 = vunpack.c.l.b16 %v77
  %v397 = vunpack.c.h.b16 %v77
  %v398 = vpack.c.b16 %v278, %v270
  %v399 = vpack.c.b16 %v279, %v271
  %v400 = vpack.c.b16 %v280, %v272
  %v401 = vpack.c.b16 %v281, %v273
  %v402 = vpack.c.b16 %v282, %v274
  %v403 = vpack.c.b16 %v283, %v275
  %v404 = vpack.c.b16 %v284, %v276
  %v405 = vpack.c.b16 %v285, %v277
  %v406 = vpack.c.b16 %v294, %v286
  %v407 = vpack.c.b16 %v295, %v287
  %v408 = vpack.c.b16 %v296, %v288
  %v409 = vpack.c.b16 %v297, %v289
  %v410 = vpack.c.b16 %v298, %v290
  %v411 = vpack.c.b16 %v299, %v291
  %v412 = vpack.c.b16 %v300, %v292
  %v413 = vpack.c.b16 %v301, %v293
  %v414 = vpack.c.b16 %v310, %v302
  %v415 = vpack.c.b16 %v311, %v303
  %v416 = vpack.c.b16 %v312, %v304
  %v417 = vpack.c.b16 %v313, %v305
  %v418 = vpack.c.b16 %v314, %v306
  %v419 = vpack.c.b16 %v315, %v307
  %v420 = vpack.c.b16 %v316, %v308
  %v421 = vpack.c.b16 %v317, %v309
  %v422 = vpack.c.b16 %v326, %v318
  %v423 = vpack.c.b16 %v327, %v319
  %v424 = vpack.c.b16 %v328, %v320
  %v425 = vpack.c.b16 %v329, %v321
  %v426 = vpack.c.b16 %v330, %v322
  %v427 = vpack.c.b16 %v331, %v323
  %v428 = vpack.c.b16 %v332, %v324
  %v429 = vpack.c.b16 %v333, %v325
  %v430 = vpack.c.b16 %v342, %v334
  %v431 = vpack.c.b16 %v343, %v335
  %v432 = vpack.c.b16 %v344, %v336
  %v433 = vpack.c.b16 %v345, %v337
  %v434 = vpack.c.b16 %v346, %v338
  %v435 = vpack.c.b16 %v347, %v339
  %v436 = vpack.c.b16 %v348, %v340
  %v437 = vpack.c.b16 %v349, %v341
  %v438 = vpack.c.b16 %v358, %v350
  %v439 = vpack.c.b16 %v359, %v351
  %v440 = vpack.c.b16 %v360, %v352
  %v441 = vpack.c.b16 %v361, %v353
  %v442 = vpack.c.b16 %v362, %v354
  %v443 = vpack.c.b16 %v363, %v355
  %v444 = vpack.c.b16 %v364, %v356
  %v445 = vpack.c.b16 %v365, %v357
  %v446 = vpack.c.b16 %v374, %v366
  %v447 = vpack.c.b16 %v375, %v367
  %v448 = vpack.c.b16 %v376, %v368
  %v449 = vpack.c.b16 %v377, %v369
  %v450 = vpack.c.b16 %v378, %v370
  %v451 = vpack.c.b16 %v379, %v371
  %v452 = vpack.c.b16 %v380, %v372
  %v453 = vpack.c.b16 %v381, %v373
  %v454 = vpack.c.b16 %v390, %v382
  %v455 = vpack.c.b16 %v391, %v383
  %v456 = vpack.c.b16 %v392, %v384
  %v457 = vpack.c.b16 %v393, %v385
  %v458 = vpack.c.b16 %v394, %v386
  %v459 = vpack.c.b16 %v395, %v387
  %v460 = vpack.c.b16 %v396, %v388
  %v461 = vpack.c.b16 %v397, %v389
  %v654 = vunpack.c.l.b16 %v78
  %v655 = vunpack.c.l.b16 %v79
  %v656 = vunpack.c.l.b16 %v80
  %v657 = vunpack.c.l.b16 %v81
  %v658 = vunpack.c.l.b16 %v82
  %v659 = vunpack.c.l.b16 %v83
  %v660 = vunpack.c.l.b16 %v84
  %v661 = vunpack.c.l.b16 %v85
  %v662 = vunpack.c.l.b16 %v86
  %v663 = vunpack.c.l.b16 %v87
  %v664 = vunpack.c.l.b16 %v88
  %v665 = vunpack.c.l.b16 %v89
  %v666 = vunpack.c.l.b16 %v90
  %v667 = vunpack.c.l.b16 %v91
  %v668 = vunpack.c.l.b16 %v92
  %v669 = vunpack.c.l.b16 %v93
  %v670 = vunpack.c.l.b16 %v94
  %v671 = vunpack.c.l.b16 %v95
  %v672 = vunpack.c.l.b16 %v96
  %v673 = vunpack.c.l.b16 %v97
  %v674 = vunpack.c.l.b16 %v98
  %v675 = vunpack.c.l.b16 %v99
  %v676 = vunpack.c.l.b16 %v100
  %v677 = vunpack.c.l.b16 %v101
  %v678 = vunpack.c.l.b16 %v102
  %v679 = vunpack.c.l.b16 %v103
  %v680 = vunpack.c.l.b16 %v104
  %v681 = vunpack.c.l.b16 %v105
  %v682 = vunpack.c.l.b16 %v106
  %v683 = vunpack.c.l.b16 %v107
  %v684 = vunpack.c.l.b16 %v108
  %v685 = vunpack.c.l.b16 %v109
  %v686 = vunpack.c.l.b16 %v110
  %v687 = vunpack.c.l.b16 %v111
  %v688 = vunpack.c.l.b16 %v112
  %v689 = vunpack.c.l.b16 %v113
  %v690 = vunpack.c.l.b16 %v114
  %v691 = vunpack.c.l.b16 %v115
  %v692 = vunpack.c.l.b16 %v116
  %v693 = vunpack.c.l.b16 %v117
  %v694 = vunpack.c.l.b16 %v118
  %v695 = vunpack.c.l.b16 %v119
  %v696 = vunpack.c.l.b16 %v120
  %v697 = vunpack.c.l.b16 %v121
  %v698 = vunpack.c.l.b16 %v122
  %v699 = vunpack.c.l.b16 %v123
  %v700 = vunpack.c.l.b16 %v124
  %v701 = vunpack.c.l.b16 %v125
  %v702 = vunpack.c.l.b16 %v126
  %v703 = vunpack.c.l.b16 %v127
  %v704 = vunpack.c.l.b16 %v128
  %v705 = vunpack.c.l.b16 %v129
  %v706 = vunpack.c.l.b16 %v130
  %v707 = vunpack.c.l.b16 %v131
  %v708 = vunpack.c.l.b16 %v132
  %v709 = vunpack.c.l.b16 %v133
  %v710 = vunpack.c.l.b16 %v134
  %v711 = vunpack.c.l.b16 %v135
  %v712 = vunpack.c.l.b16 %v136
  %v713 = vunpack.c.l.b16 %v137
  %v714 = vunpack.c.l.b16 %v138
  %v715 = vunpack.c.l.b16 %v139
  %v716 = vunpack.c.l.b16 %v140
  %v717 = vunpack.c.l.b16 %v141
  %v718 = vunpack.c.l.b16 %v142
  %v719 = vunpack.c.l.b16 %v143
  %v720 = vunpack.c.l.b16 %v144
  %v721 = vunpack.c.l.b16 %v145
  %v722 = vunpack.c.l.b16 %v146
  %v723 = vunpack.c.l.b16 %v147
  %v724 = vunpack.c.l.b16 %v148
  %v725 = vunpack.c.l.b16 %v149
  %v726 = vunpack.c.l.b16 %v150
  %v727 = vunpack.c.l.b16 %v151
  %v728 = vunpack.c.l.b16 %v152
  %v729 = vunpack.c.l.b16 %v153
  %v730 = vunpack.c.l.b16 %v154
  %v731 = vunpack.c.l.b16 %v155
  %v732 = vunpack.c.l.b16 %v156
  %v733 = vunpack.c.l.b16 %v157
  %v734 = vunpack.c.l.b16 %v158
  %v735 = vunpack.c.l.b16 %v159
  %v736 = vunpack.c.l.b16 %v160
  %v737 = vunpack.c.l.b16 %v161
  %v738 = vunpack.c.l.b16 %v162
  %v739 = vunpack.c.l.b16 %v163
  %v740 = vunpack.c.l.b16 %v164
  %v741 = vunpack.c.l.b16 %v165
  %v742 = vunpack.c.l.b16 %v166
  %v743 = vunpack.c.l.b16 %v167
  %v744 = vunpack.c.l.b16 %v168
  %v745 = vunpack.c.l.b16 %v169
  %v746 = vunpack.c.l.b16 %v170
  %v747 = vunpack.c.l.b16 %v171
  %v748 = vunpack.c.l.b16 %v172
  %v749 = vunpack.c.l.b16 %v173
  %v750 = vunpack.c.l.b16 %v174
  %v751 = vunpack.c.l.b16 %v175
  %v752 = vunpack.c.l.b16 %v176
  %v753 = vunpack.c.l.b16 %v177
  %v754 = vunpack.c.l.b16 %v178
  %v755 = vunpack.c.l.b16 %v179
  %v756 = vunpack.c.l.b16 %v180
  %v757 = vunpack.c.l.b16 %v181
  %v758 = vunpack.c.l.b16 %v182
  %v759 = vunpack.c.l.b16 %v183
  %v760 = vunpack.c.l.b16 %v184
  %v761 = vunpack.c.l.b16 %v185
  %v762 = vunpack.c.l.b16 %v186
  %v763 = vunpack.c.l.b16 %v187
  %v764 = vunpack.c.l.b16 %v188
  %v765 = vunpack.c.l.b16 %v189
  %v766 = vunpack.c.l.b16 %v190
  %v767 = vunpack.c.l.b16 %v191
  %v768 = vunpack.c.l.b16 %v192
  %v769 = vunpack.c.l.b16 %v193
  %v770 = vunpack.c.l.b16 %v194
  %v771 = vunpack.c.l.b16 %v195
  %v772 = vunpack.c.l.b16 %v196
  %v773 = vunpack.c.l.b16 %v197
  %v774 = vunpack.c.l.b16 %v198
  %v775 = vunpack.c.l.b16 %v199
  %v776 = vunpack.c.l.b16 %v200
  %v777 = vunpack.c.l.b16 %v201
  %v778 = vunpack.c.l.b16 %v202
  %v779 = vunpack.c.l.b16 %v203
  %v780 = vunpack.c.l.b16 %v204
  %v781 = vunpack.c.l.b16 %v205
  %v782 = vpack.c.b16 %v655, %v654
  %v783 = vpack.c.b16 %v657, %v656
  %v784 = vpack.c.b16 %v659, %v658
  %v785 = vpack.c.b16 %v661, %v660
  %v786 = vpack.c.b16 %v663, %v662
  %v787 = vpack.c.b16 %v665, %v664
  %v788 = vpack.c.b16 %v667, %v666
  %v789 = vpack.c.b16 %v669, %v668
  %v790 = vpack.c.b16 %v671, %v670
  %v791 = vpack.c.b16 %v673, %v672
  %v792 = vpack.c.b16 %v675, %v674
  %v793 = vpack.c.b16 %v677, %v676
  %v794 = vpack.c.b16 %v679, %v678
  %v795 = vpack.c.b16 %v681, %v680
  %v796 = vpack.c.b16 %v683, %v682
  %v797 = vpack.c.b16 %v685, %v684
  %v798 = vpack.c.b16 %v687, %v686
  %v799 = vpack.c.b16 %v689, %v688
  %v800 = vpack.c.b16 %v691, %v690
  %v801 = vpack.c.b16 %v693, %v692
  %v802 = vpack.c.b16 %v695, %v694
  %v803 = vpack.c.b16 %v697, %v696
  %v804 = vpack.c.b16 %v699, %v698
  %v805 = vpack.c.b16 %v701, %v700
  %v806 = vpack.c.b16 %v703, %v702
  %v807 = vpack.c.b16 %v705, %v704
  %v808 = vpack.c.b16 %v707, %v706
  %v809 = vpack.c.b16 %v709, %v708
  %v810 = vpack.c.b16 %v711, %v710
  %v811 = vpack.c.b16 %v713, %v712
  %v812 = vpack.c.b16 %v715, %v714
  %v813 = vpack.c.b16 %v717, %v716
  %v814 = vpack.c.b16 %v719, %v718
  %v815 = vpack.c.b16 %v721, %v720
  %v816 = vpack.c.b16 %v723, %v722
  %v817 = vpack.c.b16 %v725, %v724
  %v818 = vpack.c.b16 %v727, %v726
  %v819 = vpack.c.b16 %v729, %v728
  %v820 = vpack.c.b16 %v731, %v730
  %v821 = vpack.c.b16 %v733, %v732
  %v822 = vpack.c.b16 %v735, %v734
  %v823 = vpack.c.b16 %v737, %v736
  %v824 = vpack.c.b16 %v739, %v738
  %v825 = vpack.c.b16 %v741, %v740
  %v826 = vpack.c.b16 %v743, %v742
  %v827 = vpack.c.b16 %v745, %v744
  %v828 = vpack.c.b16 %v747, %v746
  %v829 = vpack.c.b16 %v749, %v748
  %v830 = vpack.c.b16 %v751, %v750
  %v831 = vpack.c.b16 %v753, %v752
  %v832 = vpack.c.b16 %v755, %v754
  %v833 = vpack.c.b16 %v757, %v756
  %v834 = vpack.c.b16 %v759, %v758
  %v835 = vpack.c.b16 %v761, %v760
  %v836 = vpack.c.b16 %v763, %v762
  %v837 = vpack.c.b16 %v765, %v764
  %v838 = vpack.c.b16 %v767, %v766
  %v839 = vpack.c.b16 %v769, %v768
  %v840 = vpack.c.b16 %v771, %v770
  %v841 = vpack.c.b16 %v773, %v772
  %v842 = vpack.c.b16 %v775, %v774
  %v843 = vpack.c.b16 %v777, %v776
  %v844 = vpack.c.b16 %v779, %v778
  %v845 = vpack.c.b16 %v781, %v780
  %910 = vmatpush.bf16.msra.mxu0 %v789
  %911 = vmatpush.bf16.msra.mxu0 %v788
  %912 = vmatpush.bf16.msra.mxu0 %v787
  %913 = vmatpush.bf16.msra.mxu0 %v786
  %914 = vmatpush.bf16.msra.mxu0 %v785
  %915 = vmatpush.bf16.msra.mxu0 %v784
  %916 = vmatpush.bf16.msra.mxu0 %v783
  %917 = vmatpush.bf16.msra.mxu0 %v782
  %918 = vmatmul.bf16.gmra.mxu0 %v398
  %v919 = vpop.f32.mrf.mxu0
  %v920 = vadd.f32 0.0, %v919
  %v921 = vpop.f32.mrf.mxu0
  %v922 = vadd.f32 0.0, %v921
  %923 = vmatmul.bf16.gmra.mxu0 %v406
  %v924 = vpop.f32.mrf.mxu0
  %v925 = vadd.f32 0.0, %v924
  %v926 = vpop.f32.mrf.mxu0
  %v927 = vadd.f32 0.0, %v926
  %928 = vmatmul.bf16.gmra.mxu0 %v414
  %v929 = vpop.f32.mrf.mxu0
  %v930 = vadd.f32 0.0, %v929
  %v931 = vpop.f32.mrf.mxu0
  %v932 = vadd.f32 0.0, %v931
  %933 = vmatmul.bf16.gmra.mxu0 %v422
  %v934 = vpop.f32.mrf.mxu0
  %v935 = vadd.f32 0.0, %v934
  %v936 = vpop.f32.mrf.mxu0
  %v937 = vadd.f32 0.0, %v936
  %938 = vmatmul.bf16.gmra.mxu0 %v430
  %v939 = vpop.f32.mrf.mxu0
  %v940 = vadd.f32 0.0, %v939
  %v941 = vpop.f32.mrf.mxu0
  %v942 = vadd.f32 0.0, %v941
  %943 = vmatmul.bf16.gmra.mxu0 %v438
  %v944 = vpop.f32.mrf.mxu0
  %v945 = vadd.f32 0.0, %v944
  %v946 = vpop.f32.mrf.mxu0
  %v947 = vadd.f32 0.0, %v946
  %948 = vmatmul.bf16.gmra.mxu0 %v446
  %v949 = vpop.f32.mrf.mxu0
  %v950 = vadd.f32 0.0, %v949
  %v951 = vpop.f32.mrf.mxu0
  %v952 = vadd.f32 0.0, %v951
  %953 = vmatmul.bf16.gmra.mxu0 %v454
  %v954 = vpop.f32.mrf.mxu0
  %v955 = vadd.f32 0.0, %v954
  %v956 = vpop.f32.mrf.mxu0
  %v957 = vadd.f32 0.0, %v956
  %958 = vdwg.mxu0
  %959 = vmatpush.bf16.msra.mxu0 %v797
  %960 = vmatpush.bf16.msra.mxu0 %v796
  %961 = vmatpush.bf16.msra.mxu0 %v795
  %962 = vmatpush.bf16.msra.mxu0 %v794
  %963 = vmatpush.bf16.msra.mxu0 %v793
  %964 = vmatpush.bf16.msra.mxu0 %v792
  %965 = vmatpush.bf16.msra.mxu0 %v791
  %966 = vmatpush.bf16.msra.mxu0 %v790
  %967 = vmatmul.bf16.gmra.mxu0 %v399
  %v968 = vpop.f32.mrf.mxu0
  %v969 = vadd.f32 %v920, %v968
  %v970 = vpop.f32.mrf.mxu0
  %v971 = vadd.f32 %v922, %v970
  %972 = vmatmul.bf16.gmra.mxu0 %v407
  %v973 = vpop.f32.mrf.mxu0
  %v974 = vadd.f32 %v925, %v973
  %v975 = vpop.f32.mrf.mxu0
  %v976 = vadd.f32 %v927, %v975
  %977 = vmatmul.bf16.gmra.mxu0 %v415
  %v978 = vpop.f32.mrf.mxu0
  %v979 = vadd.f32 %v930, %v978
  %v980 = vpop.f32.mrf.mxu0
  %v981 = vadd.f32 %v932, %v980
  %982 = vmatmul.bf16.gmra.mxu0 %v423
  %v983 = vpop.f32.mrf.mxu0
  %v984 = vadd.f32 %v935, %v983
  %v985 = vpop.f32.mrf.mxu0
  %v986 = vadd.f32 %v937, %v985
  %987 = vmatmul.bf16.gmra.mxu0 %v431
  %v988 = vpop.f32.mrf.mxu0
  %v989 = vadd.f32 %v940, %v988
  %v990 = vpop.f32.mrf.mxu0
  %v991 = vadd.f32 %v942, %v990
  %992 = vmatmul.bf16.gmra.mxu0 %v439
  %v993 = vpop.f32.mrf.mxu0
  %v994 = vadd.f32 %v945, %v993
  %v995 = vpop.f32.mrf.mxu0
  %v996 = vadd.f32 %v947, %v995
  %997 = vmatmul.bf16.gmra.mxu0 %v447
  %v998 = vpop.f32.mrf.mxu0
  %v999 = vadd.f32 %v950, %v998
  %v1000 = vpop.f32.mrf.mxu0
  %v1001 = vadd.f32 %v952, %v1000
  %1002 = vmatmul.bf16.gmra.mxu0 %v455
  %v1003 = vpop.f32.mrf.mxu0
  %v1004 = vadd.f32 %v955, %v1003
  %v1005 = vpop.f32.mrf.mxu0
  %v1006 = vadd.f32 %v957, %v1005
  %1007 = vdwg.mxu0
  %1008 = vmatpush.bf16.msra.mxu0 %v805
  %1009 = vmatpush.bf16.msra.mxu0 %v804
  %1010 = vmatpush.bf16.msra.mxu0 %v803
  %1011 = vmatpush.bf16.msra.mxu0 %v802
  %1012 = vmatpush.bf16.msra.mxu0 %v801
  %1013 = vmatpush.bf16.msra.mxu0 %v800
  %1014 = vmatpush.bf16.msra.mxu0 %v799
  %1015 = vmatpush.bf16.msra.mxu0 %v798
  %1016 = vmatmul.bf16.gmra.mxu0 %v400
  %v1017 = vpop.f32.mrf.mxu0
  %v1018 = vadd.f32 %v969, %v1017
  %v1019 = vpop.f32.mrf.mxu0
  %v1020 = vadd.f32 %v971, %v1019
  %1021 = vmatmul.bf16.gmra.mxu0 %v408
  %v1022 = vpop.f32.mrf.mxu0
  %v1023 = vadd.f32 %v974, %v1022
  %v1024 = vpop.f32.mrf.mxu0
  %v1025 = vadd.f32 %v976, %v1024
  %1026 = vmatmul.bf16.gmra.mxu0 %v416
  %v1027 = vpop.f32.mrf.mxu0
  %v1028 = vadd.f32 %v979, %v1027
  %v1029 = vpop.f32.mrf.mxu0
  %v1030 = vadd.f32 %v981, %v1029
  %1031 = vmatmul.bf16.gmra.mxu0 %v424
  %v1032 = vpop.f32.mrf.mxu0
  %v1033 = vadd.f32 %v984, %v1032
  %v1034 = vpop.f32.mrf.mxu0
  %v1035 = vadd.f32 %v986, %v1034
  %1036 = vmatmul.bf16.gmra.mxu0 %v432
  %v1037 = vpop.f32.mrf.mxu0
  %v1038 = vadd.f32 %v989, %v1037
  %v1039 = vpop.f32.mrf.mxu0
  %v1040 = vadd.f32 %v991, %v1039
  %1041 = vmatmul.bf16.gmra.mxu0 %v440
  %v1042 = vpop.f32.mrf.mxu0
  %v1043 = vadd.f32 %v994, %v1042
  %v1044 = vpop.f32.mrf.mxu0
  %v1045 = vadd.f32 %v996, %v1044
  %1046 = vmatmul.bf16.gmra.mxu0 %v448
  %v1047 = vpop.f32.mrf.mxu0
  %v1048 = vadd.f32 %v999, %v1047
  %v1049 = vpop.f32.mrf.mxu0
  %v1050 = vadd.f32 %v1001, %v1049
  %1051 = vmatmul.bf16.gmra.mxu0 %v456
  %v1052 = vpop.f32.mrf.mxu0
  %v1053 = vadd.f32 %v1004, %v1052
  %v1054 = vpop.f32.mrf.mxu0
  %v1055 = vadd.f32 %v1006, %v1054
  %1056 = vdwg.mxu0
  %1057 = vmatpush.bf16.msra.mxu0 %v813
  %1058 = vmatpush.bf16.msra.mxu0 %v812
  %1059 = vmatpush.bf16.msra.mxu0 %v811
  %1060 = vmatpush.bf16.msra.mxu0 %v810
  %1061 = vmatpush.bf16.msra.mxu0 %v809
  %1062 = vmatpush.bf16.msra.mxu0 %v808
  %1063 = vmatpush.bf16.msra.mxu0 %v807
  %1064 = vmatpush.bf16.msra.mxu0 %v806
  %1065 = vmatmul.bf16.gmra.mxu0 %v401
  %v1066 = vpop.f32.mrf.mxu0
  %v1067 = vadd.f32 %v1018, %v1066
  %v1068 = vpop.f32.mrf.mxu0
  %v1069 = vadd.f32 %v1020, %v1068
  %1070 = vmatmul.bf16.gmra.mxu0 %v409
  %v1071 = vpop.f32.mrf.mxu0
  %v1072 = vadd.f32 %v1023, %v1071
  %v1073 = vpop.f32.mrf.mxu0
  %v1074 = vadd.f32 %v1025, %v1073
  %1075 = vmatmul.bf16.gmra.mxu0 %v417
  %v1076 = vpop.f32.mrf.mxu0
  %v1077 = vadd.f32 %v1028, %v1076
  %v1078 = vpop.f32.mrf.mxu0
  %v1079 = vadd.f32 %v1030, %v1078
  %1080 = vmatmul.bf16.gmra.mxu0 %v425
  %v1081 = vpop.f32.mrf.mxu0
  %v1082 = vadd.f32 %v1033, %v1081
  %v1083 = vpop.f32.mrf.mxu0
  %v1084 = vadd.f32 %v1035, %v1083
  %1085 = vmatmul.bf16.gmra.mxu0 %v433
  %v1086 = vpop.f32.mrf.mxu0
  %v1087 = vadd.f32 %v1038, %v1086
  %v1088 = vpop.f32.mrf.mxu0
  %v1089 = vadd.f32 %v1040, %v1088
  %1090 = vmatmul.bf16.gmra.mxu0 %v441
  %v1091 = vpop.f32.mrf.mxu0
  %v1092 = vadd.f32 %v1043, %v1091
  %v1093 = vpop.f32.mrf.mxu0
  %v1094 = vadd.f32 %v1045, %v1093
  %1095 = vmatmul.bf16.gmra.mxu0 %v449
  %v1096 = vpop.f32.mrf.mxu0
  %v1097 = vadd.f32 %v1048, %v1096
  %v1098 = vpop.f32.mrf.mxu0
  %v1099 = vadd.f32 %v1050, %v1098
  %1100 = vmatmul.bf16.gmra.mxu0 %v457
  %v1101 = vpop.f32.mrf.mxu0
  %v1102 = vadd.f32 %v1053, %v1101
  %v1103 = vpop.f32.mrf.mxu0
  %v1104 = vadd.f32 %v1055, %v1103
  %1105 = vdwg.mxu0
  %1106 = vmatpush.bf16.msra.mxu0 %v821
  %1107 = vmatpush.bf16.msra.mxu0 %v820
  %1108 = vmatpush.bf16.msra.mxu0 %v819
  %1109 = vmatpush.bf16.msra.mxu0 %v818
  %1110 = vmatpush.bf16.msra.mxu0 %v817
  %1111 = vmatpush.bf16.msra.mxu0 %v816
  %1112 = vmatpush.bf16.msra.mxu0 %v815
  %1113 = vmatpush.bf16.msra.mxu0 %v814
  %1114 = vmatmul.bf16.gmra.mxu0 %v402
  %v1115 = vpop.f32.mrf.mxu0
  %v1116 = vadd.f32 %v1067, %v1115
  %v1117 = vpop.f32.mrf.mxu0
  %v1118 = vadd.f32 %v1069, %v1117
  %1119 = vmatmul.bf16.gmra.mxu0 %v410
  %v1120 = vpop.f32.mrf.mxu0
  %v1121 = vadd.f32 %v1072, %v1120
  %v1122 = vpop.f32.mrf.mxu0
  %v1123 = vadd.f32 %v1074, %v1122
  %1124 = vmatmul.bf16.gmra.mxu0 %v418
  %v1125 = vpop.f32.mrf.mxu0
  %v1126 = vadd.f32 %v1077, %v1125
  %v1127 = vpop.f32.mrf.mxu0
  %v1128 = vadd.f32 %v1079, %v1127
  %1129 = vmatmul.bf16.gmra.mxu0 %v426
  %v1130 = vpop.f32.mrf.mxu0
  %v1131 = vadd.f32 %v1082, %v1130
  %v1132 = vpop.f32.mrf.mxu0
  %v1133 = vadd.f32 %v1084, %v1132
  %1134 = vmatmul.bf16.gmra.mxu0 %v434
  %v1135 = vpop.f32.mrf.mxu0
  %v1136 = vadd.f32 %v1087, %v1135
  %v1137 = vpop.f32.mrf.mxu0
  %v1138 = vadd.f32 %v1089, %v1137
  %1139 = vmatmul.bf16.gmra.mxu0 %v442
  %v1140 = vpop.f32.mrf.mxu0
  %v1141 = vadd.f32 %v1092, %v1140
  %v1142 = vpop.f32.mrf.mxu0
  %v1143 = vadd.f32 %v1094, %v1142
  %1144 = vmatmul.bf16.gmra.mxu0 %v450
  %v1145 = vpop.f32.mrf.mxu0
  %v1146 = vadd.f32 %v1097, %v1145
  %v1147 = vpop.f32.mrf.mxu0
  %v1148 = vadd.f32 %v1099, %v1147
  %1149 = vmatmul.bf16.gmra.mxu0 %v458
  %v1150 = vpop.f32.mrf.mxu0
  %v1151 = vadd.f32 %v1102, %v1150
  %v1152 = vpop.f32.mrf.mxu0
  %v1153 = vadd.f32 %v1104, %v1152
  %1154 = vdwg.mxu0
  %1155 = vmatpush.bf16.msra.mxu0 %v829
  %1156 = vmatpush.bf16.msra.mxu0 %v828
  %1157 = vmatpush.bf16.msra.mxu0 %v827
  %1158 = vmatpush.bf16.msra.mxu0 %v826
  %1159 = vmatpush.bf16.msra.mxu0 %v825
  %1160 = vmatpush.bf16.msra.mxu0 %v824
  %1161 = vmatpush.bf16.msra.mxu0 %v823
  %1162 = vmatpush.bf16.msra.mxu0 %v822
  %1163 = vmatmul.bf16.gmra.mxu0 %v403
  %v1164 = vpop.f32.mrf.mxu0
  %v1165 = vadd.f32 %v1116, %v1164
  %v1166 = vpop.f32.mrf.mxu0
  %v1167 = vadd.f32 %v1118, %v1166
  %1168 = vmatmul.bf16.gmra.mxu0 %v411
  %v1169 = vpop.f32.mrf.mxu0
  %v1170 = vadd.f32 %v1121, %v1169
  %v1171 = vpop.f32.mrf.mxu0
  %v1172 = vadd.f32 %v1123, %v1171
  %1173 = vmatmul.bf16.gmra.mxu0 %v419
  %v1174 = vpop.f32.mrf.mxu0
  %v1175 = vadd.f32 %v1126, %v1174
  %v1176 = vpop.f32.mrf.mxu0
  %v1177 = vadd.f32 %v1128, %v1176
  %1178 = vmatmul.bf16.gmra.mxu0 %v427
  %v1179 = vpop.f32.mrf.mxu0
  %v1180 = vadd.f32 %v1131, %v1179
  %v1181 = vpop.f32.mrf.mxu0
  %v1182 = vadd.f32 %v1133, %v1181
  %1183 = vmatmul.bf16.gmra.mxu0 %v435
  %v1184 = vpop.f32.mrf.mxu0
  %v1185 = vadd.f32 %v1136, %v1184
  %v1186 = vpop.f32.mrf.mxu0
  %v1187 = vadd.f32 %v1138, %v1186
  %1188 = vmatmul.bf16.gmra.mxu0 %v443
  %v1189 = vpop.f32.mrf.mxu0
  %v1190 = vadd.f32 %v1141, %v1189
  %v1191 = vpop.f32.mrf.mxu0
  %v1192 = vadd.f32 %v1143, %v1191
  %1193 = vmatmul.bf16.gmra.mxu0 %v451
  %v1194 = vpop.f32.mrf.mxu0
  %v1195 = vadd.f32 %v1146, %v1194
  %v1196 = vpop.f32.mrf.mxu0
  %v1197 = vadd.f32 %v1148, %v1196
  %1198 = vmatmul.bf16.gmra.mxu0 %v459
  %v1199 = vpop.f32.mrf.mxu0
  %v1200 = vadd.f32 %v1151, %v1199
  %v1201 = vpop.f32.mrf.mxu0
  %v1202 = vadd.f32 %v1153, %v1201
  %1203 = vdwg.mxu0
  %1204 = vmatpush.bf16.msra.mxu0 %v837
  %1205 = vmatpush.bf16.msra.mxu0 %v836
  %1206 = vmatpush.bf16.msra.mxu0 %v835
  %1207 = vmatpush.bf16.msra.mxu0 %v834
  %1208 = vmatpush.bf16.msra.mxu0 %v833
  %1209 = vmatpush.bf16.msra.mxu0 %v832
  %1210 = vmatpush.bf16.msra.mxu0 %v831
  %1211 = vmatpush.bf16.msra.mxu0 %v830
  %1212 = vmatmul.bf16.gmra.mxu0 %v404
  %v1213 = vpop.f32.mrf.mxu0
  %v1214 = vadd.f32 %v1165, %v1213
  %v1215 = vpop.f32.mrf.mxu0
  %v1216 = vadd.f32 %v1167, %v1215
  %1217 = vmatmul.bf16.gmra.mxu0 %v412
  %v1218 = vpop.f32.mrf.mxu0
  %v1219 = vadd.f32 %v1170, %v1218
  %v1220 = vpop.f32.mrf.mxu0
  %v1221 = vadd.f32 %v1172, %v1220
  %1222 = vmatmul.bf16.gmra.mxu0 %v420
  %v1223 = vpop.f32.mrf.mxu0
  %v1224 = vadd.f32 %v1175, %v1223
  %v1225 = vpop.f32.mrf.mxu0
  %v1226 = vadd.f32 %v1177, %v1225
  %1227 = vmatmul.bf16.gmra.mxu0 %v428
  %v1228 = vpop.f32.mrf.mxu0
  %v1229 = vadd.f32 %v1180, %v1228
  %v1230 = vpop.f32.mrf.mxu0
  %v1231 = vadd.f32 %v1182, %v1230
  %1232 = vmatmul.bf16.gmra.mxu0 %v436
  %v1233 = vpop.f32.mrf.mxu0
  %v1234 = vadd.f32 %v1185, %v1233
  %v1235 = vpop.f32.mrf.mxu0
  %v1236 = vadd.f32 %v1187, %v1235
  %1237 = vmatmul.bf16.gmra.mxu0 %v444
  %v1238 = vpop.f32.mrf.mxu0
  %v1239 = vadd.f32 %v1190, %v1238
  %v1240 = vpop.f32.mrf.mxu0
  %v1241 = vadd.f32 %v1192, %v1240
  %1242 = vmatmul.bf16.gmra.mxu0 %v452
  %v1243 = vpop.f32.mrf.mxu0
  %v1244 = vadd.f32 %v1195, %v1243
  %v1245 = vpop.f32.mrf.mxu0
  %v1246 = vadd.f32 %v1197, %v1245
  %1247 = vmatmul.bf16.gmra.mxu0 %v460
  %v1248 = vpop.f32.mrf.mxu0
  %v1249 = vadd.f32 %v1200, %v1248
  %v1250 = vpop.f32.mrf.mxu0
  %v1251 = vadd.f32 %v1202, %v1250
  %1252 = vdwg.mxu0
  %1253 = vmatpush.bf16.msra.mxu0 %v845
  %1254 = vmatpush.bf16.msra.mxu0 %v844
  %1255 = vmatpush.bf16.msra.mxu0 %v843
  %1256 = vmatpush.bf16.msra.mxu0 %v842
  %1257 = vmatpush.bf16.msra.mxu0 %v841
  %1258 = vmatpush.bf16.msra.mxu0 %v840
  %1259 = vmatpush.bf16.msra.mxu0 %v839
  %1260 = vmatpush.bf16.msra.mxu0 %v838
  %1261 = vmatmul.bf16.gmra.mxu0 %v405
  %v1262 = vpop.f32.mrf.mxu0
  %v1263 = vadd.f32 %v1214, %v1262
  %v1264 = vpop.f32.mrf.mxu0
  %v1265 = vadd.f32 %v1216, %v1264
  %1266 = vmatmul.bf16.gmra.mxu0 %v413
  %v1267 = vpop.f32.mrf.mxu0
  %v1268 = vadd.f32 %v1219, %v1267
  %v1269 = vpop.f32.mrf.mxu0
  %v1270 = vadd.f32 %v1221, %v1269
  %1271 = vmatmul.bf16.gmra.mxu0 %v421
  %v1272 = vpop.f32.mrf.mxu0
  %v1273 = vadd.f32 %v1224, %v1272
  %v1274 = vpop.f32.mrf.mxu0
  %v1275 = vadd.f32 %v1226, %v1274
  %1276 = vmatmul.bf16.gmra.mxu0 %v429
  %v1277 = vpop.f32.mrf.mxu0
  %v1278 = vadd.f32 %v1229, %v1277
  %v1279 = vpop.f32.mrf.mxu0
  %v1280 = vadd.f32 %v1231, %v1279
  %1281 = vmatmul.bf16.gmra.mxu0 %v437
  %v1282 = vpop.f32.mrf.mxu0
  %v1283 = vadd.f32 %v1234, %v1282
  %v1284 = vpop.f32.mrf.mxu0
  %v1285 = vadd.f32 %v1236, %v1284
  %1286 = vmatmul.bf16.gmra.mxu0 %v445
  %v1287 = vpop.f32.mrf.mxu0
  %v1288 = vadd.f32 %v1239, %v1287
  %v1289 = vpop.f32.mrf.mxu0
  %v1290 = vadd.f32 %v1241, %v1289
  %1291 = vmatmul.bf16.gmra.mxu0 %v453
  %v1292 = vpop.f32.mrf.mxu0
  %v1293 = vadd.f32 %v1244, %v1292
  %v1294 = vpop.f32.mrf.mxu0
  %v1295 = vadd.f32 %v1246, %v1294
  %1296 = vmatmul.bf16.gmra.mxu0 %v461
  %v1297 = vpop.f32.mrf.mxu0
  %v1298 = vadd.f32 %v1249, %v1297
  %v1299 = vpop.f32.mrf.mxu0
  %v1300 = vadd.f32 %v1251, %v1299
  %1301 = vdwg.mxu0
  %v1302 = vpack.c.bf16 %v1263, %v1263
  %v1303 = vpack.c.bf16 %v1265, %v1265
  %v1304 = vpack.c.bf16 %v1268, %v1268
  %v1305 = vpack.c.bf16 %v1270, %v1270
  %v1306 = vpack.c.bf16 %v1273, %v1273
  %v1307 = vpack.c.bf16 %v1275, %v1275
  %v1308 = vpack.c.bf16 %v1278, %v1278
  %v1309 = vpack.c.bf16 %v1280, %v1280
  %v1310 = vpack.c.bf16 %v1283, %v1283
  %v1311 = vpack.c.bf16 %v1285, %v1285
  %v1312 = vpack.c.bf16 %v1288, %v1288
  %v1313 = vpack.c.bf16 %v1290, %v1290
  %v1314 = vpack.c.bf16 %v1293, %v1293
  %v1315 = vpack.c.bf16 %v1295, %v1295
  %v1316 = vpack.c.bf16 %v1298, %v1298
  %v1317 = vpack.c.bf16 %v1300, %v1300
  %1318 = vst [vmem:[%s2] sm:$0xf] %v1302
  %1319 = vst [vmem:[%s2 + $0x4] sm:$0xf] %v1303
  %1320 = vst [vmem:[%s2 + $0x8] sm:$0xf] %v1304
  %1321 = vst [vmem:[%s2 + $0xc] sm:$0xf] %v1305
  %1322 = vst [vmem:[%s2 + $0x10] sm:$0xf] %v1306
  %1323 = vst [vmem:[%s2 + $0x14] sm:$0xf] %v1307
  %1324 = vst [vmem:[%s2 + $0x18] sm:$0xf] %v1308
  %1325 = vst [vmem:[%s2 + $0x1c] sm:$0xf] %v1309
  %1326 = vst [vmem:[%s2 + $0x20] sm:$0xf] %v1310
  %1327 = vst [vmem:[%s2 + $0x24] sm:$0xf] %v1311
  %1328 = vst [vmem:[%s2 + $0x28] sm:$0xf] %v1312
  %1329 = vst [vmem:[%s2 + $0x2c] sm:$0xf] %v1313
  %1330 = vst [vmem:[%s2 + $0x30] sm:$0xf] %v1314
  %1331 = vst [vmem:[%s2 + $0x34] sm:$0xf] %v1315
  %1332 = vst [vmem:[%s2 + $0x38] sm:$0xf] %v1316
  %1333 = vst [vmem:[%s2 + $0x3c] sm:$0xf] %v1317
  %v1334 = vadd.f32 %v1263, %v1265
  %v1335 = vadd.f32 %v1334, %v1268
  %v1336 = vadd.f32 %v1335, %v1270
  %v1337 = vadd.f32 %v1336, %v1273
  %v1338 = vadd.f32 %v1337, %v1275
  %v1339 = vadd.f32 %v1338, %v1278
  %v1340 = vadd.f32 %v1339, %v1280
  %v1341 = vadd.f32 %v1340, %v1283
  %v1342 = vadd.f32 %v1341, %v1285
  %v1343 = vadd.f32 %v1342, %v1288
  %v1344 = vadd.f32 %v1343, %v1290
  %v1345 = vadd.f32 %v1344, %v1293
  %v1346 = vadd.f32 %v1345, %v1295
  %v1347 = vadd.f32 %v1346, %v1298
  %v1348 = vadd.f32 %v1347, %v1300
  %v1349 = vrot.slane %v1348, 4
  %v1350 = vadd.f32 %v1348, %v1349
  %v1351 = vrot.slane %v1350, 2
  %v1352 = vadd.f32 %v1350, %v1351
  %v1353 = vrot.slane %v1352, 1
  %v1354 = vadd.f32 %v1352, %v1353
  %v1355 = vmul.f32 %v1263, %v1263
  %v1356 = vmul.f32 %v1265, %v1265
  %v1357 = vmul.f32 %v1268, %v1268
  %v1358 = vmul.f32 %v1270, %v1270
  %v1359 = vmul.f32 %v1273, %v1273
  %v1360 = vmul.f32 %v1275, %v1275
  %v1361 = vmul.f32 %v1278, %v1278
  %v1362 = vmul.f32 %v1280, %v1280
  %v1363 = vmul.f32 %v1283, %v1283
  %v1364 = vmul.f32 %v1285, %v1285
  %v1365 = vmul.f32 %v1288, %v1288
  %v1366 = vmul.f32 %v1290, %v1290
  %v1367 = vmul.f32 %v1293, %v1293
  %v1368 = vmul.f32 %v1295, %v1295
  %v1369 = vmul.f32 %v1298, %v1298
  %v1370 = vmul.f32 %v1300, %v1300
  %v1371 = vadd.f32 %v1355, %v1356
  %v1372 = vadd.f32 %v1371, %v1357
  %v1373 = vadd.f32 %v1372, %v1358
  %v1374 = vadd.f32 %v1373, %v1359
  %v1375 = vadd.f32 %v1374, %v1360
  %v1376 = vadd.f32 %v1375, %v1361
  %v1377 = vadd.f32 %v1376, %v1362
  %v1378 = vadd.f32 %v1377, %v1363
  %v1379 = vadd.f32 %v1378, %v1364
  %v1380 = vadd.f32 %v1379, %v1365
  %v1381 = vadd.f32 %v1380, %v1366
  %v1382 = vadd.f32 %v1381, %v1367
  %v1383 = vadd.f32 %v1382, %v1368
  %v1384 = vadd.f32 %v1383, %v1369
  %v1385 = vadd.f32 %v1384, %v1370
  %v1386 = vrot.slane %v1385, 4
  %v1387 = vadd.f32 %v1385, %v1386
  %v1388 = vrot.slane %v1387, 2
  %v1389 = vadd.f32 %v1387, %v1388
  %v1390 = vrot.slane %v1389, 1
  %v1391 = vadd.f32 %v1389, %v1390
  %1392 = vst [vmem:[%s3] sm:$0xff] %v1354
  %1393 = vst [vmem:[%s4] sm:$0xff] %v1391
  // Predicated region
  $region10: #{discriminator_forward.7} parent=0 // pred_check
    _
  $region11: #{discriminator_forward.7} parent=0 // pred_check_branch
    %1395 = sbr.rel (0) target = $region13
  $region12: #{discriminator_forward.7} parent=0 // pred_region
    _
  $region13: #{discriminator_forward.7} parent=0 // pred_fallthru
    _
  // Predicated region
  $region14: #{discriminator_forward.7} parent=0 // pred_check
    _
  $region15: #{discriminator_forward.7} parent=0 // pred_check_branch
    %1397 = sbr.rel (0) target = $region17
  $region16: #{discriminator_forward.7} parent=0 // pred_region
    _
  $region17: #{discriminator_forward.7} parent=0 // pred_fallthru
    _
  // Predicated region
  $region18: #{discriminator_forward.7} parent=0 // pred_check
    _
  $region19: #{discriminator_forward.7} parent=0 // pred_check_branch
    %1399 = sbr.rel (0) target = $region21
  $region20: #{discriminator_forward.7} parent=0 // pred_region
    _
  $region21: #{discriminator_forward.7} parent=0 // pred_fallthru
    _
  // Predicated region
  $region22: #{discriminator_forward.7} parent=0 // pred_check
    _
  $region23: #{discriminator_forward.7} parent=0 // pred_check_branch
    %1401 = sbr.rel (0) target = $region25
  $region24: #{discriminator_forward.7} parent=0 // pred_region
    _
  $region25: #{discriminator_forward.7} parent=0 // pred_fallthru
    _
  // Predicated region
  $region26: #{discriminator_forward.7} parent=0 // pred_check
    _
  $region27: #{discriminator_forward.7} parent=0 // pred_check_branch
    %1403 = sbr.rel (0) target = $region29
  $region28: #{discriminator_forward.7} parent=0 // pred_region
    _
  $region29: #{discriminator_forward.7} parent=0 // pred_fallthru
    _
  // Predicated region
  $region30: #{discriminator_forward.7} parent=0 // pred_check
    _
  $region31: #{discriminator_forward.7} parent=0 // pred_check_branch
    %1405 = sbr.rel (0) target = $region33
  $region32: #{discriminator_forward.7} parent=0 // pred_region
    _
  $region33: #{discriminator_forward.7} parent=0 // pred_fallthru
    _

// kernel: discriminator_forward.10
$region0: #{discriminator_forward.10}
  #allocation0 [shape = 'u32[]', space=smem, size = 0x4, offset = 0x4, fixed_abs, tag = 'smem constant byte address 0x4 - core index']
  #allocation1 [shape = 'u32[72,128]{1,0:T(1,128)}', space=vmem, size = 0x9000, scoped, tag = 'internal scratch']
  %s0 = inlined_call_operand.vmem [shape: bf16[32,256], index: 0, kind: input, shape index: {}]
  %s1 = inlined_call_operand.vmem [shape: f32[1,256], index: 1, kind: input, shape index: {}]
  %s2 = inlined_call_operand.vmem [shape: f32[1,256], index: 2, kind: input, shape index: {}]
  %s3 = inlined_call_operand.vmem [shape: bf16[32,256], index: 3, kind: output, shape index: {}]
  %s4 = sld [smem:[#allocation0]]
  $region22: #{discriminator_forward.10} parent=0
    _
  %s6 = ssub.s32 1, %s4
  %s7 = scalar_select 0, %s6, %s4
  // Predicated region
  $region2: #{discriminator_forward.10} parent=0 // pred_check
    _
  $region3: #{discriminator_forward.10} parent=0 // pred_check_branch
    %9 = sbr.rel (0) target = $region5
  $region4: #{discriminator_forward.10} parent=0 // pred_region
    _
  $region5: #{discriminator_forward.10} parent=0 // pred_fallthru
    _
  // Predicated region
  $region6: #{discriminator_forward.10} parent=0 // pred_check
    _
  $region7: #{discriminator_forward.10} parent=0 // pred_check_branch
    %11 = sbr.rel (0) target = $region9
  $region8: #{discriminator_forward.10} parent=0 // pred_region
    _
  $region9: #{discriminator_forward.10} parent=0 // pred_fallthru
    _
  // Predicated region
  $region10: #{discriminator_forward.10} parent=0 // pred_check
    _
  $region11: #{discriminator_forward.10} parent=0 // pred_check_branch
    %13 = sbr.rel (0) target = $region13
  $region12: #{discriminator_forward.10} parent=0 // pred_region
    _
  $region13: #{discriminator_forward.10} parent=0 // pred_fallthru
    _
  %v14 = vld [vmem:[%s0] sm:$0xff]
  %v15 = vld [vmem:[%s0 + $0x8] sm:$0xff]
  %v16 = vld [vmem:[%s0 + $0x10] sm:$0xff]
  %v17 = vld [vmem:[%s0 + $0x18] sm:$0xff]
  %v18 = vunpack.c.l.bf16 %v14
  %v19 = vunpack.c.h.bf16 %v14
  %v20 = vunpack.c.l.bf16 %v15
  %v21 = vunpack.c.h.bf16 %v15
  %v22 = vunpack.c.l.bf16 %v16
  %v23 = vunpack.c.h.bf16 %v16
  %v24 = vunpack.c.l.bf16 %v17
  %v25 = vunpack.c.h.bf16 %v17
  %v26 = vld [vmem:[%s1] sm:$0x3]
  %v28 = vperm.slane %v26, 0
  %v29 = vperm.slane %v26, 1
  %v32 = vmul.f32 %v18, %v28
  %v33 = vmul.f32 %v19, %v29
  %v34 = vmul.f32 %v20, %v28
  %v35 = vmul.f32 %v21, %v29
  %v36 = vmul.f32 %v22, %v28
  %v37 = vmul.f32 %v23, %v29
  %v38 = vmul.f32 %v24, %v28
  %v39 = vmul.f32 %v25, %v29
  %v40 = vld [vmem:[%s2] sm:$0x3]
  %v42 = vperm.slane %v40, 0
  %v43 = vperm.slane %v40, 1
  %v46 = vadd.f32 %v32, %v42
  %v47 = vadd.f32 %v33, %v43
  %v48 = vadd.f32 %v34, %v42
  %v49 = vadd.f32 %v35, %v43
  %v50 = vadd.f32 %v36, %v42
  %v51 = vadd.f32 %v37, %v43
  %v52 = vadd.f32 %v38, %v42
  %v53 = vadd.f32 %v39, %v43
  %vm54 = vcmp.gt.f32.partialorder %v46, 0.0
  %vm55 = vcmp.gt.f32.partialorder %v47, 0.0
  %vm56 = vcmp.gt.f32.partialorder %v48, 0.0
  %vm57 = vcmp.gt.f32.partialorder %v49, 0.0
  %vm58 = vcmp.gt.f32.partialorder %v50, 0.0
  %vm59 = vcmp.gt.f32.partialorder %v51, 0.0
  %vm60 = vcmp.gt.f32.partialorder %v52, 0.0
  %vm61 = vcmp.gt.f32.partialorder %v53, 0.0
  %v62 = vmul.f32 %v46, 0.2
  %v63 = vmul.f32 %v47, 0.2
  %v64 = vmul.f32 %v48, 0.2
  %v65 = vmul.f32 %v49, 0.2
  %v66 = vmul.f32 %v50, 0.2
  %v67 = vmul.f32 %v51, 0.2
  %v68 = vmul.f32 %v52, 0.2
  %v69 = vmul.f32 %v53, 0.2
  %v70 = vsel %vm54, %v46, %v62
  %v71 = vsel %vm55, %v47, %v63
  %v72 = vsel %vm56, %v48, %v64
  %v73 = vsel %vm57, %v49, %v65
  %v74 = vsel %vm58, %v50, %v66
  %v75 = vsel %vm59, %v51, %v67
  %v76 = vsel %vm60, %v52, %v68
  %v77 = vsel %vm61, %v53, %v69
  %v78 = vpack.c.bf16 %v71, %v70
  %v79 = vpack.c.bf16 %v73, %v72
  %v80 = vpack.c.bf16 %v75, %v74
  %v81 = vpack.c.bf16 %v77, %v76
  %82 = vst [vmem:[%s3] sm:$0xff] %v78
  %83 = vst [vmem:[%s3 + $0x8] sm:$0xff] %v79
  %84 = vst [vmem:[%s3 + $0x10] sm:$0xff] %v80
  %85 = vst [vmem:[%s3 + $0x18] sm:$0xff] %v81
  // Predicated region
  $region14: #{discriminator_forward.10} parent=0 // pred_check
    _
  $region15: #{discriminator_forward.10} parent=0 // pred_check_branch
    %87 = sbr.rel (0) target = $region17
  $region16: #{discriminator_forward.10} parent=0 // pred_region
    _
  $region17: #{discriminator_forward.10} parent=0 // pred_fallthru
    _
  // Predicated region
  $region18: #{discriminator_forward.10} parent=0 // pred_check
    _
  $region19: #{discriminator_forward.10} parent=0 // pred_check_branch
    %89 = sbr.rel (0) target = $region21
  $region20: #{discriminator_forward.10} parent=0 // pred_region
    _
  $region21: #{discriminator_forward.10} parent=0 // pred_fallthru
    _

// kernel: discriminator_forward.9
$region0: #{discriminator_forward.9}
  #allocation0 [shape = 'u32[]', space=smem, size = 0x4, offset = 0x4, fixed_abs, tag = 'smem constant byte address 0x4 - core index']
  #allocation1 [shape = 'u32[72,128]{1,0:T(1,128)}', space=vmem, size = 0x9000, scoped, tag = 'internal scratch']
  %s0 = inlined_call_operand.vmem [shape: bf16[32,2048], index: 0, kind: input, shape index: {}]
  %s1 = inlined_call_operand.vmem [shape: bf16[2048,256], index: 1, kind: input, shape index: {}]
  %s2 = inlined_call_operand.vmem [shape: bf16[32,256], index: 2, kind: output, shape index: {0}]
  %s3 = inlined_call_operand.vmem [shape: f32[8,256], index: 3, kind: output, shape index: {1}]
  %s4 = inlined_call_operand.vmem [shape: f32[8,256], index: 4, kind: output, shape index: {2}]
  %5 = xla_tuple %s2, %s3, %s4
  %s6 = sld [smem:[#allocation0]]
  $region34: #{discriminator_forward.9} parent=0
    _
  %s8 = ssub.s32 1, %s6
  %s9 = scalar_select 0, %s8, %s6
  // Predicated region
  $region2: #{discriminator_forward.9} parent=0 // pred_check
    _
  $region3: #{discriminator_forward.9} parent=0 // pred_check_branch
    %11 = sbr.rel (0) target = $region5
  $region4: #{discriminator_forward.9} parent=0 // pred_region
    _
  $region5: #{discriminator_forward.9} parent=0 // pred_fallthru
    _
  // Predicated region
  $region6: #{discriminator_forward.9} parent=0 // pred_check
    _
  $region7: #{discriminator_forward.9} parent=0 // pred_check_branch
    %13 = sbr.rel (0) target = $region9
  $region8: #{discriminator_forward.9} parent=0 // pred_region
    _
  $region9: #{discriminator_forward.9} parent=0 // pred_fallthru
    _
  %v14 = vld [vmem:[%s0] sm:$0xff]
  %v15 = vld [vmem:[%s0 + $0x8] sm:$0xff]
  %v16 = vld [vmem:[%s0 + $0x10] sm:$0xff]
  %v17 = vld [vmem:[%s0 + $0x18] sm:$0xff]
  %v18 = vld [vmem:[%s0 + $0x20] sm:$0xff]
  %v19 = vld [vmem:[%s0 + $0x28] sm:$0xff]
  %v20 = vld [vmem:[%s0 + $0x30] sm:$0xff]
  %v21 = vld [vmem:[%s0 + $0x38] sm:$0xff]
  %v22 = vld [vmem:[%s0 + $0x40] sm:$0xff]
  %v23 = vld [vmem:[%s0 + $0x48] sm:$0xff]
  %v24 = vld [vmem:[%s0 + $0x50] sm:$0xff]
  %v25 = vld [vmem:[%s0 + $0x58] sm:$0xff]
  %v26 = vld [vmem:[%s0 + $0x60] sm:$0xff]
  %v27 = vld [vmem:[%s0 + $0x68] sm:$0xff]
  %v28 = vld [vmem:[%s0 + $0x70] sm:$0xff]
  %v29 = vld [vmem:[%s0 + $0x78] sm:$0xff]
  %v30 = vld [vmem:[%s0 + $0x80] sm:$0xff]
  %v31 = vld [vmem:[%s0 + $0x88] sm:$0xff]
  %v32 = vld [vmem:[%s0 + $0x90] sm:$0xff]
  %v33 = vld [vmem:[%s0 + $0x98] sm:$0xff]
  %v34 = vld [vmem:[%s0 + $0xa0] sm:$0xff]
  %v35 = vld [vmem:[%s0 + $0xa8] sm:$0xff]
  %v36 = vld [vmem:[%s0 + $0xb0] sm:$0xff]
  %v37 = vld [vmem:[%s0 + $0xb8] sm:$0xff]
  %v38 = vld [vmem:[%s0 + $0xc0] sm:$0xff]
  %v39 = vld [vmem:[%s0 + $0xc8] sm:$0xff]
  %v40 = vld [vmem:[%s0 + $0xd0] sm:$0xff]
  %v41 = vld [vmem:[%s0 + $0xd8] sm:$0xff]
  %v42 = vld [vmem:[%s0 + $0xe0] sm:$0xff]
  %v43 = vld [vmem:[%s0 + $0xe8] sm:$0xff]
  %v44 = vld [vmem:[%s0 + $0xf0] sm:$0xff]
  %v45 = vld [vmem:[%s0 + $0xf8] sm:$0xff]
  %v46 = vld [vmem:[%s1] sm:$0xff]
  %v47 = vld [vmem:[%s1 + $0x8] sm:$0xff]
  %v48 = vld [vmem:[%s1 + $0x10] sm:$0xff]
  %v49 = vld [vmem:[%s1 + $0x18] sm:$0xff]
  %v50 = vld [vmem:[%s1 + $0x20] sm:$0xff]
  %v51 = vld [vmem:[%s1 + $0x28] sm:$0xff]
  %v52 = vld [vmem:[%s1 + $0x30] sm:$0xff]
  %v53 = vld [vmem:[%s1 + $0x38] sm:$0xff]
  %v54 = vld [vmem:[%s1 + $0x40] sm:$0xff]
  %v55 = vld [vmem:[%s1 + $0x48] sm:$0xff]
  %v56 = vld [vmem:[%s1 + $0x50] sm:$0xff]
  %v57 = vld [vmem:[%s1 + $0x58] sm:$0xff]
  %v58 = vld [vmem:[%s1 + $0x60] sm:$0xff]
  %v59 = vld [vmem:[%s1 + $0x68] sm:$0xff]
  %v60 = vld [vmem:[%s1 + $0x70] sm:$0xff]
  %v61 = vld [vmem:[%s1 + $0x78] sm:$0xff]
  %v62 = vld [vmem:[%s1 + $0x80] sm:$0xff]
  %v63 = vld [vmem:[%s1 + $0x88] sm:$0xff]
  %v64 = vld [vmem:[%s1 + $0x90] sm:$0xff]
  %v65 = vld [vmem:[%s1 + $0x98] sm:$0xff]
  %v66 = vld [vmem:[%s1 + $0xa0] sm:$0xff]
  %v67 = vld [vmem:[%s1 + $0xa8] sm:$0xff]
  %v68 = vld [vmem:[%s1 + $0xb0] sm:$0xff]
  %v69 = vld [vmem:[%s1 + $0xb8] sm:$0xff]
  %v70 = vld [vmem:[%s1 + $0xc0] sm:$0xff]
  %v71 = vld [vmem:[%s1 + $0xc8] sm:$0xff]
  %v72 = vld [vmem:[%s1 + $0xd0] sm:$0xff]
  %v73 = vld [vmem:[%s1 + $0xd8] sm:$0xff]
  %v74 = vld [vmem:[%s1 + $0xe0] sm:$0xff]
  %v75 = vld [vmem:[%s1 + $0xe8] sm:$0xff]
  %v76 = vld [vmem:[%s1 + $0xf0] sm:$0xff]
  %v77 = vld [vmem:[%s1 + $0xf8] sm:$0xff]
  %v78 = vld [vmem:[%s1 + $0x100] sm:$0xff]
  %v79 = vld [vmem:[%s1 + $0x108] sm:$0xff]
  %v80 = vld [vmem:[%s1 + $0x110] sm:$0xff]
  %v81 = vld [vmem:[%s1 + $0x118] sm:$0xff]
  %v82 = vld [vmem:[%s1 + $0x120] sm:$0xff]
  %v83 = vld [vmem:[%s1 + $0x128] sm:$0xff]
  %v84 = vld [vmem:[%s1 + $0x130] sm:$0xff]
  %v85 = vld [vmem:[%s1 + $0x138] sm:$0xff]
  %v86 = vld [vmem:[%s1 + $0x140] sm:$0xff]
  %v87 = vld [vmem:[%s1 + $0x148] sm:$0xff]
  %v88 = vld [vmem:[%s1 + $0x150] sm:$0xff]
  %v89 = vld [vmem:[%s1 + $0x158] sm:$0xff]
  %v90 = vld [vmem:[%s1 + $0x160] sm:$0xff]
  %v91 = vld [vmem:[%s1 + $0x168] sm:$0xff]
  %v92 = vld [vmem:[%s1 + $0x170] sm:$0xff]
  %v93 = vld [vmem:[%s1 + $0x178] sm:$0xff]
  %v94 = vld [vmem:[%s1 + $0x180] sm:$0xff]
  %v95 = vld [vmem:[%s1 + $0x188] sm:$0xff]
  %v96 = vld [vmem:[%s1 + $0x190] sm:$0xff]
  %v97 = vld [vmem:[%s1 + $0x198] sm:$0xff]
  %v98 = vld [vmem:[%s1 + $0x1a0] sm:$0xff]
  %v99 = vld [vmem:[%s1 + $0x1a8] sm:$0xff]
  %v100 = vld [vmem:[%s1 + $0x1b0] sm:$0xff]
  %v101 = vld [vmem:[%s1 + $0x1b8] sm:$0xff]
  %v102 = vld [vmem:[%s1 + $0x1c0] sm:$0xff]
  %v103 = vld [vmem:[%s1 + $0x1c8] sm:$0xff]
  %v104 = vld [vmem:[%s1 + $0x1d0] sm:$0xff]
  %v105 = vld [vmem:[%s1 + $0x1d8] sm:$0xff]
  %v106 = vld [vmem:[%s1 + $0x1e0] sm:$0xff]
  %v107 = vld [vmem:[%s1 + $0x1e8] sm:$0xff]
  %v108 = vld [vmem:[%s1 + $0x1f0] sm:$0xff]
  %v109 = vld [vmem:[%s1 + $0x1f8] sm:$0xff]
  %v110 = vld [vmem:[%s1 + $0x200] sm:$0xff]
  %v111 = vld [vmem:[%s1 + $0x208] sm:$0xff]
  %v112 = vld [vmem:[%s1 + $0x210] sm:$0xff]
  %v113 = vld [vmem:[%s1 + $0x218] sm:$0xff]
  %v114 = vld [vmem:[%s1 + $0x220] sm:$0xff]
  %v115 = vld [vmem:[%s1 + $0x228] sm:$0xff]
  %v116 = vld [vmem:[%s1 + $0x230] sm:$0xff]
  %v117 = vld [vmem:[%s1 + $0x238] sm:$0xff]
  %v118 = vld [vmem:[%s1 + $0x240] sm:$0xff]
  %v119 = vld [vmem:[%s1 + $0x248] sm:$0xff]
  %v120 = vld [vmem:[%s1 + $0x250] sm:$0xff]
  %v121 = vld [vmem:[%s1 + $0x258] sm:$0xff]
  %v122 = vld [vmem:[%s1 + $0x260] sm:$0xff]
  %v123 = vld [vmem:[%s1 + $0x268] sm:$0xff]
  %v124 = vld [vmem:[%s1 + $0x270] sm:$0xff]
  %v125 = vld [vmem:[%s1 + $0x278] sm:$0xff]
  %v126 = vld [vmem:[%s1 + $0x280] sm:$0xff]
  %v127 = vld [vmem:[%s1 + $0x288] sm:$0xff]
  %v128 = vld [vmem:[%s1 + $0x290] sm:$0xff]
  %v129 = vld [vmem:[%s1 + $0x298] sm:$0xff]
  %v130 = vld [vmem:[%s1 + $0x2a0] sm:$0xff]
  %v131 = vld [vmem:[%s1 + $0x2a8] sm:$0xff]
  %v132 = vld [vmem:[%s1 + $0x2b0] sm:$0xff]
  %v133 = vld [vmem:[%s1 + $0x2b8] sm:$0xff]
  %v134 = vld [vmem:[%s1 + $0x2c0] sm:$0xff]
  %v135 = vld [vmem:[%s1 + $0x2c8] sm:$0xff]
  %v136 = vld [vmem:[%s1 + $0x2d0] sm:$0xff]
  %v137 = vld [vmem:[%s1 + $0x2d8] sm:$0xff]
  %v138 = vld [vmem:[%s1 + $0x2e0] sm:$0xff]
  %v139 = vld [vmem:[%s1 + $0x2e8] sm:$0xff]
  %v140 = vld [vmem:[%s1 + $0x2f0] sm:$0xff]
  %v141 = vld [vmem:[%s1 + $0x2f8] sm:$0xff]
  %v142 = vld [vmem:[%s1 + $0x300] sm:$0xff]
  %v143 = vld [vmem:[%s1 + $0x308] sm:$0xff]
  %v144 = vld [vmem:[%s1 + $0x310] sm:$0xff]
  %v145 = vld [vmem:[%s1 + $0x318] sm:$0xff]
  %v146 = vld [vmem:[%s1 + $0x320] sm:$0xff]
  %v147 = vld [vmem:[%s1 + $0x328] sm:$0xff]
  %v148 = vld [vmem:[%s1 + $0x330] sm:$0xff]
  %v149 = vld [vmem:[%s1 + $0x338] sm:$0xff]
  %v150 = vld [vmem:[%s1 + $0x340] sm:$0xff]
  %v151 = vld [vmem:[%s1 + $0x348] sm:$0xff]
  %v152 = vld [vmem:[%s1 + $0x350] sm:$0xff]
  %v153 = vld [vmem:[%s1 + $0x358] sm:$0xff]
  %v154 = vld [vmem:[%s1 + $0x360] sm:$0xff]
  %v155 = vld [vmem:[%s1 + $0x368] sm:$0xff]
  %v156 = vld [vmem:[%s1 + $0x370] sm:$0xff]
  %v157 = vld [vmem:[%s1 + $0x378] sm:$0xff]
  %v158 = vld [vmem:[%s1 + $0x380] sm:$0xff]
  %v159 = vld [vmem:[%s1 + $0x388] sm:$0xff]
  %v160 = vld [vmem:[%s1 + $0x390] sm:$0xff]
  %v161 = vld [vmem:[%s1 + $0x398] sm:$0xff]
  %v162 = vld [vmem:[%s1 + $0x3a0] sm:$0xff]
  %v163 = vld [vmem:[%s1 + $0x3a8] sm:$0xff]
  %v164 = vld [vmem:[%s1 + $0x3b0] sm:$0xff]
  %v165 = vld [vmem:[%s1 + $0x3b8] sm:$0xff]
  %v166 = vld [vmem:[%s1 + $0x3c0] sm:$0xff]
  %v167 = vld [vmem:[%s1 + $0x3c8] sm:$0xff]
  %v168 = vld [vmem:[%s1 + $0x3d0] sm:$0xff]
  %v169 = vld [vmem:[%s1 + $0x3d8] sm:$0xff]
  %v170 = vld [vmem:[%s1 + $0x3e0] sm:$0xff]
  %v171 = vld [vmem:[%s1 + $0x3e8] sm:$0xff]
  %v172 = vld [vmem:[%s1 + $0x3f0] sm:$0xff]
  %v173 = vld [vmem:[%s1 + $0x3f8] sm:$0xff]
  %v174 = vld [vmem:[%s1 + $0x400] sm:$0xff]
  %v175 = vld [vmem:[%s1 + $0x408] sm:$0xff]
  %v176 = vld [vmem:[%s1 + $0x410] sm:$0xff]
  %v177 = vld [vmem:[%s1 + $0x418] sm:$0xff]
  %v178 = vld [vmem:[%s1 + $0x420] sm:$0xff]
  %v179 = vld [vmem:[%s1 + $0x428] sm:$0xff]
  %v180 = vld [vmem:[%s1 + $0x430] sm:$0xff]
  %v181 = vld [vmem:[%s1 + $0x438] sm:$0xff]
  %v182 = vld [vmem:[%s1 + $0x440] sm:$0xff]
  %v183 = vld [vmem:[%s1 + $0x448] sm:$0xff]
  %v184 = vld [vmem:[%s1 + $0x450] sm:$0xff]
  %v185 = vld [vmem:[%s1 + $0x458] sm:$0xff]
  %v186 = vld [vmem:[%s1 + $0x460] sm:$0xff]
  %v187 = vld [vmem:[%s1 + $0x468] sm:$0xff]
  %v188 = vld [vmem:[%s1 + $0x470] sm:$0xff]
  %v189 = vld [vmem:[%s1 + $0x478] sm:$0xff]
  %v190 = vld [vmem:[%s1 + $0x480] sm:$0xff]
  %v191 = vld [vmem:[%s1 + $0x488] sm:$0xff]
  %v192 = vld [vmem:[%s1 + $0x490] sm:$0xff]
  %v193 = vld [vmem:[%s1 + $0x498] sm:$0xff]
  %v194 = vld [vmem:[%s1 + $0x4a0] sm:$0xff]
  %v195 = vld [vmem:[%s1 + $0x4a8] sm:$0xff]
  %v196 = vld [vmem:[%s1 + $0x4b0] sm:$0xff]
  %v197 = vld [vmem:[%s1 + $0x4b8] sm:$0xff]
  %v198 = vld [vmem:[%s1 + $0x4c0] sm:$0xff]
  %v199 = vld [vmem:[%s1 + $0x4c8] sm:$0xff]
  %v200 = vld [vmem:[%s1 + $0x4d0] sm:$0xff]
  %v201 = vld [vmem:[%s1 + $0x4d8] sm:$0xff]
  %v202 = vld [vmem:[%s1 + $0x4e0] sm:$0xff]
  %v203 = vld [vmem:[%s1 + $0x4e8] sm:$0xff]
  %v204 = vld [vmem:[%s1 + $0x4f0] sm:$0xff]
  %v205 = vld [vmem:[%s1 + $0x4f8] sm:$0xff]
  %v206 = vld [vmem:[%s1 + $0x500] sm:$0xff]
  %v207 = vld [vmem:[%s1 + $0x508] sm:$0xff]
  %v208 = vld [vmem:[%s1 + $0x510] sm:$0xff]
  %v209 = vld [vmem:[%s1 + $0x518] sm:$0xff]
  %v210 = vld [vmem:[%s1 + $0x520] sm:$0xff]
  %v211 = vld [vmem:[%s1 + $0x528] sm:$0xff]
  %v212 = vld [vmem:[%s1 + $0x530] sm:$0xff]
  %v213 = vld [vmem:[%s1 + $0x538] sm:$0xff]
  %v214 = vld [vmem:[%s1 + $0x540] sm:$0xff]
  %v215 = vld [vmem:[%s1 + $0x548] sm:$0xff]
  %v216 = vld [vmem:[%s1 + $0x550] sm:$0xff]
  %v217 = vld [vmem:[%s1 + $0x558] sm:$0xff]
  %v218 = vld [vmem:[%s1 + $0x560] sm:$0xff]
  %v219 = vld [vmem:[%s1 + $0x568] sm:$0xff]
  %v220 = vld [vmem:[%s1 + $0x570] sm:$0xff]
  %v221 = vld [vmem:[%s1 + $0x578] sm:$0xff]
  %v222 = vld [vmem:[%s1 + $0x580] sm:$0xff]
  %v223 = vld [vmem:[%s1 + $0x588] sm:$0xff]
  %v224 = vld [vmem:[%s1 + $0x590] sm:$0xff]
  %v225 = vld [vmem:[%s1 + $0x598] sm:$0xff]
  %v226 = vld [vmem:[%s1 + $0x5a0] sm:$0xff]
  %v227 = vld [vmem:[%s1 + $0x5a8] sm:$0xff]
  %v228 = vld [vmem:[%s1 + $0x5b0] sm:$0xff]
  %v229 = vld [vmem:[%s1 + $0x5b8] sm:$0xff]
  %v230 = vld [vmem:[%s1 + $0x5c0] sm:$0xff]
  %v231 = vld [vmem:[%s1 + $0x5c8] sm:$0xff]
  %v232 = vld [vmem:[%s1 + $0x5d0] sm:$0xff]
  %v233 = vld [vmem:[%s1 + $0x5d8] sm:$0xff]
  %v234 = vld [vmem:[%s1 + $0x5e0] sm:$0xff]
  %v235 = vld [vmem:[%s1 + $0x5e8] sm:$0xff]
  %v236 = vld [vmem:[%s1 + $0x5f0] sm:$0xff]
  %v237 = vld [vmem:[%s1 + $0x5f8] sm:$0xff]
  %v238 = vld [vmem:[%s1 + $0x600] sm:$0xff]
  %v239 = vld [vmem:[%s1 + $0x608] sm:$0xff]
  %v240 = vld [vmem:[%s1 + $0x610] sm:$0xff]
  %v241 = vld [vmem:[%s1 + $0x618] sm:$0xff]
  %v242 = vld [vmem:[%s1 + $0x620] sm:$0xff]
  %v243 = vld [vmem:[%s1 + $0x628] sm:$0xff]
  %v244 = vld [vmem:[%s1 + $0x630] sm:$0xff]
  %v245 = vld [vmem:[%s1 + $0x638] sm:$0xff]
  %v246 = vld [vmem:[%s1 + $0x640] sm:$0xff]
  %v247 = vld [vmem:[%s1 + $0x648] sm:$0xff]
  %v248 = vld [vmem:[%s1 + $0x650] sm:$0xff]
  %v249 = vld [vmem:[%s1 + $0x658] sm:$0xff]
  %v250 = vld [vmem:[%s1 + $0x660] sm:$0xff]
  %v251 = vld [vmem:[%s1 + $0x668] sm:$0xff]
  %v252 = vld [vmem:[%s1 + $0x670] sm:$0xff]
  %v253 = vld [vmem:[%s1 + $0x678] sm:$0xff]
  %v254 = vld [vmem:[%s1 + $0x680] sm:$0xff]
  %v255 = vld [vmem:[%s1 + $0x688] sm:$0xff]
  %v256 = vld [vmem:[%s1 + $0x690] sm:$0xff]
  %v257 = vld [vmem:[%s1 + $0x698] sm:$0xff]
  %v258 = vld [vmem:[%s1 + $0x6a0] sm:$0xff]
  %v259 = vld [vmem:[%s1 + $0x6a8] sm:$0xff]
  %v260 = vld [vmem:[%s1 + $0x6b0] sm:$0xff]
  %v261 = vld [vmem:[%s1 + $0x6b8] sm:$0xff]
  %v262 = vld [vmem:[%s1 + $0x6c0] sm:$0xff]
  %v263 = vld [vmem:[%s1 + $0x6c8] sm:$0xff]
  %v264 = vld [vmem:[%s1 + $0x6d0] sm:$0xff]
  %v265 = vld [vmem:[%s1 + $0x6d8] sm:$0xff]
  %v266 = vld [vmem:[%s1 + $0x6e0] sm:$0xff]
  %v267 = vld [vmem:[%s1 + $0x6e8] sm:$0xff]
  %v268 = vld [vmem:[%s1 + $0x6f0] sm:$0xff]
  %v269 = vld [vmem:[%s1 + $0x6f8] sm:$0xff]
  %v270 = vld [vmem:[%s1 + $0x700] sm:$0xff]
  %v271 = vld [vmem:[%s1 + $0x708] sm:$0xff]
  %v272 = vld [vmem:[%s1 + $0x710] sm:$0xff]
  %v273 = vld [vmem:[%s1 + $0x718] sm:$0xff]
  %v274 = vld [vmem:[%s1 + $0x720] sm:$0xff]
  %v275 = vld [vmem:[%s1 + $0x728] sm:$0xff]
  %v276 = vld [vmem:[%s1 + $0x730] sm:$0xff]
  %v277 = vld [vmem:[%s1 + $0x738] sm:$0xff]
  %v278 = vld [vmem:[%s1 + $0x740] sm:$0xff]
  %v279 = vld [vmem:[%s1 + $0x748] sm:$0xff]
  %v280 = vld [vmem:[%s1 + $0x750] sm:$0xff]
  %v281 = vld [vmem:[%s1 + $0x758] sm:$0xff]
  %v282 = vld [vmem:[%s1 + $0x760] sm:$0xff]
  %v283 = vld [vmem:[%s1 + $0x768] sm:$0xff]
  %v284 = vld [vmem:[%s1 + $0x770] sm:$0xff]
  %v285 = vld [vmem:[%s1 + $0x778] sm:$0xff]
  %v286 = vld [vmem:[%s1 + $0x780] sm:$0xff]
  %v287 = vld [vmem:[%s1 + $0x788] sm:$0xff]
  %v288 = vld [vmem:[%s1 + $0x790] sm:$0xff]
  %v289 = vld [vmem:[%s1 + $0x798] sm:$0xff]
  %v290 = vld [vmem:[%s1 + $0x7a0] sm:$0xff]
  %v291 = vld [vmem:[%s1 + $0x7a8] sm:$0xff]
  %v292 = vld [vmem:[%s1 + $0x7b0] sm:$0xff]
  %v293 = vld [vmem:[%s1 + $0x7b8] sm:$0xff]
  %v294 = vld [vmem:[%s1 + $0x7c0] sm:$0xff]
  %v295 = vld [vmem:[%s1 + $0x7c8] sm:$0xff]
  %v296 = vld [vmem:[%s1 + $0x7d0] sm:$0xff]
  %v297 = vld [vmem:[%s1 + $0x7d8] sm:$0xff]
  %v298 = vld [vmem:[%s1 + $0x7e0] sm:$0xff]
  %v299 = vld [vmem:[%s1 + $0x7e8] sm:$0xff]
  %v300 = vld [vmem:[%s1 + $0x7f0] sm:$0xff]
  %v301 = vld [vmem:[%s1 + $0x7f8] sm:$0xff]
  %v334 = vunpack.c.l.b16 %v14
  %v335 = vunpack.c.h.b16 %v14
  %v336 = vunpack.c.l.b16 %v15
  %v337 = vunpack.c.h.b16 %v15
  %v338 = vunpack.c.l.b16 %v16
  %v339 = vunpack.c.h.b16 %v16
  %v340 = vunpack.c.l.b16 %v17
  %v341 = vunpack.c.h.b16 %v17
  %v342 = vunpack.c.l.b16 %v18
  %v343 = vunpack.c.h.b16 %v18
  %v344 = vunpack.c.l.b16 %v19
  %v345 = vunpack.c.h.b16 %v19
  %v346 = vunpack.c.l.b16 %v20
  %v347 = vunpack.c.h.b16 %v20
  %v348 = vunpack.c.l.b16 %v21
  %v349 = vunpack.c.h.b16 %v21
  %v350 = vunpack.c.l.b16 %v22
  %v351 = vunpack.c.h.b16 %v22
  %v352 = vunpack.c.l.b16 %v23
  %v353 = vunpack.c.h.b16 %v23
  %v354 = vunpack.c.l.b16 %v24
  %v355 = vunpack.c.h.b16 %v24
  %v356 = vunpack.c.l.b16 %v25
  %v357 = vunpack.c.h.b16 %v25
  %v358 = vunpack.c.l.b16 %v26
  %v359 = vunpack.c.h.b16 %v26
  %v360 = vunpack.c.l.b16 %v27
  %v361 = vunpack.c.h.b16 %v27
  %v362 = vunpack.c.l.b16 %v28
  %v363 = vunpack.c.h.b16 %v28
  %v364 = vunpack.c.l.b16 %v29
  %v365 = vunpack.c.h.b16 %v29
  %v366 = vunpack.c.l.b16 %v30
  %v367 = vunpack.c.h.b16 %v30
  %v368 = vunpack.c.l.b16 %v31
  %v369 = vunpack.c.h.b16 %v31
  %v370 = vunpack.c.l.b16 %v32
  %v371 = vunpack.c.h.b16 %v32
  %v372 = vunpack.c.l.b16 %v33
  %v373 = vunpack.c.h.b16 %v33
  %v374 = vunpack.c.l.b16 %v34
  %v375 = vunpack.c.h.b16 %v34
  %v376 = vunpack.c.l.b16 %v35
  %v377 = vunpack.c.h.b16 %v35
  %v378 = vunpack.c.l.b16 %v36
  %v379 = vunpack.c.h.b16 %v36
  %v380 = vunpack.c.l.b16 %v37
  %v381 = vunpack.c.h.b16 %v37
  %v382 = vunpack.c.l.b16 %v38
  %v383 = vunpack.c.h.b16 %v38
  %v384 = vunpack.c.l.b16 %v39
  %v385 = vunpack.c.h.b16 %v39
  %v386 = vunpack.c.l.b16 %v40
  %v387 = vunpack.c.h.b16 %v40
  %v388 = vunpack.c.l.b16 %v41
  %v389 = vunpack.c.h.b16 %v41
  %v390 = vunpack.c.l.b16 %v42
  %v391 = vunpack.c.h.b16 %v42
  %v392 = vunpack.c.l.b16 %v43
  %v393 = vunpack.c.h.b16 %v43
  %v394 = vunpack.c.l.b16 %v44
  %v395 = vunpack.c.h.b16 %v44
  %v396 = vunpack.c.l.b16 %v45
  %v397 = vunpack.c.h.b16 %v45
  %v398 = vpack.c.b16 %v350, %v334
  %v399 = vpack.c.b16 %v351, %v335
  %v400 = vpack.c.b16 %v352, %v336
  %v401 = vpack.c.b16 %v353, %v337
  %v402 = vpack.c.b16 %v354, %v338
  %v403 = vpack.c.b16 %v355, %v339
  %v404 = vpack.c.b16 %v356, %v340
  %v405 = vpack.c.b16 %v357, %v341
  %v406 = vpack.c.b16 %v358, %v342
  %v407 = vpack.c.b16 %v359, %v343
  %v408 = vpack.c.b16 %v360, %v344
  %v409 = vpack.c.b16 %v361, %v345
  %v410 = vpack.c.b16 %v362, %v346
  %v411 = vpack.c.b16 %v363, %v347
  %v412 = vpack.c.b16 %v364, %v348
  %v413 = vpack.c.b16 %v365, %v349
  %v414 = vpack.c.b16 %v382, %v366
  %v415 = vpack.c.b16 %v383, %v367
  %v416 = vpack.c.b16 %v384, %v368
  %v417 = vpack.c.b16 %v385, %v369
  %v418 = vpack.c.b16 %v386, %v370
  %v419 = vpack.c.b16 %v387, %v371
  %v420 = vpack.c.b16 %v388, %v372
  %v421 = vpack.c.b16 %v389, %v373
  %v422 = vpack.c.b16 %v390, %v374
  %v423 = vpack.c.b16 %v391, %v375
  %v424 = vpack.c.b16 %v392, %v376
  %v425 = vpack.c.b16 %v393, %v377
  %v426 = vpack.c.b16 %v394, %v378
  %v427 = vpack.c.b16 %v395, %v379
  %v428 = vpack.c.b16 %v396, %v380
  %v429 = vpack.c.b16 %v397, %v381
  %v718 = vunpack.c.l.b16 %v46
  %v719 = vunpack.c.h.b16 %v46
  %v720 = vunpack.c.l.b16 %v47
  %v721 = vunpack.c.h.b16 %v47
  %v722 = vunpack.c.l.b16 %v48
  %v723 = vunpack.c.h.b16 %v48
  %v724 = vunpack.c.l.b16 %v49
  %v725 = vunpack.c.h.b16 %v49
  %v726 = vunpack.c.l.b16 %v50
  %v727 = vunpack.c.h.b16 %v50
  %v728 = vunpack.c.l.b16 %v51
  %v729 = vunpack.c.h.b16 %v51
  %v730 = vunpack.c.l.b16 %v52
  %v731 = vunpack.c.h.b16 %v52
  %v732 = vunpack.c.l.b16 %v53
  %v733 = vunpack.c.h.b16 %v53
  %v734 = vunpack.c.l.b16 %v54
  %v735 = vunpack.c.h.b16 %v54
  %v736 = vunpack.c.l.b16 %v55
  %v737 = vunpack.c.h.b16 %v55
  %v738 = vunpack.c.l.b16 %v56
  %v739 = vunpack.c.h.b16 %v56
  %v740 = vunpack.c.l.b16 %v57
  %v741 = vunpack.c.h.b16 %v57
  %v742 = vunpack.c.l.b16 %v58
  %v743 = vunpack.c.h.b16 %v58
  %v744 = vunpack.c.l.b16 %v59
  %v745 = vunpack.c.h.b16 %v59
  %v746 = vunpack.c.l.b16 %v60
  %v747 = vunpack.c.h.b16 %v60
  %v748 = vunpack.c.l.b16 %v61
  %v749 = vunpack.c.h.b16 %v61
  %v750 = vunpack.c.l.b16 %v62
  %v751 = vunpack.c.h.b16 %v62
  %v752 = vunpack.c.l.b16 %v63
  %v753 = vunpack.c.h.b16 %v63
  %v754 = vunpack.c.l.b16 %v64
  %v755 = vunpack.c.h.b16 %v64
  %v756 = vunpack.c.l.b16 %v65
  %v757 = vunpack.c.h.b16 %v65
  %v758 = vunpack.c.l.b16 %v66
  %v759 = vunpack.c.h.b16 %v66
  %v760 = vunpack.c.l.b16 %v67
  %v761 = vunpack.c.h.b16 %v67
  %v762 = vunpack.c.l.b16 %v68
  %v763 = vunpack.c.h.b16 %v68
  %v764 = vunpack.c.l.b16 %v69
  %v765 = vunpack.c.h.b16 %v69
  %v766 = vunpack.c.l.b16 %v70
  %v767 = vunpack.c.h.b16 %v70
  %v768 = vunpack.c.l.b16 %v71
  %v769 = vunpack.c.h.b16 %v71
  %v770 = vunpack.c.l.b16 %v72
  %v771 = vunpack.c.h.b16 %v72
  %v772 = vunpack.c.l.b16 %v73
  %v773 = vunpack.c.h.b16 %v73
  %v774 = vunpack.c.l.b16 %v74
  %v775 = vunpack.c.h.b16 %v74
  %v776 = vunpack.c.l.b16 %v75
  %v777 = vunpack.c.h.b16 %v75
  %v778 = vunpack.c.l.b16 %v76
  %v779 = vunpack.c.h.b16 %v76
  %v780 = vunpack.c.l.b16 %v77
  %v781 = vunpack.c.h.b16 %v77
  %v782 = vunpack.c.l.b16 %v78
  %v783 = vunpack.c.h.b16 %v78
  %v784 = vunpack.c.l.b16 %v79
  %v785 = vunpack.c.h.b16 %v79
  %v786 = vunpack.c.l.b16 %v80
  %v787 = vunpack.c.h.b16 %v80
  %v788 = vunpack.c.l.b16 %v81
  %v789 = vunpack.c.h.b16 %v81
  %v790 = vunpack.c.l.b16 %v82
  %v791 = vunpack.c.h.b16 %v82
  %v792 = vunpack.c.l.b16 %v83
  %v793 = vunpack.c.h.b16 %v83
  %v794 = vunpack.c.l.b16 %v84
  %v795 = vunpack.c.h.b16 %v84
  %v796 = vunpack.c.l.b16 %v85
  %v797 = vunpack.c.h.b16 %v85
  %v798 = vunpack.c.l.b16 %v86
  %v799 = vunpack.c.h.b16 %v86
  %v800 = vunpack.c.l.b16 %v87
  %v801 = vunpack.c.h.b16 %v87
  %v802 = vunpack.c.l.b16 %v88
  %v803 = vunpack.c.h.b16 %v88
  %v804 = vunpack.c.l.b16 %v89
  %v805 = vunpack.c.h.b16 %v89
  %v806 = vunpack.c.l.b16 %v90
  %v807 = vunpack.c.h.b16 %v90
  %v808 = vunpack.c.l.b16 %v91
  %v809 = vunpack.c.h.b16 %v91
  %v810 = vunpack.c.l.b16 %v92
  %v811 = vunpack.c.h.b16 %v92
  %v812 = vunpack.c.l.b16 %v93
  %v813 = vunpack.c.h.b16 %v93
  %v814 = vunpack.c.l.b16 %v94
  %v815 = vunpack.c.h.b16 %v94
  %v816 = vunpack.c.l.b16 %v95
  %v817 = vunpack.c.h.b16 %v95
  %v818 = vunpack.c.l.b16 %v96
  %v819 = vunpack.c.h.b16 %v96
  %v820 = vunpack.c.l.b16 %v97
  %v821 = vunpack.c.h.b16 %v97
  %v822 = vunpack.c.l.b16 %v98
  %v823 = vunpack.c.h.b16 %v98
  %v824 = vunpack.c.l.b16 %v99
  %v825 = vunpack.c.h.b16 %v99
  %v826 = vunpack.c.l.b16 %v100
  %v827 = vunpack.c.h.b16 %v100
  %v828 = vunpack.c.l.b16 %v101
  %v829 = vunpack.c.h.b16 %v101
  %v830 = vunpack.c.l.b16 %v102
  %v831 = vunpack.c.h.b16 %v102
  %v832 = vunpack.c.l.b16 %v103
  %v833 = vunpack.c.h.b16 %v103
  %v834 = vunpack.c.l.b16 %v104
  %v835 = vunpack.c.h.b16 %v104
  %v836 = vunpack.c.l.b16 %v105
  %v837 = vunpack.c.h.b16 %v105
  %v838 = vunpack.c.l.b16 %v106
  %v839 = vunpack.c.h.b16 %v106
  %v840 = vunpack.c.l.b16 %v107
  %v841 = vunpack.c.h.b16 %v107
  %v842 = vunpack.c.l.b16 %v108
  %v843 = vunpack.c.h.b16 %v108
  %v844 = vunpack.c.l.b16 %v109
  %v845 = vunpack.c.h.b16 %v109
  %v846 = vunpack.c.l.b16 %v110
  %v847 = vunpack.c.h.b16 %v110
  %v848 = vunpack.c.l.b16 %v111
  %v849 = vunpack.c.h.b16 %v111
  %v850 = vunpack.c.l.b16 %v112
  %v851 = vunpack.c.h.b16 %v112
  %v852 = vunpack.c.l.b16 %v113
  %v853 = vunpack.c.h.b16 %v113
  %v854 = vunpack.c.l.b16 %v114
  %v855 = vunpack.c.h.b16 %v114
  %v856 = vunpack.c.l.b16 %v115
  %v857 = vunpack.c.h.b16 %v115
  %v858 = vunpack.c.l.b16 %v116
  %v859 = vunpack.c.h.b16 %v116
  %v860 = vunpack.c.l.b16 %v117
  %v861 = vunpack.c.h.b16 %v117
  %v862 = vunpack.c.l.b16 %v118
  %v863 = vunpack.c.h.b16 %v118
  %v864 = vunpack.c.l.b16 %v119
  %v865 = vunpack.c.h.b16 %v119
  %v866 = vunpack.c.l.b16 %v120
  %v867 = vunpack.c.h.b16 %v120
  %v868 = vunpack.c.l.b16 %v121
  %v869 = vunpack.c.h.b16 %v121
  %v870 = vunpack.c.l.b16 %v122
  %v871 = vunpack.c.h.b16 %v122
  %v872 = vunpack.c.l.b16 %v123
  %v873 = vunpack.c.h.b16 %v123
  %v874 = vunpack.c.l.b16 %v124
  %v875 = vunpack.c.h.b16 %v124
  %v876 = vunpack.c.l.b16 %v125
  %v877 = vunpack.c.h.b16 %v125
  %v878 = vunpack.c.l.b16 %v126
  %v879 = vunpack.c.h.b16 %v126
  %v880 = vunpack.c.l.b16 %v127
  %v881 = vunpack.c.h.b16 %v127
  %v882 = vunpack.c.l.b16 %v128
  %v883 = vunpack.c.h.b16 %v128
  %v884 = vunpack.c.l.b16 %v129
  %v885 = vunpack.c.h.b16 %v129
  %v886 = vunpack.c.l.b16 %v130
  %v887 = vunpack.c.h.b16 %v130
  %v888 = vunpack.c.l.b16 %v131
  %v889 = vunpack.c.h.b16 %v131
  %v890 = vunpack.c.l.b16 %v132
  %v891 = vunpack.c.h.b16 %v132
  %v892 = vunpack.c.l.b16 %v133
  %v893 = vunpack.c.h.b16 %v133
  %v894 = vunpack.c.l.b16 %v134
  %v895 = vunpack.c.h.b16 %v134
  %v896 = vunpack.c.l.b16 %v135
  %v897 = vunpack.c.h.b16 %v135
  %v898 = vunpack.c.l.b16 %v136
  %v899 = vunpack.c.h.b16 %v136
  %v900 = vunpack.c.l.b16 %v137
  %v901 = vunpack.c.h.b16 %v137
  %v902 = vunpack.c.l.b16 %v138
  %v903 = vunpack.c.h.b16 %v138
  %v904 = vunpack.c.l.b16 %v139
  %v905 = vunpack.c.h.b16 %v139
  %v906 = vunpack.c.l.b16 %v140
  %v907 = vunpack.c.h.b16 %v140
  %v908 = vunpack.c.l.b16 %v141
  %v909 = vunpack.c.h.b16 %v141
  %v910 = vunpack.c.l.b16 %v142
  %v911 = vunpack.c.h.b16 %v142
  %v912 = vunpack.c.l.b16 %v143
  %v913 = vunpack.c.h.b16 %v143
  %v914 = vunpack.c.l.b16 %v144
  %v915 = vunpack.c.h.b16 %v144
  %v916 = vunpack.c.l.b16 %v145
  %v917 = vunpack.c.h.b16 %v145
  %v918 = vunpack.c.l.b16 %v146
  %v919 = vunpack.c.h.b16 %v146
  %v920 = vunpack.c.l.b16 %v147
  %v921 = vunpack.c.h.b16 %v147
  %v922 = vunpack.c.l.b16 %v148
  %v923 = vunpack.c.h.b16 %v148
  %v924 = vunpack.c.l.b16 %v149
  %v925 = vunpack.c.h.b16 %v149
  %v926 = vunpack.c.l.b16 %v150
  %v927 = vunpack.c.h.b16 %v150
  %v928 = vunpack.c.l.b16 %v151
  %v929 = vunpack.c.h.b16 %v151
  %v930 = vunpack.c.l.b16 %v152
  %v931 = vunpack.c.h.b16 %v152
  %v932 = vunpack.c.l.b16 %v153
  %v933 = vunpack.c.h.b16 %v153
  %v934 = vunpack.c.l.b16 %v154
  %v935 = vunpack.c.h.b16 %v154
  %v936 = vunpack.c.l.b16 %v155
  %v937 = vunpack.c.h.b16 %v155
  %v938 = vunpack.c.l.b16 %v156
  %v939 = vunpack.c.h.b16 %v156
  %v940 = vunpack.c.l.b16 %v157
  %v941 = vunpack.c.h.b16 %v157
  %v942 = vunpack.c.l.b16 %v158
  %v943 = vunpack.c.h.b16 %v158
  %v944 = vunpack.c.l.b16 %v159
  %v945 = vunpack.c.h.b16 %v159
  %v946 = vunpack.c.l.b16 %v160
  %v947 = vunpack.c.h.b16 %v160
  %v948 = vunpack.c.l.b16 %v161
  %v949 = vunpack.c.h.b16 %v161
  %v950 = vunpack.c.l.b16 %v162
  %v951 = vunpack.c.h.b16 %v162
  %v952 = vunpack.c.l.b16 %v163
  %v953 = vunpack.c.h.b16 %v163
  %v954 = vunpack.c.l.b16 %v164
  %v955 = vunpack.c.h.b16 %v164
  %v956 = vunpack.c.l.b16 %v165
  %v957 = vunpack.c.h.b16 %v165
  %v958 = vunpack.c.l.b16 %v166
  %v959 = vunpack.c.h.b16 %v166
  %v960 = vunpack.c.l.b16 %v167
  %v961 = vunpack.c.h.b16 %v167
  %v962 = vunpack.c.l.b16 %v168
  %v963 = vunpack.c.h.b16 %v168
  %v964 = vunpack.c.l.b16 %v169
  %v965 = vunpack.c.h.b16 %v169
  %v966 = vunpack.c.l.b16 %v170
  %v967 = vunpack.c.h.b16 %v170
  %v968 = vunpack.c.l.b16 %v171
  %v969 = vunpack.c.h.b16 %v171
  %v970 = vunpack.c.l.b16 %v172
  %v971 = vunpack.c.h.b16 %v172
  %v972 = vunpack.c.l.b16 %v173
  %v973 = vunpack.c.h.b16 %v173
  %v974 = vunpack.c.l.b16 %v174
  %v975 = vunpack.c.h.b16 %v174
  %v976 = vunpack.c.l.b16 %v175
  %v977 = vunpack.c.h.b16 %v175
  %v978 = vunpack.c.l.b16 %v176
  %v979 = vunpack.c.h.b16 %v176
  %v980 = vunpack.c.l.b16 %v177
  %v981 = vunpack.c.h.b16 %v177
  %v982 = vunpack.c.l.b16 %v178
  %v983 = vunpack.c.h.b16 %v178
  %v984 = vunpack.c.l.b16 %v179
  %v985 = vunpack.c.h.b16 %v179
  %v986 = vunpack.c.l.b16 %v180
  %v987 = vunpack.c.h.b16 %v180
  %v988 = vunpack.c.l.b16 %v181
  %v989 = vunpack.c.h.b16 %v181
  %v990 = vunpack.c.l.b16 %v182
  %v991 = vunpack.c.h.b16 %v182
  %v992 = vunpack.c.l.b16 %v183
  %v993 = vunpack.c.h.b16 %v183
  %v994 = vunpack.c.l.b16 %v184
  %v995 = vunpack.c.h.b16 %v184
  %v996 = vunpack.c.l.b16 %v185
  %v997 = vunpack.c.h.b16 %v185
  %v998 = vunpack.c.l.b16 %v186
  %v999 = vunpack.c.h.b16 %v186
  %v1000 = vunpack.c.l.b16 %v187
  %v1001 = vunpack.c.h.b16 %v187
  %v1002 = vunpack.c.l.b16 %v188
  %v1003 = vunpack.c.h.b16 %v188
  %v1004 = vunpack.c.l.b16 %v189
  %v1005 = vunpack.c.h.b16 %v189
  %v1006 = vunpack.c.l.b16 %v190
  %v1007 = vunpack.c.h.b16 %v190
  %v1008 = vunpack.c.l.b16 %v191
  %v1009 = vunpack.c.h.b16 %v191
  %v1010 = vunpack.c.l.b16 %v192
  %v1011 = vunpack.c.h.b16 %v192
  %v1012 = vunpack.c.l.b16 %v193
  %v1013 = vunpack.c.h.b16 %v193
  %v1014 = vunpack.c.l.b16 %v194
  %v1015 = vunpack.c.h.b16 %v194
  %v1016 = vunpack.c.l.b16 %v195
  %v1017 = vunpack.c.h.b16 %v195
  %v1018 = vunpack.c.l.b16 %v196
  %v1019 = vunpack.c.h.b16 %v196
  %v1020 = vunpack.c.l.b16 %v197
  %v1021 = vunpack.c.h.b16 %v197
  %v1022 = vunpack.c.l.b16 %v198
  %v1023 = vunpack.c.h.b16 %v198
  %v1024 = vunpack.c.l.b16 %v199
  %v1025 = vunpack.c.h.b16 %v199
  %v1026 = vunpack.c.l.b16 %v200
  %v1027 = vunpack.c.h.b16 %v200
  %v1028 = vunpack.c.l.b16 %v201
  %v1029 = vunpack.c.h.b16 %v201
  %v1030 = vunpack.c.l.b16 %v202
  %v1031 = vunpack.c.h.b16 %v202
  %v1032 = vunpack.c.l.b16 %v203
  %v1033 = vunpack.c.h.b16 %v203
  %v1034 = vunpack.c.l.b16 %v204
  %v1035 = vunpack.c.h.b16 %v204
  %v1036 = vunpack.c.l.b16 %v205
  %v1037 = vunpack.c.h.b16 %v205
  %v1038 = vunpack.c.l.b16 %v206
  %v1039 = vunpack.c.h.b16 %v206
  %v1040 = vunpack.c.l.b16 %v207
  %v1041 = vunpack.c.h.b16 %v207
  %v1042 = vunpack.c.l.b16 %v208
  %v1043 = vunpack.c.h.b16 %v208
  %v1044 = vunpack.c.l.b16 %v209
  %v1045 = vunpack.c.h.b16 %v209
  %v1046 = vunpack.c.l.b16 %v210
  %v1047 = vunpack.c.h.b16 %v210
  %v1048 = vunpack.c.l.b16 %v211
  %v1049 = vunpack.c.h.b16 %v211
  %v1050 = vunpack.c.l.b16 %v212
  %v1051 = vunpack.c.h.b16 %v212
  %v1052 = vunpack.c.l.b16 %v213
  %v1053 = vunpack.c.h.b16 %v213
  %v1054 = vunpack.c.l.b16 %v214
  %v1055 = vunpack.c.h.b16 %v214
  %v1056 = vunpack.c.l.b16 %v215
  %v1057 = vunpack.c.h.b16 %v215
  %v1058 = vunpack.c.l.b16 %v216
  %v1059 = vunpack.c.h.b16 %v216
  %v1060 = vunpack.c.l.b16 %v217
  %v1061 = vunpack.c.h.b16 %v217
  %v1062 = vunpack.c.l.b16 %v218
  %v1063 = vunpack.c.h.b16 %v218
  %v1064 = vunpack.c.l.b16 %v219
  %v1065 = vunpack.c.h.b16 %v219
  %v1066 = vunpack.c.l.b16 %v220
  %v1067 = vunpack.c.h.b16 %v220
  %v1068 = vunpack.c.l.b16 %v221
  %v1069 = vunpack.c.h.b16 %v221
  %v1070 = vunpack.c.l.b16 %v222
  %v1071 = vunpack.c.h.b16 %v222
  %v1072 = vunpack.c.l.b16 %v223
  %v1073 = vunpack.c.h.b16 %v223
  %v1074 = vunpack.c.l.b16 %v224
  %v1075 = vunpack.c.h.b16 %v224
  %v1076 = vunpack.c.l.b16 %v225
  %v1077 = vunpack.c.h.b16 %v225
  %v1078 = vunpack.c.l.b16 %v226
  %v1079 = vunpack.c.h.b16 %v226
  %v1080 = vunpack.c.l.b16 %v227
  %v1081 = vunpack.c.h.b16 %v227
  %v1082 = vunpack.c.l.b16 %v228
  %v1083 = vunpack.c.h.b16 %v228
  %v1084 = vunpack.c.l.b16 %v229
  %v1085 = vunpack.c.h.b16 %v229
  %v1086 = vunpack.c.l.b16 %v230
  %v1087 = vunpack.c.h.b16 %v230
  %v1088 = vunpack.c.l.b16 %v231
  %v1089 = vunpack.c.h.b16 %v231
  %v1090 = vunpack.c.l.b16 %v232
  %v1091 = vunpack.c.h.b16 %v232
  %v1092 = vunpack.c.l.b16 %v233
  %v1093 = vunpack.c.h.b16 %v233
  %v1094 = vunpack.c.l.b16 %v234
  %v1095 = vunpack.c.h.b16 %v234
  %v1096 = vunpack.c.l.b16 %v235
  %v1097 = vunpack.c.h.b16 %v235
  %v1098 = vunpack.c.l.b16 %v236
  %v1099 = vunpack.c.h.b16 %v236
  %v1100 = vunpack.c.l.b16 %v237
  %v1101 = vunpack.c.h.b16 %v237
  %v1102 = vunpack.c.l.b16 %v238
  %v1103 = vunpack.c.h.b16 %v238
  %v1104 = vunpack.c.l.b16 %v239
  %v1105 = vunpack.c.h.b16 %v239
  %v1106 = vunpack.c.l.b16 %v240
  %v1107 = vunpack.c.h.b16 %v240
  %v1108 = vunpack.c.l.b16 %v241
  %v1109 = vunpack.c.h.b16 %v241
  %v1110 = vunpack.c.l.b16 %v242
  %v1111 = vunpack.c.h.b16 %v242
  %v1112 = vunpack.c.l.b16 %v243
  %v1113 = vunpack.c.h.b16 %v243
  %v1114 = vunpack.c.l.b16 %v244
  %v1115 = vunpack.c.h.b16 %v244
  %v1116 = vunpack.c.l.b16 %v245
  %v1117 = vunpack.c.h.b16 %v245
  %v1118 = vunpack.c.l.b16 %v246
  %v1119 = vunpack.c.h.b16 %v246
  %v1120 = vunpack.c.l.b16 %v247
  %v1121 = vunpack.c.h.b16 %v247
  %v1122 = vunpack.c.l.b16 %v248
  %v1123 = vunpack.c.h.b16 %v248
  %v1124 = vunpack.c.l.b16 %v249
  %v1125 = vunpack.c.h.b16 %v249
  %v1126 = vunpack.c.l.b16 %v250
  %v1127 = vunpack.c.h.b16 %v250
  %v1128 = vunpack.c.l.b16 %v251
  %v1129 = vunpack.c.h.b16 %v251
  %v1130 = vunpack.c.l.b16 %v252
  %v1131 = vunpack.c.h.b16 %v252
  %v1132 = vunpack.c.l.b16 %v253
  %v1133 = vunpack.c.h.b16 %v253
  %v1134 = vunpack.c.l.b16 %v254
  %v1135 = vunpack.c.h.b16 %v254
  %v1136 = vunpack.c.l.b16 %v255
  %v1137 = vunpack.c.h.b16 %v255
  %v1138 = vunpack.c.l.b16 %v256
  %v1139 = vunpack.c.h.b16 %v256
  %v1140 = vunpack.c.l.b16 %v257
  %v1141 = vunpack.c.h.b16 %v257
  %v1142 = vunpack.c.l.b16 %v258
  %v1143 = vunpack.c.h.b16 %v258
  %v1144 = vunpack.c.l.b16 %v259
  %v1145 = vunpack.c.h.b16 %v259
  %v1146 = vunpack.c.l.b16 %v260
  %v1147 = vunpack.c.h.b16 %v260
  %v1148 = vunpack.c.l.b16 %v261
  %v1149 = vunpack.c.h.b16 %v261
  %v1150 = vunpack.c.l.b16 %v262
  %v1151 = vunpack.c.h.b16 %v262
  %v1152 = vunpack.c.l.b16 %v263
  %v1153 = vunpack.c.h.b16 %v263
  %v1154 = vunpack.c.l.b16 %v264
  %v1155 = vunpack.c.h.b16 %v264
  %v1156 = vunpack.c.l.b16 %v265
  %v1157 = vunpack.c.h.b16 %v265
  %v1158 = vunpack.c.l.b16 %v266
  %v1159 = vunpack.c.h.b16 %v266
  %v1160 = vunpack.c.l.b16 %v267
  %v1161 = vunpack.c.h.b16 %v267
  %v1162 = vunpack.c.l.b16 %v268
  %v1163 = vunpack.c.h.b16 %v268
  %v1164 = vunpack.c.l.b16 %v269
  %v1165 = vunpack.c.h.b16 %v269
  %v1166 = vunpack.c.l.b16 %v270
  %v1167 = vunpack.c.h.b16 %v270
  %v1168 = vunpack.c.l.b16 %v271
  %v1169 = vunpack.c.h.b16 %v271
  %v1170 = vunpack.c.l.b16 %v272
  %v1171 = vunpack.c.h.b16 %v272
  %v1172 = vunpack.c.l.b16 %v273
  %v1173 = vunpack.c.h.b16 %v273
  %v1174 = vunpack.c.l.b16 %v274
  %v1175 = vunpack.c.h.b16 %v274
  %v1176 = vunpack.c.l.b16 %v275
  %v1177 = vunpack.c.h.b16 %v275
  %v1178 = vunpack.c.l.b16 %v276
  %v1179 = vunpack.c.h.b16 %v276
  %v1180 = vunpack.c.l.b16 %v277
  %v1181 = vunpack.c.h.b16 %v277
  %v1182 = vunpack.c.l.b16 %v278
  %v1183 = vunpack.c.h.b16 %v278
  %v1184 = vunpack.c.l.b16 %v279
  %v1185 = vunpack.c.h.b16 %v279
  %v1186 = vunpack.c.l.b16 %v280
  %v1187 = vunpack.c.h.b16 %v280
  %v1188 = vunpack.c.l.b16 %v281
  %v1189 = vunpack.c.h.b16 %v281
  %v1190 = vunpack.c.l.b16 %v282
  %v1191 = vunpack.c.h.b16 %v282
  %v1192 = vunpack.c.l.b16 %v283
  %v1193 = vunpack.c.h.b16 %v283
  %v1194 = vunpack.c.l.b16 %v284
  %v1195 = vunpack.c.h.b16 %v284
  %v1196 = vunpack.c.l.b16 %v285
  %v1197 = vunpack.c.h.b16 %v285
  %v1198 = vunpack.c.l.b16 %v286
  %v1199 = vunpack.c.h.b16 %v286
  %v1200 = vunpack.c.l.b16 %v287
  %v1201 = vunpack.c.h.b16 %v287
  %v1202 = vunpack.c.l.b16 %v288
  %v1203 = vunpack.c.h.b16 %v288
  %v1204 = vunpack.c.l.b16 %v289
  %v1205 = vunpack.c.h.b16 %v289
  %v1206 = vunpack.c.l.b16 %v290
  %v1207 = vunpack.c.h.b16 %v290
  %v1208 = vunpack.c.l.b16 %v291
  %v1209 = vunpack.c.h.b16 %v291
  %v1210 = vunpack.c.l.b16 %v292
  %v1211 = vunpack.c.h.b16 %v292
  %v1212 = vunpack.c.l.b16 %v293
  %v1213 = vunpack.c.h.b16 %v293
  %v1214 = vunpack.c.l.b16 %v294
  %v1215 = vunpack.c.h.b16 %v294
  %v1216 = vunpack.c.l.b16 %v295
  %v1217 = vunpack.c.h.b16 %v295
  %v1218 = vunpack.c.l.b16 %v296
  %v1219 = vunpack.c.h.b16 %v296
  %v1220 = vunpack.c.l.b16 %v297
  %v1221 = vunpack.c.h.b16 %v297
  %v1222 = vunpack.c.l.b16 %v298
  %v1223 = vunpack.c.h.b16 %v298
  %v1224 = vunpack.c.l.b16 %v299
  %v1225 = vunpack.c.h.b16 %v299
  %v1226 = vunpack.c.l.b16 %v300
  %v1227 = vunpack.c.h.b16 %v300
  %v1228 = vunpack.c.l.b16 %v301
  %v1229 = vunpack.c.h.b16 %v301
  %v1230 = vpack.c.b16 %v720, %v718
  %v1231 = vpack.c.b16 %v721, %v719
  %v1232 = vpack.c.b16 %v724, %v722
  %v1233 = vpack.c.b16 %v725, %v723
  %v1234 = vpack.c.b16 %v728, %v726
  %v1235 = vpack.c.b16 %v729, %v727
  %v1236 = vpack.c.b16 %v732, %v730
  %v1237 = vpack.c.b16 %v733, %v731
  %v1238 = vpack.c.b16 %v736, %v734
  %v1239 = vpack.c.b16 %v737, %v735
  %v1240 = vpack.c.b16 %v740, %v738
  %v1241 = vpack.c.b16 %v741, %v739
  %v1242 = vpack.c.b16 %v744, %v742
  %v1243 = vpack.c.b16 %v745, %v743
  %v1244 = vpack.c.b16 %v748, %v746
  %v1245 = vpack.c.b16 %v749, %v747
  %v1246 = vpack.c.b16 %v752, %v750
  %v1247 = vpack.c.b16 %v753, %v751
  %v1248 = vpack.c.b16 %v756, %v754
  %v1249 = vpack.c.b16 %v757, %v755
  %v1250 = vpack.c.b16 %v760, %v758
  %v1251 = vpack.c.b16 %v761, %v759
  %v1252 = vpack.c.b16 %v764, %v762
  %v1253 = vpack.c.b16 %v765, %v763
  %v1254 = vpack.c.b16 %v768, %v766
  %v1255 = vpack.c.b16 %v769, %v767
  %v1256 = vpack.c.b16 %v772, %v770
  %v1257 = vpack.c.b16 %v773, %v771
  %v1258 = vpack.c.b16 %v776, %v774
  %v1259 = vpack.c.b16 %v777, %v775
  %v1260 = vpack.c.b16 %v780, %v778
  %v1261 = vpack.c.b16 %v781, %v779
  %v1262 = vpack.c.b16 %v784, %v782
  %v1263 = vpack.c.b16 %v785, %v783
  %v1264 = vpack.c.b16 %v788, %v786
  %v1265 = vpack.c.b16 %v789, %v787
  %v1266 = vpack.c.b16 %v792, %v790
  %v1267 = vpack.c.b16 %v793, %v791
  %v1268 = vpack.c.b16 %v796, %v794
  %v1269 = vpack.c.b16 %v797, %v795
  %v1270 = vpack.c.b16 %v800, %v798
  %v1271 = vpack.c.b16 %v801, %v799
  %v1272 = vpack.c.b16 %v804, %v802
  %v1273 = vpack.c.b16 %v805, %v803
  %v1274 = vpack.c.b16 %v808, %v806
  %v1275 = vpack.c.b16 %v809, %v807
  %v1276 = vpack.c.b16 %v812, %v810
  %v1277 = vpack.c.b16 %v813, %v811
  %v1278 = vpack.c.b16 %v816, %v814
  %v1279 = vpack.c.b16 %v817, %v815
  %v1280 = vpack.c.b16 %v820, %v818
  %v1281 = vpack.c.b16 %v821, %v819
  %v1282 = vpack.c.b16 %v824, %v822
  %v1283 = vpack.c.b16 %v825, %v823
  %v1284 = vpack.c.b16 %v828, %v826
  %v1285 = vpack.c.b16 %v829, %v827
  %v1286 = vpack.c.b16 %v832, %v830
  %v1287 = vpack.c.b16 %v833, %v831
  %v1288 = vpack.c.b16 %v836, %v834
  %v1289 = vpack.c.b16 %v837, %v835
  %v1290 = vpack.c.b16 %v840, %v838
  %v1291 = vpack.c.b16 %v841, %v839
  %v1292 = vpack.c.b16 %v844, %v842
  %v1293 = vpack.c.b16 %v845, %v843
  %v1294 = vpack.c.b16 %v848, %v846
  %v1295 = vpack.c.b16 %v849, %v847
  %v1296 = vpack.c.b16 %v852, %v850
  %v1297 = vpack.c.b16 %v853, %v851
  %v1298 = vpack.c.b16 %v856, %v854
  %v1299 = vpack.c.b16 %v857, %v855
  %v1300 = vpack.c.b16 %v860, %v858
  %v1301 = vpack.c.b16 %v861, %v859
  %v1302 = vpack.c.b16 %v864, %v862
  %v1303 = vpack.c.b16 %v865, %v863
  %v1304 = vpack.c.b16 %v868, %v866
  %v1305 = vpack.c.b16 %v869, %v867
  %v1306 = vpack.c.b16 %v872, %v870
  %v1307 = vpack.c.b16 %v873, %v871
  %v1308 = vpack.c.b16 %v876, %v874
  %v1309 = vpack.c.b16 %v877, %v875
  %v1310 = vpack.c.b16 %v880, %v878
  %v1311 = vpack.c.b16 %v881, %v879
  %v1312 = vpack.c.b16 %v884, %v882
  %v1313 = vpack.c.b16 %v885, %v883
  %v1314 = vpack.c.b16 %v888, %v886
  %v1315 = vpack.c.b16 %v889, %v887
  %v1316 = vpack.c.b16 %v892, %v890
  %v1317 = vpack.c.b16 %v893, %v891
  %v1318 = vpack.c.b16 %v896, %v894
  %v1319 = vpack.c.b16 %v897, %v895
  %v1320 = vpack.c.b16 %v900, %v898
  %v1321 = vpack.c.b16 %v901, %v899
  %v1322 = vpack.c.b16 %v904, %v902
  %v1323 = vpack.c.b16 %v905, %v903
  %v1324 = vpack.c.b16 %v908, %v906
  %v1325 = vpack.c.b16 %v909, %v907
  %v1326 = vpack.c.b16 %v912, %v910
  %v1327 = vpack.c.b16 %v913, %v911
  %v1328 = vpack.c.b16 %v916, %v914
  %v1329 = vpack.c.b16 %v917, %v915
  %v1330 = vpack.c.b16 %v920, %v918
  %v1331 = vpack.c.b16 %v921, %v919
  %v1332 = vpack.c.b16 %v924, %v922
  %v1333 = vpack.c.b16 %v925, %v923
  %v1334 = vpack.c.b16 %v928, %v926
  %v1335 = vpack.c.b16 %v929, %v927
  %v1336 = vpack.c.b16 %v932, %v930
  %v1337 = vpack.c.b16 %v933, %v931
  %v1338 = vpack.c.b16 %v936, %v934
  %v1339 = vpack.c.b16 %v937, %v935
  %v1340 = vpack.c.b16 %v940, %v938
  %v1341 = vpack.c.b16 %v941, %v939
  %v1342 = vpack.c.b16 %v944, %v942
  %v1343 = vpack.c.b16 %v945, %v943
  %v1344 = vpack.c.b16 %v948, %v946
  %v1345 = vpack.c.b16 %v949, %v947
  %v1346 = vpack.c.b16 %v952, %v950
  %v1347 = vpack.c.b16 %v953, %v951
  %v1348 = vpack.c.b16 %v956, %v954
  %v1349 = vpack.c.b16 %v957, %v955
  %v1350 = vpack.c.b16 %v960, %v958
  %v1351 = vpack.c.b16 %v961, %v959
  %v1352 = vpack.c.b16 %v964, %v962
  %v1353 = vpack.c.b16 %v965, %v963
  %v1354 = vpack.c.b16 %v968, %v966
  %v1355 = vpack.c.b16 %v969, %v967
  %v1356 = vpack.c.b16 %v972, %v970
  %v1357 = vpack.c.b16 %v973, %v971
  %v1358 = vpack.c.b16 %v976, %v974
  %v1359 = vpack.c.b16 %v977, %v975
  %v1360 = vpack.c.b16 %v980, %v978
  %v1361 = vpack.c.b16 %v981, %v979
  %v1362 = vpack.c.b16 %v984, %v982
  %v1363 = vpack.c.b16 %v985, %v983
  %v1364 = vpack.c.b16 %v988, %v986
  %v1365 = vpack.c.b16 %v989, %v987
  %v1366 = vpack.c.b16 %v992, %v990
  %v1367 = vpack.c.b16 %v993, %v991
  %v1368 = vpack.c.b16 %v996, %v994
  %v1369 = vpack.c.b16 %v997, %v995
  %v1370 = vpack.c.b16 %v1000, %v998
  %v1371 = vpack.c.b16 %v1001, %v999
  %v1372 = vpack.c.b16 %v1004, %v1002
  %v1373 = vpack.c.b16 %v1005, %v1003
  %v1374 = vpack.c.b16 %v1008, %v1006
  %v1375 = vpack.c.b16 %v1009, %v1007
  %v1376 = vpack.c.b16 %v1012, %v1010
  %v1377 = vpack.c.b16 %v1013, %v1011
  %v1378 = vpack.c.b16 %v1016, %v1014
  %v1379 = vpack.c.b16 %v1017, %v1015
  %v1380 = vpack.c.b16 %v1020, %v1018
  %v1381 = vpack.c.b16 %v1021, %v1019
  %v1382 = vpack.c.b16 %v1024, %v1022
  %v1383 = vpack.c.b16 %v1025, %v1023
  %v1384 = vpack.c.b16 %v1028, %v1026
  %v1385 = vpack.c.b16 %v1029, %v1027
  %v1386 = vpack.c.b16 %v1032, %v1030
  %v1387 = vpack.c.b16 %v1033, %v1031
  %v1388 = vpack.c.b16 %v1036, %v1034
  %v1389 = vpack.c.b16 %v1037, %v1035
  %v1390 = vpack.c.b16 %v1040, %v1038
  %v1391 = vpack.c.b16 %v1041, %v1039
  %v1392 = vpack.c.b16 %v1044, %v1042
  %v1393 = vpack.c.b16 %v1045, %v1043
  %v1394 = vpack.c.b16 %v1048, %v1046
  %v1395 = vpack.c.b16 %v1049, %v1047
  %v1396 = vpack.c.b16 %v1052, %v1050
  %v1397 = vpack.c.b16 %v1053, %v1051
  %v1398 = vpack.c.b16 %v1056, %v1054
  %v1399 = vpack.c.b16 %v1057, %v1055
  %v1400 = vpack.c.b16 %v1060, %v1058
  %v1401 = vpack.c.b16 %v1061, %v1059
  %v1402 = vpack.c.b16 %v1064, %v1062
  %v1403 = vpack.c.b16 %v1065, %v1063
  %v1404 = vpack.c.b16 %v1068, %v1066
  %v1405 = vpack.c.b16 %v1069, %v1067
  %v1406 = vpack.c.b16 %v1072, %v1070
  %v1407 = vpack.c.b16 %v1073, %v1071
  %v1408 = vpack.c.b16 %v1076, %v1074
  %v1409 = vpack.c.b16 %v1077, %v1075
  %v1410 = vpack.c.b16 %v1080, %v1078
  %v1411 = vpack.c.b16 %v1081, %v1079
  %v1412 = vpack.c.b16 %v1084, %v1082
  %v1413 = vpack.c.b16 %v1085, %v1083
  %v1414 = vpack.c.b16 %v1088, %v1086
  %v1415 = vpack.c.b16 %v1089, %v1087
  %v1416 = vpack.c.b16 %v1092, %v1090
  %v1417 = vpack.c.b16 %v1093, %v1091
  %v1418 = vpack.c.b16 %v1096, %v1094
  %v1419 = vpack.c.b16 %v1097, %v1095
  %v1420 = vpack.c.b16 %v1100, %v1098
  %v1421 = vpack.c.b16 %v1101, %v1099
  %v1422 = vpack.c.b16 %v1104, %v1102
  %v1423 = vpack.c.b16 %v1105, %v1103
  %v1424 = vpack.c.b16 %v1108, %v1106
  %v1425 = vpack.c.b16 %v1109, %v1107
  %v1426 = vpack.c.b16 %v1112, %v1110
  %v1427 = vpack.c.b16 %v1113, %v1111
  %v1428 = vpack.c.b16 %v1116, %v1114
  %v1429 = vpack.c.b16 %v1117, %v1115
  %v1430 = vpack.c.b16 %v1120, %v1118
  %v1431 = vpack.c.b16 %v1121, %v1119
  %v1432 = vpack.c.b16 %v1124, %v1122
  %v1433 = vpack.c.b16 %v1125, %v1123
  %v1434 = vpack.c.b16 %v1128, %v1126
  %v1435 = vpack.c.b16 %v1129, %v1127
  %v1436 = vpack.c.b16 %v1132, %v1130
  %v1437 = vpack.c.b16 %v1133, %v1131
  %v1438 = vpack.c.b16 %v1136, %v1134
  %v1439 = vpack.c.b16 %v1137, %v1135
  %v1440 = vpack.c.b16 %v1140, %v1138
  %v1441 = vpack.c.b16 %v1141, %v1139
  %v1442 = vpack.c.b16 %v1144, %v1142
  %v1443 = vpack.c.b16 %v1145, %v1143
  %v1444 = vpack.c.b16 %v1148, %v1146
  %v1445 = vpack.c.b16 %v1149, %v1147
  %v1446 = vpack.c.b16 %v1152, %v1150
  %v1447 = vpack.c.b16 %v1153, %v1151
  %v1448 = vpack.c.b16 %v1156, %v1154
  %v1449 = vpack.c.b16 %v1157, %v1155
  %v1450 = vpack.c.b16 %v1160, %v1158
  %v1451 = vpack.c.b16 %v1161, %v1159
  %v1452 = vpack.c.b16 %v1164, %v1162
  %v1453 = vpack.c.b16 %v1165, %v1163
  %v1454 = vpack.c.b16 %v1168, %v1166
  %v1455 = vpack.c.b16 %v1169, %v1167
  %v1456 = vpack.c.b16 %v1172, %v1170
  %v1457 = vpack.c.b16 %v1173, %v1171
  %v1458 = vpack.c.b16 %v1176, %v1174
  %v1459 = vpack.c.b16 %v1177, %v1175
  %v1460 = vpack.c.b16 %v1180, %v1178
  %v1461 = vpack.c.b16 %v1181, %v1179
  %v1462 = vpack.c.b16 %v1184, %v1182
  %v1463 = vpack.c.b16 %v1185, %v1183
  %v1464 = vpack.c.b16 %v1188, %v1186
  %v1465 = vpack.c.b16 %v1189, %v1187
  %v1466 = vpack.c.b16 %v1192, %v1190
  %v1467 = vpack.c.b16 %v1193, %v1191
  %v1468 = vpack.c.b16 %v1196, %v1194
  %v1469 = vpack.c.b16 %v1197, %v1195
  %v1470 = vpack.c.b16 %v1200, %v1198
  %v1471 = vpack.c.b16 %v1201, %v1199
  %v1472 = vpack.c.b16 %v1204, %v1202
  %v1473 = vpack.c.b16 %v1205, %v1203
  %v1474 = vpack.c.b16 %v1208, %v1206
  %v1475 = vpack.c.b16 %v1209, %v1207
  %v1476 = vpack.c.b16 %v1212, %v1210
  %v1477 = vpack.c.b16 %v1213, %v1211
  %v1478 = vpack.c.b16 %v1216, %v1214
  %v1479 = vpack.c.b16 %v1217, %v1215
  %v1480 = vpack.c.b16 %v1220, %v1218
  %v1481 = vpack.c.b16 %v1221, %v1219
  %v1482 = vpack.c.b16 %v1224, %v1222
  %v1483 = vpack.c.b16 %v1225, %v1223
  %v1484 = vpack.c.b16 %v1228, %v1226
  %v1485 = vpack.c.b16 %v1229, %v1227
  %1742 = vmatpush.bf16.msra.mxu0 %v1244
  %1743 = vmatpush.bf16.msra.mxu0 %v1242
  %1744 = vmatpush.bf16.msra.mxu0 %v1240
  %1745 = vmatpush.bf16.msra.mxu0 %v1238
  %1746 = vmatpush.bf16.msra.mxu0 %v1236
  %1747 = vmatpush.bf16.msra.mxu0 %v1234
  %1748 = vmatpush.bf16.msra.mxu0 %v1232
  %1749 = vmatpush.bf16.msra.mxu0 %v1230
  %1750 = vmatmul.bf16.gmra.mxu0 %v398
  %v1751 = vpop.f32.mrf.mxu0
  %v1752 = vadd.f32 0.0, %v1751
  %v1753 = vpop.f32.mrf.mxu0
  %v1754 = vadd.f32 0.0, %v1753
  %1755 = vmatmul.bf16.gmra.mxu0 %v414
  %v1756 = vpop.f32.mrf.mxu0
  %v1757 = vadd.f32 0.0, %v1756
  %v1758 = vpop.f32.mrf.mxu0
  %v1759 = vadd.f32 0.0, %v1758
  %1760 = vdwg.mxu0
  %1761 = vmatpush.bf16.msra.mxu0 %v1260
  %1762 = vmatpush.bf16.msra.mxu0 %v1258
  %1763 = vmatpush.bf16.msra.mxu0 %v1256
  %1764 = vmatpush.bf16.msra.mxu0 %v1254
  %1765 = vmatpush.bf16.msra.mxu0 %v1252
  %1766 = vmatpush.bf16.msra.mxu0 %v1250
  %1767 = vmatpush.bf16.msra.mxu0 %v1248
  %1768 = vmatpush.bf16.msra.mxu0 %v1246
  %1769 = vmatmul.bf16.gmra.mxu0 %v399
  %v1770 = vpop.f32.mrf.mxu0
  %v1771 = vadd.f32 %v1752, %v1770
  %v1772 = vpop.f32.mrf.mxu0
  %v1773 = vadd.f32 %v1754, %v1772
  %1774 = vmatmul.bf16.gmra.mxu0 %v415
  %v1775 = vpop.f32.mrf.mxu0
  %v1776 = vadd.f32 %v1757, %v1775
  %v1777 = vpop.f32.mrf.mxu0
  %v1778 = vadd.f32 %v1759, %v1777
  %1779 = vdwg.mxu0
  %1780 = vmatpush.bf16.msra.mxu0 %v1276
  %1781 = vmatpush.bf16.msra.mxu0 %v1274
  %1782 = vmatpush.bf16.msra.mxu0 %v1272
  %1783 = vmatpush.bf16.msra.mxu0 %v1270
  %1784 = vmatpush.bf16.msra.mxu0 %v1268
  %1785 = vmatpush.bf16.msra.mxu0 %v1266
  %1786 = vmatpush.bf16.msra.mxu0 %v1264
  %1787 = vmatpush.bf16.msra.mxu0 %v1262
  %1788 = vmatmul.bf16.gmra.mxu0 %v400
  %v1789 = vpop.f32.mrf.mxu0
  %v1790 = vadd.f32 %v1771, %v1789
  %v1791 = vpop.f32.mrf.mxu0
  %v1792 = vadd.f32 %v1773, %v1791
  %1793 = vmatmul.bf16.gmra.mxu0 %v416
  %v1794 = vpop.f32.mrf.mxu0
  %v1795 = vadd.f32 %v1776, %v1794
  %v1796 = vpop.f32.mrf.mxu0
  %v1797 = vadd.f32 %v1778, %v1796
  %1798 = vdwg.mxu0
  %1799 = vmatpush.bf16.msra.mxu0 %v1292
  %1800 = vmatpush.bf16.msra.mxu0 %v1290
  %1801 = vmatpush.bf16.msra.mxu0 %v1288
  %1802 = vmatpush.bf16.msra.mxu0 %v1286
  %1803 = vmatpush.bf16.msra.mxu0 %v1284
  %1804 = vmatpush.bf16.msra.mxu0 %v1282
  %1805 = vmatpush.bf16.msra.mxu0 %v1280
  %1806 = vmatpush.bf16.msra.mxu0 %v1278
  %1807 = vmatmul.bf16.gmra.mxu0 %v401
  %v1808 = vpop.f32.mrf.mxu0
  %v1809 = vadd.f32 %v1790, %v1808
  %v1810 = vpop.f32.mrf.mxu0
  %v1811 = vadd.f32 %v1792, %v1810
  %1812 = vmatmul.bf16.gmra.mxu0 %v417
  %v1813 = vpop.f32.mrf.mxu0
  %v1814 = vadd.f32 %v1795, %v1813
  %v1815 = vpop.f32.mrf.mxu0
  %v1816 = vadd.f32 %v1797, %v1815
  %1817 = vdwg.mxu0
  %1818 = vmatpush.bf16.msra.mxu0 %v1308
  %1819 = vmatpush.bf16.msra.mxu0 %v1306
  %1820 = vmatpush.bf16.msra.mxu0 %v1304
  %1821 = vmatpush.bf16.msra.mxu0 %v1302
  %1822 = vmatpush.bf16.msra.mxu0 %v1300
  %1823 = vmatpush.bf16.msra.mxu0 %v1298
  %1824 = vmatpush.bf16.msra.mxu0 %v1296
  %1825 = vmatpush.bf16.msra.mxu0 %v1294
  %1826 = vmatmul.bf16.gmra.mxu0 %v402
  %v1827 = vpop.f32.mrf.mxu0
  %v1828 = vadd.f32 %v1809, %v1827
  %v1829 = vpop.f32.mrf.mxu0
  %v1830 = vadd.f32 %v1811, %v1829
  %1831 = vmatmul.bf16.gmra.mxu0 %v418
  %v1832 = vpop.f32.mrf.mxu0
  %v1833 = vadd.f32 %v1814, %v1832
  %v1834 = vpop.f32.mrf.mxu0
  %v1835 = vadd.f32 %v1816, %v1834
  %1836 = vdwg.mxu0
  %1837 = vmatpush.bf16.msra.mxu0 %v1324
  %1838 = vmatpush.bf16.msra.mxu0 %v1322
  %1839 = vmatpush.bf16.msra.mxu0 %v1320
  %1840 = vmatpush.bf16.msra.mxu0 %v1318
  %1841 = vmatpush.bf16.msra.mxu0 %v1316
  %1842 = vmatpush.bf16.msra.mxu0 %v1314
  %1843 = vmatpush.bf16.msra.mxu0 %v1312
  %1844 = vmatpush.bf16.msra.mxu0 %v1310
  %1845 = vmatmul.bf16.gmra.mxu0 %v403
  %v1846 = vpop.f32.mrf.mxu0
  %v1847 = vadd.f32 %v1828, %v1846
  %v1848 = vpop.f32.mrf.mxu0
  %v1849 = vadd.f32 %v1830, %v1848
  %1850 = vmatmul.bf16.gmra.mxu0 %v419
  %v1851 = vpop.f32.mrf.mxu0
  %v1852 = vadd.f32 %v1833, %v1851
  %v1853 = vpop.f32.mrf.mxu0
  %v1854 = vadd.f32 %v1835, %v1853
  %1855 = vdwg.mxu0
  %1856 = vmatpush.bf16.msra.mxu0 %v1340
  %1857 = vmatpush.bf16.msra.mxu0 %v1338
  %1858 = vmatpush.bf16.msra.mxu0 %v1336
  %1859 = vmatpush.bf16.msra.mxu0 %v1334
  %1860 = vmatpush.bf16.msra.mxu0 %v1332
  %1861 = vmatpush.bf16.msra.mxu0 %v1330
  %1862 = vmatpush.bf16.msra.mxu0 %v1328
  %1863 = vmatpush.bf16.msra.mxu0 %v1326
  %1864 = vmatmul.bf16.gmra.mxu0 %v404
  %v1865 = vpop.f32.mrf.mxu0
  %v1866 = vadd.f32 %v1847, %v1865
  %v1867 = vpop.f32.mrf.mxu0
  %v1868 = vadd.f32 %v1849, %v1867
  %1869 = vmatmul.bf16.gmra.mxu0 %v420
  %v1870 = vpop.f32.mrf.mxu0
  %v1871 = vadd.f32 %v1852, %v1870
  %v1872 = vpop.f32.mrf.mxu0
  %v1873 = vadd.f32 %v1854, %v1872
  %1874 = vdwg.mxu0
  %1875 = vmatpush.bf16.msra.mxu0 %v1356
  %1876 = vmatpush.bf16.msra.mxu0 %v1354
  %1877 = vmatpush.bf16.msra.mxu0 %v1352
  %1878 = vmatpush.bf16.msra.mxu0 %v1350
  %1879 = vmatpush.bf16.msra.mxu0 %v1348
  %1880 = vmatpush.bf16.msra.mxu0 %v1346
  %1881 = vmatpush.bf16.msra.mxu0 %v1344
  %1882 = vmatpush.bf16.msra.mxu0 %v1342
  %1883 = vmatmul.bf16.gmra.mxu0 %v405
  %v1884 = vpop.f32.mrf.mxu0
  %v1885 = vadd.f32 %v1866, %v1884
  %v1886 = vpop.f32.mrf.mxu0
  %v1887 = vadd.f32 %v1868, %v1886
  %1888 = vmatmul.bf16.gmra.mxu0 %v421
  %v1889 = vpop.f32.mrf.mxu0
  %v1890 = vadd.f32 %v1871, %v1889
  %v1891 = vpop.f32.mrf.mxu0
  %v1892 = vadd.f32 %v1873, %v1891
  %1893 = vdwg.mxu0
  %1894 = vmatpush.bf16.msra.mxu0 %v1372
  %1895 = vmatpush.bf16.msra.mxu0 %v1370
  %1896 = vmatpush.bf16.msra.mxu0 %v1368
  %1897 = vmatpush.bf16.msra.mxu0 %v1366
  %1898 = vmatpush.bf16.msra.mxu0 %v1364
  %1899 = vmatpush.bf16.msra.mxu0 %v1362
  %1900 = vmatpush.bf16.msra.mxu0 %v1360
  %1901 = vmatpush.bf16.msra.mxu0 %v1358
  %1902 = vmatmul.bf16.gmra.mxu0 %v406
  %v1903 = vpop.f32.mrf.mxu0
  %v1904 = vadd.f32 %v1885, %v1903
  %v1905 = vpop.f32.mrf.mxu0
  %v1906 = vadd.f32 %v1887, %v1905
  %1907 = vmatmul.bf16.gmra.mxu0 %v422
  %v1908 = vpop.f32.mrf.mxu0
  %v1909 = vadd.f32 %v1890, %v1908
  %v1910 = vpop.f32.mrf.mxu0
  %v1911 = vadd.f32 %v1892, %v1910
  %1912 = vdwg.mxu0
  %1913 = vmatpush.bf16.msra.mxu0 %v1388
  %1914 = vmatpush.bf16.msra.mxu0 %v1386
  %1915 = vmatpush.bf16.msra.mxu0 %v1384
  %1916 = vmatpush.bf16.msra.mxu0 %v1382
  %1917 = vmatpush.bf16.msra.mxu0 %v1380
  %1918 = vmatpush.bf16.msra.mxu0 %v1378
  %1919 = vmatpush.bf16.msra.mxu0 %v1376
  %1920 = vmatpush.bf16.msra.mxu0 %v1374
  %1921 = vmatmul.bf16.gmra.mxu0 %v407
  %v1922 = vpop.f32.mrf.mxu0
  %v1923 = vadd.f32 %v1904, %v1922
  %v1924 = vpop.f32.mrf.mxu0
  %v1925 = vadd.f32 %v1906, %v1924
  %1926 = vmatmul.bf16.gmra.mxu0 %v423
  %v1927 = vpop.f32.mrf.mxu0
  %v1928 = vadd.f32 %v1909, %v1927
  %v1929 = vpop.f32.mrf.mxu0
  %v1930 = vadd.f32 %v1911, %v1929
  %1931 = vdwg.mxu0
  %1932 = vmatpush.bf16.msra.mxu0 %v1404
  %1933 = vmatpush.bf16.msra.mxu0 %v1402
  %1934 = vmatpush.bf16.msra.mxu0 %v1400
  %1935 = vmatpush.bf16.msra.mxu0 %v1398
  %1936 = vmatpush.bf16.msra.mxu0 %v1396
  %1937 = vmatpush.bf16.msra.mxu0 %v1394
  %1938 = vmatpush.bf16.msra.mxu0 %v1392
  %1939 = vmatpush.bf16.msra.mxu0 %v1390
  %1940 = vmatmul.bf16.gmra.mxu0 %v408
  %v1941 = vpop.f32.mrf.mxu0
  %v1942 = vadd.f32 %v1923, %v1941
  %v1943 = vpop.f32.mrf.mxu0
  %v1944 = vadd.f32 %v1925, %v1943
  %1945 = vmatmul.bf16.gmra.mxu0 %v424
  %v1946 = vpop.f32.mrf.mxu0
  %v1947 = vadd.f32 %v1928, %v1946
  %v1948 = vpop.f32.mrf.mxu0
  %v1949 = vadd.f32 %v1930, %v1948
  %1950 = vdwg.mxu0
  %1951 = vmatpush.bf16.msra.mxu0 %v1420
  %1952 = vmatpush.bf16.msra.mxu0 %v1418
  %1953 = vmatpush.bf16.msra.mxu0 %v1416
  %1954 = vmatpush.bf16.msra.mxu0 %v1414
  %1955 = vmatpush.bf16.msra.mxu0 %v1412
  %1956 = vmatpush.bf16.msra.mxu0 %v1410
  %1957 = vmatpush.bf16.msra.mxu0 %v1408
  %1958 = vmatpush.bf16.msra.mxu0 %v1406
  %1959 = vmatmul.bf16.gmra.mxu0 %v409
  %v1960 = vpop.f32.mrf.mxu0
  %v1961 = vadd.f32 %v1942, %v1960
  %v1962 = vpop.f32.mrf.mxu0
  %v1963 = vadd.f32 %v1944, %v1962
  %1964 = vmatmul.bf16.gmra.mxu0 %v425
  %v1965 = vpop.f32.mrf.mxu0
  %v1966 = vadd.f32 %v1947, %v1965
  %v1967 = vpop.f32.mrf.mxu0
  %v1968 = vadd.f32 %v1949, %v1967
  %1969 = vdwg.mxu0
  %1970 = vmatpush.bf16.msra.mxu0 %v1436
  %1971 = vmatpush.bf16.msra.mxu0 %v1434
  %1972 = vmatpush.bf16.msra.mxu0 %v1432
  %1973 = vmatpush.bf16.msra.mxu0 %v1430
  %1974 = vmatpush.bf16.msra.mxu0 %v1428
  %1975 = vmatpush.bf16.msra.mxu0 %v1426
  %1976 = vmatpush.bf16.msra.mxu0 %v1424
  %1977 = vmatpush.bf16.msra.mxu0 %v1422
  %1978 = vmatmul.bf16.gmra.mxu0 %v410
  %v1979 = vpop.f32.mrf.mxu0
  %v1980 = vadd.f32 %v1961, %v1979
  %v1981 = vpop.f32.mrf.mxu0
  %v1982 = vadd.f32 %v1963, %v1981
  %1983 = vmatmul.bf16.gmra.mxu0 %v426
  %v1984 = vpop.f32.mrf.mxu0
  %v1985 = vadd.f32 %v1966, %v1984
  %v1986 = vpop.f32.mrf.mxu0
  %v1987 = vadd.f32 %v1968, %v1986
  %1988 = vdwg.mxu0
  %1989 = vmatpush.bf16.msra.mxu0 %v1452
  %1990 = vmatpush.bf16.msra.mxu0 %v1450
  %1991 = vmatpush.bf16.msra.mxu0 %v1448
  %1992 = vmatpush.bf16.msra.mxu0 %v1446
  %1993 = vmatpush.bf16.msra.mxu0 %v1444
  %1994 = vmatpush.bf16.msra.mxu0 %v1442
  %1995 = vmatpush.bf16.msra.mxu0 %v1440
  %1996 = vmatpush.bf16.msra.mxu0 %v1438
  %1997 = vmatmul.bf16.gmra.mxu0 %v411
  %v1998 = vpop.f32.mrf.mxu0
  %v1999 = vadd.f32 %v1980, %v1998
  %v2000 = vpop.f32.mrf.mxu0
  %v2001 = vadd.f32 %v1982, %v2000
  %2002 = vmatmul.bf16.gmra.mxu0 %v427
  %v2003 = vpop.f32.mrf.mxu0
  %v2004 = vadd.f32 %v1985, %v2003
  %v2005 = vpop.f32.mrf.mxu0
  %v2006 = vadd.f32 %v1987, %v2005
  %2007 = vdwg.mxu0
  %2008 = vmatpush.bf16.msra.mxu0 %v1468
  %2009 = vmatpush.bf16.msra.mxu0 %v1466
  %2010 = vmatpush.bf16.msra.mxu0 %v1464
  %2011 = vmatpush.bf16.msra.mxu0 %v1462
  %2012 = vmatpush.bf16.msra.mxu0 %v1460
  %2013 = vmatpush.bf16.msra.mxu0 %v1458
  %2014 = vmatpush.bf16.msra.mxu0 %v1456
  %2015 = vmatpush.bf16.msra.mxu0 %v1454
  %2016 = vmatmul.bf16.gmra.mxu0 %v412
  %v2017 = vpop.f32.mrf.mxu0
  %v2018 = vadd.f32 %v1999, %v2017
  %v2019 = vpop.f32.mrf.mxu0
  %v2020 = vadd.f32 %v2001, %v2019
  %2021 = vmatmul.bf16.gmra.mxu0 %v428
  %v2022 = vpop.f32.mrf.mxu0
  %v2023 = vadd.f32 %v2004, %v2022
  %v2024 = vpop.f32.mrf.mxu0
  %v2025 = vadd.f32 %v2006, %v2024
  %2026 = vdwg.mxu0
  %2027 = vmatpush.bf16.msra.mxu0 %v1484
  %2028 = vmatpush.bf16.msra.mxu0 %v1482
  %2029 = vmatpush.bf16.msra.mxu0 %v1480
  %2030 = vmatpush.bf16.msra.mxu0 %v1478
  %2031 = vmatpush.bf16.msra.mxu0 %v1476
  %2032 = vmatpush.bf16.msra.mxu0 %v1474
  %2033 = vmatpush.bf16.msra.mxu0 %v1472
  %2034 = vmatpush.bf16.msra.mxu0 %v1470
  %2035 = vmatmul.bf16.gmra.mxu0 %v413
  %v2036 = vpop.f32.mrf.mxu0
  %v2037 = vadd.f32 %v2018, %v2036
  %v2038 = vpop.f32.mrf.mxu0
  %v2039 = vadd.f32 %v2020, %v2038
  %2040 = vmatmul.bf16.gmra.mxu0 %v429
  %v2041 = vpop.f32.mrf.mxu0
  %v2042 = vadd.f32 %v2023, %v2041
  %v2043 = vpop.f32.mrf.mxu0
  %v2044 = vadd.f32 %v2025, %v2043
  %2045 = vdwg.mxu0
  %2046 = vmatpush.bf16.msra.mxu0 %v1245
  %2047 = vmatpush.bf16.msra.mxu0 %v1243
  %2048 = vmatpush.bf16.msra.mxu0 %v1241
  %2049 = vmatpush.bf16.msra.mxu0 %v1239
  %2050 = vmatpush.bf16.msra.mxu0 %v1237
  %2051 = vmatpush.bf16.msra.mxu0 %v1235
  %2052 = vmatpush.bf16.msra.mxu0 %v1233
  %2053 = vmatpush.bf16.msra.mxu0 %v1231
  %2054 = vmatmul.bf16.gmra.mxu0 %v398
  %v2055 = vpop.f32.mrf.mxu0
  %v2056 = vadd.f32 0.0, %v2055
  %v2057 = vpop.f32.mrf.mxu0
  %v2058 = vadd.f32 0.0, %v2057
  %2059 = vmatmul.bf16.gmra.mxu0 %v414
  %v2060 = vpop.f32.mrf.mxu0
  %v2061 = vadd.f32 0.0, %v2060
  %v2062 = vpop.f32.mrf.mxu0
  %v2063 = vadd.f32 0.0, %v2062
  %2064 = vdwg.mxu0
  %2065 = vmatpush.bf16.msra.mxu0 %v1261
  %2066 = vmatpush.bf16.msra.mxu0 %v1259
  %2067 = vmatpush.bf16.msra.mxu0 %v1257
  %2068 = vmatpush.bf16.msra.mxu0 %v1255
  %2069 = vmatpush.bf16.msra.mxu0 %v1253
  %2070 = vmatpush.bf16.msra.mxu0 %v1251
  %2071 = vmatpush.bf16.msra.mxu0 %v1249
  %2072 = vmatpush.bf16.msra.mxu0 %v1247
  %2073 = vmatmul.bf16.gmra.mxu0 %v399
  %v2074 = vpop.f32.mrf.mxu0
  %v2075 = vadd.f32 %v2056, %v2074
  %v2076 = vpop.f32.mrf.mxu0
  %v2077 = vadd.f32 %v2058, %v2076
  %2078 = vmatmul.bf16.gmra.mxu0 %v415
  %v2079 = vpop.f32.mrf.mxu0
  %v2080 = vadd.f32 %v2061, %v2079
  %v2081 = vpop.f32.mrf.mxu0
  %v2082 = vadd.f32 %v2063, %v2081
  %2083 = vdwg.mxu0
  %2084 = vmatpush.bf16.msra.mxu0 %v1277
  %2085 = vmatpush.bf16.msra.mxu0 %v1275
  %2086 = vmatpush.bf16.msra.mxu0 %v1273
  %2087 = vmatpush.bf16.msra.mxu0 %v1271
  %2088 = vmatpush.bf16.msra.mxu0 %v1269
  %2089 = vmatpush.bf16.msra.mxu0 %v1267
  %2090 = vmatpush.bf16.msra.mxu0 %v1265
  %2091 = vmatpush.bf16.msra.mxu0 %v1263
  %2092 = vmatmul.bf16.gmra.mxu0 %v400
  %v2093 = vpop.f32.mrf.mxu0
  %v2094 = vadd.f32 %v2075, %v2093
  %v2095 = vpop.f32.mrf.mxu0
  %v2096 = vadd.f32 %v2077, %v2095
  %2097 = vmatmul.bf16.gmra.mxu0 %v416
  %v2098 = vpop.f32.mrf.mxu0
  %v2099 = vadd.f32 %v2080, %v2098
  %v2100 = vpop.f32.mrf.mxu0
  %v2101 = vadd.f32 %v2082, %v2100
  %2102 = vdwg.mxu0
  %2103 = vmatpush.bf16.msra.mxu0 %v1293
  %2104 = vmatpush.bf16.msra.mxu0 %v1291
  %2105 = vmatpush.bf16.msra.mxu0 %v1289
  %2106 = vmatpush.bf16.msra.mxu0 %v1287
  %2107 = vmatpush.bf16.msra.mxu0 %v1285
  %2108 = vmatpush.bf16.msra.mxu0 %v1283
  %2109 = vmatpush.bf16.msra.mxu0 %v1281
  %2110 = vmatpush.bf16.msra.mxu0 %v1279
  %2111 = vmatmul.bf16.gmra.mxu0 %v401
  %v2112 = vpop.f32.mrf.mxu0
  %v2113 = vadd.f32 %v2094, %v2112
  %v2114 = vpop.f32.mrf.mxu0
  %v2115 = vadd.f32 %v2096, %v2114
  %2116 = vmatmul.bf16.gmra.mxu0 %v417
  %v2117 = vpop.f32.mrf.mxu0
  %v2118 = vadd.f32 %v2099, %v2117
  %v2119 = vpop.f32.mrf.mxu0
  %v2120 = vadd.f32 %v2101, %v2119
  %2121 = vdwg.mxu0
  %2122 = vmatpush.bf16.msra.mxu0 %v1309
  %2123 = vmatpush.bf16.msra.mxu0 %v1307
  %2124 = vmatpush.bf16.msra.mxu0 %v1305
  %2125 = vmatpush.bf16.msra.mxu0 %v1303
  %2126 = vmatpush.bf16.msra.mxu0 %v1301
  %2127 = vmatpush.bf16.msra.mxu0 %v1299
  %2128 = vmatpush.bf16.msra.mxu0 %v1297
  %2129 = vmatpush.bf16.msra.mxu0 %v1295
  %2130 = vmatmul.bf16.gmra.mxu0 %v402
  %v2131 = vpop.f32.mrf.mxu0
  %v2132 = vadd.f32 %v2113, %v2131
  %v2133 = vpop.f32.mrf.mxu0
  %v2134 = vadd.f32 %v2115, %v2133
  %2135 = vmatmul.bf16.gmra.mxu0 %v418
  %v2136 = vpop.f32.mrf.mxu0
  %v2137 = vadd.f32 %v2118, %v2136
  %v2138 = vpop.f32.mrf.mxu0
  %v2139 = vadd.f32 %v2120, %v2138
  %2140 = vdwg.mxu0
  %2141 = vmatpush.bf16.msra.mxu0 %v1325
  %2142 = vmatpush.bf16.msra.mxu0 %v1323
  %2143 = vmatpush.bf16.msra.mxu0 %v1321
  %2144 = vmatpush.bf16.msra.mxu0 %v1319
  %2145 = vmatpush.bf16.msra.mxu0 %v1317
  %2146 = vmatpush.bf16.msra.mxu0 %v1315
  %2147 = vmatpush.bf16.msra.mxu0 %v1313
  %2148 = vmatpush.bf16.msra.mxu0 %v1311
  %2149 = vmatmul.bf16.gmra.mxu0 %v403
  %v2150 = vpop.f32.mrf.mxu0
  %v2151 = vadd.f32 %v2132, %v2150
  %v2152 = vpop.f32.mrf.mxu0
  %v2153 = vadd.f32 %v2134, %v2152
  %2154 = vmatmul.bf16.gmra.mxu0 %v419
  %v2155 = vpop.f32.mrf.mxu0
  %v2156 = vadd.f32 %v2137, %v2155
  %v2157 = vpop.f32.mrf.mxu0
  %v2158 = vadd.f32 %v2139, %v2157
  %2159 = vdwg.mxu0
  %2160 = vmatpush.bf16.msra.mxu0 %v1341
  %2161 = vmatpush.bf16.msra.mxu0 %v1339
  %2162 = vmatpush.bf16.msra.mxu0 %v1337
  %2163 = vmatpush.bf16.msra.mxu0 %v1335
  %2164 = vmatpush.bf16.msra.mxu0 %v1333
  %2165 = vmatpush.bf16.msra.mxu0 %v1331
  %2166 = vmatpush.bf16.msra.mxu0 %v1329
  %2167 = vmatpush.bf16.msra.mxu0 %v1327
  %2168 = vmatmul.bf16.gmra.mxu0 %v404
  %v2169 = vpop.f32.mrf.mxu0
  %v2170 = vadd.f32 %v2151, %v2169
  %v2171 = vpop.f32.mrf.mxu0
  %v2172 = vadd.f32 %v2153, %v2171
  %2173 = vmatmul.bf16.gmra.mxu0 %v420
  %v2174 = vpop.f32.mrf.mxu0
  %v2175 = vadd.f32 %v2156, %v2174
  %v2176 = vpop.f32.mrf.mxu0
  %v2177 = vadd.f32 %v2158, %v2176
  %2178 = vdwg.mxu0
  %2179 = vmatpush.bf16.msra.mxu0 %v1357
  %2180 = vmatpush.bf16.msra.mxu0 %v1355
  %2181 = vmatpush.bf16.msra.mxu0 %v1353
  %2182 = vmatpush.bf16.msra.mxu0 %v1351
  %2183 = vmatpush.bf16.msra.mxu0 %v1349
  %2184 = vmatpush.bf16.msra.mxu0 %v1347
  %2185 = vmatpush.bf16.msra.mxu0 %v1345
  %2186 = vmatpush.bf16.msra.mxu0 %v1343
  %2187 = vmatmul.bf16.gmra.mxu0 %v405
  %v2188 = vpop.f32.mrf.mxu0
  %v2189 = vadd.f32 %v2170, %v2188
  %v2190 = vpop.f32.mrf.mxu0
  %v2191 = vadd.f32 %v2172, %v2190
  %2192 = vmatmul.bf16.gmra.mxu0 %v421
  %v2193 = vpop.f32.mrf.mxu0
  %v2194 = vadd.f32 %v2175, %v2193
  %v2195 = vpop.f32.mrf.mxu0
  %v2196 = vadd.f32 %v2177, %v2195
  %2197 = vdwg.mxu0
  %2198 = vmatpush.bf16.msra.mxu0 %v1373
  %2199 = vmatpush.bf16.msra.mxu0 %v1371
  %2200 = vmatpush.bf16.msra.mxu0 %v1369
  %2201 = vmatpush.bf16.msra.mxu0 %v1367
  %2202 = vmatpush.bf16.msra.mxu0 %v1365
  %2203 = vmatpush.bf16.msra.mxu0 %v1363
  %2204 = vmatpush.bf16.msra.mxu0 %v1361
  %2205 = vmatpush.bf16.msra.mxu0 %v1359
  %2206 = vmatmul.bf16.gmra.mxu0 %v406
  %v2207 = vpop.f32.mrf.mxu0
  %v2208 = vadd.f32 %v2189, %v2207
  %v2209 = vpop.f32.mrf.mxu0
  %v2210 = vadd.f32 %v2191, %v2209
  %2211 = vmatmul.bf16.gmra.mxu0 %v422
  %v2212 = vpop.f32.mrf.mxu0
  %v2213 = vadd.f32 %v2194, %v2212
  %v2214 = vpop.f32.mrf.mxu0
  %v2215 = vadd.f32 %v2196, %v2214
  %2216 = vdwg.mxu0
  %2217 = vmatpush.bf16.msra.mxu0 %v1389
  %2218 = vmatpush.bf16.msra.mxu0 %v1387
  %2219 = vmatpush.bf16.msra.mxu0 %v1385
  %2220 = vmatpush.bf16.msra.mxu0 %v1383
  %2221 = vmatpush.bf16.msra.mxu0 %v1381
  %2222 = vmatpush.bf16.msra.mxu0 %v1379
  %2223 = vmatpush.bf16.msra.mxu0 %v1377
  %2224 = vmatpush.bf16.msra.mxu0 %v1375
  %2225 = vmatmul.bf16.gmra.mxu0 %v407
  %v2226 = vpop.f32.mrf.mxu0
  %v2227 = vadd.f32 %v2208, %v2226
  %v2228 = vpop.f32.mrf.mxu0
  %v2229 = vadd.f32 %v2210, %v2228
  %2230 = vmatmul.bf16.gmra.mxu0 %v423
  %v2231 = vpop.f32.mrf.mxu0
  %v2232 = vadd.f32 %v2213, %v2231
  %v2233 = vpop.f32.mrf.mxu0
  %v2234 = vadd.f32 %v2215, %v2233
  %2235 = vdwg.mxu0
  %2236 = vmatpush.bf16.msra.mxu0 %v1405
  %2237 = vmatpush.bf16.msra.mxu0 %v1403
  %2238 = vmatpush.bf16.msra.mxu0 %v1401
  %2239 = vmatpush.bf16.msra.mxu0 %v1399
  %2240 = vmatpush.bf16.msra.mxu0 %v1397
  %2241 = vmatpush.bf16.msra.mxu0 %v1395
  %2242 = vmatpush.bf16.msra.mxu0 %v1393
  %2243 = vmatpush.bf16.msra.mxu0 %v1391
  %2244 = vmatmul.bf16.gmra.mxu0 %v408
  %v2245 = vpop.f32.mrf.mxu0
  %v2246 = vadd.f32 %v2227, %v2245
  %v2247 = vpop.f32.mrf.mxu0
  %v2248 = vadd.f32 %v2229, %v2247
  %2249 = vmatmul.bf16.gmra.mxu0 %v424
  %v2250 = vpop.f32.mrf.mxu0
  %v2251 = vadd.f32 %v2232, %v2250
  %v2252 = vpop.f32.mrf.mxu0
  %v2253 = vadd.f32 %v2234, %v2252
  %2254 = vdwg.mxu0
  %2255 = vmatpush.bf16.msra.mxu0 %v1421
  %2256 = vmatpush.bf16.msra.mxu0 %v1419
  %2257 = vmatpush.bf16.msra.mxu0 %v1417
  %2258 = vmatpush.bf16.msra.mxu0 %v1415
  %2259 = vmatpush.bf16.msra.mxu0 %v1413
  %2260 = vmatpush.bf16.msra.mxu0 %v1411
  %2261 = vmatpush.bf16.msra.mxu0 %v1409
  %2262 = vmatpush.bf16.msra.mxu0 %v1407
  %2263 = vmatmul.bf16.gmra.mxu0 %v409
  %v2264 = vpop.f32.mrf.mxu0
  %v2265 = vadd.f32 %v2246, %v2264
  %v2266 = vpop.f32.mrf.mxu0
  %v2267 = vadd.f32 %v2248, %v2266
  %2268 = vmatmul.bf16.gmra.mxu0 %v425
  %v2269 = vpop.f32.mrf.mxu0
  %v2270 = vadd.f32 %v2251, %v2269
  %v2271 = vpop.f32.mrf.mxu0
  %v2272 = vadd.f32 %v2253, %v2271
  %2273 = vdwg.mxu0
  %2274 = vmatpush.bf16.msra.mxu0 %v1437
  %2275 = vmatpush.bf16.msra.mxu0 %v1435
  %2276 = vmatpush.bf16.msra.mxu0 %v1433
  %2277 = vmatpush.bf16.msra.mxu0 %v1431
  %2278 = vmatpush.bf16.msra.mxu0 %v1429
  %2279 = vmatpush.bf16.msra.mxu0 %v1427
  %2280 = vmatpush.bf16.msra.mxu0 %v1425
  %2281 = vmatpush.bf16.msra.mxu0 %v1423
  %2282 = vmatmul.bf16.gmra.mxu0 %v410
  %v2283 = vpop.f32.mrf.mxu0
  %v2284 = vadd.f32 %v2265, %v2283
  %v2285 = vpop.f32.mrf.mxu0
  %v2286 = vadd.f32 %v2267, %v2285
  %2287 = vmatmul.bf16.gmra.mxu0 %v426
  %v2288 = vpop.f32.mrf.mxu0
  %v2289 = vadd.f32 %v2270, %v2288
  %v2290 = vpop.f32.mrf.mxu0
  %v2291 = vadd.f32 %v2272, %v2290
  %2292 = vdwg.mxu0
  %2293 = vmatpush.bf16.msra.mxu0 %v1453
  %2294 = vmatpush.bf16.msra.mxu0 %v1451
  %2295 = vmatpush.bf16.msra.mxu0 %v1449
  %2296 = vmatpush.bf16.msra.mxu0 %v1447
  %2297 = vmatpush.bf16.msra.mxu0 %v1445
  %2298 = vmatpush.bf16.msra.mxu0 %v1443
  %2299 = vmatpush.bf16.msra.mxu0 %v1441
  %2300 = vmatpush.bf16.msra.mxu0 %v1439
  %2301 = vmatmul.bf16.gmra.mxu0 %v411
  %v2302 = vpop.f32.mrf.mxu0
  %v2303 = vadd.f32 %v2284, %v2302
  %v2304 = vpop.f32.mrf.mxu0
  %v2305 = vadd.f32 %v2286, %v2304
  %2306 = vmatmul.bf16.gmra.mxu0 %v427
  %v2307 = vpop.f32.mrf.mxu0
  %v2308 = vadd.f32 %v2289, %v2307
  %v2309 = vpop.f32.mrf.mxu0
  %v2310 = vadd.f32 %v2291, %v2309
  %2311 = vdwg.mxu0
  %2312 = vmatpush.bf16.msra.mxu0 %v1469
  %2313 = vmatpush.bf16.msra.mxu0 %v1467
  %2314 = vmatpush.bf16.msra.mxu0 %v1465
  %2315 = vmatpush.bf16.msra.mxu0 %v1463
  %2316 = vmatpush.bf16.msra.mxu0 %v1461
  %2317 = vmatpush.bf16.msra.mxu0 %v1459
  %2318 = vmatpush.bf16.msra.mxu0 %v1457
  %2319 = vmatpush.bf16.msra.mxu0 %v1455
  %2320 = vmatmul.bf16.gmra.mxu0 %v412
  %v2321 = vpop.f32.mrf.mxu0
  %v2322 = vadd.f32 %v2303, %v2321
  %v2323 = vpop.f32.mrf.mxu0
  %v2324 = vadd.f32 %v2305, %v2323
  %2325 = vmatmul.bf16.gmra.mxu0 %v428
  %v2326 = vpop.f32.mrf.mxu0
  %v2327 = vadd.f32 %v2308, %v2326
  %v2328 = vpop.f32.mrf.mxu0
  %v2329 = vadd.f32 %v2310, %v2328
  %2330 = vdwg.mxu0
  %2331 = vmatpush.bf16.msra.mxu0 %v1485
  %2332 = vmatpush.bf16.msra.mxu0 %v1483
  %2333 = vmatpush.bf16.msra.mxu0 %v1481
  %2334 = vmatpush.bf16.msra.mxu0 %v1479
  %2335 = vmatpush.bf16.msra.mxu0 %v1477
  %2336 = vmatpush.bf16.msra.mxu0 %v1475
  %2337 = vmatpush.bf16.msra.mxu0 %v1473
  %2338 = vmatpush.bf16.msra.mxu0 %v1471
  %2339 = vmatmul.bf16.gmra.mxu0 %v413
  %v2340 = vpop.f32.mrf.mxu0
  %v2341 = vadd.f32 %v2322, %v2340
  %v2342 = vpop.f32.mrf.mxu0
  %v2343 = vadd.f32 %v2324, %v2342
  %2344 = vmatmul.bf16.gmra.mxu0 %v429
  %v2345 = vpop.f32.mrf.mxu0
  %v2346 = vadd.f32 %v2327, %v2345
  %v2347 = vpop.f32.mrf.mxu0
  %v2348 = vadd.f32 %v2329, %v2347
  %2349 = vdwg.mxu0
  %v2350 = vpack.c.bf16 %v2341, %v2037
  %v2351 = vpack.c.bf16 %v2343, %v2039
  %v2352 = vpack.c.bf16 %v2346, %v2042
  %v2353 = vpack.c.bf16 %v2348, %v2044
  %2354 = vst [vmem:[%s2] sm:$0xff] %v2350
  %2355 = vst [vmem:[%s2 + $0x8] sm:$0xff] %v2351
  %2356 = vst [vmem:[%s2 + $0x10] sm:$0xff] %v2352
  %2357 = vst [vmem:[%s2 + $0x18] sm:$0xff] %v2353
  %v2358 = vadd.f32 %v2037, %v2039
  %v2359 = vadd.f32 %v2358, %v2042
  %v2360 = vadd.f32 %v2359, %v2044
  %v2361 = vrot.slane %v2360, 4
  %v2362 = vadd.f32 %v2360, %v2361
  %v2363 = vrot.slane %v2362, 2
  %v2364 = vadd.f32 %v2362, %v2363
  %v2365 = vrot.slane %v2364, 1
  %v2366 = vadd.f32 %v2364, %v2365
  %v2367 = vadd.f32 %v2341, %v2343
  %v2368 = vadd.f32 %v2367, %v2346
  %v2369 = vadd.f32 %v2368, %v2348
  %v2370 = vrot.slane %v2369, 4
  %v2371 = vadd.f32 %v2369, %v2370
  %v2372 = vrot.slane %v2371, 2
  %v2373 = vadd.f32 %v2371, %v2372
  %v2374 = vrot.slane %v2373, 1
  %v2375 = vadd.f32 %v2373, %v2374
  %v2376 = vmul.f32 %v2037, %v2037
  %v2377 = vmul.f32 %v2341, %v2341
  %v2378 = vmul.f32 %v2039, %v2039
  %v2379 = vmul.f32 %v2343, %v2343
  %v2380 = vmul.f32 %v2042, %v2042
  %v2381 = vmul.f32 %v2346, %v2346
  %v2382 = vmul.f32 %v2044, %v2044
  %v2383 = vmul.f32 %v2348, %v2348
  %v2384 = vadd.f32 %v2376, %v2378
  %v2385 = vadd.f32 %v2384, %v2380
  %v2386 = vadd.f32 %v2385, %v2382
  %v2387 = vrot.slane %v2386, 4
  %v2388 = vadd.f32 %v2386, %v2387
  %v2389 = vrot.slane %v2388, 2
  %v2390 = vadd.f32 %v2388, %v2389
  %v2391 = vrot.slane %v2390, 1
  %v2392 = vadd.f32 %v2390, %v2391
  %v2393 = vadd.f32 %v2377, %v2379
  %v2394 = vadd.f32 %v2393, %v2381
  %v2395 = vadd.f32 %v2394, %v2383
  %v2396 = vrot.slane %v2395, 4
  %v2397 = vadd.f32 %v2395, %v2396
  %v2398 = vrot.slane %v2397, 2
  %v2399 = vadd.f32 %v2397, %v2398
  %v2400 = vrot.slane %v2399, 1
  %v2401 = vadd.f32 %v2399, %v2400
  %2402 = vst [vmem:[%s3] sm:$0xff] %v2366
  %2403 = vst [vmem:[%s3 + $0x8] sm:$0xff] %v2375
  %2404 = vst [vmem:[%s4] sm:$0xff] %v2392
  %2405 = vst [vmem:[%s4 + $0x8] sm:$0xff] %v2401
  // Predicated region
  $region10: #{discriminator_forward.9} parent=0 // pred_check
    _
  $region11: #{discriminator_forward.9} parent=0 // pred_check_branch
    %2407 = sbr.rel (0) target = $region13
  $region12: #{discriminator_forward.9} parent=0 // pred_region
    _
  $region13: #{discriminator_forward.9} parent=0 // pred_fallthru
    _
  // Predicated region
  $region14: #{discriminator_forward.9} parent=0 // pred_check
    _
  $region15: #{discriminator_forward.9} parent=0 // pred_check_branch
    %2409 = sbr.rel (0) target = $region17
  $region16: #{discriminator_forward.9} parent=0 // pred_region
    _
  $region17: #{discriminator_forward.9} parent=0 // pred_fallthru
    _
  // Predicated region
  $region18: #{discriminator_forward.9} parent=0 // pred_check
    _
  $region19: #{discriminator_forward.9} parent=0 // pred_check_branch
    %2411 = sbr.rel (0) target = $region21
  $region20: #{discriminator_forward.9} parent=0 // pred_region
    _
  $region21: #{discriminator_forward.9} parent=0 // pred_fallthru
    _
  // Predicated region
  $region22: #{discriminator_forward.9} parent=0 // pred_check
    _
  $region23: #{discriminator_forward.9} parent=0 // pred_check_branch
    %2413 = sbr.rel (0) target = $region25
  $region24: #{discriminator_forward.9} parent=0 // pred_region
    _
  $region25: #{discriminator_forward.9} parent=0 // pred_fallthru
    _
  // Predicated region
  $region26: #{discriminator_forward.9} parent=0 // pred_check
    _
  $region27: #{discriminator_forward.9} parent=0 // pred_check_branch
    %2415 = sbr.rel (0) target = $region29
  $region28: #{discriminator_forward.9} parent=0 // pred_region
    _
  $region29: #{discriminator_forward.9} parent=0 // pred_fallthru
    _
  // Predicated region
  $region30: #{discriminator_forward.9} parent=0 // pred_check
    _
  $region31: #{discriminator_forward.9} parent=0 // pred_check_branch
    %2417 = sbr.rel (0) target = $region33
  $region32: #{discriminator_forward.9} parent=0 // pred_region
    _
  $region33: #{discriminator_forward.9} parent=0 // pred_fallthru
    _

// kernel: discriminator_forward.11
$region0: #{discriminator_forward.11}
  #allocation0 [shape = 'u32[]', space=smem, size = 0x4, offset = 0x4, fixed_abs, tag = 'smem constant byte address 0x4 - core index']
  #allocation1 [shape = 'u32[72,128]{1,0:T(1,128)}', space=vmem, size = 0x9000, scoped, tag = 'internal scratch']
  %s0 = inlined_call_operand.vmem [shape: bf16[16,4096], index: 0, kind: input, shape index: {}]
  %s1 = inlined_call_operand.vmem [shape: bf16[4096,128], index: 1, kind: input, shape index: {}]
  %s2 = inlined_call_operand.vmem [shape: f32[16,128], index: 2, kind: output, shape index: {}]
  %s3 = sld [smem:[#allocation0]]
  $region18: #{discriminator_forward.11} parent=0
    _
  %s5 = ssub.s32 1, %s3
  %s6 = scalar_select 0, %s5, %s3
  // Predicated region
  $region2: #{discriminator_forward.11} parent=0 // pred_check
    _
  $region3: #{discriminator_forward.11} parent=0 // pred_check_branch
    %8 = sbr.rel (0) target = $region5
  $region4: #{discriminator_forward.11} parent=0 // pred_region
    _
  $region5: #{discriminator_forward.11} parent=0 // pred_fallthru
    _
  // Predicated region
  $region6: #{discriminator_forward.11} parent=0 // pred_check
    _
  $region7: #{discriminator_forward.11} parent=0 // pred_check_branch
    %10 = sbr.rel (0) target = $region9
  $region8: #{discriminator_forward.11} parent=0 // pred_region
    _
  $region9: #{discriminator_forward.11} parent=0 // pred_fallthru
    _
  %v11 = vld [vmem:[%s0] sm:$0xff]
  %v12 = vld [vmem:[%s0 + $0x8] sm:$0xff]
  %v13 = vld [vmem:[%s0 + $0x10] sm:$0xff]
  %v14 = vld [vmem:[%s0 + $0x18] sm:$0xff]
  %v15 = vld [vmem:[%s0 + $0x20] sm:$0xff]
  %v16 = vld [vmem:[%s0 + $0x28] sm:$0xff]
  %v17 = vld [vmem:[%s0 + $0x30] sm:$0xff]
  %v18 = vld [vmem:[%s0 + $0x38] sm:$0xff]
  %v19 = vld [vmem:[%s0 + $0x40] sm:$0xff]
  %v20 = vld [vmem:[%s0 + $0x48] sm:$0xff]
  %v21 = vld [vmem:[%s0 + $0x50] sm:$0xff]
  %v22 = vld [vmem:[%s0 + $0x58] sm:$0xff]
  %v23 = vld [vmem:[%s0 + $0x60] sm:$0xff]
  %v24 = vld [vmem:[%s0 + $0x68] sm:$0xff]
  %v25 = vld [vmem:[%s0 + $0x70] sm:$0xff]
  %v26 = vld [vmem:[%s0 + $0x78] sm:$0xff]
  %v27 = vld [vmem:[%s0 + $0x80] sm:$0xff]
  %v28 = vld [vmem:[%s0 + $0x88] sm:$0xff]
  %v29 = vld [vmem:[%s0 + $0x90] sm:$0xff]
  %v30 = vld [vmem:[%s0 + $0x98] sm:$0xff]
  %v31 = vld [vmem:[%s0 + $0xa0] sm:$0xff]
  %v32 = vld [vmem:[%s0 + $0xa8] sm:$0xff]
  %v33 = vld [vmem:[%s0 + $0xb0] sm:$0xff]
  %v34 = vld [vmem:[%s0 + $0xb8] sm:$0xff]
  %v35 = vld [vmem:[%s0 + $0xc0] sm:$0xff]
  %v36 = vld [vmem:[%s0 + $0xc8] sm:$0xff]
  %v37 = vld [vmem:[%s0 + $0xd0] sm:$0xff]
  %v38 = vld [vmem:[%s0 + $0xd8] sm:$0xff]
  %v39 = vld [vmem:[%s0 + $0xe0] sm:$0xff]
  %v40 = vld [vmem:[%s0 + $0xe8] sm:$0xff]
  %v41 = vld [vmem:[%s0 + $0xf0] sm:$0xff]
  %v42 = vld [vmem:[%s0 + $0xf8] sm:$0xff]
  %v43 = vld [vmem:[%s1] sm:$0xf]
  %v44 = vld [vmem:[%s1 + $0x4] sm:$0xf]
  %v45 = vld [vmem:[%s1 + $0x8] sm:$0xf]
  %v46 = vld [vmem:[%s1 + $0xc] sm:$0xf]
  %v47 = vld [vmem:[%s1 + $0x10] sm:$0xf]
  %v48 = vld [vmem:[%s1 + $0x14] sm:$0xf]
  %v49 = vld [vmem:[%s1 + $0x18] sm:$0xf]
  %v50 = vld [vmem:[%s1 + $0x1c] sm:$0xf]
  %v51 = vld [vmem:[%s1 + $0x20] sm:$0xf]
  %v52 = vld [vmem:[%s1 + $0x24] sm:$0xf]
  %v53 = vld [vmem:[%s1 + $0x28] sm:$0xf]
  %v54 = vld [vmem:[%s1 + $0x2c] sm:$0xf]
  %v55 = vld [vmem:[%s1 + $0x30] sm:$0xf]
  %v56 = vld [vmem:[%s1 + $0x34] sm:$0xf]
  %v57 = vld [vmem:[%s1 + $0x38] sm:$0xf]
  %v58 = vld [vmem:[%s1 + $0x3c] sm:$0xf]
  %v59 = vld [vmem:[%s1 + $0x40] sm:$0xf]
  %v60 = vld [vmem:[%s1 + $0x44] sm:$0xf]
  %v61 = vld [vmem:[%s1 + $0x48] sm:$0xf]
  %v62 = vld [vmem:[%s1 + $0x4c] sm:$0xf]
  %v63 = vld [vmem:[%s1 + $0x50] sm:$0xf]
  %v64 = vld [vmem:[%s1 + $0x54] sm:$0xf]
  %v65 = vld [vmem:[%s1 + $0x58] sm:$0xf]
  %v66 = vld [vmem:[%s1 + $0x5c] sm:$0xf]
  %v67 = vld [vmem:[%s1 + $0x60] sm:$0xf]
  %v68 = vld [vmem:[%s1 + $0x64] sm:$0xf]
  %v69 = vld [vmem:[%s1 + $0x68] sm:$0xf]
  %v70 = vld [vmem:[%s1 + $0x6c] sm:$0xf]
  %v71 = vld [vmem:[%s1 + $0x70] sm:$0xf]
  %v72 = vld [vmem:[%s1 + $0x74] sm:$0xf]
  %v73 = vld [vmem:[%s1 + $0x78] sm:$0xf]
  %v74 = vld [vmem:[%s1 + $0x7c] sm:$0xf]
  %v75 = vld [vmem:[%s1 + $0x80] sm:$0xf]
  %v76 = vld [vmem:[%s1 + $0x84] sm:$0xf]
  %v77 = vld [vmem:[%s1 + $0x88] sm:$0xf]
  %v78 = vld [vmem:[%s1 + $0x8c] sm:$0xf]
  %v79 = vld [vmem:[%s1 + $0x90] sm:$0xf]
  %v80 = vld [vmem:[%s1 + $0x94] sm:$0xf]
  %v81 = vld [vmem:[%s1 + $0x98] sm:$0xf]
  %v82 = vld [vmem:[%s1 + $0x9c] sm:$0xf]
  %v83 = vld [vmem:[%s1 + $0xa0] sm:$0xf]
  %v84 = vld [vmem:[%s1 + $0xa4] sm:$0xf]
  %v85 = vld [vmem:[%s1 + $0xa8] sm:$0xf]
  %v86 = vld [vmem:[%s1 + $0xac] sm:$0xf]
  %v87 = vld [vmem:[%s1 + $0xb0] sm:$0xf]
  %v88 = vld [vmem:[%s1 + $0xb4] sm:$0xf]
  %v89 = vld [vmem:[%s1 + $0xb8] sm:$0xf]
  %v90 = vld [vmem:[%s1 + $0xbc] sm:$0xf]
  %v91 = vld [vmem:[%s1 + $0xc0] sm:$0xf]
  %v92 = vld [vmem:[%s1 + $0xc4] sm:$0xf]
  %v93 = vld [vmem:[%s1 + $0xc8] sm:$0xf]
  %v94 = vld [vmem:[%s1 + $0xcc] sm:$0xf]
  %v95 = vld [vmem:[%s1 + $0xd0] sm:$0xf]
  %v96 = vld [vmem:[%s1 + $0xd4] sm:$0xf]
  %v97 = vld [vmem:[%s1 + $0xd8] sm:$0xf]
  %v98 = vld [vmem:[%s1 + $0xdc] sm:$0xf]
  %v99 = vld [vmem:[%s1 + $0xe0] sm:$0xf]
  %v100 = vld [vmem:[%s1 + $0xe4] sm:$0xf]
  %v101 = vld [vmem:[%s1 + $0xe8] sm:$0xf]
  %v102 = vld [vmem:[%s1 + $0xec] sm:$0xf]
  %v103 = vld [vmem:[%s1 + $0xf0] sm:$0xf]
  %v104 = vld [vmem:[%s1 + $0xf4] sm:$0xf]
  %v105 = vld [vmem:[%s1 + $0xf8] sm:$0xf]
  %v106 = vld [vmem:[%s1 + $0xfc] sm:$0xf]
  %v107 = vld [vmem:[%s1 + $0x100] sm:$0xf]
  %v108 = vld [vmem:[%s1 + $0x104] sm:$0xf]
  %v109 = vld [vmem:[%s1 + $0x108] sm:$0xf]
  %v110 = vld [vmem:[%s1 + $0x10c] sm:$0xf]
  %v111 = vld [vmem:[%s1 + $0x110] sm:$0xf]
  %v112 = vld [vmem:[%s1 + $0x114] sm:$0xf]
  %v113 = vld [vmem:[%s1 + $0x118] sm:$0xf]
  %v114 = vld [vmem:[%s1 + $0x11c] sm:$0xf]
  %v115 = vld [vmem:[%s1 + $0x120] sm:$0xf]
  %v116 = vld [vmem:[%s1 + $0x124] sm:$0xf]
  %v117 = vld [vmem:[%s1 + $0x128] sm:$0xf]
  %v118 = vld [vmem:[%s1 + $0x12c] sm:$0xf]
  %v119 = vld [vmem:[%s1 + $0x130] sm:$0xf]
  %v120 = vld [vmem:[%s1 + $0x134] sm:$0xf]
  %v121 = vld [vmem:[%s1 + $0x138] sm:$0xf]
  %v122 = vld [vmem:[%s1 + $0x13c] sm:$0xf]
  %v123 = vld [vmem:[%s1 + $0x140] sm:$0xf]
  %v124 = vld [vmem:[%s1 + $0x144] sm:$0xf]
  %v125 = vld [vmem:[%s1 + $0x148] sm:$0xf]
  %v126 = vld [vmem:[%s1 + $0x14c] sm:$0xf]
  %v127 = vld [vmem:[%s1 + $0x150] sm:$0xf]
  %v128 = vld [vmem:[%s1 + $0x154] sm:$0xf]
  %v129 = vld [vmem:[%s1 + $0x158] sm:$0xf]
  %v130 = vld [vmem:[%s1 + $0x15c] sm:$0xf]
  %v131 = vld [vmem:[%s1 + $0x160] sm:$0xf]
  %v132 = vld [vmem:[%s1 + $0x164] sm:$0xf]
  %v133 = vld [vmem:[%s1 + $0x168] sm:$0xf]
  %v134 = vld [vmem:[%s1 + $0x16c] sm:$0xf]
  %v135 = vld [vmem:[%s1 + $0x170] sm:$0xf]
  %v136 = vld [vmem:[%s1 + $0x174] sm:$0xf]
  %v137 = vld [vmem:[%s1 + $0x178] sm:$0xf]
  %v138 = vld [vmem:[%s1 + $0x17c] sm:$0xf]
  %v139 = vld [vmem:[%s1 + $0x180] sm:$0xf]
  %v140 = vld [vmem:[%s1 + $0x184] sm:$0xf]
  %v141 = vld [vmem:[%s1 + $0x188] sm:$0xf]
  %v142 = vld [vmem:[%s1 + $0x18c] sm:$0xf]
  %v143 = vld [vmem:[%s1 + $0x190] sm:$0xf]
  %v144 = vld [vmem:[%s1 + $0x194] sm:$0xf]
  %v145 = vld [vmem:[%s1 + $0x198] sm:$0xf]
  %v146 = vld [vmem:[%s1 + $0x19c] sm:$0xf]
  %v147 = vld [vmem:[%s1 + $0x1a0] sm:$0xf]
  %v148 = vld [vmem:[%s1 + $0x1a4] sm:$0xf]
  %v149 = vld [vmem:[%s1 + $0x1a8] sm:$0xf]
  %v150 = vld [vmem:[%s1 + $0x1ac] sm:$0xf]
  %v151 = vld [vmem:[%s1 + $0x1b0] sm:$0xf]
  %v152 = vld [vmem:[%s1 + $0x1b4] sm:$0xf]
  %v153 = vld [vmem:[%s1 + $0x1b8] sm:$0xf]
  %v154 = vld [vmem:[%s1 + $0x1bc] sm:$0xf]
  %v155 = vld [vmem:[%s1 + $0x1c0] sm:$0xf]
  %v156 = vld [vmem:[%s1 + $0x1c4] sm:$0xf]
  %v157 = vld [vmem:[%s1 + $0x1c8] sm:$0xf]
  %v158 = vld [vmem:[%s1 + $0x1cc] sm:$0xf]
  %v159 = vld [vmem:[%s1 + $0x1d0] sm:$0xf]
  %v160 = vld [vmem:[%s1 + $0x1d4] sm:$0xf]
  %v161 = vld [vmem:[%s1 + $0x1d8] sm:$0xf]
  %v162 = vld [vmem:[%s1 + $0x1dc] sm:$0xf]
  %v163 = vld [vmem:[%s1 + $0x1e0] sm:$0xf]
  %v164 = vld [vmem:[%s1 + $0x1e4] sm:$0xf]
  %v165 = vld [vmem:[%s1 + $0x1e8] sm:$0xf]
  %v166 = vld [vmem:[%s1 + $0x1ec] sm:$0xf]
  %v167 = vld [vmem:[%s1 + $0x1f0] sm:$0xf]
  %v168 = vld [vmem:[%s1 + $0x1f4] sm:$0xf]
  %v169 = vld [vmem:[%s1 + $0x1f8] sm:$0xf]
  %v170 = vld [vmem:[%s1 + $0x1fc] sm:$0xf]
  %v171 = vld [vmem:[%s1 + $0x200] sm:$0xf]
  %v172 = vld [vmem:[%s1 + $0x204] sm:$0xf]
  %v173 = vld [vmem:[%s1 + $0x208] sm:$0xf]
  %v174 = vld [vmem:[%s1 + $0x20c] sm:$0xf]
  %v175 = vld [vmem:[%s1 + $0x210] sm:$0xf]
  %v176 = vld [vmem:[%s1 + $0x214] sm:$0xf]
  %v177 = vld [vmem:[%s1 + $0x218] sm:$0xf]
  %v178 = vld [vmem:[%s1 + $0x21c] sm:$0xf]
  %v179 = vld [vmem:[%s1 + $0x220] sm:$0xf]
  %v180 = vld [vmem:[%s1 + $0x224] sm:$0xf]
  %v181 = vld [vmem:[%s1 + $0x228] sm:$0xf]
  %v182 = vld [vmem:[%s1 + $0x22c] sm:$0xf]
  %v183 = vld [vmem:[%s1 + $0x230] sm:$0xf]
  %v184 = vld [vmem:[%s1 + $0x234] sm:$0xf]
  %v185 = vld [vmem:[%s1 + $0x238] sm:$0xf]
  %v186 = vld [vmem:[%s1 + $0x23c] sm:$0xf]
  %v187 = vld [vmem:[%s1 + $0x240] sm:$0xf]
  %v188 = vld [vmem:[%s1 + $0x244] sm:$0xf]
  %v189 = vld [vmem:[%s1 + $0x248] sm:$0xf]
  %v190 = vld [vmem:[%s1 + $0x24c] sm:$0xf]
  %v191 = vld [vmem:[%s1 + $0x250] sm:$0xf]
  %v192 = vld [vmem:[%s1 + $0x254] sm:$0xf]
  %v193 = vld [vmem:[%s1 + $0x258] sm:$0xf]
  %v194 = vld [vmem:[%s1 + $0x25c] sm:$0xf]
  %v195 = vld [vmem:[%s1 + $0x260] sm:$0xf]
  %v196 = vld [vmem:[%s1 + $0x264] sm:$0xf]
  %v197 = vld [vmem:[%s1 + $0x268] sm:$0xf]
  %v198 = vld [vmem:[%s1 + $0x26c] sm:$0xf]
  %v199 = vld [vmem:[%s1 + $0x270] sm:$0xf]
  %v200 = vld [vmem:[%s1 + $0x274] sm:$0xf]
  %v201 = vld [vmem:[%s1 + $0x278] sm:$0xf]
  %v202 = vld [vmem:[%s1 + $0x27c] sm:$0xf]
  %v203 = vld [vmem:[%s1 + $0x280] sm:$0xf]
  %v204 = vld [vmem:[%s1 + $0x284] sm:$0xf]
  %v205 = vld [vmem:[%s1 + $0x288] sm:$0xf]
  %v206 = vld [vmem:[%s1 + $0x28c] sm:$0xf]
  %v207 = vld [vmem:[%s1 + $0x290] sm:$0xf]
  %v208 = vld [vmem:[%s1 + $0x294] sm:$0xf]
  %v209 = vld [vmem:[%s1 + $0x298] sm:$0xf]
  %v210 = vld [vmem:[%s1 + $0x29c] sm:$0xf]
  %v211 = vld [vmem:[%s1 + $0x2a0] sm:$0xf]
  %v212 = vld [vmem:[%s1 + $0x2a4] sm:$0xf]
  %v213 = vld [vmem:[%s1 + $0x2a8] sm:$0xf]
  %v214 = vld [vmem:[%s1 + $0x2ac] sm:$0xf]
  %v215 = vld [vmem:[%s1 + $0x2b0] sm:$0xf]
  %v216 = vld [vmem:[%s1 + $0x2b4] sm:$0xf]
  %v217 = vld [vmem:[%s1 + $0x2b8] sm:$0xf]
  %v218 = vld [vmem:[%s1 + $0x2bc] sm:$0xf]
  %v219 = vld [vmem:[%s1 + $0x2c0] sm:$0xf]
  %v220 = vld [vmem:[%s1 + $0x2c4] sm:$0xf]
  %v221 = vld [vmem:[%s1 + $0x2c8] sm:$0xf]
  %v222 = vld [vmem:[%s1 + $0x2cc] sm:$0xf]
  %v223 = vld [vmem:[%s1 + $0x2d0] sm:$0xf]
  %v224 = vld [vmem:[%s1 + $0x2d4] sm:$0xf]
  %v225 = vld [vmem:[%s1 + $0x2d8] sm:$0xf]
  %v226 = vld [vmem:[%s1 + $0x2dc] sm:$0xf]
  %v227 = vld [vmem:[%s1 + $0x2e0] sm:$0xf]
  %v228 = vld [vmem:[%s1 + $0x2e4] sm:$0xf]
  %v229 = vld [vmem:[%s1 + $0x2e8] sm:$0xf]
  %v230 = vld [vmem:[%s1 + $0x2ec] sm:$0xf]
  %v231 = vld [vmem:[%s1 + $0x2f0] sm:$0xf]
  %v232 = vld [vmem:[%s1 + $0x2f4] sm:$0xf]
  %v233 = vld [vmem:[%s1 + $0x2f8] sm:$0xf]
  %v234 = vld [vmem:[%s1 + $0x2fc] sm:$0xf]
  %v235 = vld [vmem:[%s1 + $0x300] sm:$0xf]
  %v236 = vld [vmem:[%s1 + $0x304] sm:$0xf]
  %v237 = vld [vmem:[%s1 + $0x308] sm:$0xf]
  %v238 = vld [vmem:[%s1 + $0x30c] sm:$0xf]
  %v239 = vld [vmem:[%s1 + $0x310] sm:$0xf]
  %v240 = vld [vmem:[%s1 + $0x314] sm:$0xf]
  %v241 = vld [vmem:[%s1 + $0x318] sm:$0xf]
  %v242 = vld [vmem:[%s1 + $0x31c] sm:$0xf]
  %v243 = vld [vmem:[%s1 + $0x320] sm:$0xf]
  %v244 = vld [vmem:[%s1 + $0x324] sm:$0xf]
  %v245 = vld [vmem:[%s1 + $0x328] sm:$0xf]
  %v246 = vld [vmem:[%s1 + $0x32c] sm:$0xf]
  %v247 = vld [vmem:[%s1 + $0x330] sm:$0xf]
  %v248 = vld [vmem:[%s1 + $0x334] sm:$0xf]
  %v249 = vld [vmem:[%s1 + $0x338] sm:$0xf]
  %v250 = vld [vmem:[%s1 + $0x33c] sm:$0xf]
  %v251 = vld [vmem:[%s1 + $0x340] sm:$0xf]
  %v252 = vld [vmem:[%s1 + $0x344] sm:$0xf]
  %v253 = vld [vmem:[%s1 + $0x348] sm:$0xf]
  %v254 = vld [vmem:[%s1 + $0x34c] sm:$0xf]
  %v255 = vld [vmem:[%s1 + $0x350] sm:$0xf]
  %v256 = vld [vmem:[%s1 + $0x354] sm:$0xf]
  %v257 = vld [vmem:[%s1 + $0x358] sm:$0xf]
  %v258 = vld [vmem:[%s1 + $0x35c] sm:$0xf]
  %v259 = vld [vmem:[%s1 + $0x360] sm:$0xf]
  %v260 = vld [vmem:[%s1 + $0x364] sm:$0xf]
  %v261 = vld [vmem:[%s1 + $0x368] sm:$0xf]
  %v262 = vld [vmem:[%s1 + $0x36c] sm:$0xf]
  %v263 = vld [vmem:[%s1 + $0x370] sm:$0xf]
  %v264 = vld [vmem:[%s1 + $0x374] sm:$0xf]
  %v265 = vld [vmem:[%s1 + $0x378] sm:$0xf]
  %v266 = vld [vmem:[%s1 + $0x37c] sm:$0xf]
  %v267 = vld [vmem:[%s1 + $0x380] sm:$0xf]
  %v268 = vld [vmem:[%s1 + $0x384] sm:$0xf]
  %v269 = vld [vmem:[%s1 + $0x388] sm:$0xf]
  %v270 = vld [vmem:[%s1 + $0x38c] sm:$0xf]
  %v271 = vld [vmem:[%s1 + $0x390] sm:$0xf]
  %v272 = vld [vmem:[%s1 + $0x394] sm:$0xf]
  %v273 = vld [vmem:[%s1 + $0x398] sm:$0xf]
  %v274 = vld [vmem:[%s1 + $0x39c] sm:$0xf]
  %v275 = vld [vmem:[%s1 + $0x3a0] sm:$0xf]
  %v276 = vld [vmem:[%s1 + $0x3a4] sm:$0xf]
  %v277 = vld [vmem:[%s1 + $0x3a8] sm:$0xf]
  %v278 = vld [vmem:[%s1 + $0x3ac] sm:$0xf]
  %v279 = vld [vmem:[%s1 + $0x3b0] sm:$0xf]
  %v280 = vld [vmem:[%s1 + $0x3b4] sm:$0xf]
  %v281 = vld [vmem:[%s1 + $0x3b8] sm:$0xf]
  %v282 = vld [vmem:[%s1 + $0x3bc] sm:$0xf]
  %v283 = vld [vmem:[%s1 + $0x3c0] sm:$0xf]
  %v284 = vld [vmem:[%s1 + $0x3c4] sm:$0xf]
  %v285 = vld [vmem:[%s1 + $0x3c8] sm:$0xf]
  %v286 = vld [vmem:[%s1 + $0x3cc] sm:$0xf]
  %v287 = vld [vmem:[%s1 + $0x3d0] sm:$0xf]
  %v288 = vld [vmem:[%s1 + $0x3d4] sm:$0xf]
  %v289 = vld [vmem:[%s1 + $0x3d8] sm:$0xf]
  %v290 = vld [vmem:[%s1 + $0x3dc] sm:$0xf]
  %v291 = vld [vmem:[%s1 + $0x3e0] sm:$0xf]
  %v292 = vld [vmem:[%s1 + $0x3e4] sm:$0xf]
  %v293 = vld [vmem:[%s1 + $0x3e8] sm:$0xf]
  %v294 = vld [vmem:[%s1 + $0x3ec] sm:$0xf]
  %v295 = vld [vmem:[%s1 + $0x3f0] sm:$0xf]
  %v296 = vld [vmem:[%s1 + $0x3f4] sm:$0xf]
  %v297 = vld [vmem:[%s1 + $0x3f8] sm:$0xf]
  %v298 = vld [vmem:[%s1 + $0x3fc] sm:$0xf]
  %v299 = vld [vmem:[%s1 + $0x400] sm:$0xf]
  %v300 = vld [vmem:[%s1 + $0x404] sm:$0xf]
  %v301 = vld [vmem:[%s1 + $0x408] sm:$0xf]
  %v302 = vld [vmem:[%s1 + $0x40c] sm:$0xf]
  %v303 = vld [vmem:[%s1 + $0x410] sm:$0xf]
  %v304 = vld [vmem:[%s1 + $0x414] sm:$0xf]
  %v305 = vld [vmem:[%s1 + $0x418] sm:$0xf]
  %v306 = vld [vmem:[%s1 + $0x41c] sm:$0xf]
  %v307 = vld [vmem:[%s1 + $0x420] sm:$0xf]
  %v308 = vld [vmem:[%s1 + $0x424] sm:$0xf]
  %v309 = vld [vmem:[%s1 + $0x428] sm:$0xf]
  %v310 = vld [vmem:[%s1 + $0x42c] sm:$0xf]
  %v311 = vld [vmem:[%s1 + $0x430] sm:$0xf]
  %v312 = vld [vmem:[%s1 + $0x434] sm:$0xf]
  %v313 = vld [vmem:[%s1 + $0x438] sm:$0xf]
  %v314 = vld [vmem:[%s1 + $0x43c] sm:$0xf]
  %v315 = vld [vmem:[%s1 + $0x440] sm:$0xf]
  %v316 = vld [vmem:[%s1 + $0x444] sm:$0xf]
  %v317 = vld [vmem:[%s1 + $0x448] sm:$0xf]
  %v318 = vld [vmem:[%s1 + $0x44c] sm:$0xf]
  %v319 = vld [vmem:[%s1 + $0x450] sm:$0xf]
  %v320 = vld [vmem:[%s1 + $0x454] sm:$0xf]
  %v321 = vld [vmem:[%s1 + $0x458] sm:$0xf]
  %v322 = vld [vmem:[%s1 + $0x45c] sm:$0xf]
  %v323 = vld [vmem:[%s1 + $0x460] sm:$0xf]
  %v324 = vld [vmem:[%s1 + $0x464] sm:$0xf]
  %v325 = vld [vmem:[%s1 + $0x468] sm:$0xf]
  %v326 = vld [vmem:[%s1 + $0x46c] sm:$0xf]
  %v327 = vld [vmem:[%s1 + $0x470] sm:$0xf]
  %v328 = vld [vmem:[%s1 + $0x474] sm:$0xf]
  %v329 = vld [vmem:[%s1 + $0x478] sm:$0xf]
  %v330 = vld [vmem:[%s1 + $0x47c] sm:$0xf]
  %v331 = vld [vmem:[%s1 + $0x480] sm:$0xf]
  %v332 = vld [vmem:[%s1 + $0x484] sm:$0xf]
  %v333 = vld [vmem:[%s1 + $0x488] sm:$0xf]
  %v334 = vld [vmem:[%s1 + $0x48c] sm:$0xf]
  %v335 = vld [vmem:[%s1 + $0x490] sm:$0xf]
  %v336 = vld [vmem:[%s1 + $0x494] sm:$0xf]
  %v337 = vld [vmem:[%s1 + $0x498] sm:$0xf]
  %v338 = vld [vmem:[%s1 + $0x49c] sm:$0xf]
  %v339 = vld [vmem:[%s1 + $0x4a0] sm:$0xf]
  %v340 = vld [vmem:[%s1 + $0x4a4] sm:$0xf]
  %v341 = vld [vmem:[%s1 + $0x4a8] sm:$0xf]
  %v342 = vld [vmem:[%s1 + $0x4ac] sm:$0xf]
  %v343 = vld [vmem:[%s1 + $0x4b0] sm:$0xf]
  %v344 = vld [vmem:[%s1 + $0x4b4] sm:$0xf]
  %v345 = vld [vmem:[%s1 + $0x4b8] sm:$0xf]
  %v346 = vld [vmem:[%s1 + $0x4bc] sm:$0xf]
  %v347 = vld [vmem:[%s1 + $0x4c0] sm:$0xf]
  %v348 = vld [vmem:[%s1 + $0x4c4] sm:$0xf]
  %v349 = vld [vmem:[%s1 + $0x4c8] sm:$0xf]
  %v350 = vld [vmem:[%s1 + $0x4cc] sm:$0xf]
  %v351 = vld [vmem:[%s1 + $0x4d0] sm:$0xf]
  %v352 = vld [vmem:[%s1 + $0x4d4] sm:$0xf]
  %v353 = vld [vmem:[%s1 + $0x4d8] sm:$0xf]
  %v354 = vld [vmem:[%s1 + $0x4dc] sm:$0xf]
  %v355 = vld [vmem:[%s1 + $0x4e0] sm:$0xf]
  %v356 = vld [vmem:[%s1 + $0x4e4] sm:$0xf]
  %v357 = vld [vmem:[%s1 + $0x4e8] sm:$0xf]
  %v358 = vld [vmem:[%s1 + $0x4ec] sm:$0xf]
  %v359 = vld [vmem:[%s1 + $0x4f0] sm:$0xf]
  %v360 = vld [vmem:[%s1 + $0x4f4] sm:$0xf]
  %v361 = vld [vmem:[%s1 + $0x4f8] sm:$0xf]
  %v362 = vld [vmem:[%s1 + $0x4fc] sm:$0xf]
  %v363 = vld [vmem:[%s1 + $0x500] sm:$0xf]
  %v364 = vld [vmem:[%s1 + $0x504] sm:$0xf]
  %v365 = vld [vmem:[%s1 + $0x508] sm:$0xf]
  %v366 = vld [vmem:[%s1 + $0x50c] sm:$0xf]
  %v367 = vld [vmem:[%s1 + $0x510] sm:$0xf]
  %v368 = vld [vmem:[%s1 + $0x514] sm:$0xf]
  %v369 = vld [vmem:[%s1 + $0x518] sm:$0xf]
  %v370 = vld [vmem:[%s1 + $0x51c] sm:$0xf]
  %v371 = vld [vmem:[%s1 + $0x520] sm:$0xf]
  %v372 = vld [vmem:[%s1 + $0x524] sm:$0xf]
  %v373 = vld [vmem:[%s1 + $0x528] sm:$0xf]
  %v374 = vld [vmem:[%s1 + $0x52c] sm:$0xf]
  %v375 = vld [vmem:[%s1 + $0x530] sm:$0xf]
  %v376 = vld [vmem:[%s1 + $0x534] sm:$0xf]
  %v377 = vld [vmem:[%s1 + $0x538] sm:$0xf]
  %v378 = vld [vmem:[%s1 + $0x53c] sm:$0xf]
  %v379 = vld [vmem:[%s1 + $0x540] sm:$0xf]
  %v380 = vld [vmem:[%s1 + $0x544] sm:$0xf]
  %v381 = vld [vmem:[%s1 + $0x548] sm:$0xf]
  %v382 = vld [vmem:[%s1 + $0x54c] sm:$0xf]
  %v383 = vld [vmem:[%s1 + $0x550] sm:$0xf]
  %v384 = vld [vmem:[%s1 + $0x554] sm:$0xf]
  %v385 = vld [vmem:[%s1 + $0x558] sm:$0xf]
  %v386 = vld [vmem:[%s1 + $0x55c] sm:$0xf]
  %v387 = vld [vmem:[%s1 + $0x560] sm:$0xf]
  %v388 = vld [vmem:[%s1 + $0x564] sm:$0xf]
  %v389 = vld [vmem:[%s1 + $0x568] sm:$0xf]
  %v390 = vld [vmem:[%s1 + $0x56c] sm:$0xf]
  %v391 = vld [vmem:[%s1 + $0x570] sm:$0xf]
  %v392 = vld [vmem:[%s1 + $0x574] sm:$0xf]
  %v393 = vld [vmem:[%s1 + $0x578] sm:$0xf]
  %v394 = vld [vmem:[%s1 + $0x57c] sm:$0xf]
  %v395 = vld [vmem:[%s1 + $0x580] sm:$0xf]
  %v396 = vld [vmem:[%s1 + $0x584] sm:$0xf]
  %v397 = vld [vmem:[%s1 + $0x588] sm:$0xf]
  %v398 = vld [vmem:[%s1 + $0x58c] sm:$0xf]
  %v399 = vld [vmem:[%s1 + $0x590] sm:$0xf]
  %v400 = vld [vmem:[%s1 + $0x594] sm:$0xf]
  %v401 = vld [vmem:[%s1 + $0x598] sm:$0xf]
  %v402 = vld [vmem:[%s1 + $0x59c] sm:$0xf]
  %v403 = vld [vmem:[%s1 + $0x5a0] sm:$0xf]
  %v404 = vld [vmem:[%s1 + $0x5a4] sm:$0xf]
  %v405 = vld [vmem:[%s1 + $0x5a8] sm:$0xf]
  %v406 = vld [vmem:[%s1 + $0x5ac] sm:$0xf]
  %v407 = vld [vmem:[%s1 + $0x5b0] sm:$0xf]
  %v408 = vld [vmem:[%s1 + $0x5b4] sm:$0xf]
  %v409 = vld [vmem:[%s1 + $0x5b8] sm:$0xf]
  %v410 = vld [vmem:[%s1 + $0x5bc] sm:$0xf]
  %v411 = vld [vmem:[%s1 + $0x5c0] sm:$0xf]
  %v412 = vld [vmem:[%s1 + $0x5c4] sm:$0xf]
  %v413 = vld [vmem:[%s1 + $0x5c8] sm:$0xf]
  %v414 = vld [vmem:[%s1 + $0x5cc] sm:$0xf]
  %v415 = vld [vmem:[%s1 + $0x5d0] sm:$0xf]
  %v416 = vld [vmem:[%s1 + $0x5d4] sm:$0xf]
  %v417 = vld [vmem:[%s1 + $0x5d8] sm:$0xf]
  %v418 = vld [vmem:[%s1 + $0x5dc] sm:$0xf]
  %v419 = vld [vmem:[%s1 + $0x5e0] sm:$0xf]
  %v420 = vld [vmem:[%s1 + $0x5e4] sm:$0xf]
  %v421 = vld [vmem:[%s1 + $0x5e8] sm:$0xf]
  %v422 = vld [vmem:[%s1 + $0x5ec] sm:$0xf]
  %v423 = vld [vmem:[%s1 + $0x5f0] sm:$0xf]
  %v424 = vld [vmem:[%s1 + $0x5f4] sm:$0xf]
  %v425 = vld [vmem:[%s1 + $0x5f8] sm:$0xf]
  %v426 = vld [vmem:[%s1 + $0x5fc] sm:$0xf]
  %v427 = vld [vmem:[%s1 + $0x600] sm:$0xf]
  %v428 = vld [vmem:[%s1 + $0x604] sm:$0xf]
  %v429 = vld [vmem:[%s1 + $0x608] sm:$0xf]
  %v430 = vld [vmem:[%s1 + $0x60c] sm:$0xf]
  %v431 = vld [vmem:[%s1 + $0x610] sm:$0xf]
  %v432 = vld [vmem:[%s1 + $0x614] sm:$0xf]
  %v433 = vld [vmem:[%s1 + $0x618] sm:$0xf]
  %v434 = vld [vmem:[%s1 + $0x61c] sm:$0xf]
  %v435 = vld [vmem:[%s1 + $0x620] sm:$0xf]
  %v436 = vld [vmem:[%s1 + $0x624] sm:$0xf]
  %v437 = vld [vmem:[%s1 + $0x628] sm:$0xf]
  %v438 = vld [vmem:[%s1 + $0x62c] sm:$0xf]
  %v439 = vld [vmem:[%s1 + $0x630] sm:$0xf]
  %v440 = vld [vmem:[%s1 + $0x634] sm:$0xf]
  %v441 = vld [vmem:[%s1 + $0x638] sm:$0xf]
  %v442 = vld [vmem:[%s1 + $0x63c] sm:$0xf]
  %v443 = vld [vmem:[%s1 + $0x640] sm:$0xf]
  %v444 = vld [vmem:[%s1 + $0x644] sm:$0xf]
  %v445 = vld [vmem:[%s1 + $0x648] sm:$0xf]
  %v446 = vld [vmem:[%s1 + $0x64c] sm:$0xf]
  %v447 = vld [vmem:[%s1 + $0x650] sm:$0xf]
  %v448 = vld [vmem:[%s1 + $0x654] sm:$0xf]
  %v449 = vld [vmem:[%s1 + $0x658] sm:$0xf]
  %v450 = vld [vmem:[%s1 + $0x65c] sm:$0xf]
  %v451 = vld [vmem:[%s1 + $0x660] sm:$0xf]
  %v452 = vld [vmem:[%s1 + $0x664] sm:$0xf]
  %v453 = vld [vmem:[%s1 + $0x668] sm:$0xf]
  %v454 = vld [vmem:[%s1 + $0x66c] sm:$0xf]
  %v455 = vld [vmem:[%s1 + $0x670] sm:$0xf]
  %v456 = vld [vmem:[%s1 + $0x674] sm:$0xf]
  %v457 = vld [vmem:[%s1 + $0x678] sm:$0xf]
  %v458 = vld [vmem:[%s1 + $0x67c] sm:$0xf]
  %v459 = vld [vmem:[%s1 + $0x680] sm:$0xf]
  %v460 = vld [vmem:[%s1 + $0x684] sm:$0xf]
  %v461 = vld [vmem:[%s1 + $0x688] sm:$0xf]
  %v462 = vld [vmem:[%s1 + $0x68c] sm:$0xf]
  %v463 = vld [vmem:[%s1 + $0x690] sm:$0xf]
  %v464 = vld [vmem:[%s1 + $0x694] sm:$0xf]
  %v465 = vld [vmem:[%s1 + $0x698] sm:$0xf]
  %v466 = vld [vmem:[%s1 + $0x69c] sm:$0xf]
  %v467 = vld [vmem:[%s1 + $0x6a0] sm:$0xf]
  %v468 = vld [vmem:[%s1 + $0x6a4] sm:$0xf]
  %v469 = vld [vmem:[%s1 + $0x6a8] sm:$0xf]
  %v470 = vld [vmem:[%s1 + $0x6ac] sm:$0xf]
  %v471 = vld [vmem:[%s1 + $0x6b0] sm:$0xf]
  %v472 = vld [vmem:[%s1 + $0x6b4] sm:$0xf]
  %v473 = vld [vmem:[%s1 + $0x6b8] sm:$0xf]
  %v474 = vld [vmem:[%s1 + $0x6bc] sm:$0xf]
  %v475 = vld [vmem:[%s1 + $0x6c0] sm:$0xf]
  %v476 = vld [vmem:[%s1 + $0x6c4] sm:$0xf]
  %v477 = vld [vmem:[%s1 + $0x6c8] sm:$0xf]
  %v478 = vld [vmem:[%s1 + $0x6cc] sm:$0xf]
  %v479 = vld [vmem:[%s1 + $0x6d0] sm:$0xf]
  %v480 = vld [vmem:[%s1 + $0x6d4] sm:$0xf]
  %v481 = vld [vmem:[%s1 + $0x6d8] sm:$0xf]
  %v482 = vld [vmem:[%s1 + $0x6dc] sm:$0xf]
  %v483 = vld [vmem:[%s1 + $0x6e0] sm:$0xf]
  %v484 = vld [vmem:[%s1 + $0x6e4] sm:$0xf]
  %v485 = vld [vmem:[%s1 + $0x6e8] sm:$0xf]
  %v486 = vld [vmem:[%s1 + $0x6ec] sm:$0xf]
  %v487 = vld [vmem:[%s1 + $0x6f0] sm:$0xf]
  %v488 = vld [vmem:[%s1 + $0x6f4] sm:$0xf]
  %v489 = vld [vmem:[%s1 + $0x6f8] sm:$0xf]
  %v490 = vld [vmem:[%s1 + $0x6fc] sm:$0xf]
  %v491 = vld [vmem:[%s1 + $0x700] sm:$0xf]
  %v492 = vld [vmem:[%s1 + $0x704] sm:$0xf]
  %v493 = vld [vmem:[%s1 + $0x708] sm:$0xf]
  %v494 = vld [vmem:[%s1 + $0x70c] sm:$0xf]
  %v495 = vld [vmem:[%s1 + $0x710] sm:$0xf]
  %v496 = vld [vmem:[%s1 + $0x714] sm:$0xf]
  %v497 = vld [vmem:[%s1 + $0x718] sm:$0xf]
  %v498 = vld [vmem:[%s1 + $0x71c] sm:$0xf]
  %v499 = vld [vmem:[%s1 + $0x720] sm:$0xf]
  %v500 = vld [vmem:[%s1 + $0x724] sm:$0xf]
  %v501 = vld [vmem:[%s1 + $0x728] sm:$0xf]
  %v502 = vld [vmem:[%s1 + $0x72c] sm:$0xf]
  %v503 = vld [vmem:[%s1 + $0x730] sm:$0xf]
  %v504 = vld [vmem:[%s1 + $0x734] sm:$0xf]
  %v505 = vld [vmem:[%s1 + $0x738] sm:$0xf]
  %v506 = vld [vmem:[%s1 + $0x73c] sm:$0xf]
  %v507 = vld [vmem:[%s1 + $0x740] sm:$0xf]
  %v508 = vld [vmem:[%s1 + $0x744] sm:$0xf]
  %v509 = vld [vmem:[%s1 + $0x748] sm:$0xf]
  %v510 = vld [vmem:[%s1 + $0x74c] sm:$0xf]
  %v511 = vld [vmem:[%s1 + $0x750] sm:$0xf]
  %v512 = vld [vmem:[%s1 + $0x754] sm:$0xf]
  %v513 = vld [vmem:[%s1 + $0x758] sm:$0xf]
  %v514 = vld [vmem:[%s1 + $0x75c] sm:$0xf]
  %v515 = vld [vmem:[%s1 + $0x760] sm:$0xf]
  %v516 = vld [vmem:[%s1 + $0x764] sm:$0xf]
  %v517 = vld [vmem:[%s1 + $0x768] sm:$0xf]
  %v518 = vld [vmem:[%s1 + $0x76c] sm:$0xf]
  %v519 = vld [vmem:[%s1 + $0x770] sm:$0xf]
  %v520 = vld [vmem:[%s1 + $0x774] sm:$0xf]
  %v521 = vld [vmem:[%s1 + $0x778] sm:$0xf]
  %v522 = vld [vmem:[%s1 + $0x77c] sm:$0xf]
  %v523 = vld [vmem:[%s1 + $0x780] sm:$0xf]
  %v524 = vld [vmem:[%s1 + $0x784] sm:$0xf]
  %v525 = vld [vmem:[%s1 + $0x788] sm:$0xf]
  %v526 = vld [vmem:[%s1 + $0x78c] sm:$0xf]
  %v527 = vld [vmem:[%s1 + $0x790] sm:$0xf]
  %v528 = vld [vmem:[%s1 + $0x794] sm:$0xf]
  %v529 = vld [vmem:[%s1 + $0x798] sm:$0xf]
  %v530 = vld [vmem:[%s1 + $0x79c] sm:$0xf]
  %v531 = vld [vmem:[%s1 + $0x7a0] sm:$0xf]
  %v532 = vld [vmem:[%s1 + $0x7a4] sm:$0xf]
  %v533 = vld [vmem:[%s1 + $0x7a8] sm:$0xf]
  %v534 = vld [vmem:[%s1 + $0x7ac] sm:$0xf]
  %v535 = vld [vmem:[%s1 + $0x7b0] sm:$0xf]
  %v536 = vld [vmem:[%s1 + $0x7b4] sm:$0xf]
  %v537 = vld [vmem:[%s1 + $0x7b8] sm:$0xf]
  %v538 = vld [vmem:[%s1 + $0x7bc] sm:$0xf]
  %v539 = vld [vmem:[%s1 + $0x7c0] sm:$0xf]
  %v540 = vld [vmem:[%s1 + $0x7c4] sm:$0xf]
  %v541 = vld [vmem:[%s1 + $0x7c8] sm:$0xf]
  %v542 = vld [vmem:[%s1 + $0x7cc] sm:$0xf]
  %v543 = vld [vmem:[%s1 + $0x7d0] sm:$0xf]
  %v544 = vld [vmem:[%s1 + $0x7d4] sm:$0xf]
  %v545 = vld [vmem:[%s1 + $0x7d8] sm:$0xf]
  %v546 = vld [vmem:[%s1 + $0x7dc] sm:$0xf]
  %v547 = vld [vmem:[%s1 + $0x7e0] sm:$0xf]
  %v548 = vld [vmem:[%s1 + $0x7e4] sm:$0xf]
  %v549 = vld [vmem:[%s1 + $0x7e8] sm:$0xf]
  %v550 = vld [vmem:[%s1 + $0x7ec] sm:$0xf]
  %v551 = vld [vmem:[%s1 + $0x7f0] sm:$0xf]
  %v552 = vld [vmem:[%s1 + $0x7f4] sm:$0xf]
  %v553 = vld [vmem:[%s1 + $0x7f8] sm:$0xf]
  %v554 = vld [vmem:[%s1 + $0x7fc] sm:$0xf]
  %v587 = vunpack.c.l.b16 %v11
  %v588 = vunpack.c.h.b16 %v11
  %v589 = vunpack.c.l.b16 %v12
  %v590 = vunpack.c.h.b16 %v12
  %v591 = vunpack.c.l.b16 %v13
  %v592 = vunpack.c.h.b16 %v13
  %v593 = vunpack.c.l.b16 %v14
  %v594 = vunpack.c.h.b16 %v14
  %v595 = vunpack.c.l.b16 %v15
  %v596 = vunpack.c.h.b16 %v15
  %v597 = vunpack.c.l.b16 %v16
  %v598 = vunpack.c.h.b16 %v16
  %v599 = vunpack.c.l.b16 %v17
  %v600 = vunpack.c.h.b16 %v17
  %v601 = vunpack.c.l.b16 %v18
  %v602 = vunpack.c.h.b16 %v18
  %v603 = vunpack.c.l.b16 %v19
  %v604 = vunpack.c.h.b16 %v19
  %v605 = vunpack.c.l.b16 %v20
  %v606 = vunpack.c.h.b16 %v20
  %v607 = vunpack.c.l.b16 %v21
  %v608 = vunpack.c.h.b16 %v21
  %v609 = vunpack.c.l.b16 %v22
  %v610 = vunpack.c.h.b16 %v22
  %v611 = vunpack.c.l.b16 %v23
  %v612 = vunpack.c.h.b16 %v23
  %v613 = vunpack.c.l.b16 %v24
  %v614 = vunpack.c.h.b16 %v24
  %v615 = vunpack.c.l.b16 %v25
  %v616 = vunpack.c.h.b16 %v25
  %v617 = vunpack.c.l.b16 %v26
  %v618 = vunpack.c.h.b16 %v26
  %v619 = vunpack.c.l.b16 %v27
  %v620 = vunpack.c.h.b16 %v27
  %v621 = vunpack.c.l.b16 %v28
  %v622 = vunpack.c.h.b16 %v28
  %v623 = vunpack.c.l.b16 %v29
  %v624 = vunpack.c.h.b16 %v29
  %v625 = vunpack.c.l.b16 %v30
  %v626 = vunpack.c.h.b16 %v30
  %v627 = vunpack.c.l.b16 %v31
  %v628 = vunpack.c.h.b16 %v31
  %v629 = vunpack.c.l.b16 %v32
  %v630 = vunpack.c.h.b16 %v32
  %v631 = vunpack.c.l.b16 %v33
  %v632 = vunpack.c.h.b16 %v33
  %v633 = vunpack.c.l.b16 %v34
  %v634 = vunpack.c.h.b16 %v34
  %v635 = vunpack.c.l.b16 %v35
  %v636 = vunpack.c.h.b16 %v35
  %v637 = vunpack.c.l.b16 %v36
  %v638 = vunpack.c.h.b16 %v36
  %v639 = vunpack.c.l.b16 %v37
  %v640 = vunpack.c.h.b16 %v37
  %v641 = vunpack.c.l.b16 %v38
  %v642 = vunpack.c.h.b16 %v38
  %v643 = vunpack.c.l.b16 %v39
  %v644 = vunpack.c.h.b16 %v39
  %v645 = vunpack.c.l.b16 %v40
  %v646 = vunpack.c.h.b16 %v40
  %v647 = vunpack.c.l.b16 %v41
  %v648 = vunpack.c.h.b16 %v41
  %v649 = vunpack.c.l.b16 %v42
  %v650 = vunpack.c.h.b16 %v42
  %v651 = vpack.c.b16 %v619, %v587
  %v652 = vpack.c.b16 %v620, %v588
  %v653 = vpack.c.b16 %v621, %v589
  %v654 = vpack.c.b16 %v622, %v590
  %v655 = vpack.c.b16 %v623, %v591
  %v656 = vpack.c.b16 %v624, %v592
  %v657 = vpack.c.b16 %v625, %v593
  %v658 = vpack.c.b16 %v626, %v594
  %v659 = vpack.c.b16 %v627, %v595
  %v660 = vpack.c.b16 %v628, %v596
  %v661 = vpack.c.b16 %v629, %v597
  %v662 = vpack.c.b16 %v630, %v598
  %v663 = vpack.c.b16 %v631, %v599
  %v664 = vpack.c.b16 %v632, %v600
  %v665 = vpack.c.b16 %v633, %v601
  %v666 = vpack.c.b16 %v634, %v602
  %v667 = vpack.c.b16 %v635, %v603
  %v668 = vpack.c.b16 %v636, %v604
  %v669 = vpack.c.b16 %v637, %v605
  %v670 = vpack.c.b16 %v638, %v606
  %v671 = vpack.c.b16 %v639, %v607
  %v672 = vpack.c.b16 %v640, %v608
  %v673 = vpack.c.b16 %v641, %v609
  %v674 = vpack.c.b16 %v642, %v610
  %v675 = vpack.c.b16 %v643, %v611
  %v676 = vpack.c.b16 %v644, %v612
  %v677 = vpack.c.b16 %v645, %v613
  %v678 = vpack.c.b16 %v646, %v614
  %v679 = vpack.c.b16 %v647, %v615
  %v680 = vpack.c.b16 %v648, %v616
  %v681 = vpack.c.b16 %v649, %v617
  %v682 = vpack.c.b16 %v650, %v618
  %v1227 = vunpack.c.l.b16 %v43
  %v1228 = vunpack.c.l.b16 %v44
  %v1229 = vunpack.c.l.b16 %v45
  %v1230 = vunpack.c.l.b16 %v46
  %v1231 = vunpack.c.l.b16 %v47
  %v1232 = vunpack.c.l.b16 %v48
  %v1233 = vunpack.c.l.b16 %v49
  %v1234 = vunpack.c.l.b16 %v50
  %v1235 = vunpack.c.l.b16 %v51
  %v1236 = vunpack.c.l.b16 %v52
  %v1237 = vunpack.c.l.b16 %v53
  %v1238 = vunpack.c.l.b16 %v54
  %v1239 = vunpack.c.l.b16 %v55
  %v1240 = vunpack.c.l.b16 %v56
  %v1241 = vunpack.c.l.b16 %v57
  %v1242 = vunpack.c.l.b16 %v58
  %v1243 = vunpack.c.l.b16 %v59
  %v1244 = vunpack.c.l.b16 %v60
  %v1245 = vunpack.c.l.b16 %v61
  %v1246 = vunpack.c.l.b16 %v62
  %v1247 = vunpack.c.l.b16 %v63
  %v1248 = vunpack.c.l.b16 %v64
  %v1249 = vunpack.c.l.b16 %v65
  %v1250 = vunpack.c.l.b16 %v66
  %v1251 = vunpack.c.l.b16 %v67
  %v1252 = vunpack.c.l.b16 %v68
  %v1253 = vunpack.c.l.b16 %v69
  %v1254 = vunpack.c.l.b16 %v70
  %v1255 = vunpack.c.l.b16 %v71
  %v1256 = vunpack.c.l.b16 %v72
  %v1257 = vunpack.c.l.b16 %v73
  %v1258 = vunpack.c.l.b16 %v74
  %v1259 = vunpack.c.l.b16 %v75
  %v1260 = vunpack.c.l.b16 %v76
  %v1261 = vunpack.c.l.b16 %v77
  %v1262 = vunpack.c.l.b16 %v78
  %v1263 = vunpack.c.l.b16 %v79
  %v1264 = vunpack.c.l.b16 %v80
  %v1265 = vunpack.c.l.b16 %v81
  %v1266 = vunpack.c.l.b16 %v82
  %v1267 = vunpack.c.l.b16 %v83
  %v1268 = vunpack.c.l.b16 %v84
  %v1269 = vunpack.c.l.b16 %v85
  %v1270 = vunpack.c.l.b16 %v86
  %v1271 = vunpack.c.l.b16 %v87
  %v1272 = vunpack.c.l.b16 %v88
  %v1273 = vunpack.c.l.b16 %v89
  %v1274 = vunpack.c.l.b16 %v90
  %v1275 = vunpack.c.l.b16 %v91
  %v1276 = vunpack.c.l.b16 %v92
  %v1277 = vunpack.c.l.b16 %v93
  %v1278 = vunpack.c.l.b16 %v94
  %v1279 = vunpack.c.l.b16 %v95
  %v1280 = vunpack.c.l.b16 %v96
  %v1281 = vunpack.c.l.b16 %v97
  %v1282 = vunpack.c.l.b16 %v98
  %v1283 = vunpack.c.l.b16 %v99
  %v1284 = vunpack.c.l.b16 %v100
  %v1285 = vunpack.c.l.b16 %v101
  %v1286 = vunpack.c.l.b16 %v102
  %v1287 = vunpack.c.l.b16 %v103
  %v1288 = vunpack.c.l.b16 %v104
  %v1289 = vunpack.c.l.b16 %v105
  %v1290 = vunpack.c.l.b16 %v106
  %v1291 = vunpack.c.l.b16 %v107
  %v1292 = vunpack.c.l.b16 %v108
  %v1293 = vunpack.c.l.b16 %v109
  %v1294 = vunpack.c.l.b16 %v110
  %v1295 = vunpack.c.l.b16 %v111
  %v1296 = vunpack.c.l.b16 %v112
  %v1297 = vunpack.c.l.b16 %v113
  %v1298 = vunpack.c.l.b16 %v114
  %v1299 = vunpack.c.l.b16 %v115
  %v1300 = vunpack.c.l.b16 %v116
  %v1301 = vunpack.c.l.b16 %v117
  %v1302 = vunpack.c.l.b16 %v118
  %v1303 = vunpack.c.l.b16 %v119
  %v1304 = vunpack.c.l.b16 %v120
  %v1305 = vunpack.c.l.b16 %v121
  %v1306 = vunpack.c.l.b16 %v122
  %v1307 = vunpack.c.l.b16 %v123
  %v1308 = vunpack.c.l.b16 %v124
  %v1309 = vunpack.c.l.b16 %v125
  %v1310 = vunpack.c.l.b16 %v126
  %v1311 = vunpack.c.l.b16 %v127
  %v1312 = vunpack.c.l.b16 %v128
  %v1313 = vunpack.c.l.b16 %v129
  %v1314 = vunpack.c.l.b16 %v130
  %v1315 = vunpack.c.l.b16 %v131
  %v1316 = vunpack.c.l.b16 %v132
  %v1317 = vunpack.c.l.b16 %v133
  %v1318 = vunpack.c.l.b16 %v134
  %v1319 = vunpack.c.l.b16 %v135
  %v1320 = vunpack.c.l.b16 %v136
  %v1321 = vunpack.c.l.b16 %v137
  %v1322 = vunpack.c.l.b16 %v138
  %v1323 = vunpack.c.l.b16 %v139
  %v1324 = vunpack.c.l.b16 %v140
  %v1325 = vunpack.c.l.b16 %v141
  %v1326 = vunpack.c.l.b16 %v142
  %v1327 = vunpack.c.l.b16 %v143
  %v1328 = vunpack.c.l.b16 %v144
  %v1329 = vunpack.c.l.b16 %v145
  %v1330 = vunpack.c.l.b16 %v146
  %v1331 = vunpack.c.l.b16 %v147
  %v1332 = vunpack.c.l.b16 %v148
  %v1333 = vunpack.c.l.b16 %v149
  %v1334 = vunpack.c.l.b16 %v150
  %v1335 = vunpack.c.l.b16 %v151
  %v1336 = vunpack.c.l.b16 %v152
  %v1337 = vunpack.c.l.b16 %v153
  %v1338 = vunpack.c.l.b16 %v154
  %v1339 = vunpack.c.l.b16 %v155
  %v1340 = vunpack.c.l.b16 %v156
  %v1341 = vunpack.c.l.b16 %v157
  %v1342 = vunpack.c.l.b16 %v158
  %v1343 = vunpack.c.l.b16 %v159
  %v1344 = vunpack.c.l.b16 %v160
  %v1345 = vunpack.c.l.b16 %v161
  %v1346 = vunpack.c.l.b16 %v162
  %v1347 = vunpack.c.l.b16 %v163
  %v1348 = vunpack.c.l.b16 %v164
  %v1349 = vunpack.c.l.b16 %v165
  %v1350 = vunpack.c.l.b16 %v166
  %v1351 = vunpack.c.l.b16 %v167
  %v1352 = vunpack.c.l.b16 %v168
  %v1353 = vunpack.c.l.b16 %v169
  %v1354 = vunpack.c.l.b16 %v170
  %v1355 = vunpack.c.l.b16 %v171
  %v1356 = vunpack.c.l.b16 %v172
  %v1357 = vunpack.c.l.b16 %v173
  %v1358 = vunpack.c.l.b16 %v174
  %v1359 = vunpack.c.l.b16 %v175
  %v1360 = vunpack.c.l.b16 %v176
  %v1361 = vunpack.c.l.b16 %v177
  %v1362 = vunpack.c.l.b16 %v178
  %v1363 = vunpack.c.l.b16 %v179
  %v1364 = vunpack.c.l.b16 %v180
  %v1365 = vunpack.c.l.b16 %v181
  %v1366 = vunpack.c.l.b16 %v182
  %v1367 = vunpack.c.l.b16 %v183
  %v1368 = vunpack.c.l.b16 %v184
  %v1369 = vunpack.c.l.b16 %v185
  %v1370 = vunpack.c.l.b16 %v186
  %v1371 = vunpack.c.l.b16 %v187
  %v1372 = vunpack.c.l.b16 %v188
  %v1373 = vunpack.c.l.b16 %v189
  %v1374 = vunpack.c.l.b16 %v190
  %v1375 = vunpack.c.l.b16 %v191
  %v1376 = vunpack.c.l.b16 %v192
  %v1377 = vunpack.c.l.b16 %v193
  %v1378 = vunpack.c.l.b16 %v194
  %v1379 = vunpack.c.l.b16 %v195
  %v1380 = vunpack.c.l.b16 %v196
  %v1381 = vunpack.c.l.b16 %v197
  %v1382 = vunpack.c.l.b16 %v198
  %v1383 = vunpack.c.l.b16 %v199
  %v1384 = vunpack.c.l.b16 %v200
  %v1385 = vunpack.c.l.b16 %v201
  %v1386 = vunpack.c.l.b16 %v202
  %v1387 = vunpack.c.l.b16 %v203
  %v1388 = vunpack.c.l.b16 %v204
  %v1389 = vunpack.c.l.b16 %v205
  %v1390 = vunpack.c.l.b16 %v206
  %v1391 = vunpack.c.l.b16 %v207
  %v1392 = vunpack.c.l.b16 %v208
  %v1393 = vunpack.c.l.b16 %v209
  %v1394 = vunpack.c.l.b16 %v210
  %v1395 = vunpack.c.l.b16 %v211
  %v1396 = vunpack.c.l.b16 %v212
  %v1397 = vunpack.c.l.b16 %v213
  %v1398 = vunpack.c.l.b16 %v214
  %v1399 = vunpack.c.l.b16 %v215
  %v1400 = vunpack.c.l.b16 %v216
  %v1401 = vunpack.c.l.b16 %v217
  %v1402 = vunpack.c.l.b16 %v218
  %v1403 = vunpack.c.l.b16 %v219
  %v1404 = vunpack.c.l.b16 %v220
  %v1405 = vunpack.c.l.b16 %v221
  %v1406 = vunpack.c.l.b16 %v222
  %v1407 = vunpack.c.l.b16 %v223
  %v1408 = vunpack.c.l.b16 %v224
  %v1409 = vunpack.c.l.b16 %v225
  %v1410 = vunpack.c.l.b16 %v226
  %v1411 = vunpack.c.l.b16 %v227
  %v1412 = vunpack.c.l.b16 %v228
  %v1413 = vunpack.c.l.b16 %v229
  %v1414 = vunpack.c.l.b16 %v230
  %v1415 = vunpack.c.l.b16 %v231
  %v1416 = vunpack.c.l.b16 %v232
  %v1417 = vunpack.c.l.b16 %v233
  %v1418 = vunpack.c.l.b16 %v234
  %v1419 = vunpack.c.l.b16 %v235
  %v1420 = vunpack.c.l.b16 %v236
  %v1421 = vunpack.c.l.b16 %v237
  %v1422 = vunpack.c.l.b16 %v238
  %v1423 = vunpack.c.l.b16 %v239
  %v1424 = vunpack.c.l.b16 %v240
  %v1425 = vunpack.c.l.b16 %v241
  %v1426 = vunpack.c.l.b16 %v242
  %v1427 = vunpack.c.l.b16 %v243
  %v1428 = vunpack.c.l.b16 %v244
  %v1429 = vunpack.c.l.b16 %v245
  %v1430 = vunpack.c.l.b16 %v246
  %v1431 = vunpack.c.l.b16 %v247
  %v1432 = vunpack.c.l.b16 %v248
  %v1433 = vunpack.c.l.b16 %v249
  %v1434 = vunpack.c.l.b16 %v250
  %v1435 = vunpack.c.l.b16 %v251
  %v1436 = vunpack.c.l.b16 %v252
  %v1437 = vunpack.c.l.b16 %v253
  %v1438 = vunpack.c.l.b16 %v254
  %v1439 = vunpack.c.l.b16 %v255
  %v1440 = vunpack.c.l.b16 %v256
  %v1441 = vunpack.c.l.b16 %v257
  %v1442 = vunpack.c.l.b16 %v258
  %v1443 = vunpack.c.l.b16 %v259
  %v1444 = vunpack.c.l.b16 %v260
  %v1445 = vunpack.c.l.b16 %v261
  %v1446 = vunpack.c.l.b16 %v262
  %v1447 = vunpack.c.l.b16 %v263
  %v1448 = vunpack.c.l.b16 %v264
  %v1449 = vunpack.c.l.b16 %v265
  %v1450 = vunpack.c.l.b16 %v266
  %v1451 = vunpack.c.l.b16 %v267
  %v1452 = vunpack.c.l.b16 %v268
  %v1453 = vunpack.c.l.b16 %v269
  %v1454 = vunpack.c.l.b16 %v270
  %v1455 = vunpack.c.l.b16 %v271
  %v1456 = vunpack.c.l.b16 %v272
  %v1457 = vunpack.c.l.b16 %v273
  %v1458 = vunpack.c.l.b16 %v274
  %v1459 = vunpack.c.l.b16 %v275
  %v1460 = vunpack.c.l.b16 %v276
  %v1461 = vunpack.c.l.b16 %v277
  %v1462 = vunpack.c.l.b16 %v278
  %v1463 = vunpack.c.l.b16 %v279
  %v1464 = vunpack.c.l.b16 %v280
  %v1465 = vunpack.c.l.b16 %v281
  %v1466 = vunpack.c.l.b16 %v282
  %v1467 = vunpack.c.l.b16 %v283
  %v1468 = vunpack.c.l.b16 %v284
  %v1469 = vunpack.c.l.b16 %v285
  %v1470 = vunpack.c.l.b16 %v286
  %v1471 = vunpack.c.l.b16 %v287
  %v1472 = vunpack.c.l.b16 %v288
  %v1473 = vunpack.c.l.b16 %v289
  %v1474 = vunpack.c.l.b16 %v290
  %v1475 = vunpack.c.l.b16 %v291
  %v1476 = vunpack.c.l.b16 %v292
  %v1477 = vunpack.c.l.b16 %v293
  %v1478 = vunpack.c.l.b16 %v294
  %v1479 = vunpack.c.l.b16 %v295
  %v1480 = vunpack.c.l.b16 %v296
  %v1481 = vunpack.c.l.b16 %v297
  %v1482 = vunpack.c.l.b16 %v298
  %v1483 = vunpack.c.l.b16 %v299
  %v1484 = vunpack.c.l.b16 %v300
  %v1485 = vunpack.c.l.b16 %v301
  %v1486 = vunpack.c.l.b16 %v302
  %v1487 = vunpack.c.l.b16 %v303
  %v1488 = vunpack.c.l.b16 %v304
  %v1489 = vunpack.c.l.b16 %v305
  %v1490 = vunpack.c.l.b16 %v306
  %v1491 = vunpack.c.l.b16 %v307
  %v1492 = vunpack.c.l.b16 %v308
  %v1493 = vunpack.c.l.b16 %v309
  %v1494 = vunpack.c.l.b16 %v310
  %v1495 = vunpack.c.l.b16 %v311
  %v1496 = vunpack.c.l.b16 %v312
  %v1497 = vunpack.c.l.b16 %v313
  %v1498 = vunpack.c.l.b16 %v314
  %v1499 = vunpack.c.l.b16 %v315
  %v1500 = vunpack.c.l.b16 %v316
  %v1501 = vunpack.c.l.b16 %v317
  %v1502 = vunpack.c.l.b16 %v318
  %v1503 = vunpack.c.l.b16 %v319
  %v1504 = vunpack.c.l.b16 %v320
  %v1505 = vunpack.c.l.b16 %v321
  %v1506 = vunpack.c.l.b16 %v322
  %v1507 = vunpack.c.l.b16 %v323
  %v1508 = vunpack.c.l.b16 %v324
  %v1509 = vunpack.c.l.b16 %v325
  %v1510 = vunpack.c.l.b16 %v326
  %v1511 = vunpack.c.l.b16 %v327
  %v1512 = vunpack.c.l.b16 %v328
  %v1513 = vunpack.c.l.b16 %v329
  %v1514 = vunpack.c.l.b16 %v330
  %v1515 = vunpack.c.l.b16 %v331
  %v1516 = vunpack.c.l.b16 %v332
  %v1517 = vunpack.c.l.b16 %v333
  %v1518 = vunpack.c.l.b16 %v334
  %v1519 = vunpack.c.l.b16 %v335
  %v1520 = vunpack.c.l.b16 %v336
  %v1521 = vunpack.c.l.b16 %v337
  %v1522 = vunpack.c.l.b16 %v338
  %v1523 = vunpack.c.l.b16 %v339
  %v1524 = vunpack.c.l.b16 %v340
  %v1525 = vunpack.c.l.b16 %v341
  %v1526 = vunpack.c.l.b16 %v342
  %v1527 = vunpack.c.l.b16 %v343
  %v1528 = vunpack.c.l.b16 %v344
  %v1529 = vunpack.c.l.b16 %v345
  %v1530 = vunpack.c.l.b16 %v346
  %v1531 = vunpack.c.l.b16 %v347
  %v1532 = vunpack.c.l.b16 %v348
  %v1533 = vunpack.c.l.b16 %v349
  %v1534 = vunpack.c.l.b16 %v350
  %v1535 = vunpack.c.l.b16 %v351
  %v1536 = vunpack.c.l.b16 %v352
  %v1537 = vunpack.c.l.b16 %v353
  %v1538 = vunpack.c.l.b16 %v354
  %v1539 = vunpack.c.l.b16 %v355
  %v1540 = vunpack.c.l.b16 %v356
  %v1541 = vunpack.c.l.b16 %v357
  %v1542 = vunpack.c.l.b16 %v358
  %v1543 = vunpack.c.l.b16 %v359
  %v1544 = vunpack.c.l.b16 %v360
  %v1545 = vunpack.c.l.b16 %v361
  %v1546 = vunpack.c.l.b16 %v362
  %v1547 = vunpack.c.l.b16 %v363
  %v1548 = vunpack.c.l.b16 %v364
  %v1549 = vunpack.c.l.b16 %v365
  %v1550 = vunpack.c.l.b16 %v366
  %v1551 = vunpack.c.l.b16 %v367
  %v1552 = vunpack.c.l.b16 %v368
  %v1553 = vunpack.c.l.b16 %v369
  %v1554 = vunpack.c.l.b16 %v370
  %v1555 = vunpack.c.l.b16 %v371
  %v1556 = vunpack.c.l.b16 %v372
  %v1557 = vunpack.c.l.b16 %v373
  %v1558 = vunpack.c.l.b16 %v374
  %v1559 = vunpack.c.l.b16 %v375
  %v1560 = vunpack.c.l.b16 %v376
  %v1561 = vunpack.c.l.b16 %v377
  %v1562 = vunpack.c.l.b16 %v378
  %v1563 = vunpack.c.l.b16 %v379
  %v1564 = vunpack.c.l.b16 %v380
  %v1565 = vunpack.c.l.b16 %v381
  %v1566 = vunpack.c.l.b16 %v382
  %v1567 = vunpack.c.l.b16 %v383
  %v1568 = vunpack.c.l.b16 %v384
  %v1569 = vunpack.c.l.b16 %v385
  %v1570 = vunpack.c.l.b16 %v386
  %v1571 = vunpack.c.l.b16 %v387
  %v1572 = vunpack.c.l.b16 %v388
  %v1573 = vunpack.c.l.b16 %v389
  %v1574 = vunpack.c.l.b16 %v390
  %v1575 = vunpack.c.l.b16 %v391
  %v1576 = vunpack.c.l.b16 %v392
  %v1577 = vunpack.c.l.b16 %v393
  %v1578 = vunpack.c.l.b16 %v394
  %v1579 = vunpack.c.l.b16 %v395
  %v1580 = vunpack.c.l.b16 %v396
  %v1581 = vunpack.c.l.b16 %v397
  %v1582 = vunpack.c.l.b16 %v398
  %v1583 = vunpack.c.l.b16 %v399
  %v1584 = vunpack.c.l.b16 %v400
  %v1585 = vunpack.c.l.b16 %v401
  %v1586 = vunpack.c.l.b16 %v402
  %v1587 = vunpack.c.l.b16 %v403
  %v1588 = vunpack.c.l.b16 %v404
  %v1589 = vunpack.c.l.b16 %v405
  %v1590 = vunpack.c.l.b16 %v406
  %v1591 = vunpack.c.l.b16 %v407
  %v1592 = vunpack.c.l.b16 %v408
  %v1593 = vunpack.c.l.b16 %v409
  %v1594 = vunpack.c.l.b16 %v410
  %v1595 = vunpack.c.l.b16 %v411
  %v1596 = vunpack.c.l.b16 %v412
  %v1597 = vunpack.c.l.b16 %v413
  %v1598 = vunpack.c.l.b16 %v414
  %v1599 = vunpack.c.l.b16 %v415
  %v1600 = vunpack.c.l.b16 %v416
  %v1601 = vunpack.c.l.b16 %v417
  %v1602 = vunpack.c.l.b16 %v418
  %v1603 = vunpack.c.l.b16 %v419
  %v1604 = vunpack.c.l.b16 %v420
  %v1605 = vunpack.c.l.b16 %v421
  %v1606 = vunpack.c.l.b16 %v422
  %v1607 = vunpack.c.l.b16 %v423
  %v1608 = vunpack.c.l.b16 %v424
  %v1609 = vunpack.c.l.b16 %v425
  %v1610 = vunpack.c.l.b16 %v426
  %v1611 = vunpack.c.l.b16 %v427
  %v1612 = vunpack.c.l.b16 %v428
  %v1613 = vunpack.c.l.b16 %v429
  %v1614 = vunpack.c.l.b16 %v430
  %v1615 = vunpack.c.l.b16 %v431
  %v1616 = vunpack.c.l.b16 %v432
  %v1617 = vunpack.c.l.b16 %v433
  %v1618 = vunpack.c.l.b16 %v434
  %v1619 = vunpack.c.l.b16 %v435
  %v1620 = vunpack.c.l.b16 %v436
  %v1621 = vunpack.c.l.b16 %v437
  %v1622 = vunpack.c.l.b16 %v438
  %v1623 = vunpack.c.l.b16 %v439
  %v1624 = vunpack.c.l.b16 %v440
  %v1625 = vunpack.c.l.b16 %v441
  %v1626 = vunpack.c.l.b16 %v442
  %v1627 = vunpack.c.l.b16 %v443
  %v1628 = vunpack.c.l.b16 %v444
  %v1629 = vunpack.c.l.b16 %v445
  %v1630 = vunpack.c.l.b16 %v446
  %v1631 = vunpack.c.l.b16 %v447
  %v1632 = vunpack.c.l.b16 %v448
  %v1633 = vunpack.c.l.b16 %v449
  %v1634 = vunpack.c.l.b16 %v450
  %v1635 = vunpack.c.l.b16 %v451
  %v1636 = vunpack.c.l.b16 %v452
  %v1637 = vunpack.c.l.b16 %v453
  %v1638 = vunpack.c.l.b16 %v454
  %v1639 = vunpack.c.l.b16 %v455
  %v1640 = vunpack.c.l.b16 %v456
  %v1641 = vunpack.c.l.b16 %v457
  %v1642 = vunpack.c.l.b16 %v458
  %v1643 = vunpack.c.l.b16 %v459
  %v1644 = vunpack.c.l.b16 %v460
  %v1645 = vunpack.c.l.b16 %v461
  %v1646 = vunpack.c.l.b16 %v462
  %v1647 = vunpack.c.l.b16 %v463
  %v1648 = vunpack.c.l.b16 %v464
  %v1649 = vunpack.c.l.b16 %v465
  %v1650 = vunpack.c.l.b16 %v466
  %v1651 = vunpack.c.l.b16 %v467
  %v1652 = vunpack.c.l.b16 %v468
  %v1653 = vunpack.c.l.b16 %v469
  %v1654 = vunpack.c.l.b16 %v470
  %v1655 = vunpack.c.l.b16 %v471
  %v1656 = vunpack.c.l.b16 %v472
  %v1657 = vunpack.c.l.b16 %v473
  %v1658 = vunpack.c.l.b16 %v474
  %v1659 = vunpack.c.l.b16 %v475
  %v1660 = vunpack.c.l.b16 %v476
  %v1661 = vunpack.c.l.b16 %v477
  %v1662 = vunpack.c.l.b16 %v478
  %v1663 = vunpack.c.l.b16 %v479
  %v1664 = vunpack.c.l.b16 %v480
  %v1665 = vunpack.c.l.b16 %v481
  %v1666 = vunpack.c.l.b16 %v482
  %v1667 = vunpack.c.l.b16 %v483
  %v1668 = vunpack.c.l.b16 %v484
  %v1669 = vunpack.c.l.b16 %v485
  %v1670 = vunpack.c.l.b16 %v486
  %v1671 = vunpack.c.l.b16 %v487
  %v1672 = vunpack.c.l.b16 %v488
  %v1673 = vunpack.c.l.b16 %v489
  %v1674 = vunpack.c.l.b16 %v490
  %v1675 = vunpack.c.l.b16 %v491
  %v1676 = vunpack.c.l.b16 %v492
  %v1677 = vunpack.c.l.b16 %v493
  %v1678 = vunpack.c.l.b16 %v494
  %v1679 = vunpack.c.l.b16 %v495
  %v1680 = vunpack.c.l.b16 %v496
  %v1681 = vunpack.c.l.b16 %v497
  %v1682 = vunpack.c.l.b16 %v498
  %v1683 = vunpack.c.l.b16 %v499
  %v1684 = vunpack.c.l.b16 %v500
  %v1685 = vunpack.c.l.b16 %v501
  %v1686 = vunpack.c.l.b16 %v502
  %v1687 = vunpack.c.l.b16 %v503
  %v1688 = vunpack.c.l.b16 %v504
  %v1689 = vunpack.c.l.b16 %v505
  %v1690 = vunpack.c.l.b16 %v506
  %v1691 = vunpack.c.l.b16 %v507
  %v1692 = vunpack.c.l.b16 %v508
  %v1693 = vunpack.c.l.b16 %v509
  %v1694 = vunpack.c.l.b16 %v510
  %v1695 = vunpack.c.l.b16 %v511
  %v1696 = vunpack.c.l.b16 %v512
  %v1697 = vunpack.c.l.b16 %v513
  %v1698 = vunpack.c.l.b16 %v514
  %v1699 = vunpack.c.l.b16 %v515
  %v1700 = vunpack.c.l.b16 %v516
  %v1701 = vunpack.c.l.b16 %v517
  %v1702 = vunpack.c.l.b16 %v518
  %v1703 = vunpack.c.l.b16 %v519
  %v1704 = vunpack.c.l.b16 %v520
  %v1705 = vunpack.c.l.b16 %v521
  %v1706 = vunpack.c.l.b16 %v522
  %v1707 = vunpack.c.l.b16 %v523
  %v1708 = vunpack.c.l.b16 %v524
  %v1709 = vunpack.c.l.b16 %v525
  %v1710 = vunpack.c.l.b16 %v526
  %v1711 = vunpack.c.l.b16 %v527
  %v1712 = vunpack.c.l.b16 %v528
  %v1713 = vunpack.c.l.b16 %v529
  %v1714 = vunpack.c.l.b16 %v530
  %v1715 = vunpack.c.l.b16 %v531
  %v1716 = vunpack.c.l.b16 %v532
  %v1717 = vunpack.c.l.b16 %v533
  %v1718 = vunpack.c.l.b16 %v534
  %v1719 = vunpack.c.l.b16 %v535
  %v1720 = vunpack.c.l.b16 %v536
  %v1721 = vunpack.c.l.b16 %v537
  %v1722 = vunpack.c.l.b16 %v538
  %v1723 = vunpack.c.l.b16 %v539
  %v1724 = vunpack.c.l.b16 %v540
  %v1725 = vunpack.c.l.b16 %v541
  %v1726 = vunpack.c.l.b16 %v542
  %v1727 = vunpack.c.l.b16 %v543
  %v1728 = vunpack.c.l.b16 %v544
  %v1729 = vunpack.c.l.b16 %v545
  %v1730 = vunpack.c.l.b16 %v546
  %v1731 = vunpack.c.l.b16 %v547
  %v1732 = vunpack.c.l.b16 %v548
  %v1733 = vunpack.c.l.b16 %v549
  %v1734 = vunpack.c.l.b16 %v550
  %v1735 = vunpack.c.l.b16 %v551
  %v1736 = vunpack.c.l.b16 %v552
  %v1737 = vunpack.c.l.b16 %v553
  %v1738 = vunpack.c.l.b16 %v554
  %v1739 = vpack.c.b16 %v1228, %v1227
  %v1740 = vpack.c.b16 %v1230, %v1229
  %v1741 = vpack.c.b16 %v1232, %v1231
  %v1742 = vpack.c.b16 %v1234, %v1233
  %v1743 = vpack.c.b16 %v1236, %v1235
  %v1744 = vpack.c.b16 %v1238, %v1237
  %v1745 = vpack.c.b16 %v1240, %v1239
  %v1746 = vpack.c.b16 %v1242, %v1241
  %v1747 = vpack.c.b16 %v1244, %v1243
  %v1748 = vpack.c.b16 %v1246, %v1245
  %v1749 = vpack.c.b16 %v1248, %v1247
  %v1750 = vpack.c.b16 %v1250, %v1249
  %v1751 = vpack.c.b16 %v1252, %v1251
  %v1752 = vpack.c.b16 %v1254, %v1253
  %v1753 = vpack.c.b16 %v1256, %v1255
  %v1754 = vpack.c.b16 %v1258, %v1257
  %v1755 = vpack.c.b16 %v1260, %v1259
  %v1756 = vpack.c.b16 %v1262, %v1261
  %v1757 = vpack.c.b16 %v1264, %v1263
  %v1758 = vpack.c.b16 %v1266, %v1265
  %v1759 = vpack.c.b16 %v1268, %v1267
  %v1760 = vpack.c.b16 %v1270, %v1269
  %v1761 = vpack.c.b16 %v1272, %v1271
  %v1762 = vpack.c.b16 %v1274, %v1273
  %v1763 = vpack.c.b16 %v1276, %v1275
  %v1764 = vpack.c.b16 %v1278, %v1277
  %v1765 = vpack.c.b16 %v1280, %v1279
  %v1766 = vpack.c.b16 %v1282, %v1281
  %v1767 = vpack.c.b16 %v1284, %v1283
  %v1768 = vpack.c.b16 %v1286, %v1285
  %v1769 = vpack.c.b16 %v1288, %v1287
  %v1770 = vpack.c.b16 %v1290, %v1289
  %v1771 = vpack.c.b16 %v1292, %v1291
  %v1772 = vpack.c.b16 %v1294, %v1293
  %v1773 = vpack.c.b16 %v1296, %v1295
  %v1774 = vpack.c.b16 %v1298, %v1297
  %v1775 = vpack.c.b16 %v1300, %v1299
  %v1776 = vpack.c.b16 %v1302, %v1301
  %v1777 = vpack.c.b16 %v1304, %v1303
  %v1778 = vpack.c.b16 %v1306, %v1305
  %v1779 = vpack.c.b16 %v1308, %v1307
  %v1780 = vpack.c.b16 %v1310, %v1309
  %v1781 = vpack.c.b16 %v1312, %v1311
  %v1782 = vpack.c.b16 %v1314, %v1313
  %v1783 = vpack.c.b16 %v1316, %v1315
  %v1784 = vpack.c.b16 %v1318, %v1317
  %v1785 = vpack.c.b16 %v1320, %v1319
  %v1786 = vpack.c.b16 %v1322, %v1321
  %v1787 = vpack.c.b16 %v1324, %v1323
  %v1788 = vpack.c.b16 %v1326, %v1325
  %v1789 = vpack.c.b16 %v1328, %v1327
  %v1790 = vpack.c.b16 %v1330, %v1329
  %v1791 = vpack.c.b16 %v1332, %v1331
  %v1792 = vpack.c.b16 %v1334, %v1333
  %v1793 = vpack.c.b16 %v1336, %v1335
  %v1794 = vpack.c.b16 %v1338, %v1337
  %v1795 = vpack.c.b16 %v1340, %v1339
  %v1796 = vpack.c.b16 %v1342, %v1341
  %v1797 = vpack.c.b16 %v1344, %v1343
  %v1798 = vpack.c.b16 %v1346, %v1345
  %v1799 = vpack.c.b16 %v1348, %v1347
  %v1800 = vpack.c.b16 %v1350, %v1349
  %v1801 = vpack.c.b16 %v1352, %v1351
  %v1802 = vpack.c.b16 %v1354, %v1353
  %v1803 = vpack.c.b16 %v1356, %v1355
  %v1804 = vpack.c.b16 %v1358, %v1357
  %v1805 = vpack.c.b16 %v1360, %v1359
  %v1806 = vpack.c.b16 %v1362, %v1361
  %v1807 = vpack.c.b16 %v1364, %v1363
  %v1808 = vpack.c.b16 %v1366, %v1365
  %v1809 = vpack.c.b16 %v1368, %v1367
  %v1810 = vpack.c.b16 %v1370, %v1369
  %v1811 = vpack.c.b16 %v1372, %v1371
  %v1812 = vpack.c.b16 %v1374, %v1373
  %v1813 = vpack.c.b16 %v1376, %v1375
  %v1814 = vpack.c.b16 %v1378, %v1377
  %v1815 = vpack.c.b16 %v1380, %v1379
  %v1816 = vpack.c.b16 %v1382, %v1381
  %v1817 = vpack.c.b16 %v1384, %v1383
  %v1818 = vpack.c.b16 %v1386, %v1385
  %v1819 = vpack.c.b16 %v1388, %v1387
  %v1820 = vpack.c.b16 %v1390, %v1389
  %v1821 = vpack.c.b16 %v1392, %v1391
  %v1822 = vpack.c.b16 %v1394, %v1393
  %v1823 = vpack.c.b16 %v1396, %v1395
  %v1824 = vpack.c.b16 %v1398, %v1397
  %v1825 = vpack.c.b16 %v1400, %v1399
  %v1826 = vpack.c.b16 %v1402, %v1401
  %v1827 = vpack.c.b16 %v1404, %v1403
  %v1828 = vpack.c.b16 %v1406, %v1405
  %v1829 = vpack.c.b16 %v1408, %v1407
  %v1830 = vpack.c.b16 %v1410, %v1409
  %v1831 = vpack.c.b16 %v1412, %v1411
  %v1832 = vpack.c.b16 %v1414, %v1413
  %v1833 = vpack.c.b16 %v1416, %v1415
  %v1834 = vpack.c.b16 %v1418, %v1417
  %v1835 = vpack.c.b16 %v1420, %v1419
  %v1836 = vpack.c.b16 %v1422, %v1421
  %v1837 = vpack.c.b16 %v1424, %v1423
  %v1838 = vpack.c.b16 %v1426, %v1425
  %v1839 = vpack.c.b16 %v1428, %v1427
  %v1840 = vpack.c.b16 %v1430, %v1429
  %v1841 = vpack.c.b16 %v1432, %v1431
  %v1842 = vpack.c.b16 %v1434, %v1433
  %v1843 = vpack.c.b16 %v1436, %v1435
  %v1844 = vpack.c.b16 %v1438, %v1437
  %v1845 = vpack.c.b16 %v1440, %v1439
  %v1846 = vpack.c.b16 %v1442, %v1441
  %v1847 = vpack.c.b16 %v1444, %v1443
  %v1848 = vpack.c.b16 %v1446, %v1445
  %v1849 = vpack.c.b16 %v1448, %v1447
  %v1850 = vpack.c.b16 %v1450, %v1449
  %v1851 = vpack.c.b16 %v1452, %v1451
  %v1852 = vpack.c.b16 %v1454, %v1453
  %v1853 = vpack.c.b16 %v1456, %v1455
  %v1854 = vpack.c.b16 %v1458, %v1457
  %v1855 = vpack.c.b16 %v1460, %v1459
  %v1856 = vpack.c.b16 %v1462, %v1461
  %v1857 = vpack.c.b16 %v1464, %v1463
  %v1858 = vpack.c.b16 %v1466, %v1465
  %v1859 = vpack.c.b16 %v1468, %v1467
  %v1860 = vpack.c.b16 %v1470, %v1469
  %v1861 = vpack.c.b16 %v1472, %v1471
  %v1862 = vpack.c.b16 %v1474, %v1473
  %v1863 = vpack.c.b16 %v1476, %v1475
  %v1864 = vpack.c.b16 %v1478, %v1477
  %v1865 = vpack.c.b16 %v1480, %v1479
  %v1866 = vpack.c.b16 %v1482, %v1481
  %v1867 = vpack.c.b16 %v1484, %v1483
  %v1868 = vpack.c.b16 %v1486, %v1485
  %v1869 = vpack.c.b16 %v1488, %v1487
  %v1870 = vpack.c.b16 %v1490, %v1489
  %v1871 = vpack.c.b16 %v1492, %v1491
  %v1872 = vpack.c.b16 %v1494, %v1493
  %v1873 = vpack.c.b16 %v1496, %v1495
  %v1874 = vpack.c.b16 %v1498, %v1497
  %v1875 = vpack.c.b16 %v1500, %v1499
  %v1876 = vpack.c.b16 %v1502, %v1501
  %v1877 = vpack.c.b16 %v1504, %v1503
  %v1878 = vpack.c.b16 %v1506, %v1505
  %v1879 = vpack.c.b16 %v1508, %v1507
  %v1880 = vpack.c.b16 %v1510, %v1509
  %v1881 = vpack.c.b16 %v1512, %v1511
  %v1882 = vpack.c.b16 %v1514, %v1513
  %v1883 = vpack.c.b16 %v1516, %v1515
  %v1884 = vpack.c.b16 %v1518, %v1517
  %v1885 = vpack.c.b16 %v1520, %v1519
  %v1886 = vpack.c.b16 %v1522, %v1521
  %v1887 = vpack.c.b16 %v1524, %v1523
  %v1888 = vpack.c.b16 %v1526, %v1525
  %v1889 = vpack.c.b16 %v1528, %v1527
  %v1890 = vpack.c.b16 %v1530, %v1529
  %v1891 = vpack.c.b16 %v1532, %v1531
  %v1892 = vpack.c.b16 %v1534, %v1533
  %v1893 = vpack.c.b16 %v1536, %v1535
  %v1894 = vpack.c.b16 %v1538, %v1537
  %v1895 = vpack.c.b16 %v1540, %v1539
  %v1896 = vpack.c.b16 %v1542, %v1541
  %v1897 = vpack.c.b16 %v1544, %v1543
  %v1898 = vpack.c.b16 %v1546, %v1545
  %v1899 = vpack.c.b16 %v1548, %v1547
  %v1900 = vpack.c.b16 %v1550, %v1549
  %v1901 = vpack.c.b16 %v1552, %v1551
  %v1902 = vpack.c.b16 %v1554, %v1553
  %v1903 = vpack.c.b16 %v1556, %v1555
  %v1904 = vpack.c.b16 %v1558, %v1557
  %v1905 = vpack.c.b16 %v1560, %v1559
  %v1906 = vpack.c.b16 %v1562, %v1561
  %v1907 = vpack.c.b16 %v1564, %v1563
  %v1908 = vpack.c.b16 %v1566, %v1565
  %v1909 = vpack.c.b16 %v1568, %v1567
  %v1910 = vpack.c.b16 %v1570, %v1569
  %v1911 = vpack.c.b16 %v1572, %v1571
  %v1912 = vpack.c.b16 %v1574, %v1573
  %v1913 = vpack.c.b16 %v1576, %v1575
  %v1914 = vpack.c.b16 %v1578, %v1577
  %v1915 = vpack.c.b16 %v1580, %v1579
  %v1916 = vpack.c.b16 %v1582, %v1581
  %v1917 = vpack.c.b16 %v1584, %v1583
  %v1918 = vpack.c.b16 %v1586, %v1585
  %v1919 = vpack.c.b16 %v1588, %v1587
  %v1920 = vpack.c.b16 %v1590, %v1589
  %v1921 = vpack.c.b16 %v1592, %v1591
  %v1922 = vpack.c.b16 %v1594, %v1593
  %v1923 = vpack.c.b16 %v1596, %v1595
  %v1924 = vpack.c.b16 %v1598, %v1597
  %v1925 = vpack.c.b16 %v1600, %v1599
  %v1926 = vpack.c.b16 %v1602, %v1601
  %v1927 = vpack.c.b16 %v1604, %v1603
  %v1928 = vpack.c.b16 %v1606, %v1605
  %v1929 = vpack.c.b16 %v1608, %v1607
  %v1930 = vpack.c.b16 %v1610, %v1609
  %v1931 = vpack.c.b16 %v1612, %v1611
  %v1932 = vpack.c.b16 %v1614, %v1613
  %v1933 = vpack.c.b16 %v1616, %v1615
  %v1934 = vpack.c.b16 %v1618, %v1617
  %v1935 = vpack.c.b16 %v1620, %v1619
  %v1936 = vpack.c.b16 %v1622, %v1621
  %v1937 = vpack.c.b16 %v1624, %v1623
  %v1938 = vpack.c.b16 %v1626, %v1625
  %v1939 = vpack.c.b16 %v1628, %v1627
  %v1940 = vpack.c.b16 %v1630, %v1629
  %v1941 = vpack.c.b16 %v1632, %v1631
  %v1942 = vpack.c.b16 %v1634, %v1633
  %v1943 = vpack.c.b16 %v1636, %v1635
  %v1944 = vpack.c.b16 %v1638, %v1637
  %v1945 = vpack.c.b16 %v1640, %v1639
  %v1946 = vpack.c.b16 %v1642, %v1641
  %v1947 = vpack.c.b16 %v1644, %v1643
  %v1948 = vpack.c.b16 %v1646, %v1645
  %v1949 = vpack.c.b16 %v1648, %v1647
  %v1950 = vpack.c.b16 %v1650, %v1649
  %v1951 = vpack.c.b16 %v1652, %v1651
  %v1952 = vpack.c.b16 %v1654, %v1653
  %v1953 = vpack.c.b16 %v1656, %v1655
  %v1954 = vpack.c.b16 %v1658, %v1657
  %v1955 = vpack.c.b16 %v1660, %v1659
  %v1956 = vpack.c.b16 %v1662, %v1661
  %v1957 = vpack.c.b16 %v1664, %v1663
  %v1958 = vpack.c.b16 %v1666, %v1665
  %v1959 = vpack.c.b16 %v1668, %v1667
  %v1960 = vpack.c.b16 %v1670, %v1669
  %v1961 = vpack.c.b16 %v1672, %v1671
  %v1962 = vpack.c.b16 %v1674, %v1673
  %v1963 = vpack.c.b16 %v1676, %v1675
  %v1964 = vpack.c.b16 %v1678, %v1677
  %v1965 = vpack.c.b16 %v1680, %v1679
  %v1966 = vpack.c.b16 %v1682, %v1681
  %v1967 = vpack.c.b16 %v1684, %v1683
  %v1968 = vpack.c.b16 %v1686, %v1685
  %v1969 = vpack.c.b16 %v1688, %v1687
  %v1970 = vpack.c.b16 %v1690, %v1689
  %v1971 = vpack.c.b16 %v1692, %v1691
  %v1972 = vpack.c.b16 %v1694, %v1693
  %v1973 = vpack.c.b16 %v1696, %v1695
  %v1974 = vpack.c.b16 %v1698, %v1697
  %v1975 = vpack.c.b16 %v1700, %v1699
  %v1976 = vpack.c.b16 %v1702, %v1701
  %v1977 = vpack.c.b16 %v1704, %v1703
  %v1978 = vpack.c.b16 %v1706, %v1705
  %v1979 = vpack.c.b16 %v1708, %v1707
  %v1980 = vpack.c.b16 %v1710, %v1709
  %v1981 = vpack.c.b16 %v1712, %v1711
  %v1982 = vpack.c.b16 %v1714, %v1713
  %v1983 = vpack.c.b16 %v1716, %v1715
  %v1984 = vpack.c.b16 %v1718, %v1717
  %v1985 = vpack.c.b16 %v1720, %v1719
  %v1986 = vpack.c.b16 %v1722, %v1721
  %v1987 = vpack.c.b16 %v1724, %v1723
  %v1988 = vpack.c.b16 %v1726, %v1725
  %v1989 = vpack.c.b16 %v1728, %v1727
  %v1990 = vpack.c.b16 %v1730, %v1729
  %v1991 = vpack.c.b16 %v1732, %v1731
  %v1992 = vpack.c.b16 %v1734, %v1733
  %v1993 = vpack.c.b16 %v1736, %v1735
  %v1994 = vpack.c.b16 %v1738, %v1737
  %2251 = vmatpush.bf16.msra.mxu0 %v1746
  %2252 = vmatpush.bf16.msra.mxu0 %v1745
  %2253 = vmatpush.bf16.msra.mxu0 %v1744
  %2254 = vmatpush.bf16.msra.mxu0 %v1743
  %2255 = vmatpush.bf16.msra.mxu0 %v1742
  %2256 = vmatpush.bf16.msra.mxu0 %v1741
  %2257 = vmatpush.bf16.msra.mxu0 %v1740
  %2258 = vmatpush.bf16.msra.mxu0 %v1739
  %2259 = vmatmul.bf16.gmra.mxu0 %v651
  %v2260 = vpop.f32.mrf.mxu0
  %v2261 = vadd.f32 0.0, %v2260
  %v2262 = vpop.f32.mrf.mxu0
  %v2263 = vadd.f32 0.0, %v2262
  %2264 = vdwg.mxu0
  %2265 = vmatpush.bf16.msra.mxu0 %v1754
  %2266 = vmatpush.bf16.msra.mxu0 %v1753
  %2267 = vmatpush.bf16.msra.mxu0 %v1752
  %2268 = vmatpush.bf16.msra.mxu0 %v1751
  %2269 = vmatpush.bf16.msra.mxu0 %v1750
  %2270 = vmatpush.bf16.msra.mxu0 %v1749
  %2271 = vmatpush.bf16.msra.mxu0 %v1748
  %2272 = vmatpush.bf16.msra.mxu0 %v1747
  %2273 = vmatmul.bf16.gmra.mxu0 %v652
  %v2274 = vpop.f32.mrf.mxu0
  %v2275 = vadd.f32 %v2261, %v2274
  %v2276 = vpop.f32.mrf.mxu0
  %v2277 = vadd.f32 %v2263, %v2276
  %2278 = vdwg.mxu0
  %2279 = vmatpush.bf16.msra.mxu0 %v1762
  %2280 = vmatpush.bf16.msra.mxu0 %v1761
  %2281 = vmatpush.bf16.msra.mxu0 %v1760
  %2282 = vmatpush.bf16.msra.mxu0 %v1759
  %2283 = vmatpush.bf16.msra.mxu0 %v1758
  %2284 = vmatpush.bf16.msra.mxu0 %v1757
  %2285 = vmatpush.bf16.msra.mxu0 %v1756
  %2286 = vmatpush.bf16.msra.mxu0 %v1755
  %2287 = vmatmul.bf16.gmra.mxu0 %v653
  %v2288 = vpop.f32.mrf.mxu0
  %v2289 = vadd.f32 %v2275, %v2288
  %v2290 = vpop.f32.mrf.mxu0
  %v2291 = vadd.f32 %v2277, %v2290
  %2292 = vdwg.mxu0
  %2293 = vmatpush.bf16.msra.mxu0 %v1770
  %2294 = vmatpush.bf16.msra.mxu0 %v1769
  %2295 = vmatpush.bf16.msra.mxu0 %v1768
  %2296 = vmatpush.bf16.msra.mxu0 %v1767
  %2297 = vmatpush.bf16.msra.mxu0 %v1766
  %2298 = vmatpush.bf16.msra.mxu0 %v1765
  %2299 = vmatpush.bf16.msra.mxu0 %v1764
  %2300 = vmatpush.bf16.msra.mxu0 %v1763
  %2301 = vmatmul.bf16.gmra.mxu0 %v654
  %v2302 = vpop.f32.mrf.mxu0
  %v2303 = vadd.f32 %v2289, %v2302
  %v2304 = vpop.f32.mrf.mxu0
  %v2305 = vadd.f32 %v2291, %v2304
  %2306 = vdwg.mxu0
  %2307 = vmatpush.bf16.msra.mxu0 %v1778
  %2308 = vmatpush.bf16.msra.mxu0 %v1777
  %2309 = vmatpush.bf16.msra.mxu0 %v1776
  %2310 = vmatpush.bf16.msra.mxu0 %v1775
  %2311 = vmatpush.bf16.msra.mxu0 %v1774
  %2312 = vmatpush.bf16.msra.mxu0 %v1773
  %2313 = vmatpush.bf16.msra.mxu0 %v1772
  %2314 = vmatpush.bf16.msra.mxu0 %v1771
  %2315 = vmatmul.bf16.gmra.mxu0 %v655
  %v2316 = vpop.f32.mrf.mxu0
  %v2317 = vadd.f32 %v2303, %v2316
  %v2318 = vpop.f32.mrf.mxu0
  %v2319 = vadd.f32 %v2305, %v2318
  %2320 = vdwg.mxu0
  %2321 = vmatpush.bf16.msra.mxu0 %v1786
  %2322 = vmatpush.bf16.msra.mxu0 %v1785
  %2323 = vmatpush.bf16.msra.mxu0 %v1784
  %2324 = vmatpush.bf16.msra.mxu0 %v1783
  %2325 = vmatpush.bf16.msra.mxu0 %v1782
  %2326 = vmatpush.bf16.msra.mxu0 %v1781
  %2327 = vmatpush.bf16.msra.mxu0 %v1780
  %2328 = vmatpush.bf16.msra.mxu0 %v1779
  %2329 = vmatmul.bf16.gmra.mxu0 %v656
  %v2330 = vpop.f32.mrf.mxu0
  %v2331 = vadd.f32 %v2317, %v2330
  %v2332 = vpop.f32.mrf.mxu0
  %v2333 = vadd.f32 %v2319, %v2332
  %2334 = vdwg.mxu0
  %2335 = vmatpush.bf16.msra.mxu0 %v1794
  %2336 = vmatpush.bf16.msra.mxu0 %v1793
  %2337 = vmatpush.bf16.msra.mxu0 %v1792
  %2338 = vmatpush.bf16.msra.mxu0 %v1791
  %2339 = vmatpush.bf16.msra.mxu0 %v1790
  %2340 = vmatpush.bf16.msra.mxu0 %v1789
  %2341 = vmatpush.bf16.msra.mxu0 %v1788
  %2342 = vmatpush.bf16.msra.mxu0 %v1787
  %2343 = vmatmul.bf16.gmra.mxu0 %v657
  %v2344 = vpop.f32.mrf.mxu0
  %v2345 = vadd.f32 %v2331, %v2344
  %v2346 = vpop.f32.mrf.mxu0
  %v2347 = vadd.f32 %v2333, %v2346
  %2348 = vdwg.mxu0
  %2349 = vmatpush.bf16.msra.mxu0 %v1802
  %2350 = vmatpush.bf16.msra.mxu0 %v1801
  %2351 = vmatpush.bf16.msra.mxu0 %v1800
  %2352 = vmatpush.bf16.msra.mxu0 %v1799
  %2353 = vmatpush.bf16.msra.mxu0 %v1798
  %2354 = vmatpush.bf16.msra.mxu0 %v1797
  %2355 = vmatpush.bf16.msra.mxu0 %v1796
  %2356 = vmatpush.bf16.msra.mxu0 %v1795
  %2357 = vmatmul.bf16.gmra.mxu0 %v658
  %v2358 = vpop.f32.mrf.mxu0
  %v2359 = vadd.f32 %v2345, %v2358
  %v2360 = vpop.f32.mrf.mxu0
  %v2361 = vadd.f32 %v2347, %v2360
  %2362 = vdwg.mxu0
  %2363 = vmatpush.bf16.msra.mxu0 %v1810
  %2364 = vmatpush.bf16.msra.mxu0 %v1809
  %2365 = vmatpush.bf16.msra.mxu0 %v1808
  %2366 = vmatpush.bf16.msra.mxu0 %v1807
  %2367 = vmatpush.bf16.msra.mxu0 %v1806
  %2368 = vmatpush.bf16.msra.mxu0 %v1805
  %2369 = vmatpush.bf16.msra.mxu0 %v1804
  %2370 = vmatpush.bf16.msra.mxu0 %v1803
  %2371 = vmatmul.bf16.gmra.mxu0 %v659
  %v2372 = vpop.f32.mrf.mxu0
  %v2373 = vadd.f32 %v2359, %v2372
  %v2374 = vpop.f32.mrf.mxu0
  %v2375 = vadd.f32 %v2361, %v2374
  %2376 = vdwg.mxu0
  %2377 = vmatpush.bf16.msra.mxu0 %v1818
  %2378 = vmatpush.bf16.msra.mxu0 %v1817
  %2379 = vmatpush.bf16.msra.mxu0 %v1816
  %2380 = vmatpush.bf16.msra.mxu0 %v1815
  %2381 = vmatpush.bf16.msra.mxu0 %v1814
  %2382 = vmatpush.bf16.msra.mxu0 %v1813
  %2383 = vmatpush.bf16.msra.mxu0 %v1812
  %2384 = vmatpush.bf16.msra.mxu0 %v1811
  %2385 = vmatmul.bf16.gmra.mxu0 %v660
  %v2386 = vpop.f32.mrf.mxu0
  %v2387 = vadd.f32 %v2373, %v2386
  %v2388 = vpop.f32.mrf.mxu0
  %v2389 = vadd.f32 %v2375, %v2388
  %2390 = vdwg.mxu0
  %2391 = vmatpush.bf16.msra.mxu0 %v1826
  %2392 = vmatpush.bf16.msra.mxu0 %v1825
  %2393 = vmatpush.bf16.msra.mxu0 %v1824
  %2394 = vmatpush.bf16.msra.mxu0 %v1823
  %2395 = vmatpush.bf16.msra.mxu0 %v1822
  %2396 = vmatpush.bf16.msra.mxu0 %v1821
  %2397 = vmatpush.bf16.msra.mxu0 %v1820
  %2398 = vmatpush.bf16.msra.mxu0 %v1819
  %2399 = vmatmul.bf16.gmra.mxu0 %v661
  %v2400 = vpop.f32.mrf.mxu0
  %v2401 = vadd.f32 %v2387, %v2400
  %v2402 = vpop.f32.mrf.mxu0
  %v2403 = vadd.f32 %v2389, %v2402
  %2404 = vdwg.mxu0
  %2405 = vmatpush.bf16.msra.mxu0 %v1834
  %2406 = vmatpush.bf16.msra.mxu0 %v1833
  %2407 = vmatpush.bf16.msra.mxu0 %v1832
  %2408 = vmatpush.bf16.msra.mxu0 %v1831
  %2409 = vmatpush.bf16.msra.mxu0 %v1830
  %2410 = vmatpush.bf16.msra.mxu0 %v1829
  %2411 = vmatpush.bf16.msra.mxu0 %v1828
  %2412 = vmatpush.bf16.msra.mxu0 %v1827
  %2413 = vmatmul.bf16.gmra.mxu0 %v662
  %v2414 = vpop.f32.mrf.mxu0
  %v2415 = vadd.f32 %v2401, %v2414
  %v2416 = vpop.f32.mrf.mxu0
  %v2417 = vadd.f32 %v2403, %v2416
  %2418 = vdwg.mxu0
  %2419 = vmatpush.bf16.msra.mxu0 %v1842
  %2420 = vmatpush.bf16.msra.mxu0 %v1841
  %2421 = vmatpush.bf16.msra.mxu0 %v1840
  %2422 = vmatpush.bf16.msra.mxu0 %v1839
  %2423 = vmatpush.bf16.msra.mxu0 %v1838
  %2424 = vmatpush.bf16.msra.mxu0 %v1837
  %2425 = vmatpush.bf16.msra.mxu0 %v1836
  %2426 = vmatpush.bf16.msra.mxu0 %v1835
  %2427 = vmatmul.bf16.gmra.mxu0 %v663
  %v2428 = vpop.f32.mrf.mxu0
  %v2429 = vadd.f32 %v2415, %v2428
  %v2430 = vpop.f32.mrf.mxu0
  %v2431 = vadd.f32 %v2417, %v2430
  %2432 = vdwg.mxu0
  %2433 = vmatpush.bf16.msra.mxu0 %v1850
  %2434 = vmatpush.bf16.msra.mxu0 %v1849
  %2435 = vmatpush.bf16.msra.mxu0 %v1848
  %2436 = vmatpush.bf16.msra.mxu0 %v1847
  %2437 = vmatpush.bf16.msra.mxu0 %v1846
  %2438 = vmatpush.bf16.msra.mxu0 %v1845
  %2439 = vmatpush.bf16.msra.mxu0 %v1844
  %2440 = vmatpush.bf16.msra.mxu0 %v1843
  %2441 = vmatmul.bf16.gmra.mxu0 %v664
  %v2442 = vpop.f32.mrf.mxu0
  %v2443 = vadd.f32 %v2429, %v2442
  %v2444 = vpop.f32.mrf.mxu0
  %v2445 = vadd.f32 %v2431, %v2444
  %2446 = vdwg.mxu0
  %2447 = vmatpush.bf16.msra.mxu0 %v1858
  %2448 = vmatpush.bf16.msra.mxu0 %v1857
  %2449 = vmatpush.bf16.msra.mxu0 %v1856
  %2450 = vmatpush.bf16.msra.mxu0 %v1855
  %2451 = vmatpush.bf16.msra.mxu0 %v1854
  %2452 = vmatpush.bf16.msra.mxu0 %v1853
  %2453 = vmatpush.bf16.msra.mxu0 %v1852
  %2454 = vmatpush.bf16.msra.mxu0 %v1851
  %2455 = vmatmul.bf16.gmra.mxu0 %v665
  %v2456 = vpop.f32.mrf.mxu0
  %v2457 = vadd.f32 %v2443, %v2456
  %v2458 = vpop.f32.mrf.mxu0
  %v2459 = vadd.f32 %v2445, %v2458
  %2460 = vdwg.mxu0
  %2461 = vmatpush.bf16.msra.mxu0 %v1866
  %2462 = vmatpush.bf16.msra.mxu0 %v1865
  %2463 = vmatpush.bf16.msra.mxu0 %v1864
  %2464 = vmatpush.bf16.msra.mxu0 %v1863
  %2465 = vmatpush.bf16.msra.mxu0 %v1862
  %2466 = vmatpush.bf16.msra.mxu0 %v1861
  %2467 = vmatpush.bf16.msra.mxu0 %v1860
  %2468 = vmatpush.bf16.msra.mxu0 %v1859
  %2469 = vmatmul.bf16.gmra.mxu0 %v666
  %v2470 = vpop.f32.mrf.mxu0
  %v2471 = vadd.f32 %v2457, %v2470
  %v2472 = vpop.f32.mrf.mxu0
  %v2473 = vadd.f32 %v2459, %v2472
  %2474 = vdwg.mxu0
  %2475 = vmatpush.bf16.msra.mxu0 %v1874
  %2476 = vmatpush.bf16.msra.mxu0 %v1873
  %2477 = vmatpush.bf16.msra.mxu0 %v1872
  %2478 = vmatpush.bf16.msra.mxu0 %v1871
  %2479 = vmatpush.bf16.msra.mxu0 %v1870
  %2480 = vmatpush.bf16.msra.mxu0 %v1869
  %2481 = vmatpush.bf16.msra.mxu0 %v1868
  %2482 = vmatpush.bf16.msra.mxu0 %v1867
  %2483 = vmatmul.bf16.gmra.mxu0 %v667
  %v2484 = vpop.f32.mrf.mxu0
  %v2485 = vadd.f32 %v2471, %v2484
  %v2486 = vpop.f32.mrf.mxu0
  %v2487 = vadd.f32 %v2473, %v2486
  %2488 = vdwg.mxu0
  %2489 = vmatpush.bf16.msra.mxu0 %v1882
  %2490 = vmatpush.bf16.msra.mxu0 %v1881
  %2491 = vmatpush.bf16.msra.mxu0 %v1880
  %2492 = vmatpush.bf16.msra.mxu0 %v1879
  %2493 = vmatpush.bf16.msra.mxu0 %v1878
  %2494 = vmatpush.bf16.msra.mxu0 %v1877
  %2495 = vmatpush.bf16.msra.mxu0 %v1876
  %2496 = vmatpush.bf16.msra.mxu0 %v1875
  %2497 = vmatmul.bf16.gmra.mxu0 %v668
  %v2498 = vpop.f32.mrf.mxu0
  %v2499 = vadd.f32 %v2485, %v2498
  %v2500 = vpop.f32.mrf.mxu0
  %v2501 = vadd.f32 %v2487, %v2500
  %2502 = vdwg.mxu0
  %2503 = vmatpush.bf16.msra.mxu0 %v1890
  %2504 = vmatpush.bf16.msra.mxu0 %v1889
  %2505 = vmatpush.bf16.msra.mxu0 %v1888
  %2506 = vmatpush.bf16.msra.mxu0 %v1887
  %2507 = vmatpush.bf16.msra.mxu0 %v1886
  %2508 = vmatpush.bf16.msra.mxu0 %v1885
  %2509 = vmatpush.bf16.msra.mxu0 %v1884
  %2510 = vmatpush.bf16.msra.mxu0 %v1883
  %2511 = vmatmul.bf16.gmra.mxu0 %v669
  %v2512 = vpop.f32.mrf.mxu0
  %v2513 = vadd.f32 %v2499, %v2512
  %v2514 = vpop.f32.mrf.mxu0
  %v2515 = vadd.f32 %v2501, %v2514
  %2516 = vdwg.mxu0
  %2517 = vmatpush.bf16.msra.mxu0 %v1898
  %2518 = vmatpush.bf16.msra.mxu0 %v1897
  %2519 = vmatpush.bf16.msra.mxu0 %v1896
  %2520 = vmatpush.bf16.msra.mxu0 %v1895
  %2521 = vmatpush.bf16.msra.mxu0 %v1894
  %2522 = vmatpush.bf16.msra.mxu0 %v1893
  %2523 = vmatpush.bf16.msra.mxu0 %v1892
  %2524 = vmatpush.bf16.msra.mxu0 %v1891
  %2525 = vmatmul.bf16.gmra.mxu0 %v670
  %v2526 = vpop.f32.mrf.mxu0
  %v2527 = vadd.f32 %v2513, %v2526
  %v2528 = vpop.f32.mrf.mxu0
  %v2529 = vadd.f32 %v2515, %v2528
  %2530 = vdwg.mxu0
  %2531 = vmatpush.bf16.msra.mxu0 %v1906
  %2532 = vmatpush.bf16.msra.mxu0 %v1905
  %2533 = vmatpush.bf16.msra.mxu0 %v1904
  %2534 = vmatpush.bf16.msra.mxu0 %v1903
  %2535 = vmatpush.bf16.msra.mxu0 %v1902
  %2536 = vmatpush.bf16.msra.mxu0 %v1901
  %2537 = vmatpush.bf16.msra.mxu0 %v1900
  %2538 = vmatpush.bf16.msra.mxu0 %v1899
  %2539 = vmatmul.bf16.gmra.mxu0 %v671
  %v2540 = vpop.f32.mrf.mxu0
  %v2541 = vadd.f32 %v2527, %v2540
  %v2542 = vpop.f32.mrf.mxu0
  %v2543 = vadd.f32 %v2529, %v2542
  %2544 = vdwg.mxu0
  %2545 = vmatpush.bf16.msra.mxu0 %v1914
  %2546 = vmatpush.bf16.msra.mxu0 %v1913
  %2547 = vmatpush.bf16.msra.mxu0 %v1912
  %2548 = vmatpush.bf16.msra.mxu0 %v1911
  %2549 = vmatpush.bf16.msra.mxu0 %v1910
  %2550 = vmatpush.bf16.msra.mxu0 %v1909
  %2551 = vmatpush.bf16.msra.mxu0 %v1908
  %2552 = vmatpush.bf16.msra.mxu0 %v1907
  %2553 = vmatmul.bf16.gmra.mxu0 %v672
  %v2554 = vpop.f32.mrf.mxu0
  %v2555 = vadd.f32 %v2541, %v2554
  %v2556 = vpop.f32.mrf.mxu0
  %v2557 = vadd.f32 %v2543, %v2556
  %2558 = vdwg.mxu0
  %2559 = vmatpush.bf16.msra.mxu0 %v1922
  %2560 = vmatpush.bf16.msra.mxu0 %v1921
  %2561 = vmatpush.bf16.msra.mxu0 %v1920
  %2562 = vmatpush.bf16.msra.mxu0 %v1919
  %2563 = vmatpush.bf16.msra.mxu0 %v1918
  %2564 = vmatpush.bf16.msra.mxu0 %v1917
  %2565 = vmatpush.bf16.msra.mxu0 %v1916
  %2566 = vmatpush.bf16.msra.mxu0 %v1915
  %2567 = vmatmul.bf16.gmra.mxu0 %v673
  %v2568 = vpop.f32.mrf.mxu0
  %v2569 = vadd.f32 %v2555, %v2568
  %v2570 = vpop.f32.mrf.mxu0
  %v2571 = vadd.f32 %v2557, %v2570
  %2572 = vdwg.mxu0
  %2573 = vmatpush.bf16.msra.mxu0 %v1930
  %2574 = vmatpush.bf16.msra.mxu0 %v1929
  %2575 = vmatpush.bf16.msra.mxu0 %v1928
  %2576 = vmatpush.bf16.msra.mxu0 %v1927
  %2577 = vmatpush.bf16.msra.mxu0 %v1926
  %2578 = vmatpush.bf16.msra.mxu0 %v1925
  %2579 = vmatpush.bf16.msra.mxu0 %v1924
  %2580 = vmatpush.bf16.msra.mxu0 %v1923
  %2581 = vmatmul.bf16.gmra.mxu0 %v674
  %v2582 = vpop.f32.mrf.mxu0
  %v2583 = vadd.f32 %v2569, %v2582
  %v2584 = vpop.f32.mrf.mxu0
  %v2585 = vadd.f32 %v2571, %v2584
  %2586 = vdwg.mxu0
  %2587 = vmatpush.bf16.msra.mxu0 %v1938
  %2588 = vmatpush.bf16.msra.mxu0 %v1937
  %2589 = vmatpush.bf16.msra.mxu0 %v1936
  %2590 = vmatpush.bf16.msra.mxu0 %v1935
  %2591 = vmatpush.bf16.msra.mxu0 %v1934
  %2592 = vmatpush.bf16.msra.mxu0 %v1933
  %2593 = vmatpush.bf16.msra.mxu0 %v1932
  %2594 = vmatpush.bf16.msra.mxu0 %v1931
  %2595 = vmatmul.bf16.gmra.mxu0 %v675
  %v2596 = vpop.f32.mrf.mxu0
  %v2597 = vadd.f32 %v2583, %v2596
  %v2598 = vpop.f32.mrf.mxu0
  %v2599 = vadd.f32 %v2585, %v2598
  %2600 = vdwg.mxu0
  %2601 = vmatpush.bf16.msra.mxu0 %v1946
  %2602 = vmatpush.bf16.msra.mxu0 %v1945
  %2603 = vmatpush.bf16.msra.mxu0 %v1944
  %2604 = vmatpush.bf16.msra.mxu0 %v1943
  %2605 = vmatpush.bf16.msra.mxu0 %v1942
  %2606 = vmatpush.bf16.msra.mxu0 %v1941
  %2607 = vmatpush.bf16.msra.mxu0 %v1940
  %2608 = vmatpush.bf16.msra.mxu0 %v1939
  %2609 = vmatmul.bf16.gmra.mxu0 %v676
  %v2610 = vpop.f32.mrf.mxu0
  %v2611 = vadd.f32 %v2597, %v2610
  %v2612 = vpop.f32.mrf.mxu0
  %v2613 = vadd.f32 %v2599, %v2612
  %2614 = vdwg.mxu0
  %2615 = vmatpush.bf16.msra.mxu0 %v1954
  %2616 = vmatpush.bf16.msra.mxu0 %v1953
  %2617 = vmatpush.bf16.msra.mxu0 %v1952
  %2618 = vmatpush.bf16.msra.mxu0 %v1951
  %2619 = vmatpush.bf16.msra.mxu0 %v1950
  %2620 = vmatpush.bf16.msra.mxu0 %v1949
  %2621 = vmatpush.bf16.msra.mxu0 %v1948
  %2622 = vmatpush.bf16.msra.mxu0 %v1947
  %2623 = vmatmul.bf16.gmra.mxu0 %v677
  %v2624 = vpop.f32.mrf.mxu0
  %v2625 = vadd.f32 %v2611, %v2624
  %v2626 = vpop.f32.mrf.mxu0
  %v2627 = vadd.f32 %v2613, %v2626
  %2628 = vdwg.mxu0
  %2629 = vmatpush.bf16.msra.mxu0 %v1962
  %2630 = vmatpush.bf16.msra.mxu0 %v1961
  %2631 = vmatpush.bf16.msra.mxu0 %v1960
  %2632 = vmatpush.bf16.msra.mxu0 %v1959
  %2633 = vmatpush.bf16.msra.mxu0 %v1958
  %2634 = vmatpush.bf16.msra.mxu0 %v1957
  %2635 = vmatpush.bf16.msra.mxu0 %v1956
  %2636 = vmatpush.bf16.msra.mxu0 %v1955
  %2637 = vmatmul.bf16.gmra.mxu0 %v678
  %v2638 = vpop.f32.mrf.mxu0
  %v2639 = vadd.f32 %v2625, %v2638
  %v2640 = vpop.f32.mrf.mxu0
  %v2641 = vadd.f32 %v2627, %v2640
  %2642 = vdwg.mxu0
  %2643 = vmatpush.bf16.msra.mxu0 %v1970
  %2644 = vmatpush.bf16.msra.mxu0 %v1969
  %2645 = vmatpush.bf16.msra.mxu0 %v1968
  %2646 = vmatpush.bf16.msra.mxu0 %v1967
  %2647 = vmatpush.bf16.msra.mxu0 %v1966
  %2648 = vmatpush.bf16.msra.mxu0 %v1965
  %2649 = vmatpush.bf16.msra.mxu0 %v1964
  %2650 = vmatpush.bf16.msra.mxu0 %v1963
  %2651 = vmatmul.bf16.gmra.mxu0 %v679
  %v2652 = vpop.f32.mrf.mxu0
  %v2653 = vadd.f32 %v2639, %v2652
  %v2654 = vpop.f32.mrf.mxu0
  %v2655 = vadd.f32 %v2641, %v2654
  %2656 = vdwg.mxu0
  %2657 = vmatpush.bf16.msra.mxu0 %v1978
  %2658 = vmatpush.bf16.msra.mxu0 %v1977
  %2659 = vmatpush.bf16.msra.mxu0 %v1976
  %2660 = vmatpush.bf16.msra.mxu0 %v1975
  %2661 = vmatpush.bf16.msra.mxu0 %v1974
  %2662 = vmatpush.bf16.msra.mxu0 %v1973
  %2663 = vmatpush.bf16.msra.mxu0 %v1972
  %2664 = vmatpush.bf16.msra.mxu0 %v1971
  %2665 = vmatmul.bf16.gmra.mxu0 %v680
  %v2666 = vpop.f32.mrf.mxu0
  %v2667 = vadd.f32 %v2653, %v2666
  %v2668 = vpop.f32.mrf.mxu0
  %v2669 = vadd.f32 %v2655, %v2668
  %2670 = vdwg.mxu0
  %2671 = vmatpush.bf16.msra.mxu0 %v1986
  %2672 = vmatpush.bf16.msra.mxu0 %v1985
  %2673 = vmatpush.bf16.msra.mxu0 %v1984
  %2674 = vmatpush.bf16.msra.mxu0 %v1983
  %2675 = vmatpush.bf16.msra.mxu0 %v1982
  %2676 = vmatpush.bf16.msra.mxu0 %v1981
  %2677 = vmatpush.bf16.msra.mxu0 %v1980
  %2678 = vmatpush.bf16.msra.mxu0 %v1979
  %2679 = vmatmul.bf16.gmra.mxu0 %v681
  %v2680 = vpop.f32.mrf.mxu0
  %v2681 = vadd.f32 %v2667, %v2680
  %v2682 = vpop.f32.mrf.mxu0
  %v2683 = vadd.f32 %v2669, %v2682
  %2684 = vdwg.mxu0
  %2685 = vmatpush.bf16.msra.mxu0 %v1994
  %2686 = vmatpush.bf16.msra.mxu0 %v1993
  %2687 = vmatpush.bf16.msra.mxu0 %v1992
  %2688 = vmatpush.bf16.msra.mxu0 %v1991
  %2689 = vmatpush.bf16.msra.mxu0 %v1990
  %2690 = vmatpush.bf16.msra.mxu0 %v1989
  %2691 = vmatpush.bf16.msra.mxu0 %v1988
  %2692 = vmatpush.bf16.msra.mxu0 %v1987
  %2693 = vmatmul.bf16.gmra.mxu0 %v682
  %v2694 = vpop.f32.mrf.mxu0
  %v2695 = vadd.f32 %v2681, %v2694
  %v2696 = vpop.f32.mrf.mxu0
  %v2697 = vadd.f32 %v2683, %v2696
  %2698 = vdwg.mxu0
  %v2699 = vxor.u32 %v2695, 2147483648
  %v2700 = vxor.u32 %v2697, 2147483648
  %v2701 = vmul.f32 %v2699, 1.442695
  %v2702 = vpow.pop %v2701
  %v2703 = vmul.f32 %v2700, 1.442695
  %v2704 = vpow.pop %v2703
  %v2705 = vadd.f32 %v2702, 1.0
  %v2706 = vadd.f32 %v2704, 1.0
  %v2707 = vrcp.pop %v2705
  %v2708 = vmul.f32 %v2705, %v2707
  %v2709 = vsub.f32 1.0, %v2708
  %v2710 = vmul.f32 %v2707, %v2709
  %v2711 = vadd.f32 %v2707, %v2710
  %vm2712 = vweird.f32 %v2705
  %vm2713 = vweird.f32 %v2707
  %vm2714 = vmor %vm2712, %vm2713
  %v2715 = vsel %vm2714, %v2707, %v2711
  %v2716 = vand.u32 2147483647, %v2705
  %vm2717 = vcmp.eq.f32.partialorder %v2716, 8.507059e+37
  %v2718 = vand.u32 %v2705, 2147483648
  %v2719 = vor.u32 1.1754944e-38, %v2718
  %v2720 = vsel %vm2717, %v2719, %v2715
  %v2721 = vmul.f32 1.0, %v2720
  %v2722 = vrcp.pop %v2706
  %v2723 = vmul.f32 %v2706, %v2722
  %v2724 = vsub.f32 1.0, %v2723
  %v2725 = vmul.f32 %v2722, %v2724
  %v2726 = vadd.f32 %v2722, %v2725
  %vm2727 = vweird.f32 %v2706
  %vm2728 = vweird.f32 %v2722
  %vm2729 = vmor %vm2727, %vm2728
  %v2730 = vsel %vm2729, %v2722, %v2726
  %v2731 = vand.u32 2147483647, %v2706
  %vm2732 = vcmp.eq.f32.partialorder %v2731, 8.507059e+37
  %v2733 = vand.u32 %v2706, 2147483648
  %v2734 = vor.u32 1.1754944e-38, %v2733
  %v2735 = vsel %vm2732, %v2734, %v2730
  %v2736 = vmul.f32 1.0, %v2735
  %2737 = vst [vmem:[%s2] sm:$0xff] %v2721
  %2738 = vst [vmem:[%s2 + $0x8] sm:$0xff] %v2736
  // Predicated region
  $region10: #{discriminator_forward.11} parent=0 // pred_check
    _
  $region11: #{discriminator_forward.11} parent=0 // pred_check_branch
    %2740 = sbr.rel (0) target = $region13
  $region12: #{discriminator_forward.11} parent=0 // pred_region
    _
  $region13: #{discriminator_forward.11} parent=0 // pred_fallthru
    _
  // Predicated region
  $region14: #{discriminator_forward.11} parent=0 // pred_check
    _
  $region15: #{discriminator_forward.11} parent=0 // pred_check_branch
    %2742 = sbr.rel (0) target = $region17
  $region16: #{discriminator_forward.11} parent=0 // pred_region
    _
  $region17: #{discriminator_forward.11} parent=0 // pred_fallthru
    _

</llo_original>
